<compile_context>
chip_gen: v6e
topology: v6e:2x2x1
jax: 0.10.0
libtpu: 0.0.40
codegen_flags: <defaults>
</compile_context>

<pallas_src>
import functools

import jax
import jax.numpy as jnp
from jax.experimental import pallas as pl
from jax.experimental.pallas import tpu as pltpu


def _decoder_embedding_kernel(xw_ref, w0_ref, b0_ref, w1_ref, b1_ref,
                              o_ref, f0fold_ref, *,
                              H, W, KH0, KH1, KW1, BN, slope):
    """Fused conv0 + LeakyReLU + conv1 + LeakyReLU + residual for BN slabs.

    xw_ref    : (BN, H+KH0-1, W, Kc0)    bf16, kw-folded, zero-padded conv0 input
                (Kc0 = KW0*Cin rounded up to a multiple of 128)
    w0_ref    : (KH0, Kc0, depth)         bf16
    b0_ref    : (1, depth)                f32
    w1_ref    : (KH1, KW1*depth, depth)   bf16
    b1_ref    : (1, depth)                f32
    o_ref     : (BN, H, W, depth)         output slabs
    f0fold_ref: VMEM (H+KH1-1, W, KW1*depth) bf16 -- kw-folded, zero-halo
                staging buffer holding conv1's im2col'd input (feature_0).
    """
    depth = o_ref.shape[-1]
    ph1, pw1 = (KH1 - 1) // 2, (KW1 - 1) // 2
    Kc0 = w0_ref.shape[1]           # padded KW0 * Cin
    Kc1 = w1_ref.shape[1]           # KW1 * depth
    Hp1 = H + KH1 - 1
    fdt = f0fold_ref.dtype

    # --- once per grid step: zero only the constant halo strips -------------
    # (top/bottom row halo + the never-written column edges of each kw piece).
    # Done unconditionally (not under program_id == 0) so it stays correct when
    # the "parallel" grid axis is sharded across TensorCores (v7x megacore).
    f0fold_ref[0:ph1, :, :] = jnp.zeros((ph1, W, Kc1), fdt)
    f0fold_ref[ph1 + H:Hp1, :, :] = jnp.zeros((Hp1 - ph1 - H, W, Kc1), fdt)
    for kw in range(KW1):
        d = pw1 - kw
        if d > 0:       # left edge of this kw piece is never written by slabs
            f0fold_ref[:, 0:d, kw * depth:(kw + 1) * depth] = (
                jnp.zeros((Hp1, d, depth), fdt))
        elif d < 0:     # right edge of this kw piece is never written by slabs
            f0fold_ref[:, W + d:W, kw * depth:(kw + 1) * depth] = (
                jnp.zeros((Hp1, -d, depth), fdt))

    b0 = b0_ref[...]                # (1, depth) f32, broadcasts over H*W rows
    b1 = b1_ref[...]

    def slab(i, carry):
        # ---------- conv0: KH0 matmuls, K = Kc0 (kw taps pre-folded) --------
        acc0 = jnp.dot(xw_ref[i, 0:H, :, :].reshape(H * W, Kc0), w0_ref[0],
                       preferred_element_type=jnp.float32)
        for kh in range(1, KH0):
            lhs = xw_ref[i, kh:kh + H, :, :].reshape(H * W, Kc0)
            acc0 = acc0 + jnp.dot(lhs, w0_ref[kh],
                                  preferred_element_type=jnp.float32)
        acc0 = acc0 + b0
        f0 = jnp.maximum(acc0, slope * acc0)                 # LeakyReLU(0.2)
        f0b = f0.reshape(H, W, depth).astype(fdt)

        # ---------- stage feature_0, pre-shifted per kw tap, into the -------
        # ---------- kw-folded zero-halo scratch (hoisted out of the kh loop) -
        for kw in range(KW1):
            d = pw1 - kw
            lo, hi = kw * depth, (kw + 1) * depth
            if d >= 0:
                f0fold_ref[ph1:ph1 + H, d:W, lo:hi] = f0b[:, 0:W - d, :]
            else:
                f0fold_ref[ph1:ph1 + H, 0:W + d, lo:hi] = f0b[:, -d:W, :]

        # ---------- conv1: KH1 matmuls, K = KW1*depth; each kh tap is a -----
        # ---------- free slice along the untiled leading dim of the scratch -
        acc1 = jnp.dot(f0fold_ref[0:H, :, :].reshape(H * W, Kc1), w1_ref[0],
                       preferred_element_type=jnp.float32)
        for kh in range(1, KH1):
            lhs = f0fold_ref[kh:kh + H, :, :].reshape(H * W, Kc1)
            acc1 = acc1 + jnp.dot(lhs, w1_ref[kh],
                                  preferred_element_type=jnp.float32)
        acc1 = acc1 + b1
        g1 = jnp.maximum(acc1, slope * acc1)                 # LeakyReLU(0.2)

        # Residual from the bf16 staged copy (the center kw piece is exactly
        # the unshifted feature_0); matches the f32 reference within the
        # asserted bf16-matmul tolerance and frees the f32 copy's live range.
        f0_res = f0fold_ref[ph1:ph1 + H, :, pw1 * depth:(pw1 + 1) * depth]
        f1 = f0_res.reshape(H * W, depth).astype(jnp.float32) + g1
        o_ref[i] = f1.reshape(H, W, depth).astype(o_ref.dtype)
        return carry

    jax.lax.fori_loop(0, BN, slab, 0)


def decoder_embedding_forward(x, w0, b0, w1, b1):
    """x: (B, S, 16, H, W); w0: (7,7,16,depth); w1: (5,5,depth,depth) (HWIO).

    Returns (B, S, depth, H, W) matching DecoderEmbedding.forward (eval mode).
    """
    B, S, C, H, W = x.shape
    KH0, KW0, C0, depth = w0.shape
    KH1, KW1, C1i, C1o = w1.shape
    assert C0 == C, "conv0 expects Cin == input channels (16)"
    assert C1i == depth and C1o == depth, "residual requires conv1 depth->depth"
    # Lane-aligned kw pieces / lane-dense output stores rely on depth % 128 == 0
    # (module default depth=256 satisfies this); other depths need a padded
    # fallback which is not implemented here.
    assert depth % 128 == 0, "kernel requires depth to be a multiple of 128"

    N = B * S
    ph0, pw0 = (KH0 - 1) // 2, (KW0 - 1) // 2
    Hp0 = H + KH0 - 1

    # (B, S, C, H, W) -> NHWC slabs (N, H, W, C)
    x_nhwc = jnp.transpose(x.reshape(N, C, H, W), (0, 2, 3, 1))

    # kw-folded im2col for conv0 (Cin is only 16, so this widened input stays
    # small while raising conv0's contraction from K=16 to K=KW0*16).  The
    # folded contraction dim is zero-padded to a lane multiple (112 -> 128).
    # TODO(synk): on v6e/v7x, folding kh pairs (K~224 -> pad 256) would fill
    # the 256-deep MXU; kept at K=128 to stay v5e-friendly and simple.
    Kraw = KW0 * C
    Kc0 = ((Kraw + 127) // 128) * 128
    xpad = jnp.pad(x_nhwc, ((0, 0), (ph0, ph0), (pw0, pw0), (0, 0)))
    xw = jnp.concatenate([xpad[:, :, kw:kw + W, :] for kw in range(KW0)],
                         axis=-1)                        # (N, Hp0, W, KW0*C)
    if Kc0 > Kraw:
        xw = jnp.pad(xw, ((0, 0), (0, 0), (0, 0), (0, Kc0 - Kraw)))
    xw = xw.astype(jnp.bfloat16)

    # Tap-folded bf16 weights; contraction index = kw*Cin + c (matches xw).
    w0r = w0.reshape(KH0, Kraw, depth)
    if Kc0 > Kraw:
        w0r = jnp.pad(w0r, ((0, 0), (0, Kc0 - Kraw), (0, 0)))
    w0r = w0r.astype(jnp.bfloat16)
    w1r = w1.reshape(KH1, KW1 * depth, depth).astype(jnp.bfloat16)
    b0r = b0.reshape(1, depth).astype(jnp.float32)
    b1r = b1.reshape(1, depth).astype(jnp.float32)

    out_itemsize = x.dtype.itemsize

    # Several (B,S) slabs per grid step amortize the ~0.35us per-step overhead;
    # prefer an EVEN grid length so v7x's two TensorCores get balanced work.
    slab_bytes = Hp0 * W * Kc0 * 2 + H * W * depth * out_itemsize
    cands = [bn for bn in range(min(N, 8), 0, -1)
             if N % bn == 0 and bn * slab_bytes <= 4 * 1024 * 1024]
    even = [bn for bn in cands if (N // bn) % 2 == 0]
    BN = even[0] if even else (cands[0] if cands else 1)

    # VMEM estimate: double-buffered blocks + scratch + f32 temporaries; only
    # override the scoped default when we would exceed it.
    # TODO(synk): at production H/W/depth (e.g. 64x64x256) add row-tiling of
    # each slab so per-slab temporaries stay within v7x's 64 MiB VMEM.
    blk_bytes = (BN * Hp0 * W * Kc0 * 2
                 + KH0 * Kc0 * depth * 2
                 + KH1 * KW1 * depth * depth * 2
                 + 2 * depth * 4
                 + BN * H * W * depth * out_itemsize)
    scratch_bytes = (H + KH1 - 1) * W * KW1 * depth * 2
    est_vmem = 2 * blk_bytes + scratch_bytes + 4 * H * W * depth * 4
    vmem_limit = None
    if est_vmem > 32 * 1024 * 1024:
        vmem_limit = min(int(est_vmem * 1.25), 112 * 1024 * 1024)

    flops = 2 * N * H * W * depth * (KH0 * KW0 * C + KH1 * KW1 * depth)
    bytes_accessed = (xw.size * 2 + w0r.size * 2 + w1r.size * 2
                      + (b0r.size + b1r.size) * 4
                      + N * H * W * depth * out_itemsize)
    cost = pl.CostEstimate(flops=flops, transcendentals=0,
                           bytes_accessed=bytes_accessed)

    kernel = functools.partial(
        _decoder_embedding_kernel, H=H, W=W, KH0=KH0,
        KH1=KH1, KW1=KW1, BN=BN, slope=0.2)

    out_nhwc = pl.pallas_call(
        kernel,
        out_shape=jax.ShapeDtypeStruct((N, H, W, depth), x.dtype),
        grid=(N // BN,),
        in_specs=[
            pl.BlockSpec((BN, Hp0, W, Kc0), lambda n: (n, 0, 0, 0)),
            pl.BlockSpec((KH0, Kc0, depth), lambda n: (0, 0, 0)),
            pl.BlockSpec((1, depth), lambda n: (0, 0)),
            pl.BlockSpec((KH1, KW1 * depth, depth), lambda n: (0, 0, 0)),
            pl.BlockSpec((1, depth), lambda n: (0, 0)),
        ],
        out_specs=pl.BlockSpec((BN, H, W, depth), lambda n: (n, 0, 0, 0)),
        scratch_shapes=[
            # kw-folded zero-halo feature_0 staging buffer (bf16)
            pltpu.VMEM((H + KH1 - 1, W, KW1 * depth), jnp.bfloat16),
        ],
        compiler_params=pltpu.CompilerParams(
            dimension_semantics=("parallel",),
            vmem_limit_bytes=vmem_limit),
        cost_estimate=cost,
    )(xw, w0r, b0r, w1r, b1r)

    # TODO(synk): nn.Dropout3d(0.1) is identity in eval mode; train-mode
    # channel dropout (pltpu.prng_seed/prng_random_bits) is not implemented.

    return jnp.transpose(out_nhwc, (0, 3, 1, 2)).reshape(B, S, depth, H, W)


def _reference_forward(x, w0, b0, w1, b1):
    """Pure-JAX f32 reference (lax conv) for validation."""
    B, S, C, H, W = x.shape
    depth = w0.shape[-1]
    xn = jnp.transpose(x.reshape(B * S, C, H, W), (0, 2, 3, 1))
    dn = jax.lax.conv_dimension_numbers(xn.shape, w0.shape,
                                        ("NHWC", "HWIO", "NHWC"))

    def conv(inp, w, b):
        return jax.lax.conv_general_dilated(inp, w, (1, 1), "SAME",
                                            dimension_numbers=dn) + b

    def lrelu(v):
        return jnp.where(v > 0, v, 0.2 * v)

    f0 = lrelu(conv(xn, w0, b0))
    f1 = f0 + lrelu(conv(f0, w1, b1))
    return jnp.transpose(f1, (0, 3, 1, 2)).reshape(B, S, depth, H, W)


if __name__ == "__main__":
    # Small demo shapes: the module fixes Cin=16; depth kept a multiple of 128
    # (lane-dense stores); module default is depth=256.
    B, S, C, H, W = 2, 3, 16, 16, 16
    depth = 128

    key = jax.random.PRNGKey(0)
    k1, k2, k3, k4, k5 = jax.random.split(key, 5)
    x = jax.random.normal(k1, (B, S, C, H, W), jnp.float32)
    w0 = jax.random.normal(k2, (7, 7, C, depth), jnp.float32) * 0.02
    b0 = jax.random.normal(k3, (depth,), jnp.float32) * 0.02
    w1 = jax.random.normal(k4, (5, 5, depth, depth), jnp.float32) * 0.02
    b1 = jax.random.normal(k5, (depth,), jnp.float32) * 0.02

    fwd = jax.jit(decoder_embedding_forward)
    out = jax.block_until_ready(fwd(x, w0, b0, w1, b1))

    assert out.shape == (B, S, depth, H, W), out.shape

    ref = _reference_forward(x, w0, b0, w1, b1)
    max_err = float(jnp.max(jnp.abs(out - ref)))
    # bf16 matmul operands / bf16-staged residual with f32 accumulation ->
    # small, bounded mismatch vs. the pure-f32 reference.
    assert jnp.allclose(out, ref, atol=5e-2, rtol=5e-2), max_err

    print("KERNEL_OK")
</pallas_src>

<mosaic_0001>
module attributes {stable_mosaic.version = 11 : i64} {
  func.func @_decoder_embedding_kernel(%arg0: i32, %arg1: memref<3x22x16x128xbf16, #tpu.memory_space<vmem>>, %arg2: memref<7x128x128xbf16, #tpu.memory_space<vmem>>, %arg3: memref<1x128xf32, #tpu.memory_space<vmem>>, %arg4: memref<5x640x128xbf16, #tpu.memory_space<vmem>>, %arg5: memref<1x128xf32, #tpu.memory_space<vmem>>, %arg6: memref<3x16x16x128xf32, #tpu.memory_space<vmem>>, %arg7: memref<20x16x640xbf16, #tpu.memory_space<vmem>>) attributes {dimension_semantics = [#tpu.dimension_semantics<parallel>], iteration_bounds = array<i64: 2>, scalar_prefetch = 0 : i64, scratch_operands = 1 : i64, tpu.core_type = #tpu.core_type<tc>, window_params = [{transform_indices = @transform_0, window_bounds = array<i64: 3, 22, 16, 128>}, {pipeline_mode = #tpu.pipeline_mode<synchronous>, transform_indices = @transform_1, window_bounds = array<i64: 7, 128, 128>}, {pipeline_mode = #tpu.pipeline_mode<synchronous>, transform_indices = @transform_2, window_bounds = array<i64: 1, 128>}, {pipeline_mode = #tpu.pipeline_mode<synchronous>, transform_indices = @transform_3, window_bounds = array<i64: 5, 640, 128>}, {pipeline_mode = #tpu.pipeline_mode<synchronous>, transform_indices = @transform_4, window_bounds = array<i64: 1, 128>}, {transform_indices = @transform_5, window_bounds = array<i64: 3, 16, 16, 128>}]} {
    %cst = arith.constant 0.000000e+00 : bf16
    %0 = vector.broadcast %cst : bf16 to vector<2x16x640xbf16>
    %c0 = arith.constant 0 : index
    %c0_0 = arith.constant 0 : index
    %c0_1 = arith.constant 0 : index
    %1 = vector.load %arg7[%c0, %c0_0, %c0_1] : memref<20x16x640xbf16, #tpu.memory_space<vmem>>, vector<2x16x640xbf16>
    tpu.vector_store %arg7[%c0, %c0_0, %c0_1], %0 {strides = array<i32>} : memref<20x16x640xbf16, #tpu.memory_space<vmem>>, vector<2x16x640xbf16>,
    %cst_2 = arith.constant 0.000000e+00 : bf16
    %2 = vector.broadcast %cst_2 : bf16 to vector<2x16x640xbf16>
    %c18 = arith.constant 18 : index
    %c0_3 = arith.constant 0 : index
    %c0_4 = arith.constant 0 : index
    %3 = vector.load %arg7[%c18, %c0_3, %c0_4] : memref<20x16x640xbf16, #tpu.memory_space<vmem>>, vector<2x16x640xbf16>
    tpu.vector_store %arg7[%c18, %c0_3, %c0_4], %2 {strides = array<i32>} : memref<20x16x640xbf16, #tpu.memory_space<vmem>>, vector<2x16x640xbf16>,
    %cst_5 = arith.constant 0.000000e+00 : bf16
    %4 = vector.broadcast %cst_5 : bf16 to vector<20x2x128xbf16>
    %c0_6 = arith.constant 0 : index
    %c0_7 = arith.constant 0 : index
    %c0_8 = arith.constant 0 : index
    %5 = vector.load %arg7[%c0_6, %c0_7, %c0_8] : memref<20x16x640xbf16, #tpu.memory_space<vmem>>, vector<20x2x128xbf16>
    tpu.vector_store %arg7[%c0_6, %c0_7, %c0_8], %4 {strides = array<i32>} : memref<20x16x640xbf16, #tpu.memory_space<vmem>>, vector<20x2x128xbf16>,
    %cst_9 = arith.constant 0.000000e+00 : bf16
    %6 = vector.broadcast %cst_9 : bf16 to vector<20x1x128xbf16>
    %c0_10 = arith.constant 0 : index
    %c0_11 = arith.constant 0 : index
    %c128 = arith.constant 128 : index
    %7 = vector.load %arg7[%c0_10, %c0_11, %c128] : memref<20x16x640xbf16, #tpu.memory_space<vmem>>, vector<20x1x128xbf16>
    tpu.vector_store %arg7[%c0_10, %c0_11, %c128], %6 {strides = array<i32>} : memref<20x16x640xbf16, #tpu.memory_space<vmem>>, vector<20x1x128xbf16>,
    %cst_12 = arith.constant 0.000000e+00 : bf16
    %8 = vector.broadcast %cst_12 : bf16 to vector<20x1x128xbf16>
    %c0_13 = arith.constant 0 : index
    %c15 = arith.constant 15 : index
    %c384 = arith.constant 384 : index
    %9 = vector.load %arg7[%c0_13, %c15, %c384] : memref<20x16x640xbf16, #tpu.memory_space<vmem>>, vector<20x1x128xbf16>
    tpu.vector_store %arg7[%c0_13, %c15, %c384], %8 {strides = array<i32>} : memref<20x16x640xbf16, #tpu.memory_space<vmem>>, vector<20x1x128xbf16>,
    %cst_14 = arith.constant 0.000000e+00 : bf16
    %10 = vector.broadcast %cst_14 : bf16 to vector<20x2x128xbf16>
    %c0_15 = arith.constant 0 : index
    %c14 = arith.constant 14 : index
    %c512 = arith.constant 512 : index
    %11 = vector.load %arg7[%c0_15, %c14, %c512] : memref<20x16x640xbf16, #tpu.memory_space<vmem>>, vector<20x2x128xbf16>
    tpu.vector_store %arg7[%c0_15, %c14, %c512], %10 {strides = array<i32>} : memref<20x16x640xbf16, #tpu.memory_space<vmem>>, vector<20x2x128xbf16>,
    %c0_16 = arith.constant 0 : index
    %c0_17 = arith.constant 0 : index
    %12 = vector.load %arg3[%c0_16, %c0_17] : memref<1x128xf32, #tpu.memory_space<vmem>>, vector<1x128xf32>
    %c0_18 = arith.constant 0 : index
    %c0_19 = arith.constant 0 : index
    %13 = vector.load %arg5[%c0_18, %c0_19] : memref<1x128xf32, #tpu.memory_space<vmem>>, vector<1x128xf32>
    %c0_i32 = arith.constant 0 : i32
    %c3_i32 = arith.constant 3 : i32
    %14 = arith.addi %c0_i32, %c3_i32 : i32
    %c1_i32 = arith.constant 1 : i32
    scf.for %arg8 = %c0_i32 to %14 step %c1_i32  : i32 {
      %15 = arith.index_cast %arg8 : i32 to index
      %c0_21 = arith.constant 0 : index
      %c0_22 = arith.constant 0 : index
      %c0_23 = arith.constant 0 : index
      %16 = vector.load %arg1[%15, %c0_21, %c0_22, %c0_23] : memref<3x22x16x128xbf16, #tpu.memory_space<vmem>>, vector<1x16x16x128xbf16>
      %17 = vector.shape_cast %16 : vector<1x16x16x128xbf16> to vector<16x16x128xbf16>
      %18 = vector.shape_cast %17 : vector<16x16x128xbf16> to vector<256x128xbf16>
      %c0_24 = arith.constant 0 : index
      %c0_25 = arith.constant 0 : index
      %c0_26 = arith.constant 0 : index
      %19 = vector.load %arg2[%c0_24, %c0_25, %c0_26] : memref<7x128x128xbf16, #tpu.memory_space<vmem>>, vector<1x128x128xbf16>
      %20 = vector.shape_cast %19 : vector<1x128x128xbf16> to vector<128x128xbf16>
      %cst_27 = arith.constant dense<0.000000e+00> : vector<256x128xf32>
      %21 = tpu.matmul %18, %20, %cst_27 {dimension_numbers = #tpu.dot_dimension_numbers<[1], [0], [0], [1], [0, 0, 1, 1], [], []>} : vector<256x128xbf16>, vector<128x128xbf16>, vector<256x128xf32> -> vector<256x128xf32>
      %22 = arith.index_cast %arg8 : i32 to index
      %c1 = arith.constant 1 : index
      %c0_28 = arith.constant 0 : index
      %c0_29 = arith.constant 0 : index
      %23 = vector.load %arg1[%22, %c1, %c0_28, %c0_29] : memref<3x22x16x128xbf16, #tpu.memory_space<vmem>>, vector<1x16x16x128xbf16>
      %24 = vector.shape_cast %23 : vector<1x16x16x128xbf16> to vector<16x16x128xbf16>
      %25 = vector.shape_cast %24 : vector<16x16x128xbf16> to vector<256x128xbf16>
      %c1_30 = arith.constant 1 : index
      %c0_31 = arith.constant 0 : index
      %c0_32 = arith.constant 0 : index
      %26 = vector.load %arg2[%c1_30, %c0_31, %c0_32] : memref<7x128x128xbf16, #tpu.memory_space<vmem>>, vector<1x128x128xbf16>
      %27 = vector.shape_cast %26 : vector<1x128x128xbf16> to vector<128x128xbf16>
      %cst_33 = arith.constant dense<0.000000e+00> : vector<256x128xf32>
      %28 = tpu.matmul %25, %27, %cst_33 {dimension_numbers = #tpu.dot_dimension_numbers<[1], [0], [0], [1], [0, 0, 1, 1], [], []>} : vector<256x128xbf16>, vector<128x128xbf16>, vector<256x128xf32> -> vector<256x128xf32>
      %29 = arith.addf %21, %28 : vector<256x128xf32>
      %30 = arith.index_cast %arg8 : i32 to index
      %c2 = arith.constant 2 : index
      %c0_34 = arith.constant 0 : index
      %c0_35 = arith.constant 0 : index
      %31 = vector.load %arg1[%30, %c2, %c0_34, %c0_35] : memref<3x22x16x128xbf16, #tpu.memory_space<vmem>>, vector<1x16x16x128xbf16>
      %32 = vector.shape_cast %31 : vector<1x16x16x128xbf16> to vector<16x16x128xbf16>
      %33 = vector.shape_cast %32 : vector<16x16x128xbf16> to vector<256x128xbf16>
      %c2_36 = arith.constant 2 : index
      %c0_37 = arith.constant 0 : index
      %c0_38 = arith.constant 0 : index
      %34 = vector.load %arg2[%c2_36, %c0_37, %c0_38] : memref<7x128x128xbf16, #tpu.memory_space<vmem>>, vector<1x128x128xbf16>
      %35 = vector.shape_cast %34 : vector<1x128x128xbf16> to vector<128x128xbf16>
      %cst_39 = arith.constant dense<0.000000e+00> : vector<256x128xf32>
      %36 = tpu.matmul %33, %35, %cst_39 {dimension_numbers = #tpu.dot_dimension_numbers<[1], [0], [0], [1], [0, 0, 1, 1], [], []>} : vector<256x128xbf16>, vector<128x128xbf16>, vector<256x128xf32> -> vector<256x128xf32>
      %37 = arith.addf %29, %36 : vector<256x128xf32>
      %38 = arith.index_cast %arg8 : i32 to index
      %c3 = arith.constant 3 : index
      %c0_40 = arith.constant 0 : index
      %c0_41 = arith.constant 0 : index
      %39 = vector.load %arg1[%38, %c3, %c0_40, %c0_41] : memref<3x22x16x128xbf16, #tpu.memory_space<vmem>>, vector<1x16x16x128xbf16>
      %40 = vector.shape_cast %39 : vector<1x16x16x128xbf16> to vector<16x16x128xbf16>
      %41 = vector.shape_cast %40 : vector<16x16x128xbf16> to vector<256x128xbf16>
      %c3_42 = arith.constant 3 : index
      %c0_43 = arith.constant 0 : index
      %c0_44 = arith.constant 0 : index
      %42 = vector.load %arg2[%c3_42, %c0_43, %c0_44] : memref<7x128x128xbf16, #tpu.memory_space<vmem>>, vector<1x128x128xbf16>
      %43 = vector.shape_cast %42 : vector<1x128x128xbf16> to vector<128x128xbf16>
      %cst_45 = arith.constant dense<0.000000e+00> : vector<256x128xf32>
      %44 = tpu.matmul %41, %43, %cst_45 {dimension_numbers = #tpu.dot_dimension_numbers<[1], [0], [0], [1], [0, 0, 1, 1], [], []>} : vector<256x128xbf16>, vector<128x128xbf16>, vector<256x128xf32> -> vector<256x128xf32>
      %45 = arith.addf %37, %44 : vector<256x128xf32>
      %46 = arith.index_cast %arg8 : i32 to index
      %c4 = arith.constant 4 : index
      %c0_46 = arith.constant 0 : index
      %c0_47 = arith.constant 0 : index
      %47 = vector.load %arg1[%46, %c4, %c0_46, %c0_47] : memref<3x22x16x128xbf16, #tpu.memory_space<vmem>>, vector<1x16x16x128xbf16>
      %48 = vector.shape_cast %47 : vector<1x16x16x128xbf16> to vector<16x16x128xbf16>
      %49 = vector.shape_cast %48 : vector<16x16x128xbf16> to vector<256x128xbf16>
      %c4_48 = arith.constant 4 : index
      %c0_49 = arith.constant 0 : index
      %c0_50 = arith.constant 0 : index
      %50 = vector.load %arg2[%c4_48, %c0_49, %c0_50] : memref<7x128x128xbf16, #tpu.memory_space<vmem>>, vector<1x128x128xbf16>
      %51 = vector.shape_cast %50 : vector<1x128x128xbf16> to vector<128x128xbf16>
      %cst_51 = arith.constant dense<0.000000e+00> : vector<256x128xf32>
      %52 = tpu.matmul %49, %51, %cst_51 {dimension_numbers = #tpu.dot_dimension_numbers<[1], [0], [0], [1], [0, 0, 1, 1], [], []>} : vector<256x128xbf16>, vector<128x128xbf16>, vector<256x128xf32> -> vector<256x128xf32>
      %53 = arith.addf %45, %52 : vector<256x128xf32>
      %54 = arith.index_cast %arg8 : i32 to index
      %c5 = arith.constant 5 : index
      %c0_52 = arith.constant 0 : index
      %c0_53 = arith.constant 0 : index
      %55 = vector.load %arg1[%54, %c5, %c0_52, %c0_53] : memref<3x22x16x128xbf16, #tpu.memory_space<vmem>>, vector<1x16x16x128xbf16>
      %56 = vector.shape_cast %55 : vector<1x16x16x128xbf16> to vector<16x16x128xbf16>
      %57 = vector.shape_cast %56 : vector<16x16x128xbf16> to vector<256x128xbf16>
      %c5_54 = arith.constant 5 : index
      %c0_55 = arith.constant 0 : index
      %c0_56 = arith.constant 0 : index
      %58 = vector.load %arg2[%c5_54, %c0_55, %c0_56] : memref<7x128x128xbf16, #tpu.memory_space<vmem>>, vector<1x128x128xbf16>
      %59 = vector.shape_cast %58 : vector<1x128x128xbf16> to vector<128x128xbf16>
      %cst_57 = arith.constant dense<0.000000e+00> : vector<256x128xf32>
      %60 = tpu.matmul %57, %59, %cst_57 {dimension_numbers = #tpu.dot_dimension_numbers<[1], [0], [0], [1], [0, 0, 1, 1], [], []>} : vector<256x128xbf16>, vector<128x128xbf16>, vector<256x128xf32> -> vector<256x128xf32>
      %61 = arith.addf %53, %60 : vector<256x128xf32>
      %62 = arith.index_cast %arg8 : i32 to index
      %c6 = arith.constant 6 : index
      %c0_58 = arith.constant 0 : index
      %c0_59 = arith.constant 0 : index
      %63 = vector.load %arg1[%62, %c6, %c0_58, %c0_59] : memref<3x22x16x128xbf16, #tpu.memory_space<vmem>>, vector<1x16x16x128xbf16>
      %64 = vector.shape_cast %63 : vector<1x16x16x128xbf16> to vector<16x16x128xbf16>
      %65 = vector.shape_cast %64 : vector<16x16x128xbf16> to vector<256x128xbf16>
      %c6_60 = arith.constant 6 : index
      %c0_61 = arith.constant 0 : index
      %c0_62 = arith.constant 0 : index
      %66 = vector.load %arg2[%c6_60, %c0_61, %c0_62] : memref<7x128x128xbf16, #tpu.memory_space<vmem>>, vector<1x128x128xbf16>
      %67 = vector.shape_cast %66 : vector<1x128x128xbf16> to vector<128x128xbf16>
      %cst_63 = arith.constant dense<0.000000e+00> : vector<256x128xf32>
      %68 = tpu.matmul %65, %67, %cst_63 {dimension_numbers = #tpu.dot_dimension_numbers<[1], [0], [0], [1], [0, 0, 1, 1], [], []>} : vector<256x128xbf16>, vector<128x128xbf16>, vector<256x128xf32> -> vector<256x128xf32>
      %69 = arith.addf %61, %68 : vector<256x128xf32>
      %70 = vector.broadcast %12 : vector<1x128xf32> to vector<256x128xf32>
      %71 = arith.addf %69, %70 : vector<256x128xf32>
      %cst_64 = arith.constant 2.000000e-01 : f32
      %72 = vector.broadcast %cst_64 : f32 to vector<256x128xf32>
      %73 = arith.mulf %72, %71 : vector<256x128xf32>
      %74 = arith.maximumf %71, %73 : vector<256x128xf32>
      %75 = vector.shape_cast %74 : vector<256x128xf32> to vector<16x16x128xf32>
      %76 = arith.truncf %75 : vector<16x16x128xf32> to vector<16x16x128xbf16>
      %77 = vector.extract_strided_slice %76 {offsets = [0, 0, 0], sizes = [16, 14, 128], strides = [1, 1, 1]} : vector<16x16x128xbf16> to vector<16x14x128xbf16>
      %c2_65 = arith.constant 2 : index
      %c2_66 = arith.constant 2 : index
      %c0_67 = arith.constant 0 : index
      %78 = vector.load %arg7[%c2_65, %c2_66, %c0_67] : memref<20x16x640xbf16, #tpu.memory_space<vmem>>, vector<16x14x128xbf16>
      tpu.vector_store %arg7[%c2_65, %c2_66, %c0_67], %77 {strides = array<i32>} : memref<20x16x640xbf16, #tpu.memory_space<vmem>>, vector<16x14x128xbf16>,
      %79 = vector.extract_strided_slice %76 {offsets = [0, 0, 0], sizes = [16, 15, 128], strides = [1, 1, 1]} : vector<16x16x128xbf16> to vector<16x15x128xbf16>
      %c2_68 = arith.constant 2 : index
      %c1_69 = arith.constant 1 : index
      %c128_70 = arith.constant 128 : index
      %80 = vector.load %arg7[%c2_68, %c1_69, %c128_70] : memref<20x16x640xbf16, #tpu.memory_space<vmem>>, vector<16x15x128xbf16>
      tpu.vector_store %arg7[%c2_68, %c1_69, %c128_70], %79 {strides = array<i32>} : memref<20x16x640xbf16, #tpu.memory_space<vmem>>, vector<16x15x128xbf16>,
      %c2_71 = arith.constant 2 : index
      %c0_72 = arith.constant 0 : index
      %c256 = arith.constant 256 : index
      %81 = vector.load %arg7[%c2_71, %c0_72, %c256] : memref<20x16x640xbf16, #tpu.memory_space<vmem>>, vector<16x16x128xbf16>
      tpu.vector_store %arg7[%c2_71, %c0_72, %c256], %76 {strides = array<i32>} : memref<20x16x640xbf16, #tpu.memory_space<vmem>>, vector<16x16x128xbf16>,
      %82 = vector.extract_strided_slice %76 {offsets = [0, 1, 0], sizes = [16, 15, 128], strides = [1, 1, 1]} : vector<16x16x128xbf16> to vector<16x15x128xbf16>
      %c2_73 = arith.constant 2 : index
      %c0_74 = arith.constant 0 : index
      %c384_75 = arith.constant 384 : index
      %83 = vector.load %arg7[%c2_73, %c0_74, %c384_75] : memref<20x16x640xbf16, #tpu.memory_space<vmem>>, vector<16x15x128xbf16>
      tpu.vector_store %arg7[%c2_73, %c0_74, %c384_75], %82 {strides = array<i32>} : memref<20x16x640xbf16, #tpu.memory_space<vmem>>, vector<16x15x128xbf16>,
      %84 = vector.extract_strided_slice %76 {offsets = [0, 2, 0], sizes = [16, 14, 128], strides = [1, 1, 1]} : vector<16x16x128xbf16> to vector<16x14x128xbf16>
      %c2_76 = arith.constant 2 : index
      %c0_77 = arith.constant 0 : index
      %c512_78 = arith.constant 512 : index
      %85 = vector.load %arg7[%c2_76, %c0_77, %c512_78] : memref<20x16x640xbf16, #tpu.memory_space<vmem>>, vector<16x14x128xbf16>
      tpu.vector_store %arg7[%c2_76, %c0_77, %c512_78], %84 {strides = array<i32>} : memref<20x16x640xbf16, #tpu.memory_space<vmem>>, vector<16x14x128xbf16>,
      %c0_79 = arith.constant 0 : index
      %c0_80 = arith.constant 0 : index
      %c0_81 = arith.constant 0 : index
      %86 = vector.load %arg7[%c0_79, %c0_80, %c0_81] : memref<20x16x640xbf16, #tpu.memory_space<vmem>>, vector<16x16x640xbf16>
      %87 = vector.shape_cast %86 : vector<16x16x640xbf16> to vector<256x640xbf16>
      %c0_82 = arith.constant 0 : index
      %c0_83 = arith.constant 0 : index
      %c0_84 = arith.constant 0 : index
      %88 = vector.load %arg4[%c0_82, %c0_83, %c0_84] : memref<5x640x128xbf16, #tpu.memory_space<vmem>>, vector<1x640x128xbf16>
      %89 = vector.shape_cast %88 : vector<1x640x128xbf16> to vector<640x128xbf16>
      %cst_85 = arith.constant dense<0.000000e+00> : vector<256x128xf32>
      %90 = tpu.matmul %87, %89, %cst_85 {dimension_numbers = #tpu.dot_dimension_numbers<[1], [0], [0], [1], [0, 0, 1, 1], [], []>} : vector<256x640xbf16>, vector<640x128xbf16>, vector<256x128xf32> -> vector<256x128xf32>
      %c1_86 = arith.constant 1 : index
      %c0_87 = arith.constant 0 : index
      %c0_88 = arith.constant 0 : index
      %91 = vector.load %arg7[%c1_86, %c0_87, %c0_88] : memref<20x16x640xbf16, #tpu.memory_space<vmem>>, vector<16x16x640xbf16>
      %92 = vector.shape_cast %91 : vector<16x16x640xbf16> to vector<256x640xbf16>
      %c1_89 = arith.constant 1 : index
      %c0_90 = arith.constant 0 : index
      %c0_91 = arith.constant 0 : index
      %93 = vector.load %arg4[%c1_89, %c0_90, %c0_91] : memref<5x640x128xbf16, #tpu.memory_space<vmem>>, vector<1x640x128xbf16>
      %94 = vector.shape_cast %93 : vector<1x640x128xbf16> to vector<640x128xbf16>
      %cst_92 = arith.constant dense<0.000000e+00> : vector<256x128xf32>
      %95 = tpu.matmul %92, %94, %cst_92 {dimension_numbers = #tpu.dot_dimension_numbers<[1], [0], [0], [1], [0, 0, 1, 1], [], []>} : vector<256x640xbf16>, vector<640x128xbf16>, vector<256x128xf32> -> vector<256x128xf32>
      %96 = arith.addf %90, %95 : vector<256x128xf32>
      %c2_93 = arith.constant 2 : index
      %c0_94 = arith.constant 0 : index
      %c0_95 = arith.constant 0 : index
      %97 = vector.load %arg7[%c2_93, %c0_94, %c0_95] : memref<20x16x640xbf16, #tpu.memory_space<vmem>>, vector<16x16x640xbf16>
      %98 = vector.shape_cast %97 : vector<16x16x640xbf16> to vector<256x640xbf16>
      %c2_96 = arith.constant 2 : index
      %c0_97 = arith.constant 0 : index
      %c0_98 = arith.constant 0 : index
      %99 = vector.load %arg4[%c2_96, %c0_97, %c0_98] : memref<5x640x128xbf16, #tpu.memory_space<vmem>>, vector<1x640x128xbf16>
      %100 = vector.shape_cast %99 : vector<1x640x128xbf16> to vector<640x128xbf16>
      %cst_99 = arith.constant dense<0.000000e+00> : vector<256x128xf32>
      %101 = tpu.matmul %98, %100, %cst_99 {dimension_numbers = #tpu.dot_dimension_numbers<[1], [0], [0], [1], [0, 0, 1, 1], [], []>} : vector<256x640xbf16>, vector<640x128xbf16>, vector<256x128xf32> -> vector<256x128xf32>
      %102 = arith.addf %96, %101 : vector<256x128xf32>
      %c3_100 = arith.constant 3 : index
      %c0_101 = arith.constant 0 : index
      %c0_102 = arith.constant 0 : index
      %103 = vector.load %arg7[%c3_100, %c0_101, %c0_102] : memref<20x16x640xbf16, #tpu.memory_space<vmem>>, vector<16x16x640xbf16>
      %104 = vector.shape_cast %103 : vector<16x16x640xbf16> to vector<256x640xbf16>
      %c3_103 = arith.constant 3 : index
      %c0_104 = arith.constant 0 : index
      %c0_105 = arith.constant 0 : index
      %105 = vector.load %arg4[%c3_103, %c0_104, %c0_105] : memref<5x640x128xbf16, #tpu.memory_space<vmem>>, vector<1x640x128xbf16>
      %106 = vector.shape_cast %105 : vector<1x640x128xbf16> to vector<640x128xbf16>
      %cst_106 = arith.constant dense<0.000000e+00> : vector<256x128xf32>
      %107 = tpu.matmul %104, %106, %cst_106 {dimension_numbers = #tpu.dot_dimension_numbers<[1], [0], [0], [1], [0, 0, 1, 1], [], []>} : vector<256x640xbf16>, vector<640x128xbf16>, vector<256x128xf32> -> vector<256x128xf32>
      %108 = arith.addf %102, %107 : vector<256x128xf32>
      %c4_107 = arith.constant 4 : index
      %c0_108 = arith.constant 0 : index
      %c0_109 = arith.constant 0 : index
      %109 = vector.load %arg7[%c4_107, %c0_108, %c0_109] : memref<20x16x640xbf16, #tpu.memory_space<vmem>>, vector<16x16x640xbf16>
      %110 = vector.shape_cast %109 : vector<16x16x640xbf16> to vector<256x640xbf16>
      %c4_110 = arith.constant 4 : index
      %c0_111 = arith.constant 0 : index
      %c0_112 = arith.constant 0 : index
      %111 = vector.load %arg4[%c4_110, %c0_111, %c0_112] : memref<5x640x128xbf16, #tpu.memory_space<vmem>>, vector<1x640x128xbf16>
      %112 = vector.shape_cast %111 : vector<1x640x128xbf16> to vector<640x128xbf16>
      %cst_113 = arith.constant dense<0.000000e+00> : vector<256x128xf32>
      %113 = tpu.matmul %110, %112, %cst_113 {dimension_numbers = #tpu.dot_dimension_numbers<[1], [0], [0], [1], [0, 0, 1, 1], [], []>} : vector<256x640xbf16>, vector<640x128xbf16>, vector<256x128xf32> -> vector<256x128xf32>
      %114 = arith.addf %108, %113 : vector<256x128xf32>
      %115 = vector.broadcast %13 : vector<1x128xf32> to vector<256x128xf32>
      %116 = arith.addf %114, %115 : vector<256x128xf32>
      %cst_114 = arith.constant 2.000000e-01 : f32
      %117 = vector.broadcast %cst_114 : f32 to vector<256x128xf32>
      %118 = arith.mulf %117, %116 : vector<256x128xf32>
      %119 = arith.maximumf %116, %118 : vector<256x128xf32>
      %c2_115 = arith.constant 2 : index
      %c0_116 = arith.constant 0 : index
      %c256_117 = arith.constant 256 : index
      %120 = vector.load %arg7[%c2_115, %c0_116, %c256_117] : memref<20x16x640xbf16, #tpu.memory_space<vmem>>, vector<16x16x128xbf16>
      %121 = vector.shape_cast %120 : vector<16x16x128xbf16> to vector<256x128xbf16>
      %122 = arith.extf %121 : vector<256x128xbf16> to vector<256x128xf32>
      %123 = arith.addf %122, %119 : vector<256x128xf32>
      %124 = vector.shape_cast %123 : vector<256x128xf32> to vector<16x16x128xf32>
      %125 = arith.index_cast %arg8 : i32 to index
      %c0_118 = arith.constant 0 : index
      %c0_119 = arith.constant 0 : index
      %c0_120 = arith.constant 0 : index
      %126 = vector.load %arg6[%125, %c0_118, %c0_119, %c0_120] : memref<3x16x16x128xf32, #tpu.memory_space<vmem>>, vector<1x16x16x128xf32>
      %127 = vector.shape_cast %126 : vector<1x16x16x128xf32> to vector<16x16x128xf32>
      %128 = vector.shape_cast %124 : vector<16x16x128xf32> to vector<1x16x16x128xf32>
      tpu.vector_store %arg6[%125, %c0_118, %c0_119, %c0_120], %128 {strides = array<i32>} : memref<3x16x16x128xf32, #tpu.memory_space<vmem>>, vector<1x16x16x128xf32>,
    }
    %c3_i32_20 = arith.constant 3 : i32
    return
  }
  func.func @transform_0(%arg0: i32) -> (i32, i32, i32, i32) {
    %c0_i32 = arith.constant 0 : i32
    %c0_i32_0 = arith.constant 0 : i32
    %c0_i32_1 = arith.constant 0 : i32
    %c0_i32_2 = arith.constant 0 : i32
    return %arg0, %c0_i32, %c0_i32_0, %c0_i32_1 : i32, i32, i32, i32
  }
  func.func @transform_1(%arg0: i32) -> (i32, i32, i32) {
    %c0_i32 = arith.constant 0 : i32
    %c0_i32_0 = arith.constant 0 : i32
    %c0_i32_1 = arith.constant 0 : i32
    %c0_i32_2 = arith.constant 0 : i32
    return %c0_i32, %c0_i32_0, %c0_i32_1 : i32, i32, i32
  }
  func.func @transform_2(%arg0: i32) -> (i32, i32) {
    %c0_i32 = arith.constant 0 : i32
    %c0_i32_0 = arith.constant 0 : i32
    %c0_i32_1 = arith.constant 0 : i32
    return %c0_i32, %c0_i32_0 : i32, i32
  }
  func.func @transform_3(%arg0: i32) -> (i32, i32, i32) {
    %c0_i32 = arith.constant 0 : i32
    %c0_i32_0 = arith.constant 0 : i32
    %c0_i32_1 = arith.constant 0 : i32
    %c0_i32_2 = arith.constant 0 : i32
    return %c0_i32, %c0_i32_0, %c0_i32_1 : i32, i32, i32
  }
  func.func @transform_4(%arg0: i32) -> (i32, i32) {
    %c0_i32 = arith.constant 0 : i32
    %c0_i32_0 = arith.constant 0 : i32
    %c0_i32_1 = arith.constant 0 : i32
    return %c0_i32, %c0_i32_0 : i32, i32
  }
  func.func @transform_5(%arg0: i32) -> (i32, i32, i32, i32) {
    %c0_i32 = arith.constant 0 : i32
    %c0_i32_0 = arith.constant 0 : i32
    %c0_i32_1 = arith.constant 0 : i32
    %c0_i32_2 = arith.constant 0 : i32
    return %arg0, %c0_i32, %c0_i32_0, %c0_i32_1 : i32, i32, i32, i32
  }
}

</mosaic_0001>

<llo_original>
// kernel: decoder_embedding_forward.1
$region0: #{decoder_embedding_forward.1}
  #allocation0 [shape = 'u32[]', space=smem, size = 0x4, offset = 0x4, fixed_abs, tag = 'smem constant byte address 0x4 - core index']
  #allocation1 [shape = 'u32[144,128]{1,0:T(1,128)}', space=vmem, size = 0x12000, scoped, tag = 'internal scratch']
  #allocation2 [shape = 'bf16[20,16,640]{2,1,0:T(8,128)(2,1)}', space=vmem, size = 0x64000, scoped, tag = 'scratch operand']
  %s0 = inlined_call_operand.vmem [shape: bf16[6,22,16,128], index: 0, kind: input, shape index: {}]
  %s1 = inlined_call_operand.vmem [shape: bf16[7,128,128], index: 1, kind: input, shape index: {}]
  %s2 = inlined_call_operand.vmem [shape: f32[1,128], index: 2, kind: input, shape index: {}]
  %s3 = inlined_call_operand.vmem [shape: bf16[5,640,128], index: 3, kind: input, shape index: {}]
  %s4 = inlined_call_operand.vmem [shape: f32[1,128], index: 4, kind: input, shape index: {}]
  %s5 = inlined_call_operand.hbm [shape: f32[6,16,16,128], index: 5, kind: output, shape index: {}]
  %s6 = sld [smem:[#allocation0]]
  $region60: #{decoder_embedding_forward.1} parent=0
    _
  %s8 = ssub.s32 1, %s6
  %s9 = scalar_select 0, %s8, %s6
  $region1: #{decoder_embedding_forward.1} parent=0
    #allocation3 [shape = 'u8[786432]{0}', space=vmem, size = 0xc0000, scoped, tag = 'output window, operand 0']
    #allocation4 [shape = 's32[2]{0}', space=sflag, size = 0x8, scoped, tag = 'scoped memory for decoder_embedding_forward.1']
    %10 = vsyncpa [#allocation4], 0
    %s11 = scalar_lea.sflag [#allocation4], 1
    %12 = vsyncpa %s11, 0
    loop: start=0, step=1, limit=4
    $region2: #{decoder_embedding_forward.1} parent=1 // loop_pre_header
      _
    $region3: #{decoder_embedding_forward.1} parent=1 // loop_header
      %s14 = sphi 0, %s18
      %p15 = scmp.ge.s32.totalorder %s14, 4
      %s24 = sphi 0, %s26
      %s27 = sphi 0, %s24
      %s28 = sphi 0, %s27
      %s44 = sphi 0, %s28
      %s48 = sphi 0, %s48
      %s50 = sphi 0, %s48
      %s51 = sphi 0, %s50
      %s65 = sphi 0, %s51
      %s69 = sphi 0, %s69
      %s71 = sphi 0, %s69
      %s72 = sphi 0, %s71
      %s86 = sphi 0, %s72
      %s90 = sphi 0, %s90
      %s92 = sphi 0, %s90
      %s93 = sphi 0, %s92
      %s107 = sphi 0, %s93
      %s111 = sphi 0, %s111
      %s113 = sphi 0, %s111
      %s114 = sphi 0, %s113
      %s128 = sphi 0, %s114
      %s134 = sphi 0, %s136
      %s137 = sphi 0, %s134
      %s138 = sphi 0, %s137
      %s154 = sphi 0, %s138
    $region4: #{decoder_embedding_forward.1} parent=1 // loop_header_branch
      %17 = sbr.rel (%p15) target = $region8
    $region5: #{decoder_embedding_forward.1} parent=1 // loop_body
      %s19 = ssub.s32 %s14, 1
      %s20 = ssub.s32 %s14, 2
      %s21 = sadd.s32 %s14, 1
      %s22 = ssub.s32 %s14, %s21
      %p23 = scmp.eq.s32.totalorder %s22, 0
      %s25 = sadd.s32 %s24, 1
      %s26 = scalar_select %p23, %s24, %s25
      %p29 = pneg %p23
      %p30 = scmp.eq.s32.totalorder %s14, 1
      %p31 = por %p29, %p30
      %p32 = scmp.ne.s32.totalorder %s24, %s27
      %p33 = scmp.eq.s32.totalorder %s14, 0
      %p34 = por %p32, %p33
      %p35 = scmp.ne.s32.totalorder %s24, %s27
      %p36 = scmp.eq.s32.totalorder %s19, 1
      %p37 = por %p35, %p36
      %p38 = scmp.ne.s32.totalorder %s27, %s28
      %p39 = scmp.eq.s32.totalorder %s19, 0
      %p40 = por %p38, %p39
      %p41 = scmp.ne.s32.totalorder %s27, %s28
      %p42 = scmp.eq.s32.totalorder %s20, 1
      %p43 = por %p41, %p42
      %p45 = scmp.ne.s32.totalorder %s28, %s44
      %p46 = scmp.eq.s32.totalorder %s20, 0
      %p47 = por %p45, %p46
      %s49 = sadd.s32 %s48, 1
      %p52 = scmp.eq.s32.totalorder %s14, 1
      %p53 = scmp.ne.s32.totalorder %s48, %s50
      %p54 = scmp.eq.s32.totalorder %s14, 0
      %p55 = por %p53, %p54
      %p56 = scmp.ne.s32.totalorder %s48, %s50
      %p57 = scmp.eq.s32.totalorder %s19, 1
      %p58 = por %p56, %p57
      %p59 = scmp.ne.s32.totalorder %s50, %s51
      %p60 = scmp.eq.s32.totalorder %s19, 0
      %p61 = por %p59, %p60
      %p62 = scmp.ne.s32.totalorder %s50, %s51
      %p63 = scmp.eq.s32.totalorder %s20, 1
      %p64 = por %p62, %p63
      %p66 = scmp.ne.s32.totalorder %s51, %s65
      %p67 = scmp.eq.s32.totalorder %s20, 0
      %p68 = por %p66, %p67
      %s70 = sadd.s32 %s69, 1
      %p73 = scmp.eq.s32.totalorder %s14, 1
      %p74 = scmp.ne.s32.totalorder %s69, %s71
      %p75 = scmp.eq.s32.totalorder %s14, 0
      %p76 = por %p74, %p75
      %p77 = scmp.ne.s32.totalorder %s69, %s71
      %p78 = scmp.eq.s32.totalorder %s19, 1
      %p79 = por %p77, %p78
      %p80 = scmp.ne.s32.totalorder %s71, %s72
      %p81 = scmp.eq.s32.totalorder %s19, 0
      %p82 = por %p80, %p81
      %p83 = scmp.ne.s32.totalorder %s71, %s72
      %p84 = scmp.eq.s32.totalorder %s20, 1
      %p85 = por %p83, %p84
      %p87 = scmp.ne.s32.totalorder %s72, %s86
      %p88 = scmp.eq.s32.totalorder %s20, 0
      %p89 = por %p87, %p88
      %s91 = sadd.s32 %s90, 1
      %p94 = scmp.eq.s32.totalorder %s14, 1
      %p95 = scmp.ne.s32.totalorder %s90, %s92
      %p96 = scmp.eq.s32.totalorder %s14, 0
      %p97 = por %p95, %p96
      %p98 = scmp.ne.s32.totalorder %s90, %s92
      %p99 = scmp.eq.s32.totalorder %s19, 1
      %p100 = por %p98, %p99
      %p101 = scmp.ne.s32.totalorder %s92, %s93
      %p102 = scmp.eq.s32.totalorder %s19, 0
      %p103 = por %p101, %p102
      %p104 = scmp.ne.s32.totalorder %s92, %s93
      %p105 = scmp.eq.s32.totalorder %s20, 1
      %p106 = por %p104, %p105
      %p108 = scmp.ne.s32.totalorder %s93, %s107
      %p109 = scmp.eq.s32.totalorder %s20, 0
      %p110 = por %p108, %p109
      %s112 = sadd.s32 %s111, 1
      %p115 = scmp.eq.s32.totalorder %s14, 1
      %p116 = scmp.ne.s32.totalorder %s111, %s113
      %p117 = scmp.eq.s32.totalorder %s14, 0
      %p118 = por %p116, %p117
      %p119 = scmp.ne.s32.totalorder %s111, %s113
      %p120 = scmp.eq.s32.totalorder %s19, 1
      %p121 = por %p119, %p120
      %p122 = scmp.ne.s32.totalorder %s113, %s114
      %p123 = scmp.eq.s32.totalorder %s19, 0
      %p124 = por %p122, %p123
      %p125 = scmp.ne.s32.totalorder %s113, %s114
      %p126 = scmp.eq.s32.totalorder %s20, 1
      %p127 = por %p125, %p126
      %p129 = scmp.ne.s32.totalorder %s114, %s128
      %p130 = scmp.eq.s32.totalorder %s20, 0
      %p131 = por %p129, %p130
      %s132 = ssub.s32 %s14, %s21
      %p133 = scmp.eq.s32.totalorder %s132, 0
      %s135 = sadd.s32 %s134, 1
      %s136 = scalar_select %p133, %s134, %s135
      %p139 = pneg %p133
      %p140 = scmp.eq.s32.totalorder %s14, 1
      %p141 = por %p139, %p140
      %p142 = scmp.ne.s32.totalorder %s134, %s137
      %p143 = scmp.eq.s32.totalorder %s14, 0
      %p144 = por %p142, %p143
      %p145 = scmp.ne.s32.totalorder %s134, %s137
      %p146 = scmp.eq.s32.totalorder %s19, 1
      %p147 = por %p145, %p146
      %p148 = scmp.ne.s32.totalorder %s137, %s138
      %p149 = scmp.eq.s32.totalorder %s19, 0
      %p150 = por %p148, %p149
      %p151 = scmp.ne.s32.totalorder %s137, %s138
      %p152 = scmp.eq.s32.totalorder %s20, 1
      %p153 = por %p151, %p152
      %p155 = scmp.ne.s32.totalorder %s138, %s154
      %p156 = scmp.eq.s32.totalorder %s20, 0
      %p157 = por %p155, %p156
      %p158 = scmp.le.s32.totalorder 1, %s14
      %p159 = scmp.lt.s32.totalorder %s14, 3
      %p160 = pnand %p158, %p159
      %p161 = pneg %p160
      // Predicated region
      $region9: #{decoder_embedding_forward.1} parent=5 // pred_check
        _
      $region10: #{decoder_embedding_forward.1} parent=5 // pred_check_branch
        %163 = sbr.rel (%p160) target = $region12
      $region11: #{decoder_embedding_forward.1} parent=5 // pred_region
        %s164 = ssub.s32 %s14, 1
        // Predicated region
        $region13: #{decoder_embedding_forward.1} parent=11 // pred_check
          %p165 = pneg %p61
        $region14: #{decoder_embedding_forward.1} parent=11 // pred_check_branch
          %167 = sbr.rel (%p165) target = $region16
        $region15: #{decoder_embedding_forward.1} parent=11 // pred_region
          _
        $region16: #{decoder_embedding_forward.1} parent=11 // pred_fallthru
          _
        // Predicated region
        $region17: #{decoder_embedding_forward.1} parent=11 // pred_check
          %p168 = pneg %p82
        $region18: #{decoder_embedding_forward.1} parent=11 // pred_check_branch
          %170 = sbr.rel (%p168) target = $region20
        $region19: #{decoder_embedding_forward.1} parent=11 // pred_region
          _
        $region20: #{decoder_embedding_forward.1} parent=11 // pred_fallthru
          _
        // Predicated region
        $region21: #{decoder_embedding_forward.1} parent=11 // pred_check
          %p171 = pneg %p103
        $region22: #{decoder_embedding_forward.1} parent=11 // pred_check_branch
          %173 = sbr.rel (%p171) target = $region24
        $region23: #{decoder_embedding_forward.1} parent=11 // pred_region
          _
        $region24: #{decoder_embedding_forward.1} parent=11 // pred_fallthru
          _
        // Predicated region
        $region25: #{decoder_embedding_forward.1} parent=11 // pred_check
          %p174 = pneg %p124
        $region26: #{decoder_embedding_forward.1} parent=11 // pred_check_branch
          %176 = sbr.rel (%p174) target = $region28
        $region27: #{decoder_embedding_forward.1} parent=11 // pred_region
          _
        $region28: #{decoder_embedding_forward.1} parent=11 // pred_fallthru
          _
      $region12: #{decoder_embedding_forward.1} parent=5 // pred_fallthru
        _
      %p177 = scmp.lt.s32.totalorder %s14, 2
      // Predicated region
      $region29: #{decoder_embedding_forward.1} parent=5 // pred_check
        %p178 = pneg %p177
      $region30: #{decoder_embedding_forward.1} parent=5 // pred_check_branch
        %180 = sbr.rel (%p178) target = $region32
      $region31: #{decoder_embedding_forward.1} parent=5 // pred_region
        // Predicated region
        $region33: #{decoder_embedding_forward.1} parent=31 // pred_check
          %p181 = pneg %p34
        $region34: #{decoder_embedding_forward.1} parent=31 // pred_check_branch
          %183 = sbr.rel (%p181) target = $region36
        $region35: #{decoder_embedding_forward.1} parent=31 // pred_region
          %s184 = smul.u32 3, %s14
          %p185 = scmp.lt.s32.totalorder %s184, 5
          %s186 = scalar_select %p185, %s184, 5
          %s187 = smul.addr %s186, 44
          %s188 = smul.addr %s187, 4
          %s189 = scalar_lea.vmem %s0, %s188
          %s190 = smul.u32 3, %s14
        $region36: #{decoder_embedding_forward.1} parent=31 // pred_fallthru
          _
      $region32: #{decoder_embedding_forward.1} parent=5 // pred_fallthru
        _
      %p191 = scmp.le.s32.totalorder 1, %s14
      %p192 = scmp.lt.s32.totalorder %s14, 3
      %p193 = pnand %p191, %p192
      %p194 = pneg %p193
      // Predicated region
      $region37: #{decoder_embedding_forward.1} parent=5 // pred_check
        _
      $region38: #{decoder_embedding_forward.1} parent=5 // pred_check_branch
        %196 = sbr.rel (%p193) target = $region40
      $region39: #{decoder_embedding_forward.1} parent=5 // pred_region
        %s197 = ssub.s32 %s14, 1
        %s198 = smul.u32 3, %s19
        %p199 = scmp.lt.s32.totalorder %s198, 5
        %s200 = scalar_select %p199, %s198, 5
        %s201 = smul.addr %s200, 44
        %s202 = smul.addr %s201, 4
        %s203 = scalar_lea.vmem %s0, %s202
        %p204 = pneg %p40
        %p205 = pneg %p37
        %p206 = pneg %p61
        %p207 = pneg %p58
        %p208 = pneg %p82
        %p209 = pneg %p79
        %p210 = pneg %p103
        %p211 = pneg %p100
        %p212 = pneg %p124
        %p213 = pneg %p121
        %p214 = pneg %p150
        %p215 = pneg %p147
        %s216 = sand.u32 %s137, 1
        %s217 = scalar_lea.sflag [#allocation4], %s216
        %s218 = sand.u32 %s137, 1
        %s219 = smul.addr %s218, 768
        %s220 = scalar_lea.vmem [#allocation3], %s219
        %s221 = smul.u32 3, %s19
        %p222 = scmp.lt.s32.totalorder %s221, 5
        %s223 = scalar_select %p222, %s221, 5
        %s224 = smul.addr %s223, 44
        %s225 = smul.addr %s224, 4
        %s226 = scalar_lea.vmem %s0, %s225
        %s227 = smul.u32 3, %s19
        %s228 = smul.u32 3, %s19
        %230 = vst [vmem:[#allocation2] sm:$0xff] 0
        %231 = vst [vmem:[#allocation2 + $0x8] sm:$0xff] 0
        %232 = vst [vmem:[#allocation2 + $0x10] sm:$0xf] 0
        %233 = vst [vmem:[#allocation2 + $0x14] sm:$0xff] 0
        %234 = vst [vmem:[#allocation2 + $0x1c] sm:$0xff] 0
        %235 = vst [vmem:[#allocation2 + $0x24] sm:$0xf] 0
        %236 = vst [vmem:[#allocation2 + $0x28] sm:$0xff] 0
        %237 = vst [vmem:[#allocation2 + $0x30] sm:$0xff] 0
        %238 = vst [vmem:[#allocation2 + $0x38] sm:$0xf] 0
        %239 = vst [vmem:[#allocation2 + $0x3c] sm:$0xff] 0
        %240 = vst [vmem:[#allocation2 + $0x44] sm:$0xff] 0
        %241 = vst [vmem:[#allocation2 + $0x4c] sm:$0xf] 0
        %s242 = scalar_lea.vmem [#allocation2], 720
        %243 = vst [vmem:[%s242] sm:$0xff] 0
        %244 = vst [vmem:[%s242 + $0x8] sm:$0xff] 0
        %245 = vst [vmem:[%s242 + $0x10] sm:$0xf] 0
        %246 = vst [vmem:[%s242 + $0x14] sm:$0xff] 0
        %247 = vst [vmem:[%s242 + $0x1c] sm:$0xff] 0
        %248 = vst [vmem:[%s242 + $0x24] sm:$0xf] 0
        %249 = vst [vmem:[%s242 + $0x28] sm:$0xff] 0
        %250 = vst [vmem:[%s242 + $0x30] sm:$0xff] 0
        %251 = vst [vmem:[%s242 + $0x38] sm:$0xf] 0
        %252 = vst [vmem:[%s242 + $0x3c] sm:$0xff] 0
        %253 = vst [vmem:[%s242 + $0x44] sm:$0xff] 0
        %254 = vst [vmem:[%s242 + $0x4c] sm:$0xf] 0
        %255 = vst [vmem:[#allocation2] sm:$0x1] 0
        %256 = vst [vmem:[#allocation2 + $0x28] sm:$0x1] 0
        %257 = vst [vmem:[#allocation2 + $0x50] sm:$0x1] 0
        %258 = vst [vmem:[#allocation2 + $0x78] sm:$0x1] 0
        %259 = vst [vmem:[#allocation2 + $0xa0] sm:$0x1] 0
        %260 = vst [vmem:[#allocation2 + $0xc8] sm:$0x1] 0
        %261 = vst [vmem:[#allocation2 + $0xf0] sm:$0x1] 0
        %262 = vst [vmem:[#allocation2 + $0x118] sm:$0x1] 0
        %263 = vst [vmem:[#allocation2 + $0x140] sm:$0x1] 0
        %264 = vst [vmem:[#allocation2 + $0x168] sm:$0x1] 0
        %265 = vst [vmem:[#allocation2 + $0x190] sm:$0x1] 0
        %266 = vst [vmem:[#allocation2 + $0x1b8] sm:$0x1] 0
        %267 = vst [vmem:[#allocation2 + $0x1e0] sm:$0x1] 0
        %268 = vst [vmem:[#allocation2 + $0x208] sm:$0x1] 0
        %269 = vst [vmem:[#allocation2 + $0x230] sm:$0x1] 0
        %270 = vst [vmem:[#allocation2 + $0x258] sm:$0x1] 0
        %271 = vst [vmem:[#allocation2 + $0x280] sm:$0x1] 0
        %272 = vst [vmem:[#allocation2 + $0x2a8] sm:$0x1] 0
        %273 = vst [vmem:[#allocation2 + $0x2d0] sm:$0x1] 0
        %274 = vst [vmem:[#allocation2 + $0x2f8] sm:$0x1] 0
        %vm275 = vcmask 1040384
        %vm276 = vsmask.f32 256
        %vm277 = vmand %vm275, %vm276
        %v278 = vld [vmem:[#allocation2 + $0x4] sm:$0x1]
        %v279 = vsel %vm277, 0, %v278
        %280 = vst [vmem:[#allocation2 + $0x4] sm:$0x1] %v279
        %v281 = vld [vmem:[#allocation2 + $0x2c] sm:$0x1]
        %v282 = vsel %vm277, 0, %v281
        %283 = vst [vmem:[#allocation2 + $0x2c] sm:$0x1] %v282
        %v284 = vld [vmem:[#allocation2 + $0x54] sm:$0x1]
        %v285 = vsel %vm277, 0, %v284
        %286 = vst [vmem:[#allocation2 + $0x54] sm:$0x1] %v285
        %v287 = vld [vmem:[#allocation2 + $0x7c] sm:$0x1]
        %v288 = vsel %vm277, 0, %v287
        %289 = vst [vmem:[#allocation2 + $0x7c] sm:$0x1] %v288
        %v290 = vld [vmem:[#allocation2 + $0xa4] sm:$0x1]
        %v291 = vsel %vm277, 0, %v290
        %292 = vst [vmem:[#allocation2 + $0xa4] sm:$0x1] %v291
        %v293 = vld [vmem:[#allocation2 + $0xcc] sm:$0x1]
        %v294 = vsel %vm277, 0, %v293
        %295 = vst [vmem:[#allocation2 + $0xcc] sm:$0x1] %v294
        %v296 = vld [vmem:[#allocation2 + $0xf4] sm:$0x1]
        %v297 = vsel %vm277, 0, %v296
        %298 = vst [vmem:[#allocation2 + $0xf4] sm:$0x1] %v297
        %v299 = vld [vmem:[#allocation2 + $0x11c] sm:$0x1]
        %v300 = vsel %vm277, 0, %v299
        %301 = vst [vmem:[#allocation2 + $0x11c] sm:$0x1] %v300
        %v302 = vld [vmem:[#allocation2 + $0x144] sm:$0x1]
        %v303 = vsel %vm277, 0, %v302
        %304 = vst [vmem:[#allocation2 + $0x144] sm:$0x1] %v303
        %v305 = vld [vmem:[#allocation2 + $0x16c] sm:$0x1]
        %v306 = vsel %vm277, 0, %v305
        %307 = vst [vmem:[#allocation2 + $0x16c] sm:$0x1] %v306
        %v308 = vld [vmem:[#allocation2 + $0x194] sm:$0x1]
        %v309 = vsel %vm277, 0, %v308
        %310 = vst [vmem:[#allocation2 + $0x194] sm:$0x1] %v309
        %v311 = vld [vmem:[#allocation2 + $0x1bc] sm:$0x1]
        %v312 = vsel %vm277, 0, %v311
        %313 = vst [vmem:[#allocation2 + $0x1bc] sm:$0x1] %v312
        %v314 = vld [vmem:[#allocation2 + $0x1e4] sm:$0x1]
        %v315 = vsel %vm277, 0, %v314
        %316 = vst [vmem:[#allocation2 + $0x1e4] sm:$0x1] %v315
        %v317 = vld [vmem:[#allocation2 + $0x20c] sm:$0x1]
        %v318 = vsel %vm277, 0, %v317
        %319 = vst [vmem:[#allocation2 + $0x20c] sm:$0x1] %v318
        %v320 = vld [vmem:[#allocation2 + $0x234] sm:$0x1]
        %v321 = vsel %vm277, 0, %v320
        %322 = vst [vmem:[#allocation2 + $0x234] sm:$0x1] %v321
        %v323 = vld [vmem:[#allocation2 + $0x25c] sm:$0x1]
        %v324 = vsel %vm277, 0, %v323
        %325 = vst [vmem:[#allocation2 + $0x25c] sm:$0x1] %v324
        %v326 = vld [vmem:[#allocation2 + $0x284] sm:$0x1]
        %v327 = vsel %vm277, 0, %v326
        %328 = vst [vmem:[#allocation2 + $0x284] sm:$0x1] %v327
        %v329 = vld [vmem:[#allocation2 + $0x2ac] sm:$0x1]
        %v330 = vsel %vm277, 0, %v329
        %331 = vst [vmem:[#allocation2 + $0x2ac] sm:$0x1] %v330
        %v332 = vld [vmem:[#allocation2 + $0x2d4] sm:$0x1]
        %v333 = vsel %vm277, 0, %v332
        %334 = vst [vmem:[#allocation2 + $0x2d4] sm:$0x1] %v333
        %v335 = vld [vmem:[#allocation2 + $0x2fc] sm:$0x1]
        %v336 = vsel %vm277, 0, %v335
        %337 = vst [vmem:[#allocation2 + $0x2fc] sm:$0x1] %v336
        %vm338 = vcmask 1043459
        %vm339 = vsmask.f32 7950
        %vm340 = vmand %vm338, %vm339
        %v341 = vld [vmem:[#allocation2 + $0x20] sm:$0x8]
        %v342 = vsel %vm340, 0, %v341
        %343 = vst [vmem:[#allocation2 + $0x20] sm:$0x8] %v342
        %v344 = vld [vmem:[#allocation2 + $0x48] sm:$0x8]
        %v345 = vsel %vm340, 0, %v344
        %346 = vst [vmem:[#allocation2 + $0x48] sm:$0x8] %v345
        %v347 = vld [vmem:[#allocation2 + $0x70] sm:$0x8]
        %v348 = vsel %vm340, 0, %v347
        %349 = vst [vmem:[#allocation2 + $0x70] sm:$0x8] %v348
        %v350 = vld [vmem:[#allocation2 + $0x98] sm:$0x8]
        %v351 = vsel %vm340, 0, %v350
        %352 = vst [vmem:[#allocation2 + $0x98] sm:$0x8] %v351
        %v353 = vld [vmem:[#allocation2 + $0xc0] sm:$0x8]
        %v354 = vsel %vm340, 0, %v353
        %355 = vst [vmem:[#allocation2 + $0xc0] sm:$0x8] %v354
        %v356 = vld [vmem:[#allocation2 + $0xe8] sm:$0x8]
        %v357 = vsel %vm340, 0, %v356
        %358 = vst [vmem:[#allocation2 + $0xe8] sm:$0x8] %v357
        %v359 = vld [vmem:[#allocation2 + $0x110] sm:$0x8]
        %v360 = vsel %vm340, 0, %v359
        %361 = vst [vmem:[#allocation2 + $0x110] sm:$0x8] %v360
        %v362 = vld [vmem:[#allocation2 + $0x138] sm:$0x8]
        %v363 = vsel %vm340, 0, %v362
        %364 = vst [vmem:[#allocation2 + $0x138] sm:$0x8] %v363
        %v365 = vld [vmem:[#allocation2 + $0x160] sm:$0x8]
        %v366 = vsel %vm340, 0, %v365
        %367 = vst [vmem:[#allocation2 + $0x160] sm:$0x8] %v366
        %v368 = vld [vmem:[#allocation2 + $0x188] sm:$0x8]
        %v369 = vsel %vm340, 0, %v368
        %370 = vst [vmem:[#allocation2 + $0x188] sm:$0x8] %v369
        %v371 = vld [vmem:[#allocation2 + $0x1b0] sm:$0x8]
        %v372 = vsel %vm340, 0, %v371
        %373 = vst [vmem:[#allocation2 + $0x1b0] sm:$0x8] %v372
        %v374 = vld [vmem:[#allocation2 + $0x1d8] sm:$0x8]
        %v375 = vsel %vm340, 0, %v374
        %376 = vst [vmem:[#allocation2 + $0x1d8] sm:$0x8] %v375
        %v377 = vld [vmem:[#allocation2 + $0x200] sm:$0x8]
        %v378 = vsel %vm340, 0, %v377
        %379 = vst [vmem:[#allocation2 + $0x200] sm:$0x8] %v378
        %v380 = vld [vmem:[#allocation2 + $0x228] sm:$0x8]
        %v381 = vsel %vm340, 0, %v380
        %382 = vst [vmem:[#allocation2 + $0x228] sm:$0x8] %v381
        %v383 = vld [vmem:[#allocation2 + $0x250] sm:$0x8]
        %v384 = vsel %vm340, 0, %v383
        %385 = vst [vmem:[#allocation2 + $0x250] sm:$0x8] %v384
        %v386 = vld [vmem:[#allocation2 + $0x278] sm:$0x8]
        %v387 = vsel %vm340, 0, %v386
        %388 = vst [vmem:[#allocation2 + $0x278] sm:$0x8] %v387
        %v389 = vld [vmem:[#allocation2 + $0x2a0] sm:$0x8]
        %v390 = vsel %vm340, 0, %v389
        %391 = vst [vmem:[#allocation2 + $0x2a0] sm:$0x8] %v390
        %v392 = vld [vmem:[#allocation2 + $0x2c8] sm:$0x8]
        %v393 = vsel %vm340, 0, %v392
        %394 = vst [vmem:[#allocation2 + $0x2c8] sm:$0x8] %v393
        %v395 = vld [vmem:[#allocation2 + $0x2f0] sm:$0x8]
        %v396 = vsel %vm340, 0, %v395
        %397 = vst [vmem:[#allocation2 + $0x2f0] sm:$0x8] %v396
        %v398 = vld [vmem:[#allocation2 + $0x318] sm:$0x8]
        %v399 = vsel %vm340, 0, %v398
        %400 = vst [vmem:[#allocation2 + $0x318] sm:$0x8] %v399
        %401 = vst [vmem:[#allocation2 + $0x24] sm:$0x8] 0
        %402 = vst [vmem:[#allocation2 + $0x4c] sm:$0x8] 0
        %403 = vst [vmem:[#allocation2 + $0x74] sm:$0x8] 0
        %404 = vst [vmem:[#allocation2 + $0x9c] sm:$0x8] 0
        %405 = vst [vmem:[#allocation2 + $0xc4] sm:$0x8] 0
        %406 = vst [vmem:[#allocation2 + $0xec] sm:$0x8] 0
        %407 = vst [vmem:[#allocation2 + $0x114] sm:$0x8] 0
        %408 = vst [vmem:[#allocation2 + $0x13c] sm:$0x8] 0
        %409 = vst [vmem:[#allocation2 + $0x164] sm:$0x8] 0
        %410 = vst [vmem:[#allocation2 + $0x18c] sm:$0x8] 0
        %411 = vst [vmem:[#allocation2 + $0x1b4] sm:$0x8] 0
        %412 = vst [vmem:[#allocation2 + $0x1dc] sm:$0x8] 0
        %413 = vst [vmem:[#allocation2 + $0x204] sm:$0x8] 0
        %414 = vst [vmem:[#allocation2 + $0x22c] sm:$0x8] 0
        %415 = vst [vmem:[#allocation2 + $0x254] sm:$0x8] 0
        %416 = vst [vmem:[#allocation2 + $0x27c] sm:$0x8] 0
        %417 = vst [vmem:[#allocation2 + $0x2a4] sm:$0x8] 0
        %418 = vst [vmem:[#allocation2 + $0x2cc] sm:$0x8] 0
        %419 = vst [vmem:[#allocation2 + $0x2f4] sm:$0x8] 0
        %420 = vst [vmem:[#allocation2 + $0x31c] sm:$0x8] 0
        %v421 = vld [vmem:[%s2] sm:$0x1]
        %v422 = vld [vmem:[%s4] sm:$0x1]
        loop: start=0, step=1, limit=3
        $region41: #{decoder_embedding_forward.1} parent=39 // loop_pre_header
          _
        $region42: #{decoder_embedding_forward.1} parent=39 // loop_header
          %s424 = sphi 0, %s428
          %p425 = scmp.ge.s32.totalorder %s424, 3
        $region43: #{decoder_embedding_forward.1} parent=39 // loop_header_branch
          %427 = sbr.rel (%p425) target = $region47
        $region44: #{decoder_embedding_forward.1} parent=39 // loop_body
          %s429 = smul.u32 %s424, 44
          %s430 = smul.addr %s429, 4
          %s431 = scalar_lea.vmem %s226, %s430
          %v432 = vld [vmem:[%s431] sm:$0xf]
          %v433 = vld [vmem:[%s431 + $0x4] sm:$0xf]
          %v434 = vld [vmem:[%s431 + $0x8] sm:$0xf]
          %v435 = vld [vmem:[%s431 + $0xc] sm:$0xf]
          %v436 = vld [vmem:[%s431 + $0x10] sm:$0xf]
          %v437 = vld [vmem:[%s431 + $0x14] sm:$0xf]
          %v438 = vld [vmem:[%s431 + $0x18] sm:$0xf]
          %v439 = vld [vmem:[%s431 + $0x1c] sm:$0xf]
          %v440 = vld [vmem:[%s431 + $0x20] sm:$0xf]
          %v441 = vld [vmem:[%s431 + $0x24] sm:$0xf]
          %v442 = vld [vmem:[%s431 + $0x28] sm:$0xf]
          %v443 = vld [vmem:[%s431 + $0x2c] sm:$0xf]
          %v444 = vld [vmem:[%s431 + $0x30] sm:$0xf]
          %v445 = vld [vmem:[%s431 + $0x34] sm:$0xf]
          %v446 = vld [vmem:[%s431 + $0x38] sm:$0xf]
          %v447 = vld [vmem:[%s431 + $0x3c] sm:$0xf]
          %v448 = vld [vmem:[%s431 + $0x40] sm:$0xf]
          %v449 = vld [vmem:[%s431 + $0x44] sm:$0xf]
          %v450 = vld [vmem:[%s431 + $0x48] sm:$0xf]
          %v451 = vld [vmem:[%s431 + $0x4c] sm:$0xf]
          %v452 = vld [vmem:[%s431 + $0x50] sm:$0xf]
          %v453 = vld [vmem:[%s431 + $0x54] sm:$0xf]
          %v454 = vld [vmem:[%s431 + $0x58] sm:$0xf]
          %v455 = vld [vmem:[%s431 + $0x5c] sm:$0xf]
          %v456 = vld [vmem:[%s431 + $0x60] sm:$0xf]
          %v457 = vld [vmem:[%s431 + $0x64] sm:$0xf]
          %v458 = vld [vmem:[%s431 + $0x68] sm:$0xf]
          %v459 = vld [vmem:[%s431 + $0x6c] sm:$0xf]
          %v460 = vld [vmem:[%s431 + $0x70] sm:$0xf]
          %v461 = vld [vmem:[%s431 + $0x74] sm:$0xf]
          %v462 = vld [vmem:[%s431 + $0x78] sm:$0xf]
          %v463 = vld [vmem:[%s431 + $0x7c] sm:$0xf]
          %v464 = vld [vmem:[%s1] sm:$0xf]
          %v465 = vld [vmem:[%s1 + $0x4] sm:$0xf]
          %v466 = vld [vmem:[%s1 + $0x8] sm:$0xf]
          %v467 = vld [vmem:[%s1 + $0xc] sm:$0xf]
          %v468 = vld [vmem:[%s1 + $0x10] sm:$0xf]
          %v469 = vld [vmem:[%s1 + $0x14] sm:$0xf]
          %v470 = vld [vmem:[%s1 + $0x18] sm:$0xf]
          %v471 = vld [vmem:[%s1 + $0x1c] sm:$0xf]
          %v472 = vld [vmem:[%s1 + $0x20] sm:$0xf]
          %v473 = vld [vmem:[%s1 + $0x24] sm:$0xf]
          %v474 = vld [vmem:[%s1 + $0x28] sm:$0xf]
          %v475 = vld [vmem:[%s1 + $0x2c] sm:$0xf]
          %v476 = vld [vmem:[%s1 + $0x30] sm:$0xf]
          %v477 = vld [vmem:[%s1 + $0x34] sm:$0xf]
          %v478 = vld [vmem:[%s1 + $0x38] sm:$0xf]
          %v479 = vld [vmem:[%s1 + $0x3c] sm:$0xf]
          %s480 = sadd.s32 2, %s429
          %s481 = smul.addr %s480, 4
          %s482 = scalar_lea.vmem %s226, %s481
          %v483 = vld [vmem:[%s482] sm:$0xf]
          %v484 = vld [vmem:[%s482 + $0x4] sm:$0xf]
          %v485 = vld [vmem:[%s482 + $0x8] sm:$0xf]
          %v486 = vld [vmem:[%s482 + $0xc] sm:$0xf]
          %v487 = vld [vmem:[%s482 + $0x10] sm:$0xf]
          %v488 = vld [vmem:[%s482 + $0x14] sm:$0xf]
          %v489 = vld [vmem:[%s482 + $0x18] sm:$0xf]
          %v490 = vld [vmem:[%s482 + $0x1c] sm:$0xf]
          %v491 = vld [vmem:[%s482 + $0x20] sm:$0xf]
          %v492 = vld [vmem:[%s482 + $0x24] sm:$0xf]
          %v493 = vld [vmem:[%s482 + $0x28] sm:$0xf]
          %v494 = vld [vmem:[%s482 + $0x2c] sm:$0xf]
          %v495 = vld [vmem:[%s482 + $0x30] sm:$0xf]
          %v496 = vld [vmem:[%s482 + $0x34] sm:$0xf]
          %v497 = vld [vmem:[%s482 + $0x38] sm:$0xf]
          %v498 = vld [vmem:[%s482 + $0x3c] sm:$0xf]
          %v499 = vld [vmem:[%s482 + $0x40] sm:$0xf]
          %v500 = vld [vmem:[%s482 + $0x44] sm:$0xf]
          %v501 = vld [vmem:[%s482 + $0x48] sm:$0xf]
          %v502 = vld [vmem:[%s482 + $0x4c] sm:$0xf]
          %v503 = vld [vmem:[%s482 + $0x50] sm:$0xf]
          %v504 = vld [vmem:[%s482 + $0x54] sm:$0xf]
          %v505 = vld [vmem:[%s482 + $0x58] sm:$0xf]
          %v506 = vld [vmem:[%s482 + $0x5c] sm:$0xf]
          %v507 = vld [vmem:[%s482 + $0x60] sm:$0xf]
          %v508 = vld [vmem:[%s482 + $0x64] sm:$0xf]
          %v509 = vld [vmem:[%s482 + $0x68] sm:$0xf]
          %v510 = vld [vmem:[%s482 + $0x6c] sm:$0xf]
          %v511 = vld [vmem:[%s482 + $0x70] sm:$0xf]
          %v512 = vld [vmem:[%s482 + $0x74] sm:$0xf]
          %v513 = vld [vmem:[%s482 + $0x78] sm:$0xf]
          %v514 = vld [vmem:[%s482 + $0x7c] sm:$0xf]
          %s515 = scalar_lea.vmem %s1, 64
          %v516 = vld [vmem:[%s515] sm:$0xf]
          %v517 = vld [vmem:[%s515 + $0x4] sm:$0xf]
          %v518 = vld [vmem:[%s515 + $0x8] sm:$0xf]
          %v519 = vld [vmem:[%s515 + $0xc] sm:$0xf]
          %v520 = vld [vmem:[%s515 + $0x10] sm:$0xf]
          %v521 = vld [vmem:[%s515 + $0x14] sm:$0xf]
          %v522 = vld [vmem:[%s515 + $0x18] sm:$0xf]
          %v523 = vld [vmem:[%s515 + $0x1c] sm:$0xf]
          %v524 = vld [vmem:[%s515 + $0x20] sm:$0xf]
          %v525 = vld [vmem:[%s515 + $0x24] sm:$0xf]
          %v526 = vld [vmem:[%s515 + $0x28] sm:$0xf]
          %v527 = vld [vmem:[%s515 + $0x2c] sm:$0xf]
          %v528 = vld [vmem:[%s515 + $0x30] sm:$0xf]
          %v529 = vld [vmem:[%s515 + $0x34] sm:$0xf]
          %v530 = vld [vmem:[%s515 + $0x38] sm:$0xf]
          %v531 = vld [vmem:[%s515 + $0x3c] sm:$0xf]
          %v564 = vunpack.c.l.b16 %v483
          %v565 = vunpack.c.l.b16 %v484
          %v566 = vunpack.c.l.b16 %v485
          %v567 = vunpack.c.l.b16 %v486
          %v568 = vunpack.c.l.b16 %v487
          %v569 = vunpack.c.l.b16 %v488
          %v570 = vunpack.c.l.b16 %v489
          %v571 = vunpack.c.l.b16 %v490
          %v572 = vunpack.c.l.b16 %v491
          %v573 = vunpack.c.l.b16 %v492
          %v574 = vunpack.c.l.b16 %v493
          %v575 = vunpack.c.l.b16 %v494
          %v576 = vunpack.c.l.b16 %v495
          %v577 = vunpack.c.l.b16 %v496
          %v578 = vunpack.c.l.b16 %v497
          %v579 = vunpack.c.l.b16 %v498
          %v580 = vunpack.c.l.b16 %v499
          %v581 = vunpack.c.l.b16 %v500
          %v582 = vunpack.c.l.b16 %v501
          %v583 = vunpack.c.l.b16 %v502
          %v584 = vunpack.c.l.b16 %v503
          %v585 = vunpack.c.l.b16 %v504
          %v586 = vunpack.c.l.b16 %v505
          %v587 = vunpack.c.l.b16 %v506
          %v588 = vunpack.c.l.b16 %v507
          %v589 = vunpack.c.l.b16 %v508
          %v590 = vunpack.c.l.b16 %v509
          %v591 = vunpack.c.l.b16 %v510
          %v592 = vunpack.c.l.b16 %v511
          %v593 = vunpack.c.l.b16 %v512
          %v594 = vunpack.c.l.b16 %v513
          %v595 = vunpack.c.l.b16 %v514
          %v596 = vpack.c.b16 %v565, %v564
          %v597 = vpack.c.b16 %v567, %v566
          %v598 = vpack.c.b16 %v569, %v568
          %v599 = vpack.c.b16 %v571, %v570
          %v600 = vpack.c.b16 %v573, %v572
          %v601 = vpack.c.b16 %v575, %v574
          %v602 = vpack.c.b16 %v577, %v576
          %v603 = vpack.c.b16 %v579, %v578
          %v604 = vpack.c.b16 %v581, %v580
          %v605 = vpack.c.b16 %v583, %v582
          %v606 = vpack.c.b16 %v585, %v584
          %v607 = vpack.c.b16 %v587, %v586
          %v608 = vpack.c.b16 %v589, %v588
          %v609 = vpack.c.b16 %v591, %v590
          %v610 = vpack.c.b16 %v593, %v592
          %v611 = vpack.c.b16 %v595, %v594
          %v644 = vunpack.c.l.b16 %v516
          %v645 = vunpack.c.l.b16 %v517
          %v646 = vunpack.c.l.b16 %v518
          %v647 = vunpack.c.l.b16 %v519
          %v648 = vunpack.c.l.b16 %v520
          %v649 = vunpack.c.l.b16 %v521
          %v650 = vunpack.c.l.b16 %v522
          %v651 = vunpack.c.l.b16 %v523
          %v652 = vunpack.c.l.b16 %v524
          %v653 = vunpack.c.l.b16 %v525
          %v654 = vunpack.c.l.b16 %v526
          %v655 = vunpack.c.l.b16 %v527
          %v656 = vunpack.c.l.b16 %v528
          %v657 = vunpack.c.l.b16 %v529
          %v658 = vunpack.c.l.b16 %v530
          %v659 = vunpack.c.l.b16 %v531
          %v660 = vpack.c.b16 %v645, %v644
          %v661 = vpack.c.b16 %v647, %v646
          %v662 = vpack.c.b16 %v649, %v648
          %v663 = vpack.c.b16 %v651, %v650
          %v664 = vpack.c.b16 %v653, %v652
          %v665 = vpack.c.b16 %v655, %v654
          %v666 = vpack.c.b16 %v657, %v656
          %v667 = vpack.c.b16 %v659, %v658
          %676 = vmatprep.subr.bf16.mxu0 0
          %677 = vmatpush1.bf16.msra.mxu0 %v667
          %678 = vmatprep.subr.bf16.mxu0 0
          %679 = vmatpush1.bf16.msra.mxu0 %v666
          %680 = vmatprep.subr.bf16.mxu0 0
          %681 = vmatpush1.bf16.msra.mxu0 %v665
          %682 = vmatprep.subr.bf16.mxu0 0
          %683 = vmatpush1.bf16.msra.mxu0 %v664
          %684 = vmatprep.subr.bf16.mxu0 0
          %685 = vmatpush1.bf16.msra.mxu0 %v663
          %686 = vmatprep.subr.bf16.mxu0 0
          %687 = vmatpush1.bf16.msra.mxu0 %v662
          %688 = vmatprep.subr.bf16.mxu0 0
          %689 = vmatpush1.bf16.msra.mxu0 %v661
          %690 = vmatprep.subr.bf16.mxu0 0
          %691 = vmatpush1.bf16.msra.mxu0 %v660
          %692 = vmatprep.subr.bf16.mxu0 0
          %693 = vmatpush2.bf16.msra.mxu0 0
          %694 = vmatprep.subr.bf16.mxu0 0
          %695 = vmatpush2.bf16.msra.mxu0 0
          %696 = vmatprep.subr.bf16.mxu0 0
          %697 = vmatpush2.bf16.msra.mxu0 0
          %698 = vmatprep.subr.bf16.mxu0 0
          %699 = vmatpush2.bf16.msra.mxu0 0
          %700 = vmatprep.subr.bf16.mxu0 0
          %701 = vmatpush2.bf16.msra.mxu0 0
          %702 = vmatprep.subr.bf16.mxu0 0
          %703 = vmatpush2.bf16.msra.mxu0 0
          %704 = vmatprep.subr.bf16.mxu0 0
          %705 = vmatpush2.bf16.msra.mxu0 0
          %706 = vmatprep.subr.bf16.mxu0 0
          %707 = vmatpush2.bf16.msra.mxu0 0
          %708 = vmatprep.mubr.bf16.mxu0 0
          %709 = vmatmul.mubr.bf16.gmra.mxu0 %v596
          %v710 = vpop.f32.mrf.mxu0
          %v711 = vadd.f32 0.0, %v710
          %v712 = vpop.f32.mrf.mxu0
          %v713 = vpop.f32.mrf.mxu0
          %v714 = vadd.f32 0.0, %v713
          %v715 = vpop.f32.mrf.mxu0
          %716 = vmatprep.mubr.bf16.mxu0 0
          %717 = vmatmul.mubr.bf16.gmra.mxu0 %v597
          %v718 = vpop.f32.mrf.mxu0
          %v719 = vadd.f32 0.0, %v718
          %v720 = vpop.f32.mrf.mxu0
          %v721 = vpop.f32.mrf.mxu0
          %v722 = vadd.f32 0.0, %v721
          %v723 = vpop.f32.mrf.mxu0
          %724 = vmatprep.mubr.bf16.mxu0 0
          %725 = vmatmul.mubr.bf16.gmra.mxu0 %v598
          %v726 = vpop.f32.mrf.mxu0
          %v727 = vadd.f32 0.0, %v726
          %v728 = vpop.f32.mrf.mxu0
          %v729 = vpop.f32.mrf.mxu0
          %v730 = vadd.f32 0.0, %v729
          %v731 = vpop.f32.mrf.mxu0
          %732 = vmatprep.mubr.bf16.mxu0 0
          %733 = vmatmul.mubr.bf16.gmra.mxu0 %v599
          %v734 = vpop.f32.mrf.mxu0
          %v735 = vadd.f32 0.0, %v734
          %v736 = vpop.f32.mrf.mxu0
          %v737 = vpop.f32.mrf.mxu0
          %v738 = vadd.f32 0.0, %v737
          %v739 = vpop.f32.mrf.mxu0
          %740 = vmatprep.mubr.bf16.mxu0 0
          %741 = vmatmul.mubr.bf16.gmra.mxu0 %v600
          %v742 = vpop.f32.mrf.mxu0
          %v743 = vadd.f32 0.0, %v742
          %v744 = vpop.f32.mrf.mxu0
          %v745 = vpop.f32.mrf.mxu0
          %v746 = vadd.f32 0.0, %v745
          %v747 = vpop.f32.mrf.mxu0
          %748 = vmatprep.mubr.bf16.mxu0 0
          %749 = vmatmul.mubr.bf16.gmra.mxu0 %v601
          %v750 = vpop.f32.mrf.mxu0
          %v751 = vadd.f32 0.0, %v750
          %v752 = vpop.f32.mrf.mxu0
          %v753 = vpop.f32.mrf.mxu0
          %v754 = vadd.f32 0.0, %v753
          %v755 = vpop.f32.mrf.mxu0
          %756 = vmatprep.mubr.bf16.mxu0 0
          %757 = vmatmul.mubr.bf16.gmra.mxu0 %v602
          %v758 = vpop.f32.mrf.mxu0
          %v759 = vadd.f32 0.0, %v758
          %v760 = vpop.f32.mrf.mxu0
          %v761 = vpop.f32.mrf.mxu0
          %v762 = vadd.f32 0.0, %v761
          %v763 = vpop.f32.mrf.mxu0
          %764 = vmatprep.mubr.bf16.mxu0 0
          %765 = vmatmul.mubr.bf16.gmra.mxu0 %v603
          %v766 = vpop.f32.mrf.mxu0
          %v767 = vadd.f32 0.0, %v766
          %v768 = vpop.f32.mrf.mxu0
          %v769 = vpop.f32.mrf.mxu0
          %v770 = vadd.f32 0.0, %v769
          %v771 = vpop.f32.mrf.mxu0
          %772 = vmatprep.mubr.bf16.mxu0 0
          %773 = vmatmul.mubr.bf16.gmra.mxu0 %v604
          %v774 = vpop.f32.mrf.mxu0
          %v775 = vadd.f32 0.0, %v774
          %v776 = vpop.f32.mrf.mxu0
          %v777 = vpop.f32.mrf.mxu0
          %v778 = vadd.f32 0.0, %v777
          %v779 = vpop.f32.mrf.mxu0
          %780 = vmatprep.mubr.bf16.mxu0 0
          %781 = vmatmul.mubr.bf16.gmra.mxu0 %v605
          %v782 = vpop.f32.mrf.mxu0
          %v783 = vadd.f32 0.0, %v782
          %v784 = vpop.f32.mrf.mxu0
          %v785 = vpop.f32.mrf.mxu0
          %v786 = vadd.f32 0.0, %v785
          %v787 = vpop.f32.mrf.mxu0
          %788 = vmatprep.mubr.bf16.mxu0 0
          %789 = vmatmul.mubr.bf16.gmra.mxu0 %v606
          %v790 = vpop.f32.mrf.mxu0
          %v791 = vadd.f32 0.0, %v790
          %v792 = vpop.f32.mrf.mxu0
          %v793 = vpop.f32.mrf.mxu0
          %v794 = vadd.f32 0.0, %v793
          %v795 = vpop.f32.mrf.mxu0
          %796 = vmatprep.mubr.bf16.mxu0 0
          %797 = vmatmul.mubr.bf16.gmra.mxu0 %v607
          %v798 = vpop.f32.mrf.mxu0
          %v799 = vadd.f32 0.0, %v798
          %v800 = vpop.f32.mrf.mxu0
          %v801 = vpop.f32.mrf.mxu0
          %v802 = vadd.f32 0.0, %v801
          %v803 = vpop.f32.mrf.mxu0
          %804 = vmatprep.mubr.bf16.mxu0 0
          %805 = vmatmul.mubr.bf16.gmra.mxu0 %v608
          %v806 = vpop.f32.mrf.mxu0
          %v807 = vadd.f32 0.0, %v806
          %v808 = vpop.f32.mrf.mxu0
          %v809 = vpop.f32.mrf.mxu0
          %v810 = vadd.f32 0.0, %v809
          %v811 = vpop.f32.mrf.mxu0
          %812 = vmatprep.mubr.bf16.mxu0 0
          %813 = vmatmul.mubr.bf16.gmra.mxu0 %v609
          %v814 = vpop.f32.mrf.mxu0
          %v815 = vadd.f32 0.0, %v814
          %v816 = vpop.f32.mrf.mxu0
          %v817 = vpop.f32.mrf.mxu0
          %v818 = vadd.f32 0.0, %v817
          %v819 = vpop.f32.mrf.mxu0
          %820 = vmatprep.mubr.bf16.mxu0 0
          %821 = vmatmul.mubr.bf16.gmra.mxu0 %v610
          %v822 = vpop.f32.mrf.mxu0
          %v823 = vadd.f32 0.0, %v822
          %v824 = vpop.f32.mrf.mxu0
          %v825 = vpop.f32.mrf.mxu0
          %v826 = vadd.f32 0.0, %v825
          %v827 = vpop.f32.mrf.mxu0
          %828 = vmatprep.mubr.bf16.mxu0 0
          %829 = vmatmul.mubr.bf16.gmra.mxu0 %v611
          %v830 = vpop.f32.mrf.mxu0
          %v831 = vadd.f32 0.0, %v830
          %v832 = vpop.f32.mrf.mxu0
          %v833 = vpop.f32.mrf.mxu0
          %v834 = vadd.f32 0.0, %v833
          %v835 = vpop.f32.mrf.mxu0
          %836 = vdwg.mxu0
          %v869 = vunpack.c.l.b16 %v432
          %v870 = vunpack.c.l.b16 %v433
          %v871 = vunpack.c.l.b16 %v434
          %v872 = vunpack.c.l.b16 %v435
          %v873 = vunpack.c.l.b16 %v436
          %v874 = vunpack.c.l.b16 %v437
          %v875 = vunpack.c.l.b16 %v438
          %v876 = vunpack.c.l.b16 %v439
          %v877 = vunpack.c.l.b16 %v440
          %v878 = vunpack.c.l.b16 %v441
          %v879 = vunpack.c.l.b16 %v442
          %v880 = vunpack.c.l.b16 %v443
          %v881 = vunpack.c.l.b16 %v444
          %v882 = vunpack.c.l.b16 %v445
          %v883 = vunpack.c.l.b16 %v446
          %v884 = vunpack.c.l.b16 %v447
          %v885 = vunpack.c.l.b16 %v448
          %v886 = vunpack.c.l.b16 %v449
          %v887 = vunpack.c.l.b16 %v450
          %v888 = vunpack.c.l.b16 %v451
          %v889 = vunpack.c.l.b16 %v452
          %v890 = vunpack.c.l.b16 %v453
          %v891 = vunpack.c.l.b16 %v454
          %v892 = vunpack.c.l.b16 %v455
          %v893 = vunpack.c.l.b16 %v456
          %v894 = vunpack.c.l.b16 %v457
          %v895 = vunpack.c.l.b16 %v458
          %v896 = vunpack.c.l.b16 %v459
          %v897 = vunpack.c.l.b16 %v460
          %v898 = vunpack.c.l.b16 %v461
          %v899 = vunpack.c.l.b16 %v462
          %v900 = vunpack.c.l.b16 %v463
          %v901 = vpack.c.b16 %v870, %v869
          %v902 = vpack.c.b16 %v872, %v871
          %v903 = vpack.c.b16 %v874, %v873
          %v904 = vpack.c.b16 %v876, %v875
          %v905 = vpack.c.b16 %v878, %v877
          %v906 = vpack.c.b16 %v880, %v879
          %v907 = vpack.c.b16 %v882, %v881
          %v908 = vpack.c.b16 %v884, %v883
          %v909 = vpack.c.b16 %v886, %v885
          %v910 = vpack.c.b16 %v888, %v887
          %v911 = vpack.c.b16 %v890, %v889
          %v912 = vpack.c.b16 %v892, %v891
          %v913 = vpack.c.b16 %v894, %v893
          %v914 = vpack.c.b16 %v896, %v895
          %v915 = vpack.c.b16 %v898, %v897
          %v916 = vpack.c.b16 %v900, %v899
          %v949 = vunpack.c.l.b16 %v464
          %v950 = vunpack.c.l.b16 %v465
          %v951 = vunpack.c.l.b16 %v466
          %v952 = vunpack.c.l.b16 %v467
          %v953 = vunpack.c.l.b16 %v468
          %v954 = vunpack.c.l.b16 %v469
          %v955 = vunpack.c.l.b16 %v470
          %v956 = vunpack.c.l.b16 %v471
          %v957 = vunpack.c.l.b16 %v472
          %v958 = vunpack.c.l.b16 %v473
          %v959 = vunpack.c.l.b16 %v474
          %v960 = vunpack.c.l.b16 %v475
          %v961 = vunpack.c.l.b16 %v476
          %v962 = vunpack.c.l.b16 %v477
          %v963 = vunpack.c.l.b16 %v478
          %v964 = vunpack.c.l.b16 %v479
          %v965 = vpack.c.b16 %v950, %v949
          %v966 = vpack.c.b16 %v952, %v951
          %v967 = vpack.c.b16 %v954, %v953
          %v968 = vpack.c.b16 %v956, %v955
          %v969 = vpack.c.b16 %v958, %v957
          %v970 = vpack.c.b16 %v960, %v959
          %v971 = vpack.c.b16 %v962, %v961
          %v972 = vpack.c.b16 %v964, %v963
          %981 = vmatprep.subr.bf16.mxu0 0
          %982 = vmatpush1.bf16.msra.mxu0 %v972
          %983 = vmatprep.subr.bf16.mxu0 0
          %984 = vmatpush1.bf16.msra.mxu0 %v971
          %985 = vmatprep.subr.bf16.mxu0 0
          %986 = vmatpush1.bf16.msra.mxu0 %v970
          %987 = vmatprep.subr.bf16.mxu0 0
          %988 = vmatpush1.bf16.msra.mxu0 %v969
          %989 = vmatprep.subr.bf16.mxu0 0
          %990 = vmatpush1.bf16.msra.mxu0 %v968
          %991 = vmatprep.subr.bf16.mxu0 0
          %992 = vmatpush1.bf16.msra.mxu0 %v967
          %993 = vmatprep.subr.bf16.mxu0 0
          %994 = vmatpush1.bf16.msra.mxu0 %v966
          %995 = vmatprep.subr.bf16.mxu0 0
          %996 = vmatpush1.bf16.msra.mxu0 %v965
          %997 = vmatprep.subr.bf16.mxu0 0
          %998 = vmatpush2.bf16.msra.mxu0 0
          %999 = vmatprep.subr.bf16.mxu0 0
          %1000 = vmatpush2.bf16.msra.mxu0 0
          %1001 = vmatprep.subr.bf16.mxu0 0
          %1002 = vmatpush2.bf16.msra.mxu0 0
          %1003 = vmatprep.subr.bf16.mxu0 0
          %1004 = vmatpush2.bf16.msra.mxu0 0
          %1005 = vmatprep.subr.bf16.mxu0 0
          %1006 = vmatpush2.bf16.msra.mxu0 0
          %1007 = vmatprep.subr.bf16.mxu0 0
          %1008 = vmatpush2.bf16.msra.mxu0 0
          %1009 = vmatprep.subr.bf16.mxu0 0
          %1010 = vmatpush2.bf16.msra.mxu0 0
          %1011 = vmatprep.subr.bf16.mxu0 0
          %1012 = vmatpush2.bf16.msra.mxu0 0
          %1013 = vmatprep.mubr.bf16.mxu0 0
          %1014 = vmatmul.mubr.bf16.gmra.mxu0 %v901
          %v1015 = vpop.f32.mrf.mxu0
          %v1016 = vadd.f32 %v711, %v1015
          %v1017 = vpop.f32.mrf.mxu0
          %v1018 = vpop.f32.mrf.mxu0
          %v1019 = vadd.f32 %v714, %v1018
          %v1020 = vpop.f32.mrf.mxu0
          %1021 = vmatprep.mubr.bf16.mxu0 0
          %1022 = vmatmul.mubr.bf16.gmra.mxu0 %v902
          %v1023 = vpop.f32.mrf.mxu0
          %v1024 = vadd.f32 %v719, %v1023
          %v1025 = vpop.f32.mrf.mxu0
          %v1026 = vpop.f32.mrf.mxu0
          %v1027 = vadd.f32 %v722, %v1026
          %v1028 = vpop.f32.mrf.mxu0
          %1029 = vmatprep.mubr.bf16.mxu0 0
          %1030 = vmatmul.mubr.bf16.gmra.mxu0 %v903
          %v1031 = vpop.f32.mrf.mxu0
          %v1032 = vadd.f32 %v727, %v1031
          %v1033 = vpop.f32.mrf.mxu0
          %v1034 = vpop.f32.mrf.mxu0
          %v1035 = vadd.f32 %v730, %v1034
          %v1036 = vpop.f32.mrf.mxu0
          %1037 = vmatprep.mubr.bf16.mxu0 0
          %1038 = vmatmul.mubr.bf16.gmra.mxu0 %v904
          %v1039 = vpop.f32.mrf.mxu0
          %v1040 = vadd.f32 %v735, %v1039
          %v1041 = vpop.f32.mrf.mxu0
          %v1042 = vpop.f32.mrf.mxu0
          %v1043 = vadd.f32 %v738, %v1042
          %v1044 = vpop.f32.mrf.mxu0
          %1045 = vmatprep.mubr.bf16.mxu0 0
          %1046 = vmatmul.mubr.bf16.gmra.mxu0 %v905
          %v1047 = vpop.f32.mrf.mxu0
          %v1048 = vadd.f32 %v743, %v1047
          %v1049 = vpop.f32.mrf.mxu0
          %v1050 = vpop.f32.mrf.mxu0
          %v1051 = vadd.f32 %v746, %v1050
          %v1052 = vpop.f32.mrf.mxu0
          %1053 = vmatprep.mubr.bf16.mxu0 0
          %1054 = vmatmul.mubr.bf16.gmra.mxu0 %v906
          %v1055 = vpop.f32.mrf.mxu0
          %v1056 = vadd.f32 %v751, %v1055
          %v1057 = vpop.f32.mrf.mxu0
          %v1058 = vpop.f32.mrf.mxu0
          %v1059 = vadd.f32 %v754, %v1058
          %v1060 = vpop.f32.mrf.mxu0
          %1061 = vmatprep.mubr.bf16.mxu0 0
          %1062 = vmatmul.mubr.bf16.gmra.mxu0 %v907
          %v1063 = vpop.f32.mrf.mxu0
          %v1064 = vadd.f32 %v759, %v1063
          %v1065 = vpop.f32.mrf.mxu0
          %v1066 = vpop.f32.mrf.mxu0
          %v1067 = vadd.f32 %v762, %v1066
          %v1068 = vpop.f32.mrf.mxu0
          %1069 = vmatprep.mubr.bf16.mxu0 0
          %1070 = vmatmul.mubr.bf16.gmra.mxu0 %v908
          %v1071 = vpop.f32.mrf.mxu0
          %v1072 = vadd.f32 %v767, %v1071
          %v1073 = vpop.f32.mrf.mxu0
          %v1074 = vpop.f32.mrf.mxu0
          %v1075 = vadd.f32 %v770, %v1074
          %v1076 = vpop.f32.mrf.mxu0
          %1077 = vmatprep.mubr.bf16.mxu0 0
          %1078 = vmatmul.mubr.bf16.gmra.mxu0 %v909
          %v1079 = vpop.f32.mrf.mxu0
          %v1080 = vadd.f32 %v775, %v1079
          %v1081 = vpop.f32.mrf.mxu0
          %v1082 = vpop.f32.mrf.mxu0
          %v1083 = vadd.f32 %v778, %v1082
          %v1084 = vpop.f32.mrf.mxu0
          %1085 = vmatprep.mubr.bf16.mxu0 0
          %1086 = vmatmul.mubr.bf16.gmra.mxu0 %v910
          %v1087 = vpop.f32.mrf.mxu0
          %v1088 = vadd.f32 %v783, %v1087
          %v1089 = vpop.f32.mrf.mxu0
          %v1090 = vpop.f32.mrf.mxu0
          %v1091 = vadd.f32 %v786, %v1090
          %v1092 = vpop.f32.mrf.mxu0
          %1093 = vmatprep.mubr.bf16.mxu0 0
          %1094 = vmatmul.mubr.bf16.gmra.mxu0 %v911
          %v1095 = vpop.f32.mrf.mxu0
          %v1096 = vadd.f32 %v791, %v1095
          %v1097 = vpop.f32.mrf.mxu0
          %v1098 = vpop.f32.mrf.mxu0
          %v1099 = vadd.f32 %v794, %v1098
          %v1100 = vpop.f32.mrf.mxu0
          %1101 = vmatprep.mubr.bf16.mxu0 0
          %1102 = vmatmul.mubr.bf16.gmra.mxu0 %v912
          %v1103 = vpop.f32.mrf.mxu0
          %v1104 = vadd.f32 %v799, %v1103
          %v1105 = vpop.f32.mrf.mxu0
          %v1106 = vpop.f32.mrf.mxu0
          %v1107 = vadd.f32 %v802, %v1106
          %v1108 = vpop.f32.mrf.mxu0
          %1109 = vmatprep.mubr.bf16.mxu0 0
          %1110 = vmatmul.mubr.bf16.gmra.mxu0 %v913
          %v1111 = vpop.f32.mrf.mxu0
          %v1112 = vadd.f32 %v807, %v1111
          %v1113 = vpop.f32.mrf.mxu0
          %v1114 = vpop.f32.mrf.mxu0
          %v1115 = vadd.f32 %v810, %v1114
          %v1116 = vpop.f32.mrf.mxu0
          %1117 = vmatprep.mubr.bf16.mxu0 0
          %1118 = vmatmul.mubr.bf16.gmra.mxu0 %v914
          %v1119 = vpop.f32.mrf.mxu0
          %v1120 = vadd.f32 %v815, %v1119
          %v1121 = vpop.f32.mrf.mxu0
          %v1122 = vpop.f32.mrf.mxu0
          %v1123 = vadd.f32 %v818, %v1122
          %v1124 = vpop.f32.mrf.mxu0
          %1125 = vmatprep.mubr.bf16.mxu0 0
          %1126 = vmatmul.mubr.bf16.gmra.mxu0 %v915
          %v1127 = vpop.f32.mrf.mxu0
          %v1128 = vadd.f32 %v823, %v1127
          %v1129 = vpop.f32.mrf.mxu0
          %v1130 = vpop.f32.mrf.mxu0
          %v1131 = vadd.f32 %v826, %v1130
          %v1132 = vpop.f32.mrf.mxu0
          %1133 = vmatprep.mubr.bf16.mxu0 0
          %1134 = vmatmul.mubr.bf16.gmra.mxu0 %v916
          %v1135 = vpop.f32.mrf.mxu0
          %v1136 = vadd.f32 %v831, %v1135
          %v1137 = vpop.f32.mrf.mxu0
          %v1138 = vpop.f32.mrf.mxu0
          %v1139 = vadd.f32 %v834, %v1138
          %v1140 = vpop.f32.mrf.mxu0
          %1141 = vdwg.mxu0
          %s1142 = sadd.s32 4, %s429
          %s1143 = smul.addr %s1142, 4
          %s1144 = scalar_lea.vmem %s226, %s1143
          %v1145 = vld [vmem:[%s1144] sm:$0xf]
          %v1146 = vld [vmem:[%s1144 + $0x4] sm:$0xf]
          %v1147 = vld [vmem:[%s1144 + $0x8] sm:$0xf]
          %v1148 = vld [vmem:[%s1144 + $0xc] sm:$0xf]
          %v1149 = vld [vmem:[%s1144 + $0x10] sm:$0xf]
          %v1150 = vld [vmem:[%s1144 + $0x14] sm:$0xf]
          %v1151 = vld [vmem:[%s1144 + $0x18] sm:$0xf]
          %v1152 = vld [vmem:[%s1144 + $0x1c] sm:$0xf]
          %v1153 = vld [vmem:[%s1144 + $0x20] sm:$0xf]
          %v1154 = vld [vmem:[%s1144 + $0x24] sm:$0xf]
          %v1155 = vld [vmem:[%s1144 + $0x28] sm:$0xf]
          %v1156 = vld [vmem:[%s1144 + $0x2c] sm:$0xf]
          %v1157 = vld [vmem:[%s1144 + $0x30] sm:$0xf]
          %v1158 = vld [vmem:[%s1144 + $0x34] sm:$0xf]
          %v1159 = vld [vmem:[%s1144 + $0x38] sm:$0xf]
          %v1160 = vld [vmem:[%s1144 + $0x3c] sm:$0xf]
          %v1161 = vld [vmem:[%s1144 + $0x40] sm:$0xf]
          %v1162 = vld [vmem:[%s1144 + $0x44] sm:$0xf]
          %v1163 = vld [vmem:[%s1144 + $0x48] sm:$0xf]
          %v1164 = vld [vmem:[%s1144 + $0x4c] sm:$0xf]
          %v1165 = vld [vmem:[%s1144 + $0x50] sm:$0xf]
          %v1166 = vld [vmem:[%s1144 + $0x54] sm:$0xf]
          %v1167 = vld [vmem:[%s1144 + $0x58] sm:$0xf]
          %v1168 = vld [vmem:[%s1144 + $0x5c] sm:$0xf]
          %v1169 = vld [vmem:[%s1144 + $0x60] sm:$0xf]
          %v1170 = vld [vmem:[%s1144 + $0x64] sm:$0xf]
          %v1171 = vld [vmem:[%s1144 + $0x68] sm:$0xf]
          %v1172 = vld [vmem:[%s1144 + $0x6c] sm:$0xf]
          %v1173 = vld [vmem:[%s1144 + $0x70] sm:$0xf]
          %v1174 = vld [vmem:[%s1144 + $0x74] sm:$0xf]
          %v1175 = vld [vmem:[%s1144 + $0x78] sm:$0xf]
          %v1176 = vld [vmem:[%s1144 + $0x7c] sm:$0xf]
          %s1177 = scalar_lea.vmem %s1, 128
          %v1178 = vld [vmem:[%s1177] sm:$0xf]
          %v1179 = vld [vmem:[%s1177 + $0x4] sm:$0xf]
          %v1180 = vld [vmem:[%s1177 + $0x8] sm:$0xf]
          %v1181 = vld [vmem:[%s1177 + $0xc] sm:$0xf]
          %v1182 = vld [vmem:[%s1177 + $0x10] sm:$0xf]
          %v1183 = vld [vmem:[%s1177 + $0x14] sm:$0xf]
          %v1184 = vld [vmem:[%s1177 + $0x18] sm:$0xf]
          %v1185 = vld [vmem:[%s1177 + $0x1c] sm:$0xf]
          %v1186 = vld [vmem:[%s1177 + $0x20] sm:$0xf]
          %v1187 = vld [vmem:[%s1177 + $0x24] sm:$0xf]
          %v1188 = vld [vmem:[%s1177 + $0x28] sm:$0xf]
          %v1189 = vld [vmem:[%s1177 + $0x2c] sm:$0xf]
          %v1190 = vld [vmem:[%s1177 + $0x30] sm:$0xf]
          %v1191 = vld [vmem:[%s1177 + $0x34] sm:$0xf]
          %v1192 = vld [vmem:[%s1177 + $0x38] sm:$0xf]
          %v1193 = vld [vmem:[%s1177 + $0x3c] sm:$0xf]
          %v1226 = vunpack.c.l.b16 %v1145
          %v1227 = vunpack.c.l.b16 %v1146
          %v1228 = vunpack.c.l.b16 %v1147
          %v1229 = vunpack.c.l.b16 %v1148
          %v1230 = vunpack.c.l.b16 %v1149
          %v1231 = vunpack.c.l.b16 %v1150
          %v1232 = vunpack.c.l.b16 %v1151
          %v1233 = vunpack.c.l.b16 %v1152
          %v1234 = vunpack.c.l.b16 %v1153
          %v1235 = vunpack.c.l.b16 %v1154
          %v1236 = vunpack.c.l.b16 %v1155
          %v1237 = vunpack.c.l.b16 %v1156
          %v1238 = vunpack.c.l.b16 %v1157
          %v1239 = vunpack.c.l.b16 %v1158
          %v1240 = vunpack.c.l.b16 %v1159
          %v1241 = vunpack.c.l.b16 %v1160
          %v1242 = vunpack.c.l.b16 %v1161
          %v1243 = vunpack.c.l.b16 %v1162
          %v1244 = vunpack.c.l.b16 %v1163
          %v1245 = vunpack.c.l.b16 %v1164
          %v1246 = vunpack.c.l.b16 %v1165
          %v1247 = vunpack.c.l.b16 %v1166
          %v1248 = vunpack.c.l.b16 %v1167
          %v1249 = vunpack.c.l.b16 %v1168
          %v1250 = vunpack.c.l.b16 %v1169
          %v1251 = vunpack.c.l.b16 %v1170
          %v1252 = vunpack.c.l.b16 %v1171
          %v1253 = vunpack.c.l.b16 %v1172
          %v1254 = vunpack.c.l.b16 %v1173
          %v1255 = vunpack.c.l.b16 %v1174
          %v1256 = vunpack.c.l.b16 %v1175
          %v1257 = vunpack.c.l.b16 %v1176
          %v1258 = vpack.c.b16 %v1227, %v1226
          %v1259 = vpack.c.b16 %v1229, %v1228
          %v1260 = vpack.c.b16 %v1231, %v1230
          %v1261 = vpack.c.b16 %v1233, %v1232
          %v1262 = vpack.c.b16 %v1235, %v1234
          %v1263 = vpack.c.b16 %v1237, %v1236
          %v1264 = vpack.c.b16 %v1239, %v1238
          %v1265 = vpack.c.b16 %v1241, %v1240
          %v1266 = vpack.c.b16 %v1243, %v1242
          %v1267 = vpack.c.b16 %v1245, %v1244
          %v1268 = vpack.c.b16 %v1247, %v1246
          %v1269 = vpack.c.b16 %v1249, %v1248
          %v1270 = vpack.c.b16 %v1251, %v1250
          %v1271 = vpack.c.b16 %v1253, %v1252
          %v1272 = vpack.c.b16 %v1255, %v1254
          %v1273 = vpack.c.b16 %v1257, %v1256
          %v1306 = vunpack.c.l.b16 %v1178
          %v1307 = vunpack.c.l.b16 %v1179
          %v1308 = vunpack.c.l.b16 %v1180
          %v1309 = vunpack.c.l.b16 %v1181
          %v1310 = vunpack.c.l.b16 %v1182
          %v1311 = vunpack.c.l.b16 %v1183
          %v1312 = vunpack.c.l.b16 %v1184
          %v1313 = vunpack.c.l.b16 %v1185
          %v1314 = vunpack.c.l.b16 %v1186
          %v1315 = vunpack.c.l.b16 %v1187
          %v1316 = vunpack.c.l.b16 %v1188
          %v1317 = vunpack.c.l.b16 %v1189
          %v1318 = vunpack.c.l.b16 %v1190
          %v1319 = vunpack.c.l.b16 %v1191
          %v1320 = vunpack.c.l.b16 %v1192
          %v1321 = vunpack.c.l.b16 %v1193
          %v1322 = vpack.c.b16 %v1307, %v1306
          %v1323 = vpack.c.b16 %v1309, %v1308
          %v1324 = vpack.c.b16 %v1311, %v1310
          %v1325 = vpack.c.b16 %v1313, %v1312
          %v1326 = vpack.c.b16 %v1315, %v1314
          %v1327 = vpack.c.b16 %v1317, %v1316
          %v1328 = vpack.c.b16 %v1319, %v1318
          %v1329 = vpack.c.b16 %v1321, %v1320
          %1338 = vmatprep.subr.bf16.mxu0 0
          %1339 = vmatpush1.bf16.msra.mxu0 %v1329
          %1340 = vmatprep.subr.bf16.mxu0 0
          %1341 = vmatpush1.bf16.msra.mxu0 %v1328
          %1342 = vmatprep.subr.bf16.mxu0 0
          %1343 = vmatpush1.bf16.msra.mxu0 %v1327
          %1344 = vmatprep.subr.bf16.mxu0 0
          %1345 = vmatpush1.bf16.msra.mxu0 %v1326
          %1346 = vmatprep.subr.bf16.mxu0 0
          %1347 = vmatpush1.bf16.msra.mxu0 %v1325
          %1348 = vmatprep.subr.bf16.mxu0 0
          %1349 = vmatpush1.bf16.msra.mxu0 %v1324
          %1350 = vmatprep.subr.bf16.mxu0 0
          %1351 = vmatpush1.bf16.msra.mxu0 %v1323
          %1352 = vmatprep.subr.bf16.mxu0 0
          %1353 = vmatpush1.bf16.msra.mxu0 %v1322
          %1354 = vmatprep.subr.bf16.mxu0 0
          %1355 = vmatpush2.bf16.msra.mxu0 0
          %1356 = vmatprep.subr.bf16.mxu0 0
          %1357 = vmatpush2.bf16.msra.mxu0 0
          %1358 = vmatprep.subr.bf16.mxu0 0
          %1359 = vmatpush2.bf16.msra.mxu0 0
          %1360 = vmatprep.subr.bf16.mxu0 0
          %1361 = vmatpush2.bf16.msra.mxu0 0
          %1362 = vmatprep.subr.bf16.mxu0 0
          %1363 = vmatpush2.bf16.msra.mxu0 0
          %1364 = vmatprep.subr.bf16.mxu0 0
          %1365 = vmatpush2.bf16.msra.mxu0 0
          %1366 = vmatprep.subr.bf16.mxu0 0
          %1367 = vmatpush2.bf16.msra.mxu0 0
          %1368 = vmatprep.subr.bf16.mxu0 0
          %1369 = vmatpush2.bf16.msra.mxu0 0
          %1370 = vmatprep.mubr.bf16.mxu0 0
          %1371 = vmatmul.mubr.bf16.gmra.mxu0 %v1258
          %v1372 = vpop.f32.mrf.mxu0
          %v1373 = vadd.f32 0.0, %v1372
          %v1374 = vpop.f32.mrf.mxu0
          %v1375 = vpop.f32.mrf.mxu0
          %v1376 = vadd.f32 0.0, %v1375
          %v1377 = vpop.f32.mrf.mxu0
          %1378 = vmatprep.mubr.bf16.mxu0 0
          %1379 = vmatmul.mubr.bf16.gmra.mxu0 %v1259
          %v1380 = vpop.f32.mrf.mxu0
          %v1381 = vadd.f32 0.0, %v1380
          %v1382 = vpop.f32.mrf.mxu0
          %v1383 = vpop.f32.mrf.mxu0
          %v1384 = vadd.f32 0.0, %v1383
          %v1385 = vpop.f32.mrf.mxu0
          %1386 = vmatprep.mubr.bf16.mxu0 0
          %1387 = vmatmul.mubr.bf16.gmra.mxu0 %v1260
          %v1388 = vpop.f32.mrf.mxu0
          %v1389 = vadd.f32 0.0, %v1388
          %v1390 = vpop.f32.mrf.mxu0
          %v1391 = vpop.f32.mrf.mxu0
          %v1392 = vadd.f32 0.0, %v1391
          %v1393 = vpop.f32.mrf.mxu0
          %1394 = vmatprep.mubr.bf16.mxu0 0
          %1395 = vmatmul.mubr.bf16.gmra.mxu0 %v1261
          %v1396 = vpop.f32.mrf.mxu0
          %v1397 = vadd.f32 0.0, %v1396
          %v1398 = vpop.f32.mrf.mxu0
          %v1399 = vpop.f32.mrf.mxu0
          %v1400 = vadd.f32 0.0, %v1399
          %v1401 = vpop.f32.mrf.mxu0
          %1402 = vmatprep.mubr.bf16.mxu0 0
          %1403 = vmatmul.mubr.bf16.gmra.mxu0 %v1262
          %v1404 = vpop.f32.mrf.mxu0
          %v1405 = vadd.f32 0.0, %v1404
          %v1406 = vpop.f32.mrf.mxu0
          %v1407 = vpop.f32.mrf.mxu0
          %v1408 = vadd.f32 0.0, %v1407
          %v1409 = vpop.f32.mrf.mxu0
          %1410 = vmatprep.mubr.bf16.mxu0 0
          %1411 = vmatmul.mubr.bf16.gmra.mxu0 %v1263
          %v1412 = vpop.f32.mrf.mxu0
          %v1413 = vadd.f32 0.0, %v1412
          %v1414 = vpop.f32.mrf.mxu0
          %v1415 = vpop.f32.mrf.mxu0
          %v1416 = vadd.f32 0.0, %v1415
          %v1417 = vpop.f32.mrf.mxu0
          %1418 = vmatprep.mubr.bf16.mxu0 0
          %1419 = vmatmul.mubr.bf16.gmra.mxu0 %v1264
          %v1420 = vpop.f32.mrf.mxu0
          %v1421 = vadd.f32 0.0, %v1420
          %v1422 = vpop.f32.mrf.mxu0
          %v1423 = vpop.f32.mrf.mxu0
          %v1424 = vadd.f32 0.0, %v1423
          %v1425 = vpop.f32.mrf.mxu0
          %1426 = vmatprep.mubr.bf16.mxu0 0
          %1427 = vmatmul.mubr.bf16.gmra.mxu0 %v1265
          %v1428 = vpop.f32.mrf.mxu0
          %v1429 = vadd.f32 0.0, %v1428
          %v1430 = vpop.f32.mrf.mxu0
          %v1431 = vpop.f32.mrf.mxu0
          %v1432 = vadd.f32 0.0, %v1431
          %v1433 = vpop.f32.mrf.mxu0
          %1434 = vmatprep.mubr.bf16.mxu0 0
          %1435 = vmatmul.mubr.bf16.gmra.mxu0 %v1266
          %v1436 = vpop.f32.mrf.mxu0
          %v1437 = vadd.f32 0.0, %v1436
          %v1438 = vpop.f32.mrf.mxu0
          %v1439 = vpop.f32.mrf.mxu0
          %v1440 = vadd.f32 0.0, %v1439
          %v1441 = vpop.f32.mrf.mxu0
          %1442 = vmatprep.mubr.bf16.mxu0 0
          %1443 = vmatmul.mubr.bf16.gmra.mxu0 %v1267
          %v1444 = vpop.f32.mrf.mxu0
          %v1445 = vadd.f32 0.0, %v1444
          %v1446 = vpop.f32.mrf.mxu0
          %v1447 = vpop.f32.mrf.mxu0
          %v1448 = vadd.f32 0.0, %v1447
          %v1449 = vpop.f32.mrf.mxu0
          %1450 = vmatprep.mubr.bf16.mxu0 0
          %1451 = vmatmul.mubr.bf16.gmra.mxu0 %v1268
          %v1452 = vpop.f32.mrf.mxu0
          %v1453 = vadd.f32 0.0, %v1452
          %v1454 = vpop.f32.mrf.mxu0
          %v1455 = vpop.f32.mrf.mxu0
          %v1456 = vadd.f32 0.0, %v1455
          %v1457 = vpop.f32.mrf.mxu0
          %1458 = vmatprep.mubr.bf16.mxu0 0
          %1459 = vmatmul.mubr.bf16.gmra.mxu0 %v1269
          %v1460 = vpop.f32.mrf.mxu0
          %v1461 = vadd.f32 0.0, %v1460
          %v1462 = vpop.f32.mrf.mxu0
          %v1463 = vpop.f32.mrf.mxu0
          %v1464 = vadd.f32 0.0, %v1463
          %v1465 = vpop.f32.mrf.mxu0
          %1466 = vmatprep.mubr.bf16.mxu0 0
          %1467 = vmatmul.mubr.bf16.gmra.mxu0 %v1270
          %v1468 = vpop.f32.mrf.mxu0
          %v1469 = vadd.f32 0.0, %v1468
          %v1470 = vpop.f32.mrf.mxu0
          %v1471 = vpop.f32.mrf.mxu0
          %v1472 = vadd.f32 0.0, %v1471
          %v1473 = vpop.f32.mrf.mxu0
          %1474 = vmatprep.mubr.bf16.mxu0 0
          %1475 = vmatmul.mubr.bf16.gmra.mxu0 %v1271
          %v1476 = vpop.f32.mrf.mxu0
          %v1477 = vadd.f32 0.0, %v1476
          %v1478 = vpop.f32.mrf.mxu0
          %v1479 = vpop.f32.mrf.mxu0
          %v1480 = vadd.f32 0.0, %v1479
          %v1481 = vpop.f32.mrf.mxu0
          %1482 = vmatprep.mubr.bf16.mxu0 0
          %1483 = vmatmul.mubr.bf16.gmra.mxu0 %v1272
          %v1484 = vpop.f32.mrf.mxu0
          %v1485 = vadd.f32 0.0, %v1484
          %v1486 = vpop.f32.mrf.mxu0
          %v1487 = vpop.f32.mrf.mxu0
          %v1488 = vadd.f32 0.0, %v1487
          %v1489 = vpop.f32.mrf.mxu0
          %1490 = vmatprep.mubr.bf16.mxu0 0
          %1491 = vmatmul.mubr.bf16.gmra.mxu0 %v1273
          %v1492 = vpop.f32.mrf.mxu0
          %v1493 = vadd.f32 0.0, %v1492
          %v1494 = vpop.f32.mrf.mxu0
          %v1495 = vpop.f32.mrf.mxu0
          %v1496 = vadd.f32 0.0, %v1495
          %v1497 = vpop.f32.mrf.mxu0
          %1498 = vdwg.mxu0
          %v1499 = vadd.f32 %v1016, %v1373
          %v1500 = vadd.f32 %v1019, %v1376
          %v1501 = vadd.f32 %v1024, %v1381
          %v1502 = vadd.f32 %v1027, %v1384
          %v1503 = vadd.f32 %v1032, %v1389
          %v1504 = vadd.f32 %v1035, %v1392
          %v1505 = vadd.f32 %v1040, %v1397
          %v1506 = vadd.f32 %v1043, %v1400
          %v1507 = vadd.f32 %v1048, %v1405
          %v1508 = vadd.f32 %v1051, %v1408
          %v1509 = vadd.f32 %v1056, %v1413
          %v1510 = vadd.f32 %v1059, %v1416
          %v1511 = vadd.f32 %v1064, %v1421
          %v1512 = vadd.f32 %v1067, %v1424
          %v1513 = vadd.f32 %v1072, %v1429
          %v1514 = vadd.f32 %v1075, %v1432
          %v1515 = vadd.f32 %v1080, %v1437
          %v1516 = vadd.f32 %v1083, %v1440
          %v1517 = vadd.f32 %v1088, %v1445
          %v1518 = vadd.f32 %v1091, %v1448
          %v1519 = vadd.f32 %v1096, %v1453
          %v1520 = vadd.f32 %v1099, %v1456
          %v1521 = vadd.f32 %v1104, %v1461
          %v1522 = vadd.f32 %v1107, %v1464
          %v1523 = vadd.f32 %v1112, %v1469
          %v1524 = vadd.f32 %v1115, %v1472
          %v1525 = vadd.f32 %v1120, %v1477
          %v1526 = vadd.f32 %v1123, %v1480
          %v1527 = vadd.f32 %v1128, %v1485
          %v1528 = vadd.f32 %v1131, %v1488
          %v1529 = vadd.f32 %v1136, %v1493
          %v1530 = vadd.f32 %v1139, %v1496
          %s1531 = sadd.s32 6, %s429
          %s1532 = smul.addr %s1531, 4
          %s1533 = scalar_lea.vmem %s226, %s1532
          %v1534 = vld [vmem:[%s1533] sm:$0xf]
          %v1535 = vld [vmem:[%s1533 + $0x4] sm:$0xf]
          %v1536 = vld [vmem:[%s1533 + $0x8] sm:$0xf]
          %v1537 = vld [vmem:[%s1533 + $0xc] sm:$0xf]
          %v1538 = vld [vmem:[%s1533 + $0x10] sm:$0xf]
          %v1539 = vld [vmem:[%s1533 + $0x14] sm:$0xf]
          %v1540 = vld [vmem:[%s1533 + $0x18] sm:$0xf]
          %v1541 = vld [vmem:[%s1533 + $0x1c] sm:$0xf]
          %v1542 = vld [vmem:[%s1533 + $0x20] sm:$0xf]
          %v1543 = vld [vmem:[%s1533 + $0x24] sm:$0xf]
          %v1544 = vld [vmem:[%s1533 + $0x28] sm:$0xf]
          %v1545 = vld [vmem:[%s1533 + $0x2c] sm:$0xf]
          %v1546 = vld [vmem:[%s1533 + $0x30] sm:$0xf]
          %v1547 = vld [vmem:[%s1533 + $0x34] sm:$0xf]
          %v1548 = vld [vmem:[%s1533 + $0x38] sm:$0xf]
          %v1549 = vld [vmem:[%s1533 + $0x3c] sm:$0xf]
          %v1550 = vld [vmem:[%s1533 + $0x40] sm:$0xf]
          %v1551 = vld [vmem:[%s1533 + $0x44] sm:$0xf]
          %v1552 = vld [vmem:[%s1533 + $0x48] sm:$0xf]
          %v1553 = vld [vmem:[%s1533 + $0x4c] sm:$0xf]
          %v1554 = vld [vmem:[%s1533 + $0x50] sm:$0xf]
          %v1555 = vld [vmem:[%s1533 + $0x54] sm:$0xf]
          %v1556 = vld [vmem:[%s1533 + $0x58] sm:$0xf]
          %v1557 = vld [vmem:[%s1533 + $0x5c] sm:$0xf]
          %v1558 = vld [vmem:[%s1533 + $0x60] sm:$0xf]
          %v1559 = vld [vmem:[%s1533 + $0x64] sm:$0xf]
          %v1560 = vld [vmem:[%s1533 + $0x68] sm:$0xf]
          %v1561 = vld [vmem:[%s1533 + $0x6c] sm:$0xf]
          %v1562 = vld [vmem:[%s1533 + $0x70] sm:$0xf]
          %v1563 = vld [vmem:[%s1533 + $0x74] sm:$0xf]
          %v1564 = vld [vmem:[%s1533 + $0x78] sm:$0xf]
          %v1565 = vld [vmem:[%s1533 + $0x7c] sm:$0xf]
          %s1566 = scalar_lea.vmem %s1, 192
          %v1567 = vld [vmem:[%s1566] sm:$0xf]
          %v1568 = vld [vmem:[%s1566 + $0x4] sm:$0xf]
          %v1569 = vld [vmem:[%s1566 + $0x8] sm:$0xf]
          %v1570 = vld [vmem:[%s1566 + $0xc] sm:$0xf]
          %v1571 = vld [vmem:[%s1566 + $0x10] sm:$0xf]
          %v1572 = vld [vmem:[%s1566 + $0x14] sm:$0xf]
          %v1573 = vld [vmem:[%s1566 + $0x18] sm:$0xf]
          %v1574 = vld [vmem:[%s1566 + $0x1c] sm:$0xf]
          %v1575 = vld [vmem:[%s1566 + $0x20] sm:$0xf]
          %v1576 = vld [vmem:[%s1566 + $0x24] sm:$0xf]
          %v1577 = vld [vmem:[%s1566 + $0x28] sm:$0xf]
          %v1578 = vld [vmem:[%s1566 + $0x2c] sm:$0xf]
          %v1579 = vld [vmem:[%s1566 + $0x30] sm:$0xf]
          %v1580 = vld [vmem:[%s1566 + $0x34] sm:$0xf]
          %v1581 = vld [vmem:[%s1566 + $0x38] sm:$0xf]
          %v1582 = vld [vmem:[%s1566 + $0x3c] sm:$0xf]
          %v1615 = vunpack.c.l.b16 %v1534
          %v1616 = vunpack.c.l.b16 %v1535
          %v1617 = vunpack.c.l.b16 %v1536
          %v1618 = vunpack.c.l.b16 %v1537
          %v1619 = vunpack.c.l.b16 %v1538
          %v1620 = vunpack.c.l.b16 %v1539
          %v1621 = vunpack.c.l.b16 %v1540
          %v1622 = vunpack.c.l.b16 %v1541
          %v1623 = vunpack.c.l.b16 %v1542
          %v1624 = vunpack.c.l.b16 %v1543
          %v1625 = vunpack.c.l.b16 %v1544
          %v1626 = vunpack.c.l.b16 %v1545
          %v1627 = vunpack.c.l.b16 %v1546
          %v1628 = vunpack.c.l.b16 %v1547
          %v1629 = vunpack.c.l.b16 %v1548
          %v1630 = vunpack.c.l.b16 %v1549
          %v1631 = vunpack.c.l.b16 %v1550
          %v1632 = vunpack.c.l.b16 %v1551
          %v1633 = vunpack.c.l.b16 %v1552
          %v1634 = vunpack.c.l.b16 %v1553
          %v1635 = vunpack.c.l.b16 %v1554
          %v1636 = vunpack.c.l.b16 %v1555
          %v1637 = vunpack.c.l.b16 %v1556
          %v1638 = vunpack.c.l.b16 %v1557
          %v1639 = vunpack.c.l.b16 %v1558
          %v1640 = vunpack.c.l.b16 %v1559
          %v1641 = vunpack.c.l.b16 %v1560
          %v1642 = vunpack.c.l.b16 %v1561
          %v1643 = vunpack.c.l.b16 %v1562
          %v1644 = vunpack.c.l.b16 %v1563
          %v1645 = vunpack.c.l.b16 %v1564
          %v1646 = vunpack.c.l.b16 %v1565
          %v1647 = vpack.c.b16 %v1616, %v1615
          %v1648 = vpack.c.b16 %v1618, %v1617
          %v1649 = vpack.c.b16 %v1620, %v1619
          %v1650 = vpack.c.b16 %v1622, %v1621
          %v1651 = vpack.c.b16 %v1624, %v1623
          %v1652 = vpack.c.b16 %v1626, %v1625
          %v1653 = vpack.c.b16 %v1628, %v1627
          %v1654 = vpack.c.b16 %v1630, %v1629
          %v1655 = vpack.c.b16 %v1632, %v1631
          %v1656 = vpack.c.b16 %v1634, %v1633
          %v1657 = vpack.c.b16 %v1636, %v1635
          %v1658 = vpack.c.b16 %v1638, %v1637
          %v1659 = vpack.c.b16 %v1640, %v1639
          %v1660 = vpack.c.b16 %v1642, %v1641
          %v1661 = vpack.c.b16 %v1644, %v1643
          %v1662 = vpack.c.b16 %v1646, %v1645
          %v1695 = vunpack.c.l.b16 %v1567
          %v1696 = vunpack.c.l.b16 %v1568
          %v1697 = vunpack.c.l.b16 %v1569
          %v1698 = vunpack.c.l.b16 %v1570
          %v1699 = vunpack.c.l.b16 %v1571
          %v1700 = vunpack.c.l.b16 %v1572
          %v1701 = vunpack.c.l.b16 %v1573
          %v1702 = vunpack.c.l.b16 %v1574
          %v1703 = vunpack.c.l.b16 %v1575
          %v1704 = vunpack.c.l.b16 %v1576
          %v1705 = vunpack.c.l.b16 %v1577
          %v1706 = vunpack.c.l.b16 %v1578
          %v1707 = vunpack.c.l.b16 %v1579
          %v1708 = vunpack.c.l.b16 %v1580
          %v1709 = vunpack.c.l.b16 %v1581
          %v1710 = vunpack.c.l.b16 %v1582
          %v1711 = vpack.c.b16 %v1696, %v1695
          %v1712 = vpack.c.b16 %v1698, %v1697
          %v1713 = vpack.c.b16 %v1700, %v1699
          %v1714 = vpack.c.b16 %v1702, %v1701
          %v1715 = vpack.c.b16 %v1704, %v1703
          %v1716 = vpack.c.b16 %v1706, %v1705
          %v1717 = vpack.c.b16 %v1708, %v1707
          %v1718 = vpack.c.b16 %v1710, %v1709
          %1727 = vmatprep.subr.bf16.mxu0 0
          %1728 = vmatpush1.bf16.msra.mxu0 %v1718
          %1729 = vmatprep.subr.bf16.mxu0 0
          %1730 = vmatpush1.bf16.msra.mxu0 %v1717
          %1731 = vmatprep.subr.bf16.mxu0 0
          %1732 = vmatpush1.bf16.msra.mxu0 %v1716
          %1733 = vmatprep.subr.bf16.mxu0 0
          %1734 = vmatpush1.bf16.msra.mxu0 %v1715
          %1735 = vmatprep.subr.bf16.mxu0 0
          %1736 = vmatpush1.bf16.msra.mxu0 %v1714
          %1737 = vmatprep.subr.bf16.mxu0 0
          %1738 = vmatpush1.bf16.msra.mxu0 %v1713
          %1739 = vmatprep.subr.bf16.mxu0 0
          %1740 = vmatpush1.bf16.msra.mxu0 %v1712
          %1741 = vmatprep.subr.bf16.mxu0 0
          %1742 = vmatpush1.bf16.msra.mxu0 %v1711
          %1743 = vmatprep.subr.bf16.mxu0 0
          %1744 = vmatpush2.bf16.msra.mxu0 0
          %1745 = vmatprep.subr.bf16.mxu0 0
          %1746 = vmatpush2.bf16.msra.mxu0 0
          %1747 = vmatprep.subr.bf16.mxu0 0
          %1748 = vmatpush2.bf16.msra.mxu0 0
          %1749 = vmatprep.subr.bf16.mxu0 0
          %1750 = vmatpush2.bf16.msra.mxu0 0
          %1751 = vmatprep.subr.bf16.mxu0 0
          %1752 = vmatpush2.bf16.msra.mxu0 0
          %1753 = vmatprep.subr.bf16.mxu0 0
          %1754 = vmatpush2.bf16.msra.mxu0 0
          %1755 = vmatprep.subr.bf16.mxu0 0
          %1756 = vmatpush2.bf16.msra.mxu0 0
          %1757 = vmatprep.subr.bf16.mxu0 0
          %1758 = vmatpush2.bf16.msra.mxu0 0
          %1759 = vmatprep.mubr.bf16.mxu0 0
          %1760 = vmatmul.mubr.bf16.gmra.mxu0 %v1647
          %v1761 = vpop.f32.mrf.mxu0
          %v1762 = vadd.f32 0.0, %v1761
          %v1763 = vpop.f32.mrf.mxu0
          %v1764 = vpop.f32.mrf.mxu0
          %v1765 = vadd.f32 0.0, %v1764
          %v1766 = vpop.f32.mrf.mxu0
          %1767 = vmatprep.mubr.bf16.mxu0 0
          %1768 = vmatmul.mubr.bf16.gmra.mxu0 %v1648
          %v1769 = vpop.f32.mrf.mxu0
          %v1770 = vadd.f32 0.0, %v1769
          %v1771 = vpop.f32.mrf.mxu0
          %v1772 = vpop.f32.mrf.mxu0
          %v1773 = vadd.f32 0.0, %v1772
          %v1774 = vpop.f32.mrf.mxu0
          %1775 = vmatprep.mubr.bf16.mxu0 0
          %1776 = vmatmul.mubr.bf16.gmra.mxu0 %v1649
          %v1777 = vpop.f32.mrf.mxu0
          %v1778 = vadd.f32 0.0, %v1777
          %v1779 = vpop.f32.mrf.mxu0
          %v1780 = vpop.f32.mrf.mxu0
          %v1781 = vadd.f32 0.0, %v1780
          %v1782 = vpop.f32.mrf.mxu0
          %1783 = vmatprep.mubr.bf16.mxu0 0
          %1784 = vmatmul.mubr.bf16.gmra.mxu0 %v1650
          %v1785 = vpop.f32.mrf.mxu0
          %v1786 = vadd.f32 0.0, %v1785
          %v1787 = vpop.f32.mrf.mxu0
          %v1788 = vpop.f32.mrf.mxu0
          %v1789 = vadd.f32 0.0, %v1788
          %v1790 = vpop.f32.mrf.mxu0
          %1791 = vmatprep.mubr.bf16.mxu0 0
          %1792 = vmatmul.mubr.bf16.gmra.mxu0 %v1651
          %v1793 = vpop.f32.mrf.mxu0
          %v1794 = vadd.f32 0.0, %v1793
          %v1795 = vpop.f32.mrf.mxu0
          %v1796 = vpop.f32.mrf.mxu0
          %v1797 = vadd.f32 0.0, %v1796
          %v1798 = vpop.f32.mrf.mxu0
          %1799 = vmatprep.mubr.bf16.mxu0 0
          %1800 = vmatmul.mubr.bf16.gmra.mxu0 %v1652
          %v1801 = vpop.f32.mrf.mxu0
          %v1802 = vadd.f32 0.0, %v1801
          %v1803 = vpop.f32.mrf.mxu0
          %v1804 = vpop.f32.mrf.mxu0
          %v1805 = vadd.f32 0.0, %v1804
          %v1806 = vpop.f32.mrf.mxu0
          %1807 = vmatprep.mubr.bf16.mxu0 0
          %1808 = vmatmul.mubr.bf16.gmra.mxu0 %v1653
          %v1809 = vpop.f32.mrf.mxu0
          %v1810 = vadd.f32 0.0, %v1809
          %v1811 = vpop.f32.mrf.mxu0
          %v1812 = vpop.f32.mrf.mxu0
          %v1813 = vadd.f32 0.0, %v1812
          %v1814 = vpop.f32.mrf.mxu0
          %1815 = vmatprep.mubr.bf16.mxu0 0
          %1816 = vmatmul.mubr.bf16.gmra.mxu0 %v1654
          %v1817 = vpop.f32.mrf.mxu0
          %v1818 = vadd.f32 0.0, %v1817
          %v1819 = vpop.f32.mrf.mxu0
          %v1820 = vpop.f32.mrf.mxu0
          %v1821 = vadd.f32 0.0, %v1820
          %v1822 = vpop.f32.mrf.mxu0
          %1823 = vmatprep.mubr.bf16.mxu0 0
          %1824 = vmatmul.mubr.bf16.gmra.mxu0 %v1655
          %v1825 = vpop.f32.mrf.mxu0
          %v1826 = vadd.f32 0.0, %v1825
          %v1827 = vpop.f32.mrf.mxu0
          %v1828 = vpop.f32.mrf.mxu0
          %v1829 = vadd.f32 0.0, %v1828
          %v1830 = vpop.f32.mrf.mxu0
          %1831 = vmatprep.mubr.bf16.mxu0 0
          %1832 = vmatmul.mubr.bf16.gmra.mxu0 %v1656
          %v1833 = vpop.f32.mrf.mxu0
          %v1834 = vadd.f32 0.0, %v1833
          %v1835 = vpop.f32.mrf.mxu0
          %v1836 = vpop.f32.mrf.mxu0
          %v1837 = vadd.f32 0.0, %v1836
          %v1838 = vpop.f32.mrf.mxu0
          %1839 = vmatprep.mubr.bf16.mxu0 0
          %1840 = vmatmul.mubr.bf16.gmra.mxu0 %v1657
          %v1841 = vpop.f32.mrf.mxu0
          %v1842 = vadd.f32 0.0, %v1841
          %v1843 = vpop.f32.mrf.mxu0
          %v1844 = vpop.f32.mrf.mxu0
          %v1845 = vadd.f32 0.0, %v1844
          %v1846 = vpop.f32.mrf.mxu0
          %1847 = vmatprep.mubr.bf16.mxu0 0
          %1848 = vmatmul.mubr.bf16.gmra.mxu0 %v1658
          %v1849 = vpop.f32.mrf.mxu0
          %v1850 = vadd.f32 0.0, %v1849
          %v1851 = vpop.f32.mrf.mxu0
          %v1852 = vpop.f32.mrf.mxu0
          %v1853 = vadd.f32 0.0, %v1852
          %v1854 = vpop.f32.mrf.mxu0
          %1855 = vmatprep.mubr.bf16.mxu0 0
          %1856 = vmatmul.mubr.bf16.gmra.mxu0 %v1659
          %v1857 = vpop.f32.mrf.mxu0
          %v1858 = vadd.f32 0.0, %v1857
          %v1859 = vpop.f32.mrf.mxu0
          %v1860 = vpop.f32.mrf.mxu0
          %v1861 = vadd.f32 0.0, %v1860
          %v1862 = vpop.f32.mrf.mxu0
          %1863 = vmatprep.mubr.bf16.mxu0 0
          %1864 = vmatmul.mubr.bf16.gmra.mxu0 %v1660
          %v1865 = vpop.f32.mrf.mxu0
          %v1866 = vadd.f32 0.0, %v1865
          %v1867 = vpop.f32.mrf.mxu0
          %v1868 = vpop.f32.mrf.mxu0
          %v1869 = vadd.f32 0.0, %v1868
          %v1870 = vpop.f32.mrf.mxu0
          %1871 = vmatprep.mubr.bf16.mxu0 0
          %1872 = vmatmul.mubr.bf16.gmra.mxu0 %v1661
          %v1873 = vpop.f32.mrf.mxu0
          %v1874 = vadd.f32 0.0, %v1873
          %v1875 = vpop.f32.mrf.mxu0
          %v1876 = vpop.f32.mrf.mxu0
          %v1877 = vadd.f32 0.0, %v1876
          %v1878 = vpop.f32.mrf.mxu0
          %1879 = vmatprep.mubr.bf16.mxu0 0
          %1880 = vmatmul.mubr.bf16.gmra.mxu0 %v1662
          %v1881 = vpop.f32.mrf.mxu0
          %v1882 = vadd.f32 0.0, %v1881
          %v1883 = vpop.f32.mrf.mxu0
          %v1884 = vpop.f32.mrf.mxu0
          %v1885 = vadd.f32 0.0, %v1884
          %v1886 = vpop.f32.mrf.mxu0
          %1887 = vdwg.mxu0
          %v1888 = vadd.f32 %v1499, %v1762
          %v1889 = vadd.f32 %v1500, %v1765
          %v1890 = vadd.f32 %v1501, %v1770
          %v1891 = vadd.f32 %v1502, %v1773
          %v1892 = vadd.f32 %v1503, %v1778
          %v1893 = vadd.f32 %v1504, %v1781
          %v1894 = vadd.f32 %v1505, %v1786
          %v1895 = vadd.f32 %v1506, %v1789
          %v1896 = vadd.f32 %v1507, %v1794
          %v1897 = vadd.f32 %v1508, %v1797
          %v1898 = vadd.f32 %v1509, %v1802
          %v1899 = vadd.f32 %v1510, %v1805
          %v1900 = vadd.f32 %v1511, %v1810
          %v1901 = vadd.f32 %v1512, %v1813
          %v1902 = vadd.f32 %v1513, %v1818
          %v1903 = vadd.f32 %v1514, %v1821
          %v1904 = vadd.f32 %v1515, %v1826
          %v1905 = vadd.f32 %v1516, %v1829
          %v1906 = vadd.f32 %v1517, %v1834
          %v1907 = vadd.f32 %v1518, %v1837
          %v1908 = vadd.f32 %v1519, %v1842
          %v1909 = vadd.f32 %v1520, %v1845
          %v1910 = vadd.f32 %v1521, %v1850
          %v1911 = vadd.f32 %v1522, %v1853
          %v1912 = vadd.f32 %v1523, %v1858
          %v1913 = vadd.f32 %v1524, %v1861
          %v1914 = vadd.f32 %v1525, %v1866
          %v1915 = vadd.f32 %v1526, %v1869
          %v1916 = vadd.f32 %v1527, %v1874
          %v1917 = vadd.f32 %v1528, %v1877
          %v1918 = vadd.f32 %v1529, %v1882
          %v1919 = vadd.f32 %v1530, %v1885
          %s1920 = sadd.s32 8, %s429
          %s1921 = smul.addr %s1920, 4
          %s1922 = scalar_lea.vmem %s226, %s1921
          %v1923 = vld [vmem:[%s1922] sm:$0xf]
          %v1924 = vld [vmem:[%s1922 + $0x4] sm:$0xf]
          %v1925 = vld [vmem:[%s1922 + $0x8] sm:$0xf]
          %v1926 = vld [vmem:[%s1922 + $0xc] sm:$0xf]
          %v1927 = vld [vmem:[%s1922 + $0x10] sm:$0xf]
          %v1928 = vld [vmem:[%s1922 + $0x14] sm:$0xf]
          %v1929 = vld [vmem:[%s1922 + $0x18] sm:$0xf]
          %v1930 = vld [vmem:[%s1922 + $0x1c] sm:$0xf]
          %v1931 = vld [vmem:[%s1922 + $0x20] sm:$0xf]
          %v1932 = vld [vmem:[%s1922 + $0x24] sm:$0xf]
          %v1933 = vld [vmem:[%s1922 + $0x28] sm:$0xf]
          %v1934 = vld [vmem:[%s1922 + $0x2c] sm:$0xf]
          %v1935 = vld [vmem:[%s1922 + $0x30] sm:$0xf]
          %v1936 = vld [vmem:[%s1922 + $0x34] sm:$0xf]
          %v1937 = vld [vmem:[%s1922 + $0x38] sm:$0xf]
          %v1938 = vld [vmem:[%s1922 + $0x3c] sm:$0xf]
          %v1939 = vld [vmem:[%s1922 + $0x40] sm:$0xf]
          %v1940 = vld [vmem:[%s1922 + $0x44] sm:$0xf]
          %v1941 = vld [vmem:[%s1922 + $0x48] sm:$0xf]
          %v1942 = vld [vmem:[%s1922 + $0x4c] sm:$0xf]
          %v1943 = vld [vmem:[%s1922 + $0x50] sm:$0xf]
          %v1944 = vld [vmem:[%s1922 + $0x54] sm:$0xf]
          %v1945 = vld [vmem:[%s1922 + $0x58] sm:$0xf]
          %v1946 = vld [vmem:[%s1922 + $0x5c] sm:$0xf]
          %v1947 = vld [vmem:[%s1922 + $0x60] sm:$0xf]
          %v1948 = vld [vmem:[%s1922 + $0x64] sm:$0xf]
          %v1949 = vld [vmem:[%s1922 + $0x68] sm:$0xf]
          %v1950 = vld [vmem:[%s1922 + $0x6c] sm:$0xf]
          %v1951 = vld [vmem:[%s1922 + $0x70] sm:$0xf]
          %v1952 = vld [vmem:[%s1922 + $0x74] sm:$0xf]
          %v1953 = vld [vmem:[%s1922 + $0x78] sm:$0xf]
          %v1954 = vld [vmem:[%s1922 + $0x7c] sm:$0xf]
          %s1955 = scalar_lea.vmem %s1, 256
          %v1956 = vld [vmem:[%s1955] sm:$0xf]
          %v1957 = vld [vmem:[%s1955 + $0x4] sm:$0xf]
          %v1958 = vld [vmem:[%s1955 + $0x8] sm:$0xf]
          %v1959 = vld [vmem:[%s1955 + $0xc] sm:$0xf]
          %v1960 = vld [vmem:[%s1955 + $0x10] sm:$0xf]
          %v1961 = vld [vmem:[%s1955 + $0x14] sm:$0xf]
          %v1962 = vld [vmem:[%s1955 + $0x18] sm:$0xf]
          %v1963 = vld [vmem:[%s1955 + $0x1c] sm:$0xf]
          %v1964 = vld [vmem:[%s1955 + $0x20] sm:$0xf]
          %v1965 = vld [vmem:[%s1955 + $0x24] sm:$0xf]
          %v1966 = vld [vmem:[%s1955 + $0x28] sm:$0xf]
          %v1967 = vld [vmem:[%s1955 + $0x2c] sm:$0xf]
          %v1968 = vld [vmem:[%s1955 + $0x30] sm:$0xf]
          %v1969 = vld [vmem:[%s1955 + $0x34] sm:$0xf]
          %v1970 = vld [vmem:[%s1955 + $0x38] sm:$0xf]
          %v1971 = vld [vmem:[%s1955 + $0x3c] sm:$0xf]
          %v2004 = vunpack.c.l.b16 %v1923
          %v2005 = vunpack.c.l.b16 %v1924
          %v2006 = vunpack.c.l.b16 %v1925
          %v2007 = vunpack.c.l.b16 %v1926
          %v2008 = vunpack.c.l.b16 %v1927
          %v2009 = vunpack.c.l.b16 %v1928
          %v2010 = vunpack.c.l.b16 %v1929
          %v2011 = vunpack.c.l.b16 %v1930
          %v2012 = vunpack.c.l.b16 %v1931
          %v2013 = vunpack.c.l.b16 %v1932
          %v2014 = vunpack.c.l.b16 %v1933
          %v2015 = vunpack.c.l.b16 %v1934
          %v2016 = vunpack.c.l.b16 %v1935
          %v2017 = vunpack.c.l.b16 %v1936
          %v2018 = vunpack.c.l.b16 %v1937
          %v2019 = vunpack.c.l.b16 %v1938
          %v2020 = vunpack.c.l.b16 %v1939
          %v2021 = vunpack.c.l.b16 %v1940
          %v2022 = vunpack.c.l.b16 %v1941
          %v2023 = vunpack.c.l.b16 %v1942
          %v2024 = vunpack.c.l.b16 %v1943
          %v2025 = vunpack.c.l.b16 %v1944
          %v2026 = vunpack.c.l.b16 %v1945
          %v2027 = vunpack.c.l.b16 %v1946
          %v2028 = vunpack.c.l.b16 %v1947
          %v2029 = vunpack.c.l.b16 %v1948
          %v2030 = vunpack.c.l.b16 %v1949
          %v2031 = vunpack.c.l.b16 %v1950
          %v2032 = vunpack.c.l.b16 %v1951
          %v2033 = vunpack.c.l.b16 %v1952
          %v2034 = vunpack.c.l.b16 %v1953
          %v2035 = vunpack.c.l.b16 %v1954
          %v2036 = vpack.c.b16 %v2005, %v2004
          %v2037 = vpack.c.b16 %v2007, %v2006
          %v2038 = vpack.c.b16 %v2009, %v2008
          %v2039 = vpack.c.b16 %v2011, %v2010
          %v2040 = vpack.c.b16 %v2013, %v2012
          %v2041 = vpack.c.b16 %v2015, %v2014
          %v2042 = vpack.c.b16 %v2017, %v2016
          %v2043 = vpack.c.b16 %v2019, %v2018
          %v2044 = vpack.c.b16 %v2021, %v2020
          %v2045 = vpack.c.b16 %v2023, %v2022
          %v2046 = vpack.c.b16 %v2025, %v2024
          %v2047 = vpack.c.b16 %v2027, %v2026
          %v2048 = vpack.c.b16 %v2029, %v2028
          %v2049 = vpack.c.b16 %v2031, %v2030
          %v2050 = vpack.c.b16 %v2033, %v2032
          %v2051 = vpack.c.b16 %v2035, %v2034
          %v2084 = vunpack.c.l.b16 %v1956
          %v2085 = vunpack.c.l.b16 %v1957
          %v2086 = vunpack.c.l.b16 %v1958
          %v2087 = vunpack.c.l.b16 %v1959
          %v2088 = vunpack.c.l.b16 %v1960
          %v2089 = vunpack.c.l.b16 %v1961
          %v2090 = vunpack.c.l.b16 %v1962
          %v2091 = vunpack.c.l.b16 %v1963
          %v2092 = vunpack.c.l.b16 %v1964
          %v2093 = vunpack.c.l.b16 %v1965
          %v2094 = vunpack.c.l.b16 %v1966
          %v2095 = vunpack.c.l.b16 %v1967
          %v2096 = vunpack.c.l.b16 %v1968
          %v2097 = vunpack.c.l.b16 %v1969
          %v2098 = vunpack.c.l.b16 %v1970
          %v2099 = vunpack.c.l.b16 %v1971
          %v2100 = vpack.c.b16 %v2085, %v2084
          %v2101 = vpack.c.b16 %v2087, %v2086
          %v2102 = vpack.c.b16 %v2089, %v2088
          %v2103 = vpack.c.b16 %v2091, %v2090
          %v2104 = vpack.c.b16 %v2093, %v2092
          %v2105 = vpack.c.b16 %v2095, %v2094
          %v2106 = vpack.c.b16 %v2097, %v2096
          %v2107 = vpack.c.b16 %v2099, %v2098
          %2116 = vmatprep.subr.bf16.mxu0 0
          %2117 = vmatpush1.bf16.msra.mxu0 %v2107
          %2118 = vmatprep.subr.bf16.mxu0 0
          %2119 = vmatpush1.bf16.msra.mxu0 %v2106
          %2120 = vmatprep.subr.bf16.mxu0 0
          %2121 = vmatpush1.bf16.msra.mxu0 %v2105
          %2122 = vmatprep.subr.bf16.mxu0 0
          %2123 = vmatpush1.bf16.msra.mxu0 %v2104
          %2124 = vmatprep.subr.bf16.mxu0 0
          %2125 = vmatpush1.bf16.msra.mxu0 %v2103
          %2126 = vmatprep.subr.bf16.mxu0 0
          %2127 = vmatpush1.bf16.msra.mxu0 %v2102
          %2128 = vmatprep.subr.bf16.mxu0 0
          %2129 = vmatpush1.bf16.msra.mxu0 %v2101
          %2130 = vmatprep.subr.bf16.mxu0 0
          %2131 = vmatpush1.bf16.msra.mxu0 %v2100
          %2132 = vmatprep.subr.bf16.mxu0 0
          %2133 = vmatpush2.bf16.msra.mxu0 0
          %2134 = vmatprep.subr.bf16.mxu0 0
          %2135 = vmatpush2.bf16.msra.mxu0 0
          %2136 = vmatprep.subr.bf16.mxu0 0
          %2137 = vmatpush2.bf16.msra.mxu0 0
          %2138 = vmatprep.subr.bf16.mxu0 0
          %2139 = vmatpush2.bf16.msra.mxu0 0
          %2140 = vmatprep.subr.bf16.mxu0 0
          %2141 = vmatpush2.bf16.msra.mxu0 0
          %2142 = vmatprep.subr.bf16.mxu0 0
          %2143 = vmatpush2.bf16.msra.mxu0 0
          %2144 = vmatprep.subr.bf16.mxu0 0
          %2145 = vmatpush2.bf16.msra.mxu0 0
          %2146 = vmatprep.subr.bf16.mxu0 0
          %2147 = vmatpush2.bf16.msra.mxu0 0
          %2148 = vmatprep.mubr.bf16.mxu0 0
          %2149 = vmatmul.mubr.bf16.gmra.mxu0 %v2036
          %v2150 = vpop.f32.mrf.mxu0
          %v2151 = vadd.f32 0.0, %v2150
          %v2152 = vpop.f32.mrf.mxu0
          %v2153 = vpop.f32.mrf.mxu0
          %v2154 = vadd.f32 0.0, %v2153
          %v2155 = vpop.f32.mrf.mxu0
          %2156 = vmatprep.mubr.bf16.mxu0 0
          %2157 = vmatmul.mubr.bf16.gmra.mxu0 %v2037
          %v2158 = vpop.f32.mrf.mxu0
          %v2159 = vadd.f32 0.0, %v2158
          %v2160 = vpop.f32.mrf.mxu0
          %v2161 = vpop.f32.mrf.mxu0
          %v2162 = vadd.f32 0.0, %v2161
          %v2163 = vpop.f32.mrf.mxu0
          %2164 = vmatprep.mubr.bf16.mxu0 0
          %2165 = vmatmul.mubr.bf16.gmra.mxu0 %v2038
          %v2166 = vpop.f32.mrf.mxu0
          %v2167 = vadd.f32 0.0, %v2166
          %v2168 = vpop.f32.mrf.mxu0
          %v2169 = vpop.f32.mrf.mxu0
          %v2170 = vadd.f32 0.0, %v2169
          %v2171 = vpop.f32.mrf.mxu0
          %2172 = vmatprep.mubr.bf16.mxu0 0
          %2173 = vmatmul.mubr.bf16.gmra.mxu0 %v2039
          %v2174 = vpop.f32.mrf.mxu0
          %v2175 = vadd.f32 0.0, %v2174
          %v2176 = vpop.f32.mrf.mxu0
          %v2177 = vpop.f32.mrf.mxu0
          %v2178 = vadd.f32 0.0, %v2177
          %v2179 = vpop.f32.mrf.mxu0
          %2180 = vmatprep.mubr.bf16.mxu0 0
          %2181 = vmatmul.mubr.bf16.gmra.mxu0 %v2040
          %v2182 = vpop.f32.mrf.mxu0
          %v2183 = vadd.f32 0.0, %v2182
          %v2184 = vpop.f32.mrf.mxu0
          %v2185 = vpop.f32.mrf.mxu0
          %v2186 = vadd.f32 0.0, %v2185
          %v2187 = vpop.f32.mrf.mxu0
          %2188 = vmatprep.mubr.bf16.mxu0 0
          %2189 = vmatmul.mubr.bf16.gmra.mxu0 %v2041
          %v2190 = vpop.f32.mrf.mxu0
          %v2191 = vadd.f32 0.0, %v2190
          %v2192 = vpop.f32.mrf.mxu0
          %v2193 = vpop.f32.mrf.mxu0
          %v2194 = vadd.f32 0.0, %v2193
          %v2195 = vpop.f32.mrf.mxu0
          %2196 = vmatprep.mubr.bf16.mxu0 0
          %2197 = vmatmul.mubr.bf16.gmra.mxu0 %v2042
          %v2198 = vpop.f32.mrf.mxu0
          %v2199 = vadd.f32 0.0, %v2198
          %v2200 = vpop.f32.mrf.mxu0
          %v2201 = vpop.f32.mrf.mxu0
          %v2202 = vadd.f32 0.0, %v2201
          %v2203 = vpop.f32.mrf.mxu0
          %2204 = vmatprep.mubr.bf16.mxu0 0
          %2205 = vmatmul.mubr.bf16.gmra.mxu0 %v2043
          %v2206 = vpop.f32.mrf.mxu0
          %v2207 = vadd.f32 0.0, %v2206
          %v2208 = vpop.f32.mrf.mxu0
          %v2209 = vpop.f32.mrf.mxu0
          %v2210 = vadd.f32 0.0, %v2209
          %v2211 = vpop.f32.mrf.mxu0
          %2212 = vmatprep.mubr.bf16.mxu0 0
          %2213 = vmatmul.mubr.bf16.gmra.mxu0 %v2044
          %v2214 = vpop.f32.mrf.mxu0
          %v2215 = vadd.f32 0.0, %v2214
          %v2216 = vpop.f32.mrf.mxu0
          %v2217 = vpop.f32.mrf.mxu0
          %v2218 = vadd.f32 0.0, %v2217
          %v2219 = vpop.f32.mrf.mxu0
          %2220 = vmatprep.mubr.bf16.mxu0 0
          %2221 = vmatmul.mubr.bf16.gmra.mxu0 %v2045
          %v2222 = vpop.f32.mrf.mxu0
          %v2223 = vadd.f32 0.0, %v2222
          %v2224 = vpop.f32.mrf.mxu0
          %v2225 = vpop.f32.mrf.mxu0
          %v2226 = vadd.f32 0.0, %v2225
          %v2227 = vpop.f32.mrf.mxu0
          %2228 = vmatprep.mubr.bf16.mxu0 0
          %2229 = vmatmul.mubr.bf16.gmra.mxu0 %v2046
          %v2230 = vpop.f32.mrf.mxu0
          %v2231 = vadd.f32 0.0, %v2230
          %v2232 = vpop.f32.mrf.mxu0
          %v2233 = vpop.f32.mrf.mxu0
          %v2234 = vadd.f32 0.0, %v2233
          %v2235 = vpop.f32.mrf.mxu0
          %2236 = vmatprep.mubr.bf16.mxu0 0
          %2237 = vmatmul.mubr.bf16.gmra.mxu0 %v2047
          %v2238 = vpop.f32.mrf.mxu0
          %v2239 = vadd.f32 0.0, %v2238
          %v2240 = vpop.f32.mrf.mxu0
          %v2241 = vpop.f32.mrf.mxu0
          %v2242 = vadd.f32 0.0, %v2241
          %v2243 = vpop.f32.mrf.mxu0
          %2244 = vmatprep.mubr.bf16.mxu0 0
          %2245 = vmatmul.mubr.bf16.gmra.mxu0 %v2048
          %v2246 = vpop.f32.mrf.mxu0
          %v2247 = vadd.f32 0.0, %v2246
          %v2248 = vpop.f32.mrf.mxu0
          %v2249 = vpop.f32.mrf.mxu0
          %v2250 = vadd.f32 0.0, %v2249
          %v2251 = vpop.f32.mrf.mxu0
          %2252 = vmatprep.mubr.bf16.mxu0 0
          %2253 = vmatmul.mubr.bf16.gmra.mxu0 %v2049
          %v2254 = vpop.f32.mrf.mxu0
          %v2255 = vadd.f32 0.0, %v2254
          %v2256 = vpop.f32.mrf.mxu0
          %v2257 = vpop.f32.mrf.mxu0
          %v2258 = vadd.f32 0.0, %v2257
          %v2259 = vpop.f32.mrf.mxu0
          %2260 = vmatprep.mubr.bf16.mxu0 0
          %2261 = vmatmul.mubr.bf16.gmra.mxu0 %v2050
          %v2262 = vpop.f32.mrf.mxu0
          %v2263 = vadd.f32 0.0, %v2262
          %v2264 = vpop.f32.mrf.mxu0
          %v2265 = vpop.f32.mrf.mxu0
          %v2266 = vadd.f32 0.0, %v2265
          %v2267 = vpop.f32.mrf.mxu0
          %2268 = vmatprep.mubr.bf16.mxu0 0
          %2269 = vmatmul.mubr.bf16.gmra.mxu0 %v2051
          %v2270 = vpop.f32.mrf.mxu0
          %v2271 = vadd.f32 0.0, %v2270
          %v2272 = vpop.f32.mrf.mxu0
          %v2273 = vpop.f32.mrf.mxu0
          %v2274 = vadd.f32 0.0, %v2273
          %v2275 = vpop.f32.mrf.mxu0
          %2276 = vdwg.mxu0
          %v2277 = vadd.f32 %v1888, %v2151
          %v2278 = vadd.f32 %v1889, %v2154
          %v2279 = vadd.f32 %v1890, %v2159
          %v2280 = vadd.f32 %v1891, %v2162
          %v2281 = vadd.f32 %v1892, %v2167
          %v2282 = vadd.f32 %v1893, %v2170
          %v2283 = vadd.f32 %v1894, %v2175
          %v2284 = vadd.f32 %v1895, %v2178
          %v2285 = vadd.f32 %v1896, %v2183
          %v2286 = vadd.f32 %v1897, %v2186
          %v2287 = vadd.f32 %v1898, %v2191
          %v2288 = vadd.f32 %v1899, %v2194
          %v2289 = vadd.f32 %v1900, %v2199
          %v2290 = vadd.f32 %v1901, %v2202
          %v2291 = vadd.f32 %v1902, %v2207
          %v2292 = vadd.f32 %v1903, %v2210
          %v2293 = vadd.f32 %v1904, %v2215
          %v2294 = vadd.f32 %v1905, %v2218
          %v2295 = vadd.f32 %v1906, %v2223
          %v2296 = vadd.f32 %v1907, %v2226
          %v2297 = vadd.f32 %v1908, %v2231
          %v2298 = vadd.f32 %v1909, %v2234
          %v2299 = vadd.f32 %v1910, %v2239
          %v2300 = vadd.f32 %v1911, %v2242
          %v2301 = vadd.f32 %v1912, %v2247
          %v2302 = vadd.f32 %v1913, %v2250
          %v2303 = vadd.f32 %v1914, %v2255
          %v2304 = vadd.f32 %v1915, %v2258
          %v2305 = vadd.f32 %v1916, %v2263
          %v2306 = vadd.f32 %v1917, %v2266
          %v2307 = vadd.f32 %v1918, %v2271
          %v2308 = vadd.f32 %v1919, %v2274
          %s2309 = sadd.s32 10, %s429
          %s2310 = smul.addr %s2309, 4
          %s2311 = scalar_lea.vmem %s226, %s2310
          %v2312 = vld [vmem:[%s2311] sm:$0xf]
          %v2313 = vld [vmem:[%s2311 + $0x4] sm:$0xf]
          %v2314 = vld [vmem:[%s2311 + $0x8] sm:$0xf]
          %v2315 = vld [vmem:[%s2311 + $0xc] sm:$0xf]
          %v2316 = vld [vmem:[%s2311 + $0x10] sm:$0xf]
          %v2317 = vld [vmem:[%s2311 + $0x14] sm:$0xf]
          %v2318 = vld [vmem:[%s2311 + $0x18] sm:$0xf]
          %v2319 = vld [vmem:[%s2311 + $0x1c] sm:$0xf]
          %v2320 = vld [vmem:[%s2311 + $0x20] sm:$0xf]
          %v2321 = vld [vmem:[%s2311 + $0x24] sm:$0xf]
          %v2322 = vld [vmem:[%s2311 + $0x28] sm:$0xf]
          %v2323 = vld [vmem:[%s2311 + $0x2c] sm:$0xf]
          %v2324 = vld [vmem:[%s2311 + $0x30] sm:$0xf]
          %v2325 = vld [vmem:[%s2311 + $0x34] sm:$0xf]
          %v2326 = vld [vmem:[%s2311 + $0x38] sm:$0xf]
          %v2327 = vld [vmem:[%s2311 + $0x3c] sm:$0xf]
          %v2328 = vld [vmem:[%s2311 + $0x40] sm:$0xf]
          %v2329 = vld [vmem:[%s2311 + $0x44] sm:$0xf]
          %v2330 = vld [vmem:[%s2311 + $0x48] sm:$0xf]
          %v2331 = vld [vmem:[%s2311 + $0x4c] sm:$0xf]
          %v2332 = vld [vmem:[%s2311 + $0x50] sm:$0xf]
          %v2333 = vld [vmem:[%s2311 + $0x54] sm:$0xf]
          %v2334 = vld [vmem:[%s2311 + $0x58] sm:$0xf]
          %v2335 = vld [vmem:[%s2311 + $0x5c] sm:$0xf]
          %v2336 = vld [vmem:[%s2311 + $0x60] sm:$0xf]
          %v2337 = vld [vmem:[%s2311 + $0x64] sm:$0xf]
          %v2338 = vld [vmem:[%s2311 + $0x68] sm:$0xf]
          %v2339 = vld [vmem:[%s2311 + $0x6c] sm:$0xf]
          %v2340 = vld [vmem:[%s2311 + $0x70] sm:$0xf]
          %v2341 = vld [vmem:[%s2311 + $0x74] sm:$0xf]
          %v2342 = vld [vmem:[%s2311 + $0x78] sm:$0xf]
          %v2343 = vld [vmem:[%s2311 + $0x7c] sm:$0xf]
          %s2344 = scalar_lea.vmem %s1, 320
          %v2345 = vld [vmem:[%s2344] sm:$0xf]
          %v2346 = vld [vmem:[%s2344 + $0x4] sm:$0xf]
          %v2347 = vld [vmem:[%s2344 + $0x8] sm:$0xf]
          %v2348 = vld [vmem:[%s2344 + $0xc] sm:$0xf]
          %v2349 = vld [vmem:[%s2344 + $0x10] sm:$0xf]
          %v2350 = vld [vmem:[%s2344 + $0x14] sm:$0xf]
          %v2351 = vld [vmem:[%s2344 + $0x18] sm:$0xf]
          %v2352 = vld [vmem:[%s2344 + $0x1c] sm:$0xf]
          %v2353 = vld [vmem:[%s2344 + $0x20] sm:$0xf]
          %v2354 = vld [vmem:[%s2344 + $0x24] sm:$0xf]
          %v2355 = vld [vmem:[%s2344 + $0x28] sm:$0xf]
          %v2356 = vld [vmem:[%s2344 + $0x2c] sm:$0xf]
          %v2357 = vld [vmem:[%s2344 + $0x30] sm:$0xf]
          %v2358 = vld [vmem:[%s2344 + $0x34] sm:$0xf]
          %v2359 = vld [vmem:[%s2344 + $0x38] sm:$0xf]
          %v2360 = vld [vmem:[%s2344 + $0x3c] sm:$0xf]
          %v2393 = vunpack.c.l.b16 %v2312
          %v2394 = vunpack.c.l.b16 %v2313
          %v2395 = vunpack.c.l.b16 %v2314
          %v2396 = vunpack.c.l.b16 %v2315
          %v2397 = vunpack.c.l.b16 %v2316
          %v2398 = vunpack.c.l.b16 %v2317
          %v2399 = vunpack.c.l.b16 %v2318
          %v2400 = vunpack.c.l.b16 %v2319
          %v2401 = vunpack.c.l.b16 %v2320
          %v2402 = vunpack.c.l.b16 %v2321
          %v2403 = vunpack.c.l.b16 %v2322
          %v2404 = vunpack.c.l.b16 %v2323
          %v2405 = vunpack.c.l.b16 %v2324
          %v2406 = vunpack.c.l.b16 %v2325
          %v2407 = vunpack.c.l.b16 %v2326
          %v2408 = vunpack.c.l.b16 %v2327
          %v2409 = vunpack.c.l.b16 %v2328
          %v2410 = vunpack.c.l.b16 %v2329
          %v2411 = vunpack.c.l.b16 %v2330
          %v2412 = vunpack.c.l.b16 %v2331
          %v2413 = vunpack.c.l.b16 %v2332
          %v2414 = vunpack.c.l.b16 %v2333
          %v2415 = vunpack.c.l.b16 %v2334
          %v2416 = vunpack.c.l.b16 %v2335
          %v2417 = vunpack.c.l.b16 %v2336
          %v2418 = vunpack.c.l.b16 %v2337
          %v2419 = vunpack.c.l.b16 %v2338
          %v2420 = vunpack.c.l.b16 %v2339
          %v2421 = vunpack.c.l.b16 %v2340
          %v2422 = vunpack.c.l.b16 %v2341
          %v2423 = vunpack.c.l.b16 %v2342
          %v2424 = vunpack.c.l.b16 %v2343
          %v2425 = vpack.c.b16 %v2394, %v2393
          %v2426 = vpack.c.b16 %v2396, %v2395
          %v2427 = vpack.c.b16 %v2398, %v2397
          %v2428 = vpack.c.b16 %v2400, %v2399
          %v2429 = vpack.c.b16 %v2402, %v2401
          %v2430 = vpack.c.b16 %v2404, %v2403
          %v2431 = vpack.c.b16 %v2406, %v2405
          %v2432 = vpack.c.b16 %v2408, %v2407
          %v2433 = vpack.c.b16 %v2410, %v2409
          %v2434 = vpack.c.b16 %v2412, %v2411
          %v2435 = vpack.c.b16 %v2414, %v2413
          %v2436 = vpack.c.b16 %v2416, %v2415
          %v2437 = vpack.c.b16 %v2418, %v2417
          %v2438 = vpack.c.b16 %v2420, %v2419
          %v2439 = vpack.c.b16 %v2422, %v2421
          %v2440 = vpack.c.b16 %v2424, %v2423
          %v2473 = vunpack.c.l.b16 %v2345
          %v2474 = vunpack.c.l.b16 %v2346
          %v2475 = vunpack.c.l.b16 %v2347
          %v2476 = vunpack.c.l.b16 %v2348
          %v2477 = vunpack.c.l.b16 %v2349
          %v2478 = vunpack.c.l.b16 %v2350
          %v2479 = vunpack.c.l.b16 %v2351
          %v2480 = vunpack.c.l.b16 %v2352
          %v2481 = vunpack.c.l.b16 %v2353
          %v2482 = vunpack.c.l.b16 %v2354
          %v2483 = vunpack.c.l.b16 %v2355
          %v2484 = vunpack.c.l.b16 %v2356
          %v2485 = vunpack.c.l.b16 %v2357
          %v2486 = vunpack.c.l.b16 %v2358
          %v2487 = vunpack.c.l.b16 %v2359
          %v2488 = vunpack.c.l.b16 %v2360
          %v2489 = vpack.c.b16 %v2474, %v2473
          %v2490 = vpack.c.b16 %v2476, %v2475
          %v2491 = vpack.c.b16 %v2478, %v2477
          %v2492 = vpack.c.b16 %v2480, %v2479
          %v2493 = vpack.c.b16 %v2482, %v2481
          %v2494 = vpack.c.b16 %v2484, %v2483
          %v2495 = vpack.c.b16 %v2486, %v2485
          %v2496 = vpack.c.b16 %v2488, %v2487
          %2505 = vmatprep.subr.bf16.mxu0 0
          %2506 = vmatpush1.bf16.msra.mxu0 %v2496
          %2507 = vmatprep.subr.bf16.mxu0 0
          %2508 = vmatpush1.bf16.msra.mxu0 %v2495
          %2509 = vmatprep.subr.bf16.mxu0 0
          %2510 = vmatpush1.bf16.msra.mxu0 %v2494
          %2511 = vmatprep.subr.bf16.mxu0 0
          %2512 = vmatpush1.bf16.msra.mxu0 %v2493
          %2513 = vmatprep.subr.bf16.mxu0 0
          %2514 = vmatpush1.bf16.msra.mxu0 %v2492
          %2515 = vmatprep.subr.bf16.mxu0 0
          %2516 = vmatpush1.bf16.msra.mxu0 %v2491
          %2517 = vmatprep.subr.bf16.mxu0 0
          %2518 = vmatpush1.bf16.msra.mxu0 %v2490
          %2519 = vmatprep.subr.bf16.mxu0 0
          %2520 = vmatpush1.bf16.msra.mxu0 %v2489
          %2521 = vmatprep.subr.bf16.mxu0 0
          %2522 = vmatpush2.bf16.msra.mxu0 0
          %2523 = vmatprep.subr.bf16.mxu0 0
          %2524 = vmatpush2.bf16.msra.mxu0 0
          %2525 = vmatprep.subr.bf16.mxu0 0
          %2526 = vmatpush2.bf16.msra.mxu0 0
          %2527 = vmatprep.subr.bf16.mxu0 0
          %2528 = vmatpush2.bf16.msra.mxu0 0
          %2529 = vmatprep.subr.bf16.mxu0 0
          %2530 = vmatpush2.bf16.msra.mxu0 0
          %2531 = vmatprep.subr.bf16.mxu0 0
          %2532 = vmatpush2.bf16.msra.mxu0 0
          %2533 = vmatprep.subr.bf16.mxu0 0
          %2534 = vmatpush2.bf16.msra.mxu0 0
          %2535 = vmatprep.subr.bf16.mxu0 0
          %2536 = vmatpush2.bf16.msra.mxu0 0
          %2537 = vmatprep.mubr.bf16.mxu0 0
          %2538 = vmatmul.mubr.bf16.gmra.mxu0 %v2425
          %v2539 = vpop.f32.mrf.mxu0
          %v2540 = vadd.f32 0.0, %v2539
          %v2541 = vpop.f32.mrf.mxu0
          %v2542 = vpop.f32.mrf.mxu0
          %v2543 = vadd.f32 0.0, %v2542
          %v2544 = vpop.f32.mrf.mxu0
          %2545 = vmatprep.mubr.bf16.mxu0 0
          %2546 = vmatmul.mubr.bf16.gmra.mxu0 %v2426
          %v2547 = vpop.f32.mrf.mxu0
          %v2548 = vadd.f32 0.0, %v2547
          %v2549 = vpop.f32.mrf.mxu0
          %v2550 = vpop.f32.mrf.mxu0
          %v2551 = vadd.f32 0.0, %v2550
          %v2552 = vpop.f32.mrf.mxu0
          %2553 = vmatprep.mubr.bf16.mxu0 0
          %2554 = vmatmul.mubr.bf16.gmra.mxu0 %v2427
          %v2555 = vpop.f32.mrf.mxu0
          %v2556 = vadd.f32 0.0, %v2555
          %v2557 = vpop.f32.mrf.mxu0
          %v2558 = vpop.f32.mrf.mxu0
          %v2559 = vadd.f32 0.0, %v2558
          %v2560 = vpop.f32.mrf.mxu0
          %2561 = vmatprep.mubr.bf16.mxu0 0
          %2562 = vmatmul.mubr.bf16.gmra.mxu0 %v2428
          %v2563 = vpop.f32.mrf.mxu0
          %v2564 = vadd.f32 0.0, %v2563
          %v2565 = vpop.f32.mrf.mxu0
          %v2566 = vpop.f32.mrf.mxu0
          %v2567 = vadd.f32 0.0, %v2566
          %v2568 = vpop.f32.mrf.mxu0
          %2569 = vmatprep.mubr.bf16.mxu0 0
          %2570 = vmatmul.mubr.bf16.gmra.mxu0 %v2429
          %v2571 = vpop.f32.mrf.mxu0
          %v2572 = vadd.f32 0.0, %v2571
          %v2573 = vpop.f32.mrf.mxu0
          %v2574 = vpop.f32.mrf.mxu0
          %v2575 = vadd.f32 0.0, %v2574
          %v2576 = vpop.f32.mrf.mxu0
          %2577 = vmatprep.mubr.bf16.mxu0 0
          %2578 = vmatmul.mubr.bf16.gmra.mxu0 %v2430
          %v2579 = vpop.f32.mrf.mxu0
          %v2580 = vadd.f32 0.0, %v2579
          %v2581 = vpop.f32.mrf.mxu0
          %v2582 = vpop.f32.mrf.mxu0
          %v2583 = vadd.f32 0.0, %v2582
          %v2584 = vpop.f32.mrf.mxu0
          %2585 = vmatprep.mubr.bf16.mxu0 0
          %2586 = vmatmul.mubr.bf16.gmra.mxu0 %v2431
          %v2587 = vpop.f32.mrf.mxu0
          %v2588 = vadd.f32 0.0, %v2587
          %v2589 = vpop.f32.mrf.mxu0
          %v2590 = vpop.f32.mrf.mxu0
          %v2591 = vadd.f32 0.0, %v2590
          %v2592 = vpop.f32.mrf.mxu0
          %2593 = vmatprep.mubr.bf16.mxu0 0
          %2594 = vmatmul.mubr.bf16.gmra.mxu0 %v2432
          %v2595 = vpop.f32.mrf.mxu0
          %v2596 = vadd.f32 0.0, %v2595
          %v2597 = vpop.f32.mrf.mxu0
          %v2598 = vpop.f32.mrf.mxu0
          %v2599 = vadd.f32 0.0, %v2598
          %v2600 = vpop.f32.mrf.mxu0
          %2601 = vmatprep.mubr.bf16.mxu0 0
          %2602 = vmatmul.mubr.bf16.gmra.mxu0 %v2433
          %v2603 = vpop.f32.mrf.mxu0
          %v2604 = vadd.f32 0.0, %v2603
          %v2605 = vpop.f32.mrf.mxu0
          %v2606 = vpop.f32.mrf.mxu0
          %v2607 = vadd.f32 0.0, %v2606
          %v2608 = vpop.f32.mrf.mxu0
          %2609 = vmatprep.mubr.bf16.mxu0 0
          %2610 = vmatmul.mubr.bf16.gmra.mxu0 %v2434
          %v2611 = vpop.f32.mrf.mxu0
          %v2612 = vadd.f32 0.0, %v2611
          %v2613 = vpop.f32.mrf.mxu0
          %v2614 = vpop.f32.mrf.mxu0
          %v2615 = vadd.f32 0.0, %v2614
          %v2616 = vpop.f32.mrf.mxu0
          %2617 = vmatprep.mubr.bf16.mxu0 0
          %2618 = vmatmul.mubr.bf16.gmra.mxu0 %v2435
          %v2619 = vpop.f32.mrf.mxu0
          %v2620 = vadd.f32 0.0, %v2619
          %v2621 = vpop.f32.mrf.mxu0
          %v2622 = vpop.f32.mrf.mxu0
          %v2623 = vadd.f32 0.0, %v2622
          %v2624 = vpop.f32.mrf.mxu0
          %2625 = vmatprep.mubr.bf16.mxu0 0
          %2626 = vmatmul.mubr.bf16.gmra.mxu0 %v2436
          %v2627 = vpop.f32.mrf.mxu0
          %v2628 = vadd.f32 0.0, %v2627
          %v2629 = vpop.f32.mrf.mxu0
          %v2630 = vpop.f32.mrf.mxu0
          %v2631 = vadd.f32 0.0, %v2630
          %v2632 = vpop.f32.mrf.mxu0
          %2633 = vmatprep.mubr.bf16.mxu0 0
          %2634 = vmatmul.mubr.bf16.gmra.mxu0 %v2437
          %v2635 = vpop.f32.mrf.mxu0
          %v2636 = vadd.f32 0.0, %v2635
          %v2637 = vpop.f32.mrf.mxu0
          %v2638 = vpop.f32.mrf.mxu0
          %v2639 = vadd.f32 0.0, %v2638
          %v2640 = vpop.f32.mrf.mxu0
          %2641 = vmatprep.mubr.bf16.mxu0 0
          %2642 = vmatmul.mubr.bf16.gmra.mxu0 %v2438
          %v2643 = vpop.f32.mrf.mxu0
          %v2644 = vadd.f32 0.0, %v2643
          %v2645 = vpop.f32.mrf.mxu0
          %v2646 = vpop.f32.mrf.mxu0
          %v2647 = vadd.f32 0.0, %v2646
          %v2648 = vpop.f32.mrf.mxu0
          %2649 = vmatprep.mubr.bf16.mxu0 0
          %2650 = vmatmul.mubr.bf16.gmra.mxu0 %v2439
          %v2651 = vpop.f32.mrf.mxu0
          %v2652 = vadd.f32 0.0, %v2651
          %v2653 = vpop.f32.mrf.mxu0
          %v2654 = vpop.f32.mrf.mxu0
          %v2655 = vadd.f32 0.0, %v2654
          %v2656 = vpop.f32.mrf.mxu0
          %2657 = vmatprep.mubr.bf16.mxu0 0
          %2658 = vmatmul.mubr.bf16.gmra.mxu0 %v2440
          %v2659 = vpop.f32.mrf.mxu0
          %v2660 = vadd.f32 0.0, %v2659
          %v2661 = vpop.f32.mrf.mxu0
          %v2662 = vpop.f32.mrf.mxu0
          %v2663 = vadd.f32 0.0, %v2662
          %v2664 = vpop.f32.mrf.mxu0
          %2665 = vdwg.mxu0
          %v2666 = vadd.f32 %v2277, %v2540
          %v2667 = vadd.f32 %v2278, %v2543
          %v2668 = vadd.f32 %v2279, %v2548
          %v2669 = vadd.f32 %v2280, %v2551
          %v2670 = vadd.f32 %v2281, %v2556
          %v2671 = vadd.f32 %v2282, %v2559
          %v2672 = vadd.f32 %v2283, %v2564
          %v2673 = vadd.f32 %v2284, %v2567
          %v2674 = vadd.f32 %v2285, %v2572
          %v2675 = vadd.f32 %v2286, %v2575
          %v2676 = vadd.f32 %v2287, %v2580
          %v2677 = vadd.f32 %v2288, %v2583
          %v2678 = vadd.f32 %v2289, %v2588
          %v2679 = vadd.f32 %v2290, %v2591
          %v2680 = vadd.f32 %v2291, %v2596
          %v2681 = vadd.f32 %v2292, %v2599
          %v2682 = vadd.f32 %v2293, %v2604
          %v2683 = vadd.f32 %v2294, %v2607
          %v2684 = vadd.f32 %v2295, %v2612
          %v2685 = vadd.f32 %v2296, %v2615
          %v2686 = vadd.f32 %v2297, %v2620
          %v2687 = vadd.f32 %v2298, %v2623
          %v2688 = vadd.f32 %v2299, %v2628
          %v2689 = vadd.f32 %v2300, %v2631
          %v2690 = vadd.f32 %v2301, %v2636
          %v2691 = vadd.f32 %v2302, %v2639
          %v2692 = vadd.f32 %v2303, %v2644
          %v2693 = vadd.f32 %v2304, %v2647
          %v2694 = vadd.f32 %v2305, %v2652
          %v2695 = vadd.f32 %v2306, %v2655
          %v2696 = vadd.f32 %v2307, %v2660
          %v2697 = vadd.f32 %v2308, %v2663
          %s2698 = sadd.s32 12, %s429
          %s2699 = smul.addr %s2698, 4
          %s2700 = scalar_lea.vmem %s226, %s2699
          %v2701 = vld [vmem:[%s2700] sm:$0xf]
          %v2702 = vld [vmem:[%s2700 + $0x4] sm:$0xf]
          %v2703 = vld [vmem:[%s2700 + $0x8] sm:$0xf]
          %v2704 = vld [vmem:[%s2700 + $0xc] sm:$0xf]
          %v2705 = vld [vmem:[%s2700 + $0x10] sm:$0xf]
          %v2706 = vld [vmem:[%s2700 + $0x14] sm:$0xf]
          %v2707 = vld [vmem:[%s2700 + $0x18] sm:$0xf]
          %v2708 = vld [vmem:[%s2700 + $0x1c] sm:$0xf]
          %v2709 = vld [vmem:[%s2700 + $0x20] sm:$0xf]
          %v2710 = vld [vmem:[%s2700 + $0x24] sm:$0xf]
          %v2711 = vld [vmem:[%s2700 + $0x28] sm:$0xf]
          %v2712 = vld [vmem:[%s2700 + $0x2c] sm:$0xf]
          %v2713 = vld [vmem:[%s2700 + $0x30] sm:$0xf]
          %v2714 = vld [vmem:[%s2700 + $0x34] sm:$0xf]
          %v2715 = vld [vmem:[%s2700 + $0x38] sm:$0xf]
          %v2716 = vld [vmem:[%s2700 + $0x3c] sm:$0xf]
          %v2717 = vld [vmem:[%s2700 + $0x40] sm:$0xf]
          %v2718 = vld [vmem:[%s2700 + $0x44] sm:$0xf]
          %v2719 = vld [vmem:[%s2700 + $0x48] sm:$0xf]
          %v2720 = vld [vmem:[%s2700 + $0x4c] sm:$0xf]
          %v2721 = vld [vmem:[%s2700 + $0x50] sm:$0xf]
          %v2722 = vld [vmem:[%s2700 + $0x54] sm:$0xf]
          %v2723 = vld [vmem:[%s2700 + $0x58] sm:$0xf]
          %v2724 = vld [vmem:[%s2700 + $0x5c] sm:$0xf]
          %v2725 = vld [vmem:[%s2700 + $0x60] sm:$0xf]
          %v2726 = vld [vmem:[%s2700 + $0x64] sm:$0xf]
          %v2727 = vld [vmem:[%s2700 + $0x68] sm:$0xf]
          %v2728 = vld [vmem:[%s2700 + $0x6c] sm:$0xf]
          %v2729 = vld [vmem:[%s2700 + $0x70] sm:$0xf]
          %v2730 = vld [vmem:[%s2700 + $0x74] sm:$0xf]
          %v2731 = vld [vmem:[%s2700 + $0x78] sm:$0xf]
          %v2732 = vld [vmem:[%s2700 + $0x7c] sm:$0xf]
          %s2733 = scalar_lea.vmem %s1, 384
          %v2734 = vld [vmem:[%s2733] sm:$0xf]
          %v2735 = vld [vmem:[%s2733 + $0x4] sm:$0xf]
          %v2736 = vld [vmem:[%s2733 + $0x8] sm:$0xf]
          %v2737 = vld [vmem:[%s2733 + $0xc] sm:$0xf]
          %v2738 = vld [vmem:[%s2733 + $0x10] sm:$0xf]
          %v2739 = vld [vmem:[%s2733 + $0x14] sm:$0xf]
          %v2740 = vld [vmem:[%s2733 + $0x18] sm:$0xf]
          %v2741 = vld [vmem:[%s2733 + $0x1c] sm:$0xf]
          %v2742 = vld [vmem:[%s2733 + $0x20] sm:$0xf]
          %v2743 = vld [vmem:[%s2733 + $0x24] sm:$0xf]
          %v2744 = vld [vmem:[%s2733 + $0x28] sm:$0xf]
          %v2745 = vld [vmem:[%s2733 + $0x2c] sm:$0xf]
          %v2746 = vld [vmem:[%s2733 + $0x30] sm:$0xf]
          %v2747 = vld [vmem:[%s2733 + $0x34] sm:$0xf]
          %v2748 = vld [vmem:[%s2733 + $0x38] sm:$0xf]
          %v2749 = vld [vmem:[%s2733 + $0x3c] sm:$0xf]
          %v2782 = vunpack.c.l.b16 %v2701
          %v2783 = vunpack.c.l.b16 %v2702
          %v2784 = vunpack.c.l.b16 %v2703
          %v2785 = vunpack.c.l.b16 %v2704
          %v2786 = vunpack.c.l.b16 %v2705
          %v2787 = vunpack.c.l.b16 %v2706
          %v2788 = vunpack.c.l.b16 %v2707
          %v2789 = vunpack.c.l.b16 %v2708
          %v2790 = vunpack.c.l.b16 %v2709
          %v2791 = vunpack.c.l.b16 %v2710
          %v2792 = vunpack.c.l.b16 %v2711
          %v2793 = vunpack.c.l.b16 %v2712
          %v2794 = vunpack.c.l.b16 %v2713
          %v2795 = vunpack.c.l.b16 %v2714
          %v2796 = vunpack.c.l.b16 %v2715
          %v2797 = vunpack.c.l.b16 %v2716
          %v2798 = vunpack.c.l.b16 %v2717
          %v2799 = vunpack.c.l.b16 %v2718
          %v2800 = vunpack.c.l.b16 %v2719
          %v2801 = vunpack.c.l.b16 %v2720
          %v2802 = vunpack.c.l.b16 %v2721
          %v2803 = vunpack.c.l.b16 %v2722
          %v2804 = vunpack.c.l.b16 %v2723
          %v2805 = vunpack.c.l.b16 %v2724
          %v2806 = vunpack.c.l.b16 %v2725
          %v2807 = vunpack.c.l.b16 %v2726
          %v2808 = vunpack.c.l.b16 %v2727
          %v2809 = vunpack.c.l.b16 %v2728
          %v2810 = vunpack.c.l.b16 %v2729
          %v2811 = vunpack.c.l.b16 %v2730
          %v2812 = vunpack.c.l.b16 %v2731
          %v2813 = vunpack.c.l.b16 %v2732
          %v2814 = vpack.c.b16 %v2783, %v2782
          %v2815 = vpack.c.b16 %v2785, %v2784
          %v2816 = vpack.c.b16 %v2787, %v2786
          %v2817 = vpack.c.b16 %v2789, %v2788
          %v2818 = vpack.c.b16 %v2791, %v2790
          %v2819 = vpack.c.b16 %v2793, %v2792
          %v2820 = vpack.c.b16 %v2795, %v2794
          %v2821 = vpack.c.b16 %v2797, %v2796
          %v2822 = vpack.c.b16 %v2799, %v2798
          %v2823 = vpack.c.b16 %v2801, %v2800
          %v2824 = vpack.c.b16 %v2803, %v2802
          %v2825 = vpack.c.b16 %v2805, %v2804
          %v2826 = vpack.c.b16 %v2807, %v2806
          %v2827 = vpack.c.b16 %v2809, %v2808
          %v2828 = vpack.c.b16 %v2811, %v2810
          %v2829 = vpack.c.b16 %v2813, %v2812
          %v2862 = vunpack.c.l.b16 %v2734
          %v2863 = vunpack.c.l.b16 %v2735
          %v2864 = vunpack.c.l.b16 %v2736
          %v2865 = vunpack.c.l.b16 %v2737
          %v2866 = vunpack.c.l.b16 %v2738
          %v2867 = vunpack.c.l.b16 %v2739
          %v2868 = vunpack.c.l.b16 %v2740
          %v2869 = vunpack.c.l.b16 %v2741
          %v2870 = vunpack.c.l.b16 %v2742
          %v2871 = vunpack.c.l.b16 %v2743
          %v2872 = vunpack.c.l.b16 %v2744
          %v2873 = vunpack.c.l.b16 %v2745
          %v2874 = vunpack.c.l.b16 %v2746
          %v2875 = vunpack.c.l.b16 %v2747
          %v2876 = vunpack.c.l.b16 %v2748
          %v2877 = vunpack.c.l.b16 %v2749
          %v2878 = vpack.c.b16 %v2863, %v2862
          %v2879 = vpack.c.b16 %v2865, %v2864
          %v2880 = vpack.c.b16 %v2867, %v2866
          %v2881 = vpack.c.b16 %v2869, %v2868
          %v2882 = vpack.c.b16 %v2871, %v2870
          %v2883 = vpack.c.b16 %v2873, %v2872
          %v2884 = vpack.c.b16 %v2875, %v2874
          %v2885 = vpack.c.b16 %v2877, %v2876
          %2894 = vmatprep.subr.bf16.mxu0 0
          %2895 = vmatpush1.bf16.msra.mxu0 %v2885
          %2896 = vmatprep.subr.bf16.mxu0 0
          %2897 = vmatpush1.bf16.msra.mxu0 %v2884
          %2898 = vmatprep.subr.bf16.mxu0 0
          %2899 = vmatpush1.bf16.msra.mxu0 %v2883
          %2900 = vmatprep.subr.bf16.mxu0 0
          %2901 = vmatpush1.bf16.msra.mxu0 %v2882
          %2902 = vmatprep.subr.bf16.mxu0 0
          %2903 = vmatpush1.bf16.msra.mxu0 %v2881
          %2904 = vmatprep.subr.bf16.mxu0 0
          %2905 = vmatpush1.bf16.msra.mxu0 %v2880
          %2906 = vmatprep.subr.bf16.mxu0 0
          %2907 = vmatpush1.bf16.msra.mxu0 %v2879
          %2908 = vmatprep.subr.bf16.mxu0 0
          %2909 = vmatpush1.bf16.msra.mxu0 %v2878
          %2910 = vmatprep.subr.bf16.mxu0 0
          %2911 = vmatpush2.bf16.msra.mxu0 0
          %2912 = vmatprep.subr.bf16.mxu0 0
          %2913 = vmatpush2.bf16.msra.mxu0 0
          %2914 = vmatprep.subr.bf16.mxu0 0
          %2915 = vmatpush2.bf16.msra.mxu0 0
          %2916 = vmatprep.subr.bf16.mxu0 0
          %2917 = vmatpush2.bf16.msra.mxu0 0
          %2918 = vmatprep.subr.bf16.mxu0 0
          %2919 = vmatpush2.bf16.msra.mxu0 0
          %2920 = vmatprep.subr.bf16.mxu0 0
          %2921 = vmatpush2.bf16.msra.mxu0 0
          %2922 = vmatprep.subr.bf16.mxu0 0
          %2923 = vmatpush2.bf16.msra.mxu0 0
          %2924 = vmatprep.subr.bf16.mxu0 0
          %2925 = vmatpush2.bf16.msra.mxu0 0
          %2926 = vmatprep.mubr.bf16.mxu0 0
          %2927 = vmatmul.mubr.bf16.gmra.mxu0 %v2814
          %v2928 = vpop.f32.mrf.mxu0
          %v2929 = vadd.f32 0.0, %v2928
          %v2930 = vpop.f32.mrf.mxu0
          %v2931 = vpop.f32.mrf.mxu0
          %v2932 = vadd.f32 0.0, %v2931
          %v2933 = vpop.f32.mrf.mxu0
          %2934 = vmatprep.mubr.bf16.mxu0 0
          %2935 = vmatmul.mubr.bf16.gmra.mxu0 %v2815
          %v2936 = vpop.f32.mrf.mxu0
          %v2937 = vadd.f32 0.0, %v2936
          %v2938 = vpop.f32.mrf.mxu0
          %v2939 = vpop.f32.mrf.mxu0
          %v2940 = vadd.f32 0.0, %v2939
          %v2941 = vpop.f32.mrf.mxu0
          %2942 = vmatprep.mubr.bf16.mxu0 0
          %2943 = vmatmul.mubr.bf16.gmra.mxu0 %v2816
          %v2944 = vpop.f32.mrf.mxu0
          %v2945 = vadd.f32 0.0, %v2944
          %v2946 = vpop.f32.mrf.mxu0
          %v2947 = vpop.f32.mrf.mxu0
          %v2948 = vadd.f32 0.0, %v2947
          %v2949 = vpop.f32.mrf.mxu0
          %2950 = vmatprep.mubr.bf16.mxu0 0
          %2951 = vmatmul.mubr.bf16.gmra.mxu0 %v2817
          %v2952 = vpop.f32.mrf.mxu0
          %v2953 = vadd.f32 0.0, %v2952
          %v2954 = vpop.f32.mrf.mxu0
          %v2955 = vpop.f32.mrf.mxu0
          %v2956 = vadd.f32 0.0, %v2955
          %v2957 = vpop.f32.mrf.mxu0
          %2958 = vmatprep.mubr.bf16.mxu0 0
          %2959 = vmatmul.mubr.bf16.gmra.mxu0 %v2818
          %v2960 = vpop.f32.mrf.mxu0
          %v2961 = vadd.f32 0.0, %v2960
          %v2962 = vpop.f32.mrf.mxu0
          %v2963 = vpop.f32.mrf.mxu0
          %v2964 = vadd.f32 0.0, %v2963
          %v2965 = vpop.f32.mrf.mxu0
          %2966 = vmatprep.mubr.bf16.mxu0 0
          %2967 = vmatmul.mubr.bf16.gmra.mxu0 %v2819
          %v2968 = vpop.f32.mrf.mxu0
          %v2969 = vadd.f32 0.0, %v2968
          %v2970 = vpop.f32.mrf.mxu0
          %v2971 = vpop.f32.mrf.mxu0
          %v2972 = vadd.f32 0.0, %v2971
          %v2973 = vpop.f32.mrf.mxu0
          %2974 = vmatprep.mubr.bf16.mxu0 0
          %2975 = vmatmul.mubr.bf16.gmra.mxu0 %v2820
          %v2976 = vpop.f32.mrf.mxu0
          %v2977 = vadd.f32 0.0, %v2976
          %v2978 = vpop.f32.mrf.mxu0
          %v2979 = vpop.f32.mrf.mxu0
          %v2980 = vadd.f32 0.0, %v2979
          %v2981 = vpop.f32.mrf.mxu0
          %2982 = vmatprep.mubr.bf16.mxu0 0
          %2983 = vmatmul.mubr.bf16.gmra.mxu0 %v2821
          %v2984 = vpop.f32.mrf.mxu0
          %v2985 = vadd.f32 0.0, %v2984
          %v2986 = vpop.f32.mrf.mxu0
          %v2987 = vpop.f32.mrf.mxu0
          %v2988 = vadd.f32 0.0, %v2987
          %v2989 = vpop.f32.mrf.mxu0
          %2990 = vmatprep.mubr.bf16.mxu0 0
          %2991 = vmatmul.mubr.bf16.gmra.mxu0 %v2822
          %v2992 = vpop.f32.mrf.mxu0
          %v2993 = vadd.f32 0.0, %v2992
          %v2994 = vpop.f32.mrf.mxu0
          %v2995 = vpop.f32.mrf.mxu0
          %v2996 = vadd.f32 0.0, %v2995
          %v2997 = vpop.f32.mrf.mxu0
          %2998 = vmatprep.mubr.bf16.mxu0 0
          %2999 = vmatmul.mubr.bf16.gmra.mxu0 %v2823
          %v3000 = vpop.f32.mrf.mxu0
          %v3001 = vadd.f32 0.0, %v3000
          %v3002 = vpop.f32.mrf.mxu0
          %v3003 = vpop.f32.mrf.mxu0
          %v3004 = vadd.f32 0.0, %v3003
          %v3005 = vpop.f32.mrf.mxu0
          %3006 = vmatprep.mubr.bf16.mxu0 0
          %3007 = vmatmul.mubr.bf16.gmra.mxu0 %v2824
          %v3008 = vpop.f32.mrf.mxu0
          %v3009 = vadd.f32 0.0, %v3008
          %v3010 = vpop.f32.mrf.mxu0
          %v3011 = vpop.f32.mrf.mxu0
          %v3012 = vadd.f32 0.0, %v3011
          %v3013 = vpop.f32.mrf.mxu0
          %3014 = vmatprep.mubr.bf16.mxu0 0
          %3015 = vmatmul.mubr.bf16.gmra.mxu0 %v2825
          %v3016 = vpop.f32.mrf.mxu0
          %v3017 = vadd.f32 0.0, %v3016
          %v3018 = vpop.f32.mrf.mxu0
          %v3019 = vpop.f32.mrf.mxu0
          %v3020 = vadd.f32 0.0, %v3019
          %v3021 = vpop.f32.mrf.mxu0
          %3022 = vmatprep.mubr.bf16.mxu0 0
          %3023 = vmatmul.mubr.bf16.gmra.mxu0 %v2826
          %v3024 = vpop.f32.mrf.mxu0
          %v3025 = vadd.f32 0.0, %v3024
          %v3026 = vpop.f32.mrf.mxu0
          %v3027 = vpop.f32.mrf.mxu0
          %v3028 = vadd.f32 0.0, %v3027
          %v3029 = vpop.f32.mrf.mxu0
          %3030 = vmatprep.mubr.bf16.mxu0 0
          %3031 = vmatmul.mubr.bf16.gmra.mxu0 %v2827
          %v3032 = vpop.f32.mrf.mxu0
          %v3033 = vadd.f32 0.0, %v3032
          %v3034 = vpop.f32.mrf.mxu0
          %v3035 = vpop.f32.mrf.mxu0
          %v3036 = vadd.f32 0.0, %v3035
          %v3037 = vpop.f32.mrf.mxu0
          %3038 = vmatprep.mubr.bf16.mxu0 0
          %3039 = vmatmul.mubr.bf16.gmra.mxu0 %v2828
          %v3040 = vpop.f32.mrf.mxu0
          %v3041 = vadd.f32 0.0, %v3040
          %v3042 = vpop.f32.mrf.mxu0
          %v3043 = vpop.f32.mrf.mxu0
          %v3044 = vadd.f32 0.0, %v3043
          %v3045 = vpop.f32.mrf.mxu0
          %3046 = vmatprep.mubr.bf16.mxu0 0
          %3047 = vmatmul.mubr.bf16.gmra.mxu0 %v2829
          %v3048 = vpop.f32.mrf.mxu0
          %v3049 = vadd.f32 0.0, %v3048
          %v3050 = vpop.f32.mrf.mxu0
          %v3051 = vpop.f32.mrf.mxu0
          %v3052 = vadd.f32 0.0, %v3051
          %v3053 = vpop.f32.mrf.mxu0
          %3054 = vdwg.mxu0
          %v3055 = vadd.f32 %v2666, %v2929
          %v3056 = vadd.f32 %v2667, %v2932
          %v3057 = vadd.f32 %v2668, %v2937
          %v3058 = vadd.f32 %v2669, %v2940
          %v3059 = vadd.f32 %v2670, %v2945
          %v3060 = vadd.f32 %v2671, %v2948
          %v3061 = vadd.f32 %v2672, %v2953
          %v3062 = vadd.f32 %v2673, %v2956
          %v3063 = vadd.f32 %v2674, %v2961
          %v3064 = vadd.f32 %v2675, %v2964
          %v3065 = vadd.f32 %v2676, %v2969
          %v3066 = vadd.f32 %v2677, %v2972
          %v3067 = vadd.f32 %v2678, %v2977
          %v3068 = vadd.f32 %v2679, %v2980
          %v3069 = vadd.f32 %v2680, %v2985
          %v3070 = vadd.f32 %v2681, %v2988
          %v3071 = vadd.f32 %v2682, %v2993
          %v3072 = vadd.f32 %v2683, %v2996
          %v3073 = vadd.f32 %v2684, %v3001
          %v3074 = vadd.f32 %v2685, %v3004
          %v3075 = vadd.f32 %v2686, %v3009
          %v3076 = vadd.f32 %v2687, %v3012
          %v3077 = vadd.f32 %v2688, %v3017
          %v3078 = vadd.f32 %v2689, %v3020
          %v3079 = vadd.f32 %v2690, %v3025
          %v3080 = vadd.f32 %v2691, %v3028
          %v3081 = vadd.f32 %v2692, %v3033
          %v3082 = vadd.f32 %v2693, %v3036
          %v3083 = vadd.f32 %v2694, %v3041
          %v3084 = vadd.f32 %v2695, %v3044
          %v3085 = vadd.f32 %v2696, %v3049
          %v3086 = vadd.f32 %v2697, %v3052
          %v3088 = vlaneseq
          %v3089 = vshrl.u32 %v3088, 7
          %v3090 = vsub.s32 0, %v3089
          %v3091 = vrot.slane %v421, %v3090
          %v3093 = vadd.f32 %v3055, %v3091
          %v3094 = vadd.f32 %v3056, %v3091
          %v3095 = vadd.f32 %v3057, %v3091
          %v3096 = vadd.f32 %v3058, %v3091
          %v3097 = vadd.f32 %v3059, %v3091
          %v3098 = vadd.f32 %v3060, %v3091
          %v3099 = vadd.f32 %v3061, %v3091
          %v3100 = vadd.f32 %v3062, %v3091
          %v3101 = vadd.f32 %v3063, %v3091
          %v3102 = vadd.f32 %v3064, %v3091
          %v3103 = vadd.f32 %v3065, %v3091
          %v3104 = vadd.f32 %v3066, %v3091
          %v3105 = vadd.f32 %v3067, %v3091
          %v3106 = vadd.f32 %v3068, %v3091
          %v3107 = vadd.f32 %v3069, %v3091
          %v3108 = vadd.f32 %v3070, %v3091
          %v3109 = vadd.f32 %v3071, %v3091
          %v3110 = vadd.f32 %v3072, %v3091
          %v3111 = vadd.f32 %v3073, %v3091
          %v3112 = vadd.f32 %v3074, %v3091
          %v3113 = vadd.f32 %v3075, %v3091
          %v3114 = vadd.f32 %v3076, %v3091
          %v3115 = vadd.f32 %v3077, %v3091
          %v3116 = vadd.f32 %v3078, %v3091
          %v3117 = vadd.f32 %v3079, %v3091
          %v3118 = vadd.f32 %v3080, %v3091
          %v3119 = vadd.f32 %v3081, %v3091
          %v3120 = vadd.f32 %v3082, %v3091
          %v3121 = vadd.f32 %v3083, %v3091
          %v3122 = vadd.f32 %v3084, %v3091
          %v3123 = vadd.f32 %v3085, %v3091
          %v3124 = vadd.f32 %v3086, %v3091
          %v3125 = vmul.f32 %v3093, 0.2
          %v3126 = vmul.f32 %v3094, 0.2
          %v3127 = vmul.f32 %v3095, 0.2
          %v3128 = vmul.f32 %v3096, 0.2
          %v3129 = vmul.f32 %v3097, 0.2
          %v3130 = vmul.f32 %v3098, 0.2
          %v3131 = vmul.f32 %v3099, 0.2
          %v3132 = vmul.f32 %v3100, 0.2
          %v3133 = vmul.f32 %v3101, 0.2
          %v3134 = vmul.f32 %v3102, 0.2
          %v3135 = vmul.f32 %v3103, 0.2
          %v3136 = vmul.f32 %v3104, 0.2
          %v3137 = vmul.f32 %v3105, 0.2
          %v3138 = vmul.f32 %v3106, 0.2
          %v3139 = vmul.f32 %v3107, 0.2
          %v3140 = vmul.f32 %v3108, 0.2
          %v3141 = vmul.f32 %v3109, 0.2
          %v3142 = vmul.f32 %v3110, 0.2
          %v3143 = vmul.f32 %v3111, 0.2
          %v3144 = vmul.f32 %v3112, 0.2
          %v3145 = vmul.f32 %v3113, 0.2
          %v3146 = vmul.f32 %v3114, 0.2
          %v3147 = vmul.f32 %v3115, 0.2
          %v3148 = vmul.f32 %v3116, 0.2
          %v3149 = vmul.f32 %v3117, 0.2
          %v3150 = vmul.f32 %v3118, 0.2
          %v3151 = vmul.f32 %v3119, 0.2
          %v3152 = vmul.f32 %v3120, 0.2
          %v3153 = vmul.f32 %v3121, 0.2
          %v3154 = vmul.f32 %v3122, 0.2
          %v3155 = vmul.f32 %v3123, 0.2
          %v3156 = vmul.f32 %v3124, 0.2
          %v3157 = vmax.f32 %v3093, %v3125
          %v3158 = vmax.f32 %v3094, %v3126
          %v3159 = vmax.f32 %v3095, %v3127
          %v3160 = vmax.f32 %v3096, %v3128
          %v3161 = vmax.f32 %v3097, %v3129
          %v3162 = vmax.f32 %v3098, %v3130
          %v3163 = vmax.f32 %v3099, %v3131
          %v3164 = vmax.f32 %v3100, %v3132
          %v3165 = vmax.f32 %v3101, %v3133
          %v3166 = vmax.f32 %v3102, %v3134
          %v3167 = vmax.f32 %v3103, %v3135
          %v3168 = vmax.f32 %v3104, %v3136
          %v3169 = vmax.f32 %v3105, %v3137
          %v3170 = vmax.f32 %v3106, %v3138
          %v3171 = vmax.f32 %v3107, %v3139
          %v3172 = vmax.f32 %v3108, %v3140
          %v3173 = vmax.f32 %v3109, %v3141
          %v3174 = vmax.f32 %v3110, %v3142
          %v3175 = vmax.f32 %v3111, %v3143
          %v3176 = vmax.f32 %v3112, %v3144
          %v3177 = vmax.f32 %v3113, %v3145
          %v3178 = vmax.f32 %v3114, %v3146
          %v3179 = vmax.f32 %v3115, %v3147
          %v3180 = vmax.f32 %v3116, %v3148
          %v3181 = vmax.f32 %v3117, %v3149
          %v3182 = vmax.f32 %v3118, %v3150
          %v3183 = vmax.f32 %v3119, %v3151
          %v3184 = vmax.f32 %v3120, %v3152
          %v3185 = vmax.f32 %v3121, %v3153
          %v3186 = vmax.f32 %v3122, %v3154
          %v3187 = vmax.f32 %v3123, %v3155
          %v3188 = vmax.f32 %v3124, %v3156
          %v3189 = vpack.c.bf16 %v3158, %v3157
          %v3190 = vpack.c.bf16 %v3160, %v3159
          %v3191 = vpack.c.bf16 %v3162, %v3161
          %v3192 = vpack.c.bf16 %v3164, %v3163
          %v3193 = vpack.c.bf16 %v3166, %v3165
          %v3194 = vpack.c.bf16 %v3168, %v3167
          %v3195 = vpack.c.bf16 %v3170, %v3169
          %v3196 = vpack.c.bf16 %v3172, %v3171
          %v3197 = vpack.c.bf16 %v3174, %v3173
          %v3198 = vpack.c.bf16 %v3176, %v3175
          %v3199 = vpack.c.bf16 %v3178, %v3177
          %v3200 = vpack.c.bf16 %v3180, %v3179
          %v3201 = vpack.c.bf16 %v3182, %v3181
          %v3202 = vpack.c.bf16 %v3184, %v3183
          %v3203 = vpack.c.bf16 %v3186, %v3185
          %v3204 = vpack.c.bf16 %v3188, %v3187
          %v3221 = vunpack.c.l.b16 %v3189
          %v3222 = vunpack.c.h.b16 %v3189
          %v3223 = vunpack.c.l.b16 %v3190
          %v3224 = vunpack.c.h.b16 %v3190
          %v3225 = vunpack.c.l.b16 %v3191
          %v3226 = vunpack.c.h.b16 %v3191
          %v3227 = vunpack.c.l.b16 %v3192
          %v3228 = vunpack.c.h.b16 %v3192
          %v3229 = vunpack.c.l.b16 %v3193
          %v3230 = vunpack.c.h.b16 %v3193
          %v3231 = vunpack.c.l.b16 %v3194
          %v3232 = vunpack.c.h.b16 %v3194
          %v3233 = vunpack.c.l.b16 %v3195
          %v3234 = vunpack.c.h.b16 %v3195
          %v3235 = vunpack.c.l.b16 %v3196
          %v3236 = vunpack.c.h.b16 %v3196
          %v3237 = vunpack.c.l.b16 %v3197
          %v3238 = vunpack.c.h.b16 %v3197
          %v3239 = vunpack.c.l.b16 %v3198
          %v3240 = vunpack.c.h.b16 %v3198
          %v3241 = vunpack.c.l.b16 %v3199
          %v3242 = vunpack.c.h.b16 %v3199
          %v3243 = vunpack.c.l.b16 %v3200
          %v3244 = vunpack.c.h.b16 %v3200
          %v3245 = vunpack.c.l.b16 %v3201
          %v3246 = vunpack.c.h.b16 %v3201
          %v3247 = vunpack.c.l.b16 %v3202
          %v3248 = vunpack.c.h.b16 %v3202
          %v3249 = vunpack.c.l.b16 %v3203
          %v3250 = vunpack.c.h.b16 %v3203
          %v3251 = vunpack.c.l.b16 %v3204
          %v3252 = vunpack.c.h.b16 %v3204
          %v3253 = vpack.c.b16 %v3221, %v3221
          %v3254 = vpack.c.b16 %v3222, %v3222
          %v3255 = vpack.c.b16 %v3223, %v3223
          %v3256 = vpack.c.b16 %v3224, %v3224
          %v3257 = vpack.c.b16 %v3225, %v3225
          %v3258 = vpack.c.b16 %v3226, %v3226
          %v3259 = vpack.c.b16 %v3227, %v3227
          %v3260 = vpack.c.b16 %v3228, %v3228
          %v3261 = vpack.c.b16 %v3229, %v3229
          %v3262 = vpack.c.b16 %v3230, %v3230
          %v3263 = vpack.c.b16 %v3231, %v3231
          %v3264 = vpack.c.b16 %v3232, %v3232
          %v3265 = vpack.c.b16 %v3233, %v3233
          %v3266 = vpack.c.b16 %v3234, %v3234
          %v3267 = vpack.c.b16 %v3235, %v3235
          %v3268 = vpack.c.b16 %v3236, %v3236
          %v3269 = vpack.c.b16 %v3237, %v3237
          %v3270 = vpack.c.b16 %v3238, %v3238
          %v3271 = vpack.c.b16 %v3239, %v3239
          %v3272 = vpack.c.b16 %v3240, %v3240
          %v3273 = vpack.c.b16 %v3241, %v3241
          %v3274 = vpack.c.b16 %v3242, %v3242
          %v3275 = vpack.c.b16 %v3243, %v3243
          %v3276 = vpack.c.b16 %v3244, %v3244
          %v3277 = vpack.c.b16 %v3245, %v3245
          %v3278 = vpack.c.b16 %v3246, %v3246
          %v3279 = vpack.c.b16 %v3247, %v3247
          %v3280 = vpack.c.b16 %v3248, %v3248
          %v3281 = vpack.c.b16 %v3249, %v3249
          %v3282 = vpack.c.b16 %v3250, %v3250
          %v3283 = vpack.c.b16 %v3251, %v3251
          %v3284 = vpack.c.b16 %v3252, %v3252
          %vm3285 = vcmask 1044484
          %vm3286 = vmor %vm275, %vm3285
          %v3287 = vrot.slane %v3253, 7
          %v3288 = vrot.slane %v3287, 4
          %v3289 = vrot.slane %v3254, 7
          %v3290 = vsel %vm3286, %v3288, %v3289
          %v3291 = vrot.slane %v3255, 7
          %v3292 = vrot.slane %v3291, 4
          %v3293 = vrot.slane %v3256, 7
          %v3294 = vsel %vm3286, %v3292, %v3293
          %v3295 = vrot.slane %v3257, 7
          %v3296 = vrot.slane %v3295, 4
          %v3297 = vrot.slane %v3258, 7
          %v3298 = vsel %vm3286, %v3296, %v3297
          %v3299 = vrot.slane %v3259, 7
          %v3300 = vrot.slane %v3299, 4
          %v3301 = vrot.slane %v3260, 7
          %v3302 = vsel %vm3286, %v3300, %v3301
          %v3303 = vrot.slane %v3261, 7
          %v3304 = vrot.slane %v3303, 4
          %v3305 = vrot.slane %v3262, 7
          %v3306 = vsel %vm3286, %v3304, %v3305
          %v3307 = vrot.slane %v3263, 7
          %v3308 = vrot.slane %v3307, 4
          %v3309 = vrot.slane %v3264, 7
          %v3310 = vsel %vm3286, %v3308, %v3309
          %v3311 = vrot.slane %v3265, 7
          %v3312 = vrot.slane %v3311, 4
          %v3313 = vrot.slane %v3266, 7
          %v3314 = vsel %vm3286, %v3312, %v3313
          %v3315 = vrot.slane %v3267, 7
          %v3316 = vrot.slane %v3315, 4
          %v3317 = vrot.slane %v3268, 7
          %v3318 = vsel %vm3286, %v3316, %v3317
          %v3319 = vrot.slane %v3269, 7
          %v3320 = vrot.slane %v3319, 4
          %v3321 = vrot.slane %v3270, 7
          %v3322 = vsel %vm3286, %v3320, %v3321
          %v3323 = vrot.slane %v3271, 7
          %v3324 = vrot.slane %v3323, 4
          %v3325 = vrot.slane %v3272, 7
          %v3326 = vsel %vm3286, %v3324, %v3325
          %v3327 = vrot.slane %v3273, 7
          %v3328 = vrot.slane %v3327, 4
          %v3329 = vrot.slane %v3274, 7
          %v3330 = vsel %vm3286, %v3328, %v3329
          %v3331 = vrot.slane %v3275, 7
          %v3332 = vrot.slane %v3331, 4
          %v3333 = vrot.slane %v3276, 7
          %v3334 = vsel %vm3286, %v3332, %v3333
          %v3335 = vrot.slane %v3277, 7
          %v3336 = vrot.slane %v3335, 4
          %v3337 = vrot.slane %v3278, 7
          %v3338 = vsel %vm3286, %v3336, %v3337
          %v3339 = vrot.slane %v3279, 7
          %v3340 = vrot.slane %v3339, 4
          %v3341 = vrot.slane %v3280, 7
          %v3342 = vsel %vm3286, %v3340, %v3341
          %v3343 = vrot.slane %v3281, 7
          %v3344 = vrot.slane %v3343, 4
          %v3345 = vrot.slane %v3282, 7
          %v3346 = vsel %vm3286, %v3344, %v3345
          %v3347 = vrot.slane %v3283, 7
          %v3348 = vrot.slane %v3347, 4
          %v3349 = vrot.slane %v3284, 7
          %v3350 = vsel %vm3286, %v3348, %v3349
          %s3383 = scalar_lea.vmem [#allocation2], 80
          %3384 = vst [vmem:[%s3383] sm:$0xe] %v3287
          %3385 = vst [vmem:[%s3383 + $0x14] sm:$0xf] %v3290
          %3386 = vst [vmem:[%s3383 + $0x28] sm:$0xe] %v3291
          %3387 = vst [vmem:[%s3383 + $0x3c] sm:$0xf] %v3294
          %3388 = vst [vmem:[%s3383 + $0x50] sm:$0xe] %v3295
          %3389 = vst [vmem:[%s3383 + $0x64] sm:$0xf] %v3298
          %3390 = vst [vmem:[%s3383 + $0x78] sm:$0xe] %v3299
          %3391 = vst [vmem:[%s3383 + $0x8c] sm:$0xf] %v3302
          %3392 = vst [vmem:[%s3383 + $0xa0] sm:$0xe] %v3303
          %3393 = vst [vmem:[%s3383 + $0xb4] sm:$0xf] %v3306
          %3394 = vst [vmem:[%s3383 + $0xc8] sm:$0xe] %v3307
          %3395 = vst [vmem:[%s3383 + $0xdc] sm:$0xf] %v3310
          %3396 = vst [vmem:[%s3383 + $0xf0] sm:$0xe] %v3311
          %3397 = vst [vmem:[%s3383 + $0x104] sm:$0xf] %v3314
          %3398 = vst [vmem:[%s3383 + $0x118] sm:$0xe] %v3315
          %3399 = vst [vmem:[%s3383 + $0x12c] sm:$0xf] %v3318
          %3400 = vst [vmem:[%s3383 + $0x140] sm:$0xe] %v3319
          %3401 = vst [vmem:[%s3383 + $0x154] sm:$0xf] %v3322
          %3402 = vst [vmem:[%s3383 + $0x168] sm:$0xe] %v3323
          %3403 = vst [vmem:[%s3383 + $0x17c] sm:$0xf] %v3326
          %3404 = vst [vmem:[%s3383 + $0x190] sm:$0xe] %v3327
          %3405 = vst [vmem:[%s3383 + $0x1a4] sm:$0xf] %v3330
          %3406 = vst [vmem:[%s3383 + $0x1b8] sm:$0xe] %v3331
          %3407 = vst [vmem:[%s3383 + $0x1cc] sm:$0xf] %v3334
          %3408 = vst [vmem:[%s3383 + $0x1e0] sm:$0xe] %v3335
          %3409 = vst [vmem:[%s3383 + $0x1f4] sm:$0xf] %v3338
          %3410 = vst [vmem:[%s3383 + $0x208] sm:$0xe] %v3339
          %3411 = vst [vmem:[%s3383 + $0x21c] sm:$0xf] %v3342
          %3412 = vst [vmem:[%s3383 + $0x230] sm:$0xe] %v3343
          %3413 = vst [vmem:[%s3383 + $0x244] sm:$0xf] %v3346
          %3414 = vst [vmem:[%s3383 + $0x258] sm:$0xe] %v3347
          %3415 = vst [vmem:[%s3383 + $0x26c] sm:$0xf] %v3350
          %vm3416 = vsmask.f32 4368
          %vm3417 = vmor %vm276, %vm3416
          %v3419 = vshrl.u32 %v3253, 16
          %v3421 = vrot.slane %v3419, 7
          %v3422 = vshll.u32 %v3253, 16
          %v3424 = vor.u32 %v3421, %v3422
          %v3425 = vrot.slane %v3421, 4
          %v3427 = vshrl.u32 %v3254, 16
          %v3429 = vrot.slane %v3427, 7
          %v3430 = vshll.u32 %v3254, 16
          %v3432 = vor.u32 %v3429, %v3430
          %v3433 = vsel %vm3417, %v3425, %v3432
          %v3435 = vshrl.u32 %v3255, 16
          %v3437 = vrot.slane %v3435, 7
          %v3438 = vshll.u32 %v3255, 16
          %v3440 = vor.u32 %v3437, %v3438
          %v3441 = vrot.slane %v3437, 4
          %v3443 = vshrl.u32 %v3256, 16
          %v3445 = vrot.slane %v3443, 7
          %v3446 = vshll.u32 %v3256, 16
          %v3448 = vor.u32 %v3445, %v3446
          %v3449 = vsel %vm3417, %v3441, %v3448
          %v3451 = vshrl.u32 %v3257, 16
          %v3453 = vrot.slane %v3451, 7
          %v3454 = vshll.u32 %v3257, 16
          %v3456 = vor.u32 %v3453, %v3454
          %v3457 = vrot.slane %v3453, 4
          %v3459 = vshrl.u32 %v3258, 16
          %v3461 = vrot.slane %v3459, 7
          %v3462 = vshll.u32 %v3258, 16
          %v3464 = vor.u32 %v3461, %v3462
          %v3465 = vsel %vm3417, %v3457, %v3464
          %v3467 = vshrl.u32 %v3259, 16
          %v3469 = vrot.slane %v3467, 7
          %v3470 = vshll.u32 %v3259, 16
          %v3472 = vor.u32 %v3469, %v3470
          %v3473 = vrot.slane %v3469, 4
          %v3475 = vshrl.u32 %v3260, 16
          %v3477 = vrot.slane %v3475, 7
          %v3478 = vshll.u32 %v3260, 16
          %v3480 = vor.u32 %v3477, %v3478
          %v3481 = vsel %vm3417, %v3473, %v3480
          %v3483 = vshrl.u32 %v3261, 16
          %v3485 = vrot.slane %v3483, 7
          %v3486 = vshll.u32 %v3261, 16
          %v3488 = vor.u32 %v3485, %v3486
          %v3489 = vrot.slane %v3485, 4
          %v3491 = vshrl.u32 %v3262, 16
          %v3493 = vrot.slane %v3491, 7
          %v3494 = vshll.u32 %v3262, 16
          %v3496 = vor.u32 %v3493, %v3494
          %v3497 = vsel %vm3417, %v3489, %v3496
          %v3499 = vshrl.u32 %v3263, 16
          %v3501 = vrot.slane %v3499, 7
          %v3502 = vshll.u32 %v3263, 16
          %v3504 = vor.u32 %v3501, %v3502
          %v3505 = vrot.slane %v3501, 4
          %v3507 = vshrl.u32 %v3264, 16
          %v3509 = vrot.slane %v3507, 7
          %v3510 = vshll.u32 %v3264, 16
          %v3512 = vor.u32 %v3509, %v3510
          %v3513 = vsel %vm3417, %v3505, %v3512
          %v3515 = vshrl.u32 %v3265, 16
          %v3517 = vrot.slane %v3515, 7
          %v3518 = vshll.u32 %v3265, 16
          %v3520 = vor.u32 %v3517, %v3518
          %v3521 = vrot.slane %v3517, 4
          %v3523 = vshrl.u32 %v3266, 16
          %v3525 = vrot.slane %v3523, 7
          %v3526 = vshll.u32 %v3266, 16
          %v3528 = vor.u32 %v3525, %v3526
          %v3529 = vsel %vm3417, %v3521, %v3528
          %v3531 = vshrl.u32 %v3267, 16
          %v3533 = vrot.slane %v3531, 7
          %v3534 = vshll.u32 %v3267, 16
          %v3536 = vor.u32 %v3533, %v3534
          %v3537 = vrot.slane %v3533, 4
          %v3539 = vshrl.u32 %v3268, 16
          %v3541 = vrot.slane %v3539, 7
          %v3542 = vshll.u32 %v3268, 16
          %v3544 = vor.u32 %v3541, %v3542
          %v3545 = vsel %vm3417, %v3537, %v3544
          %v3547 = vshrl.u32 %v3269, 16
          %v3549 = vrot.slane %v3547, 7
          %v3550 = vshll.u32 %v3269, 16
          %v3552 = vor.u32 %v3549, %v3550
          %v3553 = vrot.slane %v3549, 4
          %v3555 = vshrl.u32 %v3270, 16
          %v3557 = vrot.slane %v3555, 7
          %v3558 = vshll.u32 %v3270, 16
          %v3560 = vor.u32 %v3557, %v3558
          %v3561 = vsel %vm3417, %v3553, %v3560
          %v3563 = vshrl.u32 %v3271, 16
          %v3565 = vrot.slane %v3563, 7
          %v3566 = vshll.u32 %v3271, 16
          %v3568 = vor.u32 %v3565, %v3566
          %v3569 = vrot.slane %v3565, 4
          %v3571 = vshrl.u32 %v3272, 16
          %v3573 = vrot.slane %v3571, 7
          %v3574 = vshll.u32 %v3272, 16
          %v3576 = vor.u32 %v3573, %v3574
          %v3577 = vsel %vm3417, %v3569, %v3576
          %v3579 = vshrl.u32 %v3273, 16
          %v3581 = vrot.slane %v3579, 7
          %v3582 = vshll.u32 %v3273, 16
          %v3584 = vor.u32 %v3581, %v3582
          %v3585 = vrot.slane %v3581, 4
          %v3587 = vshrl.u32 %v3274, 16
          %v3589 = vrot.slane %v3587, 7
          %v3590 = vshll.u32 %v3274, 16
          %v3592 = vor.u32 %v3589, %v3590
          %v3593 = vsel %vm3417, %v3585, %v3592
          %v3595 = vshrl.u32 %v3275, 16
          %v3597 = vrot.slane %v3595, 7
          %v3598 = vshll.u32 %v3275, 16
          %v3600 = vor.u32 %v3597, %v3598
          %v3601 = vrot.slane %v3597, 4
          %v3603 = vshrl.u32 %v3276, 16
          %v3605 = vrot.slane %v3603, 7
          %v3606 = vshll.u32 %v3276, 16
          %v3608 = vor.u32 %v3605, %v3606
          %v3609 = vsel %vm3417, %v3601, %v3608
          %v3611 = vshrl.u32 %v3277, 16
          %v3613 = vrot.slane %v3611, 7
          %v3614 = vshll.u32 %v3277, 16
          %v3616 = vor.u32 %v3613, %v3614
          %v3617 = vrot.slane %v3613, 4
          %v3619 = vshrl.u32 %v3278, 16
          %v3621 = vrot.slane %v3619, 7
          %v3622 = vshll.u32 %v3278, 16
          %v3624 = vor.u32 %v3621, %v3622
          %v3625 = vsel %vm3417, %v3617, %v3624
          %v3627 = vshrl.u32 %v3279, 16
          %v3629 = vrot.slane %v3627, 7
          %v3630 = vshll.u32 %v3279, 16
          %v3632 = vor.u32 %v3629, %v3630
          %v3633 = vrot.slane %v3629, 4
          %v3635 = vshrl.u32 %v3280, 16
          %v3637 = vrot.slane %v3635, 7
          %v3638 = vshll.u32 %v3280, 16
          %v3640 = vor.u32 %v3637, %v3638
          %v3641 = vsel %vm3417, %v3633, %v3640
          %v3643 = vshrl.u32 %v3281, 16
          %v3645 = vrot.slane %v3643, 7
          %v3646 = vshll.u32 %v3281, 16
          %v3648 = vor.u32 %v3645, %v3646
          %v3649 = vrot.slane %v3645, 4
          %v3651 = vshrl.u32 %v3282, 16
          %v3653 = vrot.slane %v3651, 7
          %v3654 = vshll.u32 %v3282, 16
          %v3656 = vor.u32 %v3653, %v3654
          %v3657 = vsel %vm3417, %v3649, %v3656
          %v3659 = vshrl.u32 %v3283, 16
          %v3661 = vrot.slane %v3659, 7
          %v3662 = vshll.u32 %v3283, 16
          %v3664 = vor.u32 %v3661, %v3662
          %v3665 = vrot.slane %v3661, 4
          %v3667 = vshrl.u32 %v3284, 16
          %v3669 = vrot.slane %v3667, 7
          %v3670 = vshll.u32 %v3284, 16
          %v3672 = vor.u32 %v3669, %v3670
          %v3673 = vsel %vm3417, %v3665, %v3672
          %vm3706 = vcmask 1043456
          %vm3707 = vsmask.f32 7938
          %vm3708 = vmand %vm3706, %vm3707
          %v3709 = vld [vmem:[%s3383 + $0x4] sm:$0xf]
          %v3710 = vsel %vm3708, %v3424, %v3709
          %3711 = vst [vmem:[%s3383 + $0x4] sm:$0xf] %v3710
          %3712 = vst [vmem:[%s3383 + $0x18] sm:$0xf] %v3433
          %v3713 = vld [vmem:[%s3383 + $0x2c] sm:$0xf]
          %v3714 = vsel %vm3708, %v3440, %v3713
          %3715 = vst [vmem:[%s3383 + $0x2c] sm:$0xf] %v3714
          %3716 = vst [vmem:[%s3383 + $0x40] sm:$0xf] %v3449
          %v3717 = vld [vmem:[%s3383 + $0x54] sm:$0xf]
          %v3718 = vsel %vm3708, %v3456, %v3717
          %3719 = vst [vmem:[%s3383 + $0x54] sm:$0xf] %v3718
          %3720 = vst [vmem:[%s3383 + $0x68] sm:$0xf] %v3465
          %v3721 = vld [vmem:[%s3383 + $0x7c] sm:$0xf]
          %v3722 = vsel %vm3708, %v3472, %v3721
          %3723 = vst [vmem:[%s3383 + $0x7c] sm:$0xf] %v3722
          %3724 = vst [vmem:[%s3383 + $0x90] sm:$0xf] %v3481
          %v3725 = vld [vmem:[%s3383 + $0xa4] sm:$0xf]
          %v3726 = vsel %vm3708, %v3488, %v3725
          %3727 = vst [vmem:[%s3383 + $0xa4] sm:$0xf] %v3726
          %3728 = vst [vmem:[%s3383 + $0xb8] sm:$0xf] %v3497
          %v3729 = vld [vmem:[%s3383 + $0xcc] sm:$0xf]
          %v3730 = vsel %vm3708, %v3504, %v3729
          %3731 = vst [vmem:[%s3383 + $0xcc] sm:$0xf] %v3730
          %3732 = vst [vmem:[%s3383 + $0xe0] sm:$0xf] %v3513
          %v3733 = vld [vmem:[%s3383 + $0xf4] sm:$0xf]
          %v3734 = vsel %vm3708, %v3520, %v3733
          %3735 = vst [vmem:[%s3383 + $0xf4] sm:$0xf] %v3734
          %3736 = vst [vmem:[%s3383 + $0x108] sm:$0xf] %v3529
          %v3737 = vld [vmem:[%s3383 + $0x11c] sm:$0xf]
          %v3738 = vsel %vm3708, %v3536, %v3737
          %3739 = vst [vmem:[%s3383 + $0x11c] sm:$0xf] %v3738
          %3740 = vst [vmem:[%s3383 + $0x130] sm:$0xf] %v3545
          %v3741 = vld [vmem:[%s3383 + $0x144] sm:$0xf]
          %v3742 = vsel %vm3708, %v3552, %v3741
          %3743 = vst [vmem:[%s3383 + $0x144] sm:$0xf] %v3742
          %3744 = vst [vmem:[%s3383 + $0x158] sm:$0xf] %v3561
          %v3745 = vld [vmem:[%s3383 + $0x16c] sm:$0xf]
          %v3746 = vsel %vm3708, %v3568, %v3745
          %3747 = vst [vmem:[%s3383 + $0x16c] sm:$0xf] %v3746
          %3748 = vst [vmem:[%s3383 + $0x180] sm:$0xf] %v3577
          %v3749 = vld [vmem:[%s3383 + $0x194] sm:$0xf]
          %v3750 = vsel %vm3708, %v3584, %v3749
          %3751 = vst [vmem:[%s3383 + $0x194] sm:$0xf] %v3750
          %3752 = vst [vmem:[%s3383 + $0x1a8] sm:$0xf] %v3593
          %v3753 = vld [vmem:[%s3383 + $0x1bc] sm:$0xf]
          %v3754 = vsel %vm3708, %v3600, %v3753
          %3755 = vst [vmem:[%s3383 + $0x1bc] sm:$0xf] %v3754
          %3756 = vst [vmem:[%s3383 + $0x1d0] sm:$0xf] %v3609
          %v3757 = vld [vmem:[%s3383 + $0x1e4] sm:$0xf]
          %v3758 = vsel %vm3708, %v3616, %v3757
          %3759 = vst [vmem:[%s3383 + $0x1e4] sm:$0xf] %v3758
          %3760 = vst [vmem:[%s3383 + $0x1f8] sm:$0xf] %v3625
          %v3761 = vld [vmem:[%s3383 + $0x20c] sm:$0xf]
          %v3762 = vsel %vm3708, %v3632, %v3761
          %3763 = vst [vmem:[%s3383 + $0x20c] sm:$0xf] %v3762
          %3764 = vst [vmem:[%s3383 + $0x220] sm:$0xf] %v3641
          %v3765 = vld [vmem:[%s3383 + $0x234] sm:$0xf]
          %v3766 = vsel %vm3708, %v3648, %v3765
          %3767 = vst [vmem:[%s3383 + $0x234] sm:$0xf] %v3766
          %3768 = vst [vmem:[%s3383 + $0x248] sm:$0xf] %v3657
          %v3769 = vld [vmem:[%s3383 + $0x25c] sm:$0xf]
          %v3770 = vsel %vm3708, %v3664, %v3769
          %3771 = vst [vmem:[%s3383 + $0x25c] sm:$0xf] %v3770
          %3772 = vst [vmem:[%s3383 + $0x270] sm:$0xf] %v3673
          %3805 = vst [vmem:[%s3383 + $0x8] sm:$0xf] %v3253
          %3806 = vst [vmem:[%s3383 + $0x1c] sm:$0xf] %v3254
          %3807 = vst [vmem:[%s3383 + $0x30] sm:$0xf] %v3255
          %3808 = vst [vmem:[%s3383 + $0x44] sm:$0xf] %v3256
          %3809 = vst [vmem:[%s3383 + $0x58] sm:$0xf] %v3257
          %3810 = vst [vmem:[%s3383 + $0x6c] sm:$0xf] %v3258
          %3811 = vst [vmem:[%s3383 + $0x80] sm:$0xf] %v3259
          %3812 = vst [vmem:[%s3383 + $0x94] sm:$0xf] %v3260
          %3813 = vst [vmem:[%s3383 + $0xa8] sm:$0xf] %v3261
          %3814 = vst [vmem:[%s3383 + $0xbc] sm:$0xf] %v3262
          %3815 = vst [vmem:[%s3383 + $0xd0] sm:$0xf] %v3263
          %3816 = vst [vmem:[%s3383 + $0xe4] sm:$0xf] %v3264
          %3817 = vst [vmem:[%s3383 + $0xf8] sm:$0xf] %v3265
          %3818 = vst [vmem:[%s3383 + $0x10c] sm:$0xf] %v3266
          %3819 = vst [vmem:[%s3383 + $0x120] sm:$0xf] %v3267
          %3820 = vst [vmem:[%s3383 + $0x134] sm:$0xf] %v3268
          %3821 = vst [vmem:[%s3383 + $0x148] sm:$0xf] %v3269
          %3822 = vst [vmem:[%s3383 + $0x15c] sm:$0xf] %v3270
          %3823 = vst [vmem:[%s3383 + $0x170] sm:$0xf] %v3271
          %3824 = vst [vmem:[%s3383 + $0x184] sm:$0xf] %v3272
          %3825 = vst [vmem:[%s3383 + $0x198] sm:$0xf] %v3273
          %3826 = vst [vmem:[%s3383 + $0x1ac] sm:$0xf] %v3274
          %3827 = vst [vmem:[%s3383 + $0x1c0] sm:$0xf] %v3275
          %3828 = vst [vmem:[%s3383 + $0x1d4] sm:$0xf] %v3276
          %3829 = vst [vmem:[%s3383 + $0x1e8] sm:$0xf] %v3277
          %3830 = vst [vmem:[%s3383 + $0x1fc] sm:$0xf] %v3278
          %3831 = vst [vmem:[%s3383 + $0x210] sm:$0xf] %v3279
          %3832 = vst [vmem:[%s3383 + $0x224] sm:$0xf] %v3280
          %3833 = vst [vmem:[%s3383 + $0x238] sm:$0xf] %v3281
          %3834 = vst [vmem:[%s3383 + $0x24c] sm:$0xf] %v3282
          %3835 = vst [vmem:[%s3383 + $0x260] sm:$0xf] %v3283
          %3836 = vst [vmem:[%s3383 + $0x274] sm:$0xf] %v3284
          %vm3837 = vsmask.f32 3328
          %vm3838 = vsmask.f32 7440
          %vm3839 = vmor %vm3837, %vm3838
          %v3840 = vrot.slane %v3419, 4
          %v3841 = vrot.slane %v3422, 5
          %v3842 = vor.u32 %v3840, %v3841
          %v3843 = vrot.slane %v3842, 4
          %v3844 = vrot.slane %v3430, 5
          %v3845 = vsel %vm3839, %v3843, %v3844
          %v3846 = vrot.slane %v3427, 4
          %v3847 = vor.u32 %v3846, %v3844
          %v3848 = vrot.slane %v3847, 4
          %v3849 = vrot.slane %v3435, 4
          %v3850 = vrot.slane %v3438, 5
          %v3851 = vor.u32 %v3849, %v3850
          %v3852 = vrot.slane %v3851, 4
          %v3853 = vrot.slane %v3446, 5
          %v3854 = vsel %vm3839, %v3852, %v3853
          %v3855 = vrot.slane %v3443, 4
          %v3856 = vor.u32 %v3855, %v3853
          %v3857 = vrot.slane %v3856, 4
          %v3858 = vrot.slane %v3451, 4
          %v3859 = vrot.slane %v3454, 5
          %v3860 = vor.u32 %v3858, %v3859
          %v3861 = vrot.slane %v3860, 4
          %v3862 = vrot.slane %v3462, 5
          %v3863 = vsel %vm3839, %v3861, %v3862
          %v3864 = vrot.slane %v3459, 4
          %v3865 = vor.u32 %v3864, %v3862
          %v3866 = vrot.slane %v3865, 4
          %v3867 = vrot.slane %v3467, 4
          %v3868 = vrot.slane %v3470, 5
          %v3869 = vor.u32 %v3867, %v3868
          %v3870 = vrot.slane %v3869, 4
          %v3871 = vrot.slane %v3478, 5
          %v3872 = vsel %vm3839, %v3870, %v3871
          %v3873 = vrot.slane %v3475, 4
          %v3874 = vor.u32 %v3873, %v3871
          %v3875 = vrot.slane %v3874, 4
          %v3876 = vrot.slane %v3483, 4
          %v3877 = vrot.slane %v3486, 5
          %v3878 = vor.u32 %v3876, %v3877
          %v3879 = vrot.slane %v3878, 4
          %v3880 = vrot.slane %v3494, 5
          %v3881 = vsel %vm3839, %v3879, %v3880
          %v3882 = vrot.slane %v3491, 4
          %v3883 = vor.u32 %v3882, %v3880
          %v3884 = vrot.slane %v3883, 4
          %v3885 = vrot.slane %v3499, 4
          %v3886 = vrot.slane %v3502, 5
          %v3887 = vor.u32 %v3885, %v3886
          %v3888 = vrot.slane %v3887, 4
          %v3889 = vrot.slane %v3510, 5
          %v3890 = vsel %vm3839, %v3888, %v3889
          %v3891 = vrot.slane %v3507, 4
          %v3892 = vor.u32 %v3891, %v3889
          %v3893 = vrot.slane %v3892, 4
          %v3894 = vrot.slane %v3515, 4
          %v3895 = vrot.slane %v3518, 5
          %v3896 = vor.u32 %v3894, %v3895
          %v3897 = vrot.slane %v3896, 4
          %v3898 = vrot.slane %v3526, 5
          %v3899 = vsel %vm3839, %v3897, %v3898
          %v3900 = vrot.slane %v3523, 4
          %v3901 = vor.u32 %v3900, %v3898
          %v3902 = vrot.slane %v3901, 4
          %v3903 = vrot.slane %v3531, 4
          %v3904 = vrot.slane %v3534, 5
          %v3905 = vor.u32 %v3903, %v3904
          %v3906 = vrot.slane %v3905, 4
          %v3907 = vrot.slane %v3542, 5
          %v3908 = vsel %vm3839, %v3906, %v3907
          %v3909 = vrot.slane %v3539, 4
          %v3910 = vor.u32 %v3909, %v3907
          %v3911 = vrot.slane %v3910, 4
          %v3912 = vrot.slane %v3547, 4
          %v3913 = vrot.slane %v3550, 5
          %v3914 = vor.u32 %v3912, %v3913
          %v3915 = vrot.slane %v3914, 4
          %v3916 = vrot.slane %v3558, 5
          %v3917 = vsel %vm3839, %v3915, %v3916
          %v3918 = vrot.slane %v3555, 4
          %v3919 = vor.u32 %v3918, %v3916
          %v3920 = vrot.slane %v3919, 4
          %v3921 = vrot.slane %v3563, 4
          %v3922 = vrot.slane %v3566, 5
          %v3923 = vor.u32 %v3921, %v3922
          %v3924 = vrot.slane %v3923, 4
          %v3925 = vrot.slane %v3574, 5
          %v3926 = vsel %vm3839, %v3924, %v3925
          %v3927 = vrot.slane %v3571, 4
          %v3928 = vor.u32 %v3927, %v3925
          %v3929 = vrot.slane %v3928, 4
          %v3930 = vrot.slane %v3579, 4
          %v3931 = vrot.slane %v3582, 5
          %v3932 = vor.u32 %v3930, %v3931
          %v3933 = vrot.slane %v3932, 4
          %v3934 = vrot.slane %v3590, 5
          %v3935 = vsel %vm3839, %v3933, %v3934
          %v3936 = vrot.slane %v3587, 4
          %v3937 = vor.u32 %v3936, %v3934
          %v3938 = vrot.slane %v3937, 4
          %v3939 = vrot.slane %v3595, 4
          %v3940 = vrot.slane %v3598, 5
          %v3941 = vor.u32 %v3939, %v3940
          %v3942 = vrot.slane %v3941, 4
          %v3943 = vrot.slane %v3606, 5
          %v3944 = vsel %vm3839, %v3942, %v3943
          %v3945 = vrot.slane %v3603, 4
          %v3946 = vor.u32 %v3945, %v3943
          %v3947 = vrot.slane %v3946, 4
          %v3948 = vrot.slane %v3611, 4
          %v3949 = vrot.slane %v3614, 5
          %v3950 = vor.u32 %v3948, %v3949
          %v3951 = vrot.slane %v3950, 4
          %v3952 = vrot.slane %v3622, 5
          %v3953 = vsel %vm3839, %v3951, %v3952
          %v3954 = vrot.slane %v3619, 4
          %v3955 = vor.u32 %v3954, %v3952
          %v3956 = vrot.slane %v3955, 4
          %v3957 = vrot.slane %v3627, 4
          %v3958 = vrot.slane %v3630, 5
          %v3959 = vor.u32 %v3957, %v3958
          %v3960 = vrot.slane %v3959, 4
          %v3961 = vrot.slane %v3638, 5
          %v3962 = vsel %vm3839, %v3960, %v3961
          %v3963 = vrot.slane %v3635, 4
          %v3964 = vor.u32 %v3963, %v3961
          %v3965 = vrot.slane %v3964, 4
          %v3966 = vrot.slane %v3643, 4
          %v3967 = vrot.slane %v3646, 5
          %v3968 = vor.u32 %v3966, %v3967
          %v3969 = vrot.slane %v3968, 4
          %v3970 = vrot.slane %v3654, 5
          %v3971 = vsel %vm3839, %v3969, %v3970
          %v3972 = vrot.slane %v3651, 4
          %v3973 = vor.u32 %v3972, %v3970
          %v3974 = vrot.slane %v3973, 4
          %v3975 = vrot.slane %v3659, 4
          %v3976 = vrot.slane %v3662, 5
          %v3977 = vor.u32 %v3975, %v3976
          %v3978 = vrot.slane %v3977, 4
          %v3979 = vrot.slane %v3670, 5
          %v3980 = vsel %vm3839, %v3978, %v3979
          %v3981 = vrot.slane %v3667, 4
          %v3982 = vor.u32 %v3981, %v3979
          %v3983 = vrot.slane %v3982, 4
          %4016 = vst [vmem:[%s3383 + $0xc] sm:$0xf] %v3845
          %vm4017 = vmand %vm3706, %vm3837
          %v4018 = vld [vmem:[%s3383 + $0x20] sm:$0xf]
          %v4019 = vsel %vm4017, %v3848, %v4018
          %4020 = vst [vmem:[%s3383 + $0x20] sm:$0xf] %v4019
          %4021 = vst [vmem:[%s3383 + $0x34] sm:$0xf] %v3854
          %v4022 = vld [vmem:[%s3383 + $0x48] sm:$0xf]
          %v4023 = vsel %vm4017, %v3857, %v4022
          %4024 = vst [vmem:[%s3383 + $0x48] sm:$0xf] %v4023
          %4025 = vst [vmem:[%s3383 + $0x5c] sm:$0xf] %v3863
          %v4026 = vld [vmem:[%s3383 + $0x70] sm:$0xf]
          %v4027 = vsel %vm4017, %v3866, %v4026
          %4028 = vst [vmem:[%s3383 + $0x70] sm:$0xf] %v4027
          %4029 = vst [vmem:[%s3383 + $0x84] sm:$0xf] %v3872
          %v4030 = vld [vmem:[%s3383 + $0x98] sm:$0xf]
          %v4031 = vsel %vm4017, %v3875, %v4030
          %4032 = vst [vmem:[%s3383 + $0x98] sm:$0xf] %v4031
          %4033 = vst [vmem:[%s3383 + $0xac] sm:$0xf] %v3881
          %v4034 = vld [vmem:[%s3383 + $0xc0] sm:$0xf]
          %v4035 = vsel %vm4017, %v3884, %v4034
          %4036 = vst [vmem:[%s3383 + $0xc0] sm:$0xf] %v4035
          %4037 = vst [vmem:[%s3383 + $0xd4] sm:$0xf] %v3890
          %v4038 = vld [vmem:[%s3383 + $0xe8] sm:$0xf]
          %v4039 = vsel %vm4017, %v3893, %v4038
          %4040 = vst [vmem:[%s3383 + $0xe8] sm:$0xf] %v4039
          %4041 = vst [vmem:[%s3383 + $0xfc] sm:$0xf] %v3899
          %v4042 = vld [vmem:[%s3383 + $0x110] sm:$0xf]
          %v4043 = vsel %vm4017, %v3902, %v4042
          %4044 = vst [vmem:[%s3383 + $0x110] sm:$0xf] %v4043
          %4045 = vst [vmem:[%s3383 + $0x124] sm:$0xf] %v3908
          %v4046 = vld [vmem:[%s3383 + $0x138] sm:$0xf]
          %v4047 = vsel %vm4017, %v3911, %v4046
          %4048 = vst [vmem:[%s3383 + $0x138] sm:$0xf] %v4047
          %4049 = vst [vmem:[%s3383 + $0x14c] sm:$0xf] %v3917
          %v4050 = vld [vmem:[%s3383 + $0x160] sm:$0xf]
          %v4051 = vsel %vm4017, %v3920, %v4050
          %4052 = vst [vmem:[%s3383 + $0x160] sm:$0xf] %v4051
          %4053 = vst [vmem:[%s3383 + $0x174] sm:$0xf] %v3926
          %v4054 = vld [vmem:[%s3383 + $0x188] sm:$0xf]
          %v4055 = vsel %vm4017, %v3929, %v4054
          %4056 = vst [vmem:[%s3383 + $0x188] sm:$0xf] %v4055
          %4057 = vst [vmem:[%s3383 + $0x19c] sm:$0xf] %v3935
          %v4058 = vld [vmem:[%s3383 + $0x1b0] sm:$0xf]
          %v4059 = vsel %vm4017, %v3938, %v4058
          %4060 = vst [vmem:[%s3383 + $0x1b0] sm:$0xf] %v4059
          %4061 = vst [vmem:[%s3383 + $0x1c4] sm:$0xf] %v3944
          %v4062 = vld [vmem:[%s3383 + $0x1d8] sm:$0xf]
          %v4063 = vsel %vm4017, %v3947, %v4062
          %4064 = vst [vmem:[%s3383 + $0x1d8] sm:$0xf] %v4063
          %4065 = vst [vmem:[%s3383 + $0x1ec] sm:$0xf] %v3953
          %v4066 = vld [vmem:[%s3383 + $0x200] sm:$0xf]
          %v4067 = vsel %vm4017, %v3956, %v4066
          %4068 = vst [vmem:[%s3383 + $0x200] sm:$0xf] %v4067
          %4069 = vst [vmem:[%s3383 + $0x214] sm:$0xf] %v3962
          %v4070 = vld [vmem:[%s3383 + $0x228] sm:$0xf]
          %v4071 = vsel %vm4017, %v3965, %v4070
          %4072 = vst [vmem:[%s3383 + $0x228] sm:$0xf] %v4071
          %4073 = vst [vmem:[%s3383 + $0x23c] sm:$0xf] %v3971
          %v4074 = vld [vmem:[%s3383 + $0x250] sm:$0xf]
          %v4075 = vsel %vm4017, %v3974, %v4074
          %4076 = vst [vmem:[%s3383 + $0x250] sm:$0xf] %v4075
          %4077 = vst [vmem:[%s3383 + $0x264] sm:$0xf] %v3980
          %v4078 = vld [vmem:[%s3383 + $0x278] sm:$0xf]
          %v4079 = vsel %vm4017, %v3983, %v4078
          %4080 = vst [vmem:[%s3383 + $0x278] sm:$0xf] %v4079
          %vm4081 = vcmask 1042432
          %vm4082 = vcmask 1046532
          %vm4083 = vmor %vm4081, %vm4082
          %v4084 = vrot.slane %v3253, 5
          %v4085 = vrot.slane %v4084, 4
          %v4086 = vrot.slane %v3254, 5
          %v4087 = vsel %vm4083, %v4085, %v4086
          %v4088 = vrot.slane %v4086, 4
          %v4089 = vrot.slane %v3255, 5
          %v4090 = vrot.slane %v4089, 4
          %v4091 = vrot.slane %v3256, 5
          %v4092 = vsel %vm4083, %v4090, %v4091
          %v4093 = vrot.slane %v4091, 4
          %v4094 = vrot.slane %v3257, 5
          %v4095 = vrot.slane %v4094, 4
          %v4096 = vrot.slane %v3258, 5
          %v4097 = vsel %vm4083, %v4095, %v4096
          %v4098 = vrot.slane %v4096, 4
          %v4099 = vrot.slane %v3259, 5
          %v4100 = vrot.slane %v4099, 4
          %v4101 = vrot.slane %v3260, 5
          %v4102 = vsel %vm4083, %v4100, %v4101
          %v4103 = vrot.slane %v4101, 4
          %v4104 = vrot.slane %v3261, 5
          %v4105 = vrot.slane %v4104, 4
          %v4106 = vrot.slane %v3262, 5
          %v4107 = vsel %vm4083, %v4105, %v4106
          %v4108 = vrot.slane %v4106, 4
          %v4109 = vrot.slane %v3263, 5
          %v4110 = vrot.slane %v4109, 4
          %v4111 = vrot.slane %v3264, 5
          %v4112 = vsel %vm4083, %v4110, %v4111
          %v4113 = vrot.slane %v4111, 4
          %v4114 = vrot.slane %v3265, 5
          %v4115 = vrot.slane %v4114, 4
          %v4116 = vrot.slane %v3266, 5
          %v4117 = vsel %vm4083, %v4115, %v4116
          %v4118 = vrot.slane %v4116, 4
          %v4119 = vrot.slane %v3267, 5
          %v4120 = vrot.slane %v4119, 4
          %v4121 = vrot.slane %v3268, 5
          %v4122 = vsel %vm4083, %v4120, %v4121
          %v4123 = vrot.slane %v4121, 4
          %v4124 = vrot.slane %v3269, 5
          %v4125 = vrot.slane %v4124, 4
          %v4126 = vrot.slane %v3270, 5
          %v4127 = vsel %vm4083, %v4125, %v4126
          %v4128 = vrot.slane %v4126, 4
          %v4129 = vrot.slane %v3271, 5
          %v4130 = vrot.slane %v4129, 4
          %v4131 = vrot.slane %v3272, 5
          %v4132 = vsel %vm4083, %v4130, %v4131
          %v4133 = vrot.slane %v4131, 4
          %v4134 = vrot.slane %v3273, 5
          %v4135 = vrot.slane %v4134, 4
          %v4136 = vrot.slane %v3274, 5
          %v4137 = vsel %vm4083, %v4135, %v4136
          %v4138 = vrot.slane %v4136, 4
          %v4139 = vrot.slane %v3275, 5
          %v4140 = vrot.slane %v4139, 4
          %v4141 = vrot.slane %v3276, 5
          %v4142 = vsel %vm4083, %v4140, %v4141
          %v4143 = vrot.slane %v4141, 4
          %v4144 = vrot.slane %v3277, 5
          %v4145 = vrot.slane %v4144, 4
          %v4146 = vrot.slane %v3278, 5
          %v4147 = vsel %vm4083, %v4145, %v4146
          %v4148 = vrot.slane %v4146, 4
          %v4149 = vrot.slane %v3279, 5
          %v4150 = vrot.slane %v4149, 4
          %v4151 = vrot.slane %v3280, 5
          %v4152 = vsel %vm4083, %v4150, %v4151
          %v4153 = vrot.slane %v4151, 4
          %v4154 = vrot.slane %v3281, 5
          %v4155 = vrot.slane %v4154, 4
          %v4156 = vrot.slane %v3282, 5
          %v4157 = vsel %vm4083, %v4155, %v4156
          %v4158 = vrot.slane %v4156, 4
          %v4159 = vrot.slane %v3283, 5
          %v4160 = vrot.slane %v4159, 4
          %v4161 = vrot.slane %v3284, 5
          %v4162 = vsel %vm4083, %v4160, %v4161
          %v4163 = vrot.slane %v4161, 4
          %4196 = vst [vmem:[%s3383 + $0x10] sm:$0xf] %v4087
          %4197 = vst [vmem:[%s3383 + $0x24] sm:$0x7] %v4088
          %4198 = vst [vmem:[%s3383 + $0x38] sm:$0xf] %v4092
          %4199 = vst [vmem:[%s3383 + $0x4c] sm:$0x7] %v4093
          %4200 = vst [vmem:[%s3383 + $0x60] sm:$0xf] %v4097
          %4201 = vst [vmem:[%s3383 + $0x74] sm:$0x7] %v4098
          %4202 = vst [vmem:[%s3383 + $0x88] sm:$0xf] %v4102
          %4203 = vst [vmem:[%s3383 + $0x9c] sm:$0x7] %v4103
          %4204 = vst [vmem:[%s3383 + $0xb0] sm:$0xf] %v4107
          %4205 = vst [vmem:[%s3383 + $0xc4] sm:$0x7] %v4108
          %4206 = vst [vmem:[%s3383 + $0xd8] sm:$0xf] %v4112
          %4207 = vst [vmem:[%s3383 + $0xec] sm:$0x7] %v4113
          %4208 = vst [vmem:[%s3383 + $0x100] sm:$0xf] %v4117
          %4209 = vst [vmem:[%s3383 + $0x114] sm:$0x7] %v4118
          %4210 = vst [vmem:[%s3383 + $0x128] sm:$0xf] %v4122
          %4211 = vst [vmem:[%s3383 + $0x13c] sm:$0x7] %v4123
          %4212 = vst [vmem:[%s3383 + $0x150] sm:$0xf] %v4127
          %4213 = vst [vmem:[%s3383 + $0x164] sm:$0x7] %v4128
          %4214 = vst [vmem:[%s3383 + $0x178] sm:$0xf] %v4132
          %4215 = vst [vmem:[%s3383 + $0x18c] sm:$0x7] %v4133
          %4216 = vst [vmem:[%s3383 + $0x1a0] sm:$0xf] %v4137
          %4217 = vst [vmem:[%s3383 + $0x1b4] sm:$0x7] %v4138
          %4218 = vst [vmem:[%s3383 + $0x1c8] sm:$0xf] %v4142
          %4219 = vst [vmem:[%s3383 + $0x1dc] sm:$0x7] %v4143
          %4220 = vst [vmem:[%s3383 + $0x1f0] sm:$0xf] %v4147
          %4221 = vst [vmem:[%s3383 + $0x204] sm:$0x7] %v4148
          %4222 = vst [vmem:[%s3383 + $0x218] sm:$0xf] %v4152
          %4223 = vst [vmem:[%s3383 + $0x22c] sm:$0x7] %v4153
          %4224 = vst [vmem:[%s3383 + $0x240] sm:$0xf] %v4157
          %4225 = vst [vmem:[%s3383 + $0x254] sm:$0x7] %v4158
          %4226 = vst [vmem:[%s3383 + $0x268] sm:$0xf] %v4162
          %4227 = vst [vmem:[%s3383 + $0x27c] sm:$0x7] %v4163
          %v4228 = vld [vmem:[#allocation2] sm:$0xff]
          %v4229 = vld [vmem:[#allocation2 + $0x8] sm:$0xff]
          %v4230 = vld [vmem:[#allocation2 + $0x10] sm:$0xf]
          %v4231 = vld [vmem:[#allocation2 + $0x14] sm:$0xff]
          %v4232 = vld [vmem:[#allocation2 + $0x1c] sm:$0xff]
          %v4233 = vld [vmem:[#allocation2 + $0x24] sm:$0xf]
          %v4234 = vld [vmem:[#allocation2 + $0x28] sm:$0xff]
          %v4235 = vld [vmem:[#allocation2 + $0x30] sm:$0xff]
          %v4236 = vld [vmem:[#allocation2 + $0x38] sm:$0xf]
          %v4237 = vld [vmem:[#allocation2 + $0x3c] sm:$0xff]
          %v4238 = vld [vmem:[#allocation2 + $0x44] sm:$0xff]
          %v4239 = vld [vmem:[#allocation2 + $0x4c] sm:$0xf]
          %v4240 = vld [vmem:[#allocation2 + $0x50] sm:$0xff]
          %v4241 = vld [vmem:[#allocation2 + $0x58] sm:$0xff]
          %v4242 = vld [vmem:[#allocation2 + $0x60] sm:$0xf]
          %v4243 = vld [vmem:[#allocation2 + $0x64] sm:$0xff]
          %v4244 = vld [vmem:[#allocation2 + $0x6c] sm:$0xff]
          %v4245 = vld [vmem:[#allocation2 + $0x74] sm:$0xf]
          %v4246 = vld [vmem:[#allocation2 + $0x78] sm:$0xff]
          %v4247 = vld [vmem:[#allocation2 + $0x80] sm:$0xff]
          %v4248 = vld [vmem:[#allocation2 + $0x88] sm:$0xf]
          %v4249 = vld [vmem:[#allocation2 + $0x8c] sm:$0xff]
          %v4250 = vld [vmem:[#allocation2 + $0x94] sm:$0xff]
          %v4251 = vld [vmem:[#allocation2 + $0x9c] sm:$0xf]
          %v4252 = vld [vmem:[#allocation2 + $0xa0] sm:$0xff]
          %v4253 = vld [vmem:[#allocation2 + $0xa8] sm:$0xff]
          %v4254 = vld [vmem:[#allocation2 + $0xb0] sm:$0xf]
          %v4255 = vld [vmem:[#allocation2 + $0xb4] sm:$0xff]
          %v4256 = vld [vmem:[#allocation2 + $0xbc] sm:$0xff]
          %v4257 = vld [vmem:[#allocation2 + $0xc4] sm:$0xf]
          %v4258 = vld [vmem:[#allocation2 + $0xc8] sm:$0xff]
          %v4259 = vld [vmem:[#allocation2 + $0xd0] sm:$0xff]
          %v4260 = vld [vmem:[#allocation2 + $0xd8] sm:$0xf]
          %v4261 = vld [vmem:[#allocation2 + $0xdc] sm:$0xff]
          %v4262 = vld [vmem:[#allocation2 + $0xe4] sm:$0xff]
          %v4263 = vld [vmem:[#allocation2 + $0xec] sm:$0xf]
          %v4264 = vld [vmem:[#allocation2 + $0xf0] sm:$0xff]
          %v4265 = vld [vmem:[#allocation2 + $0xf8] sm:$0xff]
          %v4266 = vld [vmem:[#allocation2 + $0x100] sm:$0xf]
          %v4267 = vld [vmem:[#allocation2 + $0x104] sm:$0xff]
          %v4268 = vld [vmem:[#allocation2 + $0x10c] sm:$0xff]
          %v4269 = vld [vmem:[#allocation2 + $0x114] sm:$0xf]
          %v4270 = vld [vmem:[#allocation2 + $0x118] sm:$0xff]
          %v4271 = vld [vmem:[#allocation2 + $0x120] sm:$0xff]
          %v4272 = vld [vmem:[#allocation2 + $0x128] sm:$0xf]
          %v4273 = vld [vmem:[#allocation2 + $0x12c] sm:$0xff]
          %v4274 = vld [vmem:[#allocation2 + $0x134] sm:$0xff]
          %v4275 = vld [vmem:[#allocation2 + $0x13c] sm:$0xf]
          %v4276 = vld [vmem:[#allocation2 + $0x140] sm:$0xff]
          %v4277 = vld [vmem:[#allocation2 + $0x148] sm:$0xff]
          %v4278 = vld [vmem:[#allocation2 + $0x150] sm:$0xf]
          %v4279 = vld [vmem:[#allocation2 + $0x154] sm:$0xff]
          %v4280 = vld [vmem:[#allocation2 + $0x15c] sm:$0xff]
          %v4281 = vld [vmem:[#allocation2 + $0x164] sm:$0xf]
          %v4282 = vld [vmem:[#allocation2 + $0x168] sm:$0xff]
          %v4283 = vld [vmem:[#allocation2 + $0x170] sm:$0xff]
          %v4284 = vld [vmem:[#allocation2 + $0x178] sm:$0xf]
          %v4285 = vld [vmem:[#allocation2 + $0x17c] sm:$0xff]
          %v4286 = vld [vmem:[#allocation2 + $0x184] sm:$0xff]
          %v4287 = vld [vmem:[#allocation2 + $0x18c] sm:$0xf]
          %v4288 = vld [vmem:[#allocation2 + $0x190] sm:$0xff]
          %v4289 = vld [vmem:[#allocation2 + $0x198] sm:$0xff]
          %v4290 = vld [vmem:[#allocation2 + $0x1a0] sm:$0xf]
          %v4291 = vld [vmem:[#allocation2 + $0x1a4] sm:$0xff]
          %v4292 = vld [vmem:[#allocation2 + $0x1ac] sm:$0xff]
          %v4293 = vld [vmem:[#allocation2 + $0x1b4] sm:$0xf]
          %v4294 = vld [vmem:[#allocation2 + $0x1b8] sm:$0xff]
          %v4295 = vld [vmem:[#allocation2 + $0x1c0] sm:$0xff]
          %v4296 = vld [vmem:[#allocation2 + $0x1c8] sm:$0xf]
          %v4297 = vld [vmem:[#allocation2 + $0x1cc] sm:$0xff]
          %v4298 = vld [vmem:[#allocation2 + $0x1d4] sm:$0xff]
          %v4299 = vld [vmem:[#allocation2 + $0x1dc] sm:$0xf]
          %v4300 = vld [vmem:[#allocation2 + $0x1e0] sm:$0xff]
          %v4301 = vld [vmem:[#allocation2 + $0x1e8] sm:$0xff]
          %v4302 = vld [vmem:[#allocation2 + $0x1f0] sm:$0xf]
          %v4303 = vld [vmem:[#allocation2 + $0x1f4] sm:$0xff]
          %v4304 = vld [vmem:[#allocation2 + $0x1fc] sm:$0xff]
          %v4305 = vld [vmem:[#allocation2 + $0x204] sm:$0xf]
          %v4306 = vld [vmem:[#allocation2 + $0x208] sm:$0xff]
          %v4307 = vld [vmem:[#allocation2 + $0x210] sm:$0xff]
          %v4308 = vld [vmem:[#allocation2 + $0x218] sm:$0xf]
          %v4309 = vld [vmem:[#allocation2 + $0x21c] sm:$0xff]
          %v4310 = vld [vmem:[#allocation2 + $0x224] sm:$0xff]
          %v4311 = vld [vmem:[#allocation2 + $0x22c] sm:$0xf]
          %v4312 = vld [vmem:[#allocation2 + $0x230] sm:$0xff]
          %v4313 = vld [vmem:[#allocation2 + $0x238] sm:$0xff]
          %v4314 = vld [vmem:[#allocation2 + $0x240] sm:$0xf]
          %v4315 = vld [vmem:[#allocation2 + $0x244] sm:$0xff]
          %v4316 = vld [vmem:[#allocation2 + $0x24c] sm:$0xff]
          %v4317 = vld [vmem:[#allocation2 + $0x254] sm:$0xf]
          %v4318 = vld [vmem:[#allocation2 + $0x258] sm:$0xff]
          %v4319 = vld [vmem:[#allocation2 + $0x260] sm:$0xff]
          %v4320 = vld [vmem:[#allocation2 + $0x268] sm:$0xf]
          %v4321 = vld [vmem:[#allocation2 + $0x26c] sm:$0xff]
          %v4322 = vld [vmem:[#allocation2 + $0x274] sm:$0xff]
          %v4323 = vld [vmem:[#allocation2 + $0x27c] sm:$0xf]
          %v4324 = vld [vmem:[%s3] sm:$0xf]
          %v4325 = vld [vmem:[%s3 + $0x4] sm:$0xf]
          %v4326 = vld [vmem:[%s3 + $0x8] sm:$0xf]
          %v4327 = vld [vmem:[%s3 + $0xc] sm:$0xf]
          %v4328 = vld [vmem:[%s3 + $0x10] sm:$0xf]
          %v4329 = vld [vmem:[%s3 + $0x14] sm:$0xf]
          %v4330 = vld [vmem:[%s3 + $0x18] sm:$0xf]
          %v4331 = vld [vmem:[%s3 + $0x1c] sm:$0xf]
          %v4332 = vld [vmem:[%s3 + $0x20] sm:$0xf]
          %v4333 = vld [vmem:[%s3 + $0x24] sm:$0xf]
          %v4334 = vld [vmem:[%s3 + $0x28] sm:$0xf]
          %v4335 = vld [vmem:[%s3 + $0x2c] sm:$0xf]
          %v4336 = vld [vmem:[%s3 + $0x30] sm:$0xf]
          %v4337 = vld [vmem:[%s3 + $0x34] sm:$0xf]
          %v4338 = vld [vmem:[%s3 + $0x38] sm:$0xf]
          %v4339 = vld [vmem:[%s3 + $0x3c] sm:$0xf]
          %v4340 = vld [vmem:[%s3 + $0x40] sm:$0xf]
          %v4341 = vld [vmem:[%s3 + $0x44] sm:$0xf]
          %v4342 = vld [vmem:[%s3 + $0x48] sm:$0xf]
          %v4343 = vld [vmem:[%s3 + $0x4c] sm:$0xf]
          %v4344 = vld [vmem:[%s3 + $0x50] sm:$0xf]
          %v4345 = vld [vmem:[%s3 + $0x54] sm:$0xf]
          %v4346 = vld [vmem:[%s3 + $0x58] sm:$0xf]
          %v4347 = vld [vmem:[%s3 + $0x5c] sm:$0xf]
          %v4348 = vld [vmem:[%s3 + $0x60] sm:$0xf]
          %v4349 = vld [vmem:[%s3 + $0x64] sm:$0xf]
          %v4350 = vld [vmem:[%s3 + $0x68] sm:$0xf]
          %v4351 = vld [vmem:[%s3 + $0x6c] sm:$0xf]
          %v4352 = vld [vmem:[%s3 + $0x70] sm:$0xf]
          %v4353 = vld [vmem:[%s3 + $0x74] sm:$0xf]
          %v4354 = vld [vmem:[%s3 + $0x78] sm:$0xf]
          %v4355 = vld [vmem:[%s3 + $0x7c] sm:$0xf]
          %v4356 = vld [vmem:[%s3 + $0x80] sm:$0xf]
          %v4357 = vld [vmem:[%s3 + $0x84] sm:$0xf]
          %v4358 = vld [vmem:[%s3 + $0x88] sm:$0xf]
          %v4359 = vld [vmem:[%s3 + $0x8c] sm:$0xf]
          %v4360 = vld [vmem:[%s3 + $0x90] sm:$0xf]
          %v4361 = vld [vmem:[%s3 + $0x94] sm:$0xf]
          %v4362 = vld [vmem:[%s3 + $0x98] sm:$0xf]
          %v4363 = vld [vmem:[%s3 + $0x9c] sm:$0xf]
          %v4364 = vld [vmem:[%s3 + $0xa0] sm:$0xf]
          %v4365 = vld [vmem:[%s3 + $0xa4] sm:$0xf]
          %v4366 = vld [vmem:[%s3 + $0xa8] sm:$0xf]
          %v4367 = vld [vmem:[%s3 + $0xac] sm:$0xf]
          %v4368 = vld [vmem:[%s3 + $0xb0] sm:$0xf]
          %v4369 = vld [vmem:[%s3 + $0xb4] sm:$0xf]
          %v4370 = vld [vmem:[%s3 + $0xb8] sm:$0xf]
          %v4371 = vld [vmem:[%s3 + $0xbc] sm:$0xf]
          %v4372 = vld [vmem:[%s3 + $0xc0] sm:$0xf]
          %v4373 = vld [vmem:[%s3 + $0xc4] sm:$0xf]
          %v4374 = vld [vmem:[%s3 + $0xc8] sm:$0xf]
          %v4375 = vld [vmem:[%s3 + $0xcc] sm:$0xf]
          %v4376 = vld [vmem:[%s3 + $0xd0] sm:$0xf]
          %v4377 = vld [vmem:[%s3 + $0xd4] sm:$0xf]
          %v4378 = vld [vmem:[%s3 + $0xd8] sm:$0xf]
          %v4379 = vld [vmem:[%s3 + $0xdc] sm:$0xf]
          %v4380 = vld [vmem:[%s3 + $0xe0] sm:$0xf]
          %v4381 = vld [vmem:[%s3 + $0xe4] sm:$0xf]
          %v4382 = vld [vmem:[%s3 + $0xe8] sm:$0xf]
          %v4383 = vld [vmem:[%s3 + $0xec] sm:$0xf]
          %v4384 = vld [vmem:[%s3 + $0xf0] sm:$0xf]
          %v4385 = vld [vmem:[%s3 + $0xf4] sm:$0xf]
          %v4386 = vld [vmem:[%s3 + $0xf8] sm:$0xf]
          %v4387 = vld [vmem:[%s3 + $0xfc] sm:$0xf]
          %v4388 = vld [vmem:[%s3 + $0x100] sm:$0xf]
          %v4389 = vld [vmem:[%s3 + $0x104] sm:$0xf]
          %v4390 = vld [vmem:[%s3 + $0x108] sm:$0xf]
          %v4391 = vld [vmem:[%s3 + $0x10c] sm:$0xf]
          %v4392 = vld [vmem:[%s3 + $0x110] sm:$0xf]
          %v4393 = vld [vmem:[%s3 + $0x114] sm:$0xf]
          %v4394 = vld [vmem:[%s3 + $0x118] sm:$0xf]
          %v4395 = vld [vmem:[%s3 + $0x11c] sm:$0xf]
          %v4396 = vld [vmem:[%s3 + $0x120] sm:$0xf]
          %v4397 = vld [vmem:[%s3 + $0x124] sm:$0xf]
          %v4398 = vld [vmem:[%s3 + $0x128] sm:$0xf]
          %v4399 = vld [vmem:[%s3 + $0x12c] sm:$0xf]
          %v4400 = vld [vmem:[%s3 + $0x130] sm:$0xf]
          %v4401 = vld [vmem:[%s3 + $0x134] sm:$0xf]
          %v4402 = vld [vmem:[%s3 + $0x138] sm:$0xf]
          %v4403 = vld [vmem:[%s3 + $0x13c] sm:$0xf]
          %s4404 = scalar_lea.vmem [#allocation2], 40
          %v4405 = vld [vmem:[%s4404] sm:$0xff]
          %v4406 = vld [vmem:[%s4404 + $0x8] sm:$0xff]
          %v4407 = vld [vmem:[%s4404 + $0x10] sm:$0xf]
          %v4408 = vld [vmem:[%s4404 + $0x14] sm:$0xff]
          %v4409 = vld [vmem:[%s4404 + $0x1c] sm:$0xff]
          %v4410 = vld [vmem:[%s4404 + $0x24] sm:$0xf]
          %v4411 = vld [vmem:[%s4404 + $0x28] sm:$0xff]
          %v4412 = vld [vmem:[%s4404 + $0x30] sm:$0xff]
          %v4413 = vld [vmem:[%s4404 + $0x38] sm:$0xf]
          %v4414 = vld [vmem:[%s4404 + $0x3c] sm:$0xff]
          %v4415 = vld [vmem:[%s4404 + $0x44] sm:$0xff]
          %v4416 = vld [vmem:[%s4404 + $0x4c] sm:$0xf]
          %v4417 = vld [vmem:[%s4404 + $0x50] sm:$0xff]
          %v4418 = vld [vmem:[%s4404 + $0x58] sm:$0xff]
          %v4419 = vld [vmem:[%s4404 + $0x60] sm:$0xf]
          %v4420 = vld [vmem:[%s4404 + $0x64] sm:$0xff]
          %v4421 = vld [vmem:[%s4404 + $0x6c] sm:$0xff]
          %v4422 = vld [vmem:[%s4404 + $0x74] sm:$0xf]
          %v4423 = vld [vmem:[%s4404 + $0x78] sm:$0xff]
          %v4424 = vld [vmem:[%s4404 + $0x80] sm:$0xff]
          %v4425 = vld [vmem:[%s4404 + $0x88] sm:$0xf]
          %v4426 = vld [vmem:[%s4404 + $0x8c] sm:$0xff]
          %v4427 = vld [vmem:[%s4404 + $0x94] sm:$0xff]
          %v4428 = vld [vmem:[%s4404 + $0x9c] sm:$0xf]
          %v4429 = vld [vmem:[%s4404 + $0xa0] sm:$0xff]
          %v4430 = vld [vmem:[%s4404 + $0xa8] sm:$0xff]
          %v4431 = vld [vmem:[%s4404 + $0xb0] sm:$0xf]
          %v4432 = vld [vmem:[%s4404 + $0xb4] sm:$0xff]
          %v4433 = vld [vmem:[%s4404 + $0xbc] sm:$0xff]
          %v4434 = vld [vmem:[%s4404 + $0xc4] sm:$0xf]
          %v4435 = vld [vmem:[%s4404 + $0xc8] sm:$0xff]
          %v4436 = vld [vmem:[%s4404 + $0xd0] sm:$0xff]
          %v4437 = vld [vmem:[%s4404 + $0xd8] sm:$0xf]
          %v4438 = vld [vmem:[%s4404 + $0xdc] sm:$0xff]
          %v4439 = vld [vmem:[%s4404 + $0xe4] sm:$0xff]
          %v4440 = vld [vmem:[%s4404 + $0xec] sm:$0xf]
          %v4441 = vld [vmem:[%s4404 + $0xf0] sm:$0xff]
          %v4442 = vld [vmem:[%s4404 + $0xf8] sm:$0xff]
          %v4443 = vld [vmem:[%s4404 + $0x100] sm:$0xf]
          %v4444 = vld [vmem:[%s4404 + $0x104] sm:$0xff]
          %v4445 = vld [vmem:[%s4404 + $0x10c] sm:$0xff]
          %v4446 = vld [vmem:[%s4404 + $0x114] sm:$0xf]
          %v4447 = vld [vmem:[%s4404 + $0x118] sm:$0xff]
          %v4448 = vld [vmem:[%s4404 + $0x120] sm:$0xff]
          %v4449 = vld [vmem:[%s4404 + $0x128] sm:$0xf]
          %v4450 = vld [vmem:[%s4404 + $0x12c] sm:$0xff]
          %v4451 = vld [vmem:[%s4404 + $0x134] sm:$0xff]
          %v4452 = vld [vmem:[%s4404 + $0x13c] sm:$0xf]
          %v4453 = vld [vmem:[%s4404 + $0x140] sm:$0xff]
          %v4454 = vld [vmem:[%s4404 + $0x148] sm:$0xff]
          %v4455 = vld [vmem:[%s4404 + $0x150] sm:$0xf]
          %v4456 = vld [vmem:[%s4404 + $0x154] sm:$0xff]
          %v4457 = vld [vmem:[%s4404 + $0x15c] sm:$0xff]
          %v4458 = vld [vmem:[%s4404 + $0x164] sm:$0xf]
          %v4459 = vld [vmem:[%s4404 + $0x168] sm:$0xff]
          %v4460 = vld [vmem:[%s4404 + $0x170] sm:$0xff]
          %v4461 = vld [vmem:[%s4404 + $0x178] sm:$0xf]
          %v4462 = vld [vmem:[%s4404 + $0x17c] sm:$0xff]
          %v4463 = vld [vmem:[%s4404 + $0x184] sm:$0xff]
          %v4464 = vld [vmem:[%s4404 + $0x18c] sm:$0xf]
          %v4465 = vld [vmem:[%s4404 + $0x190] sm:$0xff]
          %v4466 = vld [vmem:[%s4404 + $0x198] sm:$0xff]
          %v4467 = vld [vmem:[%s4404 + $0x1a0] sm:$0xf]
          %v4468 = vld [vmem:[%s4404 + $0x1a4] sm:$0xff]
          %v4469 = vld [vmem:[%s4404 + $0x1ac] sm:$0xff]
          %v4470 = vld [vmem:[%s4404 + $0x1b4] sm:$0xf]
          %v4471 = vld [vmem:[%s4404 + $0x1b8] sm:$0xff]
          %v4472 = vld [vmem:[%s4404 + $0x1c0] sm:$0xff]
          %v4473 = vld [vmem:[%s4404 + $0x1c8] sm:$0xf]
          %v4474 = vld [vmem:[%s4404 + $0x1cc] sm:$0xff]
          %v4475 = vld [vmem:[%s4404 + $0x1d4] sm:$0xff]
          %v4476 = vld [vmem:[%s4404 + $0x1dc] sm:$0xf]
          %v4477 = vld [vmem:[%s4404 + $0x1e0] sm:$0xff]
          %v4478 = vld [vmem:[%s4404 + $0x1e8] sm:$0xff]
          %v4479 = vld [vmem:[%s4404 + $0x1f0] sm:$0xf]
          %v4480 = vld [vmem:[%s4404 + $0x1f4] sm:$0xff]
          %v4481 = vld [vmem:[%s4404 + $0x1fc] sm:$0xff]
          %v4482 = vld [vmem:[%s4404 + $0x204] sm:$0xf]
          %v4483 = vld [vmem:[%s4404 + $0x208] sm:$0xff]
          %v4484 = vld [vmem:[%s4404 + $0x210] sm:$0xff]
          %v4485 = vld [vmem:[%s4404 + $0x218] sm:$0xf]
          %v4486 = vld [vmem:[%s4404 + $0x21c] sm:$0xff]
          %v4487 = vld [vmem:[%s4404 + $0x224] sm:$0xff]
          %v4488 = vld [vmem:[%s4404 + $0x22c] sm:$0xf]
          %v4489 = vld [vmem:[%s4404 + $0x230] sm:$0xff]
          %v4490 = vld [vmem:[%s4404 + $0x238] sm:$0xff]
          %v4491 = vld [vmem:[%s4404 + $0x240] sm:$0xf]
          %v4492 = vld [vmem:[%s4404 + $0x244] sm:$0xff]
          %v4493 = vld [vmem:[%s4404 + $0x24c] sm:$0xff]
          %v4494 = vld [vmem:[%s4404 + $0x254] sm:$0xf]
          %v4495 = vld [vmem:[%s4404 + $0x258] sm:$0xff]
          %v4496 = vld [vmem:[%s4404 + $0x260] sm:$0xff]
          %v4497 = vld [vmem:[%s4404 + $0x268] sm:$0xf]
          %v4498 = vld [vmem:[%s4404 + $0x26c] sm:$0xff]
          %v4499 = vld [vmem:[%s4404 + $0x274] sm:$0xff]
          %v4500 = vld [vmem:[%s4404 + $0x27c] sm:$0xf]
          %s4501 = scalar_lea.vmem %s3, 320
          %v4502 = vld [vmem:[%s4501] sm:$0xf]
          %v4503 = vld [vmem:[%s4501 + $0x4] sm:$0xf]
          %v4504 = vld [vmem:[%s4501 + $0x8] sm:$0xf]
          %v4505 = vld [vmem:[%s4501 + $0xc] sm:$0xf]
          %v4506 = vld [vmem:[%s4501 + $0x10] sm:$0xf]
          %v4507 = vld [vmem:[%s4501 + $0x14] sm:$0xf]
          %v4508 = vld [vmem:[%s4501 + $0x18] sm:$0xf]
          %v4509 = vld [vmem:[%s4501 + $0x1c] sm:$0xf]
          %v4510 = vld [vmem:[%s4501 + $0x20] sm:$0xf]
          %v4511 = vld [vmem:[%s4501 + $0x24] sm:$0xf]
          %v4512 = vld [vmem:[%s4501 + $0x28] sm:$0xf]
          %v4513 = vld [vmem:[%s4501 + $0x2c] sm:$0xf]
          %v4514 = vld [vmem:[%s4501 + $0x30] sm:$0xf]
          %v4515 = vld [vmem:[%s4501 + $0x34] sm:$0xf]
          %v4516 = vld [vmem:[%s4501 + $0x38] sm:$0xf]
          %v4517 = vld [vmem:[%s4501 + $0x3c] sm:$0xf]
          %v4518 = vld [vmem:[%s4501 + $0x40] sm:$0xf]
          %v4519 = vld [vmem:[%s4501 + $0x44] sm:$0xf]
          %v4520 = vld [vmem:[%s4501 + $0x48] sm:$0xf]
          %v4521 = vld [vmem:[%s4501 + $0x4c] sm:$0xf]
          %v4522 = vld [vmem:[%s4501 + $0x50] sm:$0xf]
          %v4523 = vld [vmem:[%s4501 + $0x54] sm:$0xf]
          %v4524 = vld [vmem:[%s4501 + $0x58] sm:$0xf]
          %v4525 = vld [vmem:[%s4501 + $0x5c] sm:$0xf]
          %v4526 = vld [vmem:[%s4501 + $0x60] sm:$0xf]
          %v4527 = vld [vmem:[%s4501 + $0x64] sm:$0xf]
          %v4528 = vld [vmem:[%s4501 + $0x68] sm:$0xf]
          %v4529 = vld [vmem:[%s4501 + $0x6c] sm:$0xf]
          %v4530 = vld [vmem:[%s4501 + $0x70] sm:$0xf]
          %v4531 = vld [vmem:[%s4501 + $0x74] sm:$0xf]
          %v4532 = vld [vmem:[%s4501 + $0x78] sm:$0xf]
          %v4533 = vld [vmem:[%s4501 + $0x7c] sm:$0xf]
          %v4534 = vld [vmem:[%s4501 + $0x80] sm:$0xf]
          %v4535 = vld [vmem:[%s4501 + $0x84] sm:$0xf]
          %v4536 = vld [vmem:[%s4501 + $0x88] sm:$0xf]
          %v4537 = vld [vmem:[%s4501 + $0x8c] sm:$0xf]
          %v4538 = vld [vmem:[%s4501 + $0x90] sm:$0xf]
          %v4539 = vld [vmem:[%s4501 + $0x94] sm:$0xf]
          %v4540 = vld [vmem:[%s4501 + $0x98] sm:$0xf]
          %v4541 = vld [vmem:[%s4501 + $0x9c] sm:$0xf]
          %v4542 = vld [vmem:[%s4501 + $0xa0] sm:$0xf]
          %v4543 = vld [vmem:[%s4501 + $0xa4] sm:$0xf]
          %v4544 = vld [vmem:[%s4501 + $0xa8] sm:$0xf]
          %v4545 = vld [vmem:[%s4501 + $0xac] sm:$0xf]
          %v4546 = vld [vmem:[%s4501 + $0xb0] sm:$0xf]
          %v4547 = vld [vmem:[%s4501 + $0xb4] sm:$0xf]
          %v4548 = vld [vmem:[%s4501 + $0xb8] sm:$0xf]
          %v4549 = vld [vmem:[%s4501 + $0xbc] sm:$0xf]
          %v4550 = vld [vmem:[%s4501 + $0xc0] sm:$0xf]
          %v4551 = vld [vmem:[%s4501 + $0xc4] sm:$0xf]
          %v4552 = vld [vmem:[%s4501 + $0xc8] sm:$0xf]
          %v4553 = vld [vmem:[%s4501 + $0xcc] sm:$0xf]
          %v4554 = vld [vmem:[%s4501 + $0xd0] sm:$0xf]
          %v4555 = vld [vmem:[%s4501 + $0xd4] sm:$0xf]
          %v4556 = vld [vmem:[%s4501 + $0xd8] sm:$0xf]
          %v4557 = vld [vmem:[%s4501 + $0xdc] sm:$0xf]
          %v4558 = vld [vmem:[%s4501 + $0xe0] sm:$0xf]
          %v4559 = vld [vmem:[%s4501 + $0xe4] sm:$0xf]
          %v4560 = vld [vmem:[%s4501 + $0xe8] sm:$0xf]
          %v4561 = vld [vmem:[%s4501 + $0xec] sm:$0xf]
          %v4562 = vld [vmem:[%s4501 + $0xf0] sm:$0xf]
          %v4563 = vld [vmem:[%s4501 + $0xf4] sm:$0xf]
          %v4564 = vld [vmem:[%s4501 + $0xf8] sm:$0xf]
          %v4565 = vld [vmem:[%s4501 + $0xfc] sm:$0xf]
          %v4566 = vld [vmem:[%s4501 + $0x100] sm:$0xf]
          %v4567 = vld [vmem:[%s4501 + $0x104] sm:$0xf]
          %v4568 = vld [vmem:[%s4501 + $0x108] sm:$0xf]
          %v4569 = vld [vmem:[%s4501 + $0x10c] sm:$0xf]
          %v4570 = vld [vmem:[%s4501 + $0x110] sm:$0xf]
          %v4571 = vld [vmem:[%s4501 + $0x114] sm:$0xf]
          %v4572 = vld [vmem:[%s4501 + $0x118] sm:$0xf]
          %v4573 = vld [vmem:[%s4501 + $0x11c] sm:$0xf]
          %v4574 = vld [vmem:[%s4501 + $0x120] sm:$0xf]
          %v4575 = vld [vmem:[%s4501 + $0x124] sm:$0xf]
          %v4576 = vld [vmem:[%s4501 + $0x128] sm:$0xf]
          %v4577 = vld [vmem:[%s4501 + $0x12c] sm:$0xf]
          %v4578 = vld [vmem:[%s4501 + $0x130] sm:$0xf]
          %v4579 = vld [vmem:[%s4501 + $0x134] sm:$0xf]
          %v4580 = vld [vmem:[%s4501 + $0x138] sm:$0xf]
          %v4581 = vld [vmem:[%s4501 + $0x13c] sm:$0xf]
          %v4678 = vunpack.c.l.b16 %v4405
          %v4679 = vunpack.c.h.b16 %v4405
          %v4680 = vunpack.c.l.b16 %v4406
          %v4681 = vunpack.c.h.b16 %v4406
          %v4682 = vunpack.c.l.b16 %v4407
          %v4683 = vunpack.c.l.b16 %v4408
          %v4684 = vunpack.c.h.b16 %v4408
          %v4685 = vunpack.c.l.b16 %v4409
          %v4686 = vunpack.c.h.b16 %v4409
          %v4687 = vunpack.c.l.b16 %v4410
          %v4688 = vunpack.c.l.b16 %v4411
          %v4689 = vunpack.c.h.b16 %v4411
          %v4690 = vunpack.c.l.b16 %v4412
          %v4691 = vunpack.c.h.b16 %v4412
          %v4692 = vunpack.c.l.b16 %v4413
          %v4693 = vunpack.c.l.b16 %v4414
          %v4694 = vunpack.c.h.b16 %v4414
          %v4695 = vunpack.c.l.b16 %v4415
          %v4696 = vunpack.c.h.b16 %v4415
          %v4697 = vunpack.c.l.b16 %v4416
          %v4698 = vunpack.c.l.b16 %v4417
          %v4699 = vunpack.c.h.b16 %v4417
          %v4700 = vunpack.c.l.b16 %v4418
          %v4701 = vunpack.c.h.b16 %v4418
          %v4702 = vunpack.c.l.b16 %v4419
          %v4703 = vunpack.c.l.b16 %v4420
          %v4704 = vunpack.c.h.b16 %v4420
          %v4705 = vunpack.c.l.b16 %v4421
          %v4706 = vunpack.c.h.b16 %v4421
          %v4707 = vunpack.c.l.b16 %v4422
          %v4708 = vunpack.c.l.b16 %v4423
          %v4709 = vunpack.c.h.b16 %v4423
          %v4710 = vunpack.c.l.b16 %v4424
          %v4711 = vunpack.c.h.b16 %v4424
          %v4712 = vunpack.c.l.b16 %v4425
          %v4713 = vunpack.c.l.b16 %v4426
          %v4714 = vunpack.c.h.b16 %v4426
          %v4715 = vunpack.c.l.b16 %v4427
          %v4716 = vunpack.c.h.b16 %v4427
          %v4717 = vunpack.c.l.b16 %v4428
          %v4718 = vunpack.c.l.b16 %v4429
          %v4719 = vunpack.c.h.b16 %v4429
          %v4720 = vunpack.c.l.b16 %v4430
          %v4721 = vunpack.c.h.b16 %v4430
          %v4722 = vunpack.c.l.b16 %v4431
          %v4723 = vunpack.c.l.b16 %v4432
          %v4724 = vunpack.c.h.b16 %v4432
          %v4725 = vunpack.c.l.b16 %v4433
          %v4726 = vunpack.c.h.b16 %v4433
          %v4727 = vunpack.c.l.b16 %v4434
          %v4728 = vunpack.c.l.b16 %v4435
          %v4729 = vunpack.c.h.b16 %v4435
          %v4730 = vunpack.c.l.b16 %v4436
          %v4731 = vunpack.c.h.b16 %v4436
          %v4732 = vunpack.c.l.b16 %v4437
          %v4733 = vunpack.c.l.b16 %v4438
          %v4734 = vunpack.c.h.b16 %v4438
          %v4735 = vunpack.c.l.b16 %v4439
          %v4736 = vunpack.c.h.b16 %v4439
          %v4737 = vunpack.c.l.b16 %v4440
          %v4738 = vunpack.c.l.b16 %v4441
          %v4739 = vunpack.c.h.b16 %v4441
          %v4740 = vunpack.c.l.b16 %v4442
          %v4741 = vunpack.c.h.b16 %v4442
          %v4742 = vunpack.c.l.b16 %v4443
          %v4743 = vunpack.c.l.b16 %v4444
          %v4744 = vunpack.c.h.b16 %v4444
          %v4745 = vunpack.c.l.b16 %v4445
          %v4746 = vunpack.c.h.b16 %v4445
          %v4747 = vunpack.c.l.b16 %v4446
          %v4748 = vunpack.c.l.b16 %v4447
          %v4749 = vunpack.c.h.b16 %v4447
          %v4750 = vunpack.c.l.b16 %v4448
          %v4751 = vunpack.c.h.b16 %v4448
          %v4752 = vunpack.c.l.b16 %v4449
          %v4753 = vunpack.c.l.b16 %v4450
          %v4754 = vunpack.c.h.b16 %v4450
          %v4755 = vunpack.c.l.b16 %v4451
          %v4756 = vunpack.c.h.b16 %v4451
          %v4757 = vunpack.c.l.b16 %v4452
          %v4758 = vunpack.c.l.b16 %v4453
          %v4759 = vunpack.c.h.b16 %v4453
          %v4760 = vunpack.c.l.b16 %v4454
          %v4761 = vunpack.c.h.b16 %v4454
          %v4762 = vunpack.c.l.b16 %v4455
          %v4763 = vunpack.c.l.b16 %v4456
          %v4764 = vunpack.c.h.b16 %v4456
          %v4765 = vunpack.c.l.b16 %v4457
          %v4766 = vunpack.c.h.b16 %v4457
          %v4767 = vunpack.c.l.b16 %v4458
          %v4768 = vunpack.c.l.b16 %v4459
          %v4769 = vunpack.c.h.b16 %v4459
          %v4770 = vunpack.c.l.b16 %v4460
          %v4771 = vunpack.c.h.b16 %v4460
          %v4772 = vunpack.c.l.b16 %v4461
          %v4773 = vunpack.c.l.b16 %v4462
          %v4774 = vunpack.c.h.b16 %v4462
          %v4775 = vunpack.c.l.b16 %v4463
          %v4776 = vunpack.c.h.b16 %v4463
          %v4777 = vunpack.c.l.b16 %v4464
          %v4778 = vunpack.c.l.b16 %v4465
          %v4779 = vunpack.c.h.b16 %v4465
          %v4780 = vunpack.c.l.b16 %v4466
          %v4781 = vunpack.c.h.b16 %v4466
          %v4782 = vunpack.c.l.b16 %v4467
          %v4783 = vunpack.c.l.b16 %v4468
          %v4784 = vunpack.c.h.b16 %v4468
          %v4785 = vunpack.c.l.b16 %v4469
          %v4786 = vunpack.c.h.b16 %v4469
          %v4787 = vunpack.c.l.b16 %v4470
          %v4788 = vunpack.c.l.b16 %v4471
          %v4789 = vunpack.c.h.b16 %v4471
          %v4790 = vunpack.c.l.b16 %v4472
          %v4791 = vunpack.c.h.b16 %v4472
          %v4792 = vunpack.c.l.b16 %v4473
          %v4793 = vunpack.c.l.b16 %v4474
          %v4794 = vunpack.c.h.b16 %v4474
          %v4795 = vunpack.c.l.b16 %v4475
          %v4796 = vunpack.c.h.b16 %v4475
          %v4797 = vunpack.c.l.b16 %v4476
          %v4798 = vunpack.c.l.b16 %v4477
          %v4799 = vunpack.c.h.b16 %v4477
          %v4800 = vunpack.c.l.b16 %v4478
          %v4801 = vunpack.c.h.b16 %v4478
          %v4802 = vunpack.c.l.b16 %v4479
          %v4803 = vunpack.c.l.b16 %v4480
          %v4804 = vunpack.c.h.b16 %v4480
          %v4805 = vunpack.c.l.b16 %v4481
          %v4806 = vunpack.c.h.b16 %v4481
          %v4807 = vunpack.c.l.b16 %v4482
          %v4808 = vunpack.c.l.b16 %v4483
          %v4809 = vunpack.c.h.b16 %v4483
          %v4810 = vunpack.c.l.b16 %v4484
          %v4811 = vunpack.c.h.b16 %v4484
          %v4812 = vunpack.c.l.b16 %v4485
          %v4813 = vunpack.c.l.b16 %v4486
          %v4814 = vunpack.c.h.b16 %v4486
          %v4815 = vunpack.c.l.b16 %v4487
          %v4816 = vunpack.c.h.b16 %v4487
          %v4817 = vunpack.c.l.b16 %v4488
          %v4818 = vunpack.c.l.b16 %v4489
          %v4819 = vunpack.c.h.b16 %v4489
          %v4820 = vunpack.c.l.b16 %v4490
          %v4821 = vunpack.c.h.b16 %v4490
          %v4822 = vunpack.c.l.b16 %v4491
          %v4823 = vunpack.c.l.b16 %v4492
          %v4824 = vunpack.c.h.b16 %v4492
          %v4825 = vunpack.c.l.b16 %v4493
          %v4826 = vunpack.c.h.b16 %v4493
          %v4827 = vunpack.c.l.b16 %v4494
          %v4828 = vunpack.c.l.b16 %v4495
          %v4829 = vunpack.c.h.b16 %v4495
          %v4830 = vunpack.c.l.b16 %v4496
          %v4831 = vunpack.c.h.b16 %v4496
          %v4832 = vunpack.c.l.b16 %v4497
          %v4833 = vunpack.c.l.b16 %v4498
          %v4834 = vunpack.c.h.b16 %v4498
          %v4835 = vunpack.c.l.b16 %v4499
          %v4836 = vunpack.c.h.b16 %v4499
          %v4837 = vunpack.c.l.b16 %v4500
          %v4838 = vpack.c.b16 %v4683, %v4678
          %v4839 = vpack.c.b16 %v4684, %v4679
          %v4840 = vpack.c.b16 %v4685, %v4680
          %v4841 = vpack.c.b16 %v4686, %v4681
          %v4842 = vpack.c.b16 %v4687, %v4682
          %v4843 = vpack.c.b16 %v4693, %v4688
          %v4844 = vpack.c.b16 %v4694, %v4689
          %v4845 = vpack.c.b16 %v4695, %v4690
          %v4846 = vpack.c.b16 %v4696, %v4691
          %v4847 = vpack.c.b16 %v4697, %v4692
          %v4848 = vpack.c.b16 %v4703, %v4698
          %v4849 = vpack.c.b16 %v4704, %v4699
          %v4850 = vpack.c.b16 %v4705, %v4700
          %v4851 = vpack.c.b16 %v4706, %v4701
          %v4852 = vpack.c.b16 %v4707, %v4702
          %v4853 = vpack.c.b16 %v4713, %v4708
          %v4854 = vpack.c.b16 %v4714, %v4709
          %v4855 = vpack.c.b16 %v4715, %v4710
          %v4856 = vpack.c.b16 %v4716, %v4711
          %v4857 = vpack.c.b16 %v4717, %v4712
          %v4858 = vpack.c.b16 %v4723, %v4718
          %v4859 = vpack.c.b16 %v4724, %v4719
          %v4860 = vpack.c.b16 %v4725, %v4720
          %v4861 = vpack.c.b16 %v4726, %v4721
          %v4862 = vpack.c.b16 %v4727, %v4722
          %v4863 = vpack.c.b16 %v4733, %v4728
          %v4864 = vpack.c.b16 %v4734, %v4729
          %v4865 = vpack.c.b16 %v4735, %v4730
          %v4866 = vpack.c.b16 %v4736, %v4731
          %v4867 = vpack.c.b16 %v4737, %v4732
          %v4868 = vpack.c.b16 %v4743, %v4738
          %v4869 = vpack.c.b16 %v4744, %v4739
          %v4870 = vpack.c.b16 %v4745, %v4740
          %v4871 = vpack.c.b16 %v4746, %v4741
          %v4872 = vpack.c.b16 %v4747, %v4742
          %v4873 = vpack.c.b16 %v4753, %v4748
          %v4874 = vpack.c.b16 %v4754, %v4749
          %v4875 = vpack.c.b16 %v4755, %v4750
          %v4876 = vpack.c.b16 %v4756, %v4751
          %v4877 = vpack.c.b16 %v4757, %v4752
          %v4878 = vpack.c.b16 %v4763, %v4758
          %v4879 = vpack.c.b16 %v4764, %v4759
          %v4880 = vpack.c.b16 %v4765, %v4760
          %v4881 = vpack.c.b16 %v4766, %v4761
          %v4882 = vpack.c.b16 %v4767, %v4762
          %v4883 = vpack.c.b16 %v4773, %v4768
          %v4884 = vpack.c.b16 %v4774, %v4769
          %v4885 = vpack.c.b16 %v4775, %v4770
          %v4886 = vpack.c.b16 %v4776, %v4771
          %v4887 = vpack.c.b16 %v4777, %v4772
          %v4888 = vpack.c.b16 %v4783, %v4778
          %v4889 = vpack.c.b16 %v4784, %v4779
          %v4890 = vpack.c.b16 %v4785, %v4780
          %v4891 = vpack.c.b16 %v4786, %v4781
          %v4892 = vpack.c.b16 %v4787, %v4782
          %v4893 = vpack.c.b16 %v4793, %v4788
          %v4894 = vpack.c.b16 %v4794, %v4789
          %v4895 = vpack.c.b16 %v4795, %v4790
          %v4896 = vpack.c.b16 %v4796, %v4791
          %v4897 = vpack.c.b16 %v4797, %v4792
          %v4898 = vpack.c.b16 %v4803, %v4798
          %v4899 = vpack.c.b16 %v4804, %v4799
          %v4900 = vpack.c.b16 %v4805, %v4800
          %v4901 = vpack.c.b16 %v4806, %v4801
          %v4902 = vpack.c.b16 %v4807, %v4802
          %v4903 = vpack.c.b16 %v4813, %v4808
          %v4904 = vpack.c.b16 %v4814, %v4809
          %v4905 = vpack.c.b16 %v4815, %v4810
          %v4906 = vpack.c.b16 %v4816, %v4811
          %v4907 = vpack.c.b16 %v4817, %v4812
          %v4908 = vpack.c.b16 %v4823, %v4818
          %v4909 = vpack.c.b16 %v4824, %v4819
          %v4910 = vpack.c.b16 %v4825, %v4820
          %v4911 = vpack.c.b16 %v4826, %v4821
          %v4912 = vpack.c.b16 %v4827, %v4822
          %v4913 = vpack.c.b16 %v4833, %v4828
          %v4914 = vpack.c.b16 %v4834, %v4829
          %v4915 = vpack.c.b16 %v4835, %v4830
          %v4916 = vpack.c.b16 %v4836, %v4831
          %v4917 = vpack.c.b16 %v4837, %v4832
          %v5078 = vunpack.c.l.b16 %v4502
          %v5079 = vunpack.c.l.b16 %v4503
          %v5080 = vunpack.c.l.b16 %v4504
          %v5081 = vunpack.c.l.b16 %v4505
          %v5082 = vunpack.c.l.b16 %v4506
          %v5083 = vunpack.c.l.b16 %v4507
          %v5084 = vunpack.c.l.b16 %v4508
          %v5085 = vunpack.c.l.b16 %v4509
          %v5086 = vunpack.c.l.b16 %v4510
          %v5087 = vunpack.c.l.b16 %v4511
          %v5088 = vunpack.c.l.b16 %v4512
          %v5089 = vunpack.c.l.b16 %v4513
          %v5090 = vunpack.c.l.b16 %v4514
          %v5091 = vunpack.c.l.b16 %v4515
          %v5092 = vunpack.c.l.b16 %v4516
          %v5093 = vunpack.c.l.b16 %v4517
          %v5094 = vunpack.c.l.b16 %v4518
          %v5095 = vunpack.c.l.b16 %v4519
          %v5096 = vunpack.c.l.b16 %v4520
          %v5097 = vunpack.c.l.b16 %v4521
          %v5098 = vunpack.c.l.b16 %v4522
          %v5099 = vunpack.c.l.b16 %v4523
          %v5100 = vunpack.c.l.b16 %v4524
          %v5101 = vunpack.c.l.b16 %v4525
          %v5102 = vunpack.c.l.b16 %v4526
          %v5103 = vunpack.c.l.b16 %v4527
          %v5104 = vunpack.c.l.b16 %v4528
          %v5105 = vunpack.c.l.b16 %v4529
          %v5106 = vunpack.c.l.b16 %v4530
          %v5107 = vunpack.c.l.b16 %v4531
          %v5108 = vunpack.c.l.b16 %v4532
          %v5109 = vunpack.c.l.b16 %v4533
          %v5110 = vunpack.c.l.b16 %v4534
          %v5111 = vunpack.c.l.b16 %v4535
          %v5112 = vunpack.c.l.b16 %v4536
          %v5113 = vunpack.c.l.b16 %v4537
          %v5114 = vunpack.c.l.b16 %v4538
          %v5115 = vunpack.c.l.b16 %v4539
          %v5116 = vunpack.c.l.b16 %v4540
          %v5117 = vunpack.c.l.b16 %v4541
          %v5118 = vunpack.c.l.b16 %v4542
          %v5119 = vunpack.c.l.b16 %v4543
          %v5120 = vunpack.c.l.b16 %v4544
          %v5121 = vunpack.c.l.b16 %v4545
          %v5122 = vunpack.c.l.b16 %v4546
          %v5123 = vunpack.c.l.b16 %v4547
          %v5124 = vunpack.c.l.b16 %v4548
          %v5125 = vunpack.c.l.b16 %v4549
          %v5126 = vunpack.c.l.b16 %v4550
          %v5127 = vunpack.c.l.b16 %v4551
          %v5128 = vunpack.c.l.b16 %v4552
          %v5129 = vunpack.c.l.b16 %v4553
          %v5130 = vunpack.c.l.b16 %v4554
          %v5131 = vunpack.c.l.b16 %v4555
          %v5132 = vunpack.c.l.b16 %v4556
          %v5133 = vunpack.c.l.b16 %v4557
          %v5134 = vunpack.c.l.b16 %v4558
          %v5135 = vunpack.c.l.b16 %v4559
          %v5136 = vunpack.c.l.b16 %v4560
          %v5137 = vunpack.c.l.b16 %v4561
          %v5138 = vunpack.c.l.b16 %v4562
          %v5139 = vunpack.c.l.b16 %v4563
          %v5140 = vunpack.c.l.b16 %v4564
          %v5141 = vunpack.c.l.b16 %v4565
          %v5142 = vunpack.c.l.b16 %v4566
          %v5143 = vunpack.c.l.b16 %v4567
          %v5144 = vunpack.c.l.b16 %v4568
          %v5145 = vunpack.c.l.b16 %v4569
          %v5146 = vunpack.c.l.b16 %v4570
          %v5147 = vunpack.c.l.b16 %v4571
          %v5148 = vunpack.c.l.b16 %v4572
          %v5149 = vunpack.c.l.b16 %v4573
          %v5150 = vunpack.c.l.b16 %v4574
          %v5151 = vunpack.c.l.b16 %v4575
          %v5152 = vunpack.c.l.b16 %v4576
          %v5153 = vunpack.c.l.b16 %v4577
          %v5154 = vunpack.c.l.b16 %v4578
          %v5155 = vunpack.c.l.b16 %v4579
          %v5156 = vunpack.c.l.b16 %v4580
          %v5157 = vunpack.c.l.b16 %v4581
          %v5158 = vpack.c.b16 %v5079, %v5078
          %v5159 = vpack.c.b16 %v5081, %v5080
          %v5160 = vpack.c.b16 %v5083, %v5082
          %v5161 = vpack.c.b16 %v5085, %v5084
          %v5162 = vpack.c.b16 %v5087, %v5086
          %v5163 = vpack.c.b16 %v5089, %v5088
          %v5164 = vpack.c.b16 %v5091, %v5090
          %v5165 = vpack.c.b16 %v5093, %v5092
          %v5166 = vpack.c.b16 %v5095, %v5094
          %v5167 = vpack.c.b16 %v5097, %v5096
          %v5168 = vpack.c.b16 %v5099, %v5098
          %v5169 = vpack.c.b16 %v5101, %v5100
          %v5170 = vpack.c.b16 %v5103, %v5102
          %v5171 = vpack.c.b16 %v5105, %v5104
          %v5172 = vpack.c.b16 %v5107, %v5106
          %v5173 = vpack.c.b16 %v5109, %v5108
          %v5174 = vpack.c.b16 %v5111, %v5110
          %v5175 = vpack.c.b16 %v5113, %v5112
          %v5176 = vpack.c.b16 %v5115, %v5114
          %v5177 = vpack.c.b16 %v5117, %v5116
          %v5178 = vpack.c.b16 %v5119, %v5118
          %v5179 = vpack.c.b16 %v5121, %v5120
          %v5180 = vpack.c.b16 %v5123, %v5122
          %v5181 = vpack.c.b16 %v5125, %v5124
          %v5182 = vpack.c.b16 %v5127, %v5126
          %v5183 = vpack.c.b16 %v5129, %v5128
          %v5184 = vpack.c.b16 %v5131, %v5130
          %v5185 = vpack.c.b16 %v5133, %v5132
          %v5186 = vpack.c.b16 %v5135, %v5134
          %v5187 = vpack.c.b16 %v5137, %v5136
          %v5188 = vpack.c.b16 %v5139, %v5138
          %v5189 = vpack.c.b16 %v5141, %v5140
          %v5190 = vpack.c.b16 %v5143, %v5142
          %v5191 = vpack.c.b16 %v5145, %v5144
          %v5192 = vpack.c.b16 %v5147, %v5146
          %v5193 = vpack.c.b16 %v5149, %v5148
          %v5194 = vpack.c.b16 %v5151, %v5150
          %v5195 = vpack.c.b16 %v5153, %v5152
          %v5196 = vpack.c.b16 %v5155, %v5154
          %v5197 = vpack.c.b16 %v5157, %v5156
          %5238 = vmatprep.subr.bf16.mxu0 0
          %5239 = vmatpush1.bf16.msra.mxu0 %v5165
          %5240 = vmatprep.subr.bf16.mxu0 0
          %5241 = vmatpush1.bf16.msra.mxu0 %v5164
          %5242 = vmatprep.subr.bf16.mxu0 0
          %5243 = vmatpush1.bf16.msra.mxu0 %v5163
          %5244 = vmatprep.subr.bf16.mxu0 0
          %5245 = vmatpush1.bf16.msra.mxu0 %v5162
          %5246 = vmatprep.subr.bf16.mxu0 0
          %5247 = vmatpush1.bf16.msra.mxu0 %v5161
          %5248 = vmatprep.subr.bf16.mxu0 0
          %5249 = vmatpush1.bf16.msra.mxu0 %v5160
          %5250 = vmatprep.subr.bf16.mxu0 0
          %5251 = vmatpush1.bf16.msra.mxu0 %v5159
          %5252 = vmatprep.subr.bf16.mxu0 0
          %5253 = vmatpush1.bf16.msra.mxu0 %v5158
          %5254 = vmatprep.subr.bf16.mxu0 0
          %5255 = vmatpush2.bf16.msra.mxu0 %v5173
          %5256 = vmatprep.subr.bf16.mxu0 0
          %5257 = vmatpush2.bf16.msra.mxu0 %v5172
          %5258 = vmatprep.subr.bf16.mxu0 0
          %5259 = vmatpush2.bf16.msra.mxu0 %v5171
          %5260 = vmatprep.subr.bf16.mxu0 0
          %5261 = vmatpush2.bf16.msra.mxu0 %v5170
          %5262 = vmatprep.subr.bf16.mxu0 0
          %5263 = vmatpush2.bf16.msra.mxu0 %v5169
          %5264 = vmatprep.subr.bf16.mxu0 0
          %5265 = vmatpush2.bf16.msra.mxu0 %v5168
          %5266 = vmatprep.subr.bf16.mxu0 0
          %5267 = vmatpush2.bf16.msra.mxu0 %v5167
          %5268 = vmatprep.subr.bf16.mxu0 0
          %5269 = vmatpush2.bf16.msra.mxu0 %v5166
          %5270 = vmatprep.mubr.bf16.mxu0 %v4839
          %5271 = vmatmul.mubr.bf16.gmra.mxu0 %v4838
          %v5272 = vpop.f32.mrf.mxu0
          %v5273 = vadd.f32 0.0, %v5272
          %v5274 = vpop.f32.mrf.mxu0
          %v5275 = vpop.f32.mrf.mxu0
          %v5276 = vadd.f32 0.0, %v5275
          %v5277 = vpop.f32.mrf.mxu0
          %5278 = vmatprep.mubr.bf16.mxu0 %v4844
          %5279 = vmatmul.mubr.bf16.gmra.mxu0 %v4843
          %v5280 = vpop.f32.mrf.mxu0
          %v5281 = vadd.f32 0.0, %v5280
          %v5282 = vpop.f32.mrf.mxu0
          %v5283 = vpop.f32.mrf.mxu0
          %v5284 = vadd.f32 0.0, %v5283
          %v5285 = vpop.f32.mrf.mxu0
          %5286 = vmatprep.mubr.bf16.mxu0 %v4849
          %5287 = vmatmul.mubr.bf16.gmra.mxu0 %v4848
          %v5288 = vpop.f32.mrf.mxu0
          %v5289 = vadd.f32 0.0, %v5288
          %v5290 = vpop.f32.mrf.mxu0
          %v5291 = vpop.f32.mrf.mxu0
          %v5292 = vadd.f32 0.0, %v5291
          %v5293 = vpop.f32.mrf.mxu0
          %5294 = vmatprep.mubr.bf16.mxu0 %v4854
          %5295 = vmatmul.mubr.bf16.gmra.mxu0 %v4853
          %v5296 = vpop.f32.mrf.mxu0
          %v5297 = vadd.f32 0.0, %v5296
          %v5298 = vpop.f32.mrf.mxu0
          %v5299 = vpop.f32.mrf.mxu0
          %v5300 = vadd.f32 0.0, %v5299
          %v5301 = vpop.f32.mrf.mxu0
          %5302 = vmatprep.mubr.bf16.mxu0 %v4859
          %5303 = vmatmul.mubr.bf16.gmra.mxu0 %v4858
          %v5304 = vpop.f32.mrf.mxu0
          %v5305 = vadd.f32 0.0, %v5304
          %v5306 = vpop.f32.mrf.mxu0
          %v5307 = vpop.f32.mrf.mxu0
          %v5308 = vadd.f32 0.0, %v5307
          %v5309 = vpop.f32.mrf.mxu0
          %5310 = vmatprep.mubr.bf16.mxu0 %v4864
          %5311 = vmatmul.mubr.bf16.gmra.mxu0 %v4863
          %v5312 = vpop.f32.mrf.mxu0
          %v5313 = vadd.f32 0.0, %v5312
          %v5314 = vpop.f32.mrf.mxu0
          %v5315 = vpop.f32.mrf.mxu0
          %v5316 = vadd.f32 0.0, %v5315
          %v5317 = vpop.f32.mrf.mxu0
          %5318 = vmatprep.mubr.bf16.mxu0 %v4869
          %5319 = vmatmul.mubr.bf16.gmra.mxu0 %v4868
          %v5320 = vpop.f32.mrf.mxu0
          %v5321 = vadd.f32 0.0, %v5320
          %v5322 = vpop.f32.mrf.mxu0
          %v5323 = vpop.f32.mrf.mxu0
          %v5324 = vadd.f32 0.0, %v5323
          %v5325 = vpop.f32.mrf.mxu0
          %5326 = vmatprep.mubr.bf16.mxu0 %v4874
          %5327 = vmatmul.mubr.bf16.gmra.mxu0 %v4873
          %v5328 = vpop.f32.mrf.mxu0
          %v5329 = vadd.f32 0.0, %v5328
          %v5330 = vpop.f32.mrf.mxu0
          %v5331 = vpop.f32.mrf.mxu0
          %v5332 = vadd.f32 0.0, %v5331
          %v5333 = vpop.f32.mrf.mxu0
          %5334 = vmatprep.mubr.bf16.mxu0 %v4879
          %5335 = vmatmul.mubr.bf16.gmra.mxu0 %v4878
          %v5336 = vpop.f32.mrf.mxu0
          %v5337 = vadd.f32 0.0, %v5336
          %v5338 = vpop.f32.mrf.mxu0
          %v5339 = vpop.f32.mrf.mxu0
          %v5340 = vadd.f32 0.0, %v5339
          %v5341 = vpop.f32.mrf.mxu0
          %5342 = vmatprep.mubr.bf16.mxu0 %v4884
          %5343 = vmatmul.mubr.bf16.gmra.mxu0 %v4883
          %v5344 = vpop.f32.mrf.mxu0
          %v5345 = vadd.f32 0.0, %v5344
          %v5346 = vpop.f32.mrf.mxu0
          %v5347 = vpop.f32.mrf.mxu0
          %v5348 = vadd.f32 0.0, %v5347
          %v5349 = vpop.f32.mrf.mxu0
          %5350 = vmatprep.mubr.bf16.mxu0 %v4889
          %5351 = vmatmul.mubr.bf16.gmra.mxu0 %v4888
          %v5352 = vpop.f32.mrf.mxu0
          %v5353 = vadd.f32 0.0, %v5352
          %v5354 = vpop.f32.mrf.mxu0
          %v5355 = vpop.f32.mrf.mxu0
          %v5356 = vadd.f32 0.0, %v5355
          %v5357 = vpop.f32.mrf.mxu0
          %5358 = vmatprep.mubr.bf16.mxu0 %v4894
          %5359 = vmatmul.mubr.bf16.gmra.mxu0 %v4893
          %v5360 = vpop.f32.mrf.mxu0
          %v5361 = vadd.f32 0.0, %v5360
          %v5362 = vpop.f32.mrf.mxu0
          %v5363 = vpop.f32.mrf.mxu0
          %v5364 = vadd.f32 0.0, %v5363
          %v5365 = vpop.f32.mrf.mxu0
          %5366 = vmatprep.mubr.bf16.mxu0 %v4899
          %5367 = vmatmul.mubr.bf16.gmra.mxu0 %v4898
          %v5368 = vpop.f32.mrf.mxu0
          %v5369 = vadd.f32 0.0, %v5368
          %v5370 = vpop.f32.mrf.mxu0
          %v5371 = vpop.f32.mrf.mxu0
          %v5372 = vadd.f32 0.0, %v5371
          %v5373 = vpop.f32.mrf.mxu0
          %5374 = vmatprep.mubr.bf16.mxu0 %v4904
          %5375 = vmatmul.mubr.bf16.gmra.mxu0 %v4903
          %v5376 = vpop.f32.mrf.mxu0
          %v5377 = vadd.f32 0.0, %v5376
          %v5378 = vpop.f32.mrf.mxu0
          %v5379 = vpop.f32.mrf.mxu0
          %v5380 = vadd.f32 0.0, %v5379
          %v5381 = vpop.f32.mrf.mxu0
          %5382 = vmatprep.mubr.bf16.mxu0 %v4909
          %5383 = vmatmul.mubr.bf16.gmra.mxu0 %v4908
          %v5384 = vpop.f32.mrf.mxu0
          %v5385 = vadd.f32 0.0, %v5384
          %v5386 = vpop.f32.mrf.mxu0
          %v5387 = vpop.f32.mrf.mxu0
          %v5388 = vadd.f32 0.0, %v5387
          %v5389 = vpop.f32.mrf.mxu0
          %5390 = vmatprep.mubr.bf16.mxu0 %v4914
          %5391 = vmatmul.mubr.bf16.gmra.mxu0 %v4913
          %v5392 = vpop.f32.mrf.mxu0
          %v5393 = vadd.f32 0.0, %v5392
          %v5394 = vpop.f32.mrf.mxu0
          %v5395 = vpop.f32.mrf.mxu0
          %v5396 = vadd.f32 0.0, %v5395
          %v5397 = vpop.f32.mrf.mxu0
          %5398 = vdwg.mxu0
          %5399 = vmatprep.subr.bf16.mxu0 0
          %5400 = vmatpush1.bf16.msra.mxu0 %v5181
          %5401 = vmatprep.subr.bf16.mxu0 0
          %5402 = vmatpush1.bf16.msra.mxu0 %v5180
          %5403 = vmatprep.subr.bf16.mxu0 0
          %5404 = vmatpush1.bf16.msra.mxu0 %v5179
          %5405 = vmatprep.subr.bf16.mxu0 0
          %5406 = vmatpush1.bf16.msra.mxu0 %v5178
          %5407 = vmatprep.subr.bf16.mxu0 0
          %5408 = vmatpush1.bf16.msra.mxu0 %v5177
          %5409 = vmatprep.subr.bf16.mxu0 0
          %5410 = vmatpush1.bf16.msra.mxu0 %v5176
          %5411 = vmatprep.subr.bf16.mxu0 0
          %5412 = vmatpush1.bf16.msra.mxu0 %v5175
          %5413 = vmatprep.subr.bf16.mxu0 0
          %5414 = vmatpush1.bf16.msra.mxu0 %v5174
          %5415 = vmatprep.subr.bf16.mxu0 0
          %5416 = vmatpush2.bf16.msra.mxu0 %v5189
          %5417 = vmatprep.subr.bf16.mxu0 0
          %5418 = vmatpush2.bf16.msra.mxu0 %v5188
          %5419 = vmatprep.subr.bf16.mxu0 0
          %5420 = vmatpush2.bf16.msra.mxu0 %v5187
          %5421 = vmatprep.subr.bf16.mxu0 0
          %5422 = vmatpush2.bf16.msra.mxu0 %v5186
          %5423 = vmatprep.subr.bf16.mxu0 0
          %5424 = vmatpush2.bf16.msra.mxu0 %v5185
          %5425 = vmatprep.subr.bf16.mxu0 0
          %5426 = vmatpush2.bf16.msra.mxu0 %v5184
          %5427 = vmatprep.subr.bf16.mxu0 0
          %5428 = vmatpush2.bf16.msra.mxu0 %v5183
          %5429 = vmatprep.subr.bf16.mxu0 0
          %5430 = vmatpush2.bf16.msra.mxu0 %v5182
          %5431 = vmatprep.mubr.bf16.mxu0 %v4841
          %5432 = vmatmul.mubr.bf16.gmra.mxu0 %v4840
          %v5433 = vpop.f32.mrf.mxu0
          %v5434 = vadd.f32 %v5273, %v5433
          %v5435 = vpop.f32.mrf.mxu0
          %v5436 = vpop.f32.mrf.mxu0
          %v5437 = vadd.f32 %v5276, %v5436
          %v5438 = vpop.f32.mrf.mxu0
          %5439 = vmatprep.mubr.bf16.mxu0 %v4846
          %5440 = vmatmul.mubr.bf16.gmra.mxu0 %v4845
          %v5441 = vpop.f32.mrf.mxu0
          %v5442 = vadd.f32 %v5281, %v5441
          %v5443 = vpop.f32.mrf.mxu0
          %v5444 = vpop.f32.mrf.mxu0
          %v5445 = vadd.f32 %v5284, %v5444
          %v5446 = vpop.f32.mrf.mxu0
          %5447 = vmatprep.mubr.bf16.mxu0 %v4851
          %5448 = vmatmul.mubr.bf16.gmra.mxu0 %v4850
          %v5449 = vpop.f32.mrf.mxu0
          %v5450 = vadd.f32 %v5289, %v5449
          %v5451 = vpop.f32.mrf.mxu0
          %v5452 = vpop.f32.mrf.mxu0
          %v5453 = vadd.f32 %v5292, %v5452
          %v5454 = vpop.f32.mrf.mxu0
          %5455 = vmatprep.mubr.bf16.mxu0 %v4856
          %5456 = vmatmul.mubr.bf16.gmra.mxu0 %v4855
          %v5457 = vpop.f32.mrf.mxu0
          %v5458 = vadd.f32 %v5297, %v5457
          %v5459 = vpop.f32.mrf.mxu0
          %v5460 = vpop.f32.mrf.mxu0
          %v5461 = vadd.f32 %v5300, %v5460
          %v5462 = vpop.f32.mrf.mxu0
          %5463 = vmatprep.mubr.bf16.mxu0 %v4861
          %5464 = vmatmul.mubr.bf16.gmra.mxu0 %v4860
          %v5465 = vpop.f32.mrf.mxu0
          %v5466 = vadd.f32 %v5305, %v5465
          %v5467 = vpop.f32.mrf.mxu0
          %v5468 = vpop.f32.mrf.mxu0
          %v5469 = vadd.f32 %v5308, %v5468
          %v5470 = vpop.f32.mrf.mxu0
          %5471 = vmatprep.mubr.bf16.mxu0 %v4866
          %5472 = vmatmul.mubr.bf16.gmra.mxu0 %v4865
          %v5473 = vpop.f32.mrf.mxu0
          %v5474 = vadd.f32 %v5313, %v5473
          %v5475 = vpop.f32.mrf.mxu0
          %v5476 = vpop.f32.mrf.mxu0
          %v5477 = vadd.f32 %v5316, %v5476
          %v5478 = vpop.f32.mrf.mxu0
          %5479 = vmatprep.mubr.bf16.mxu0 %v4871
          %5480 = vmatmul.mubr.bf16.gmra.mxu0 %v4870
          %v5481 = vpop.f32.mrf.mxu0
          %v5482 = vadd.f32 %v5321, %v5481
          %v5483 = vpop.f32.mrf.mxu0
          %v5484 = vpop.f32.mrf.mxu0
          %v5485 = vadd.f32 %v5324, %v5484
          %v5486 = vpop.f32.mrf.mxu0
          %5487 = vmatprep.mubr.bf16.mxu0 %v4876
          %5488 = vmatmul.mubr.bf16.gmra.mxu0 %v4875
          %v5489 = vpop.f32.mrf.mxu0
          %v5490 = vadd.f32 %v5329, %v5489
          %v5491 = vpop.f32.mrf.mxu0
          %v5492 = vpop.f32.mrf.mxu0
          %v5493 = vadd.f32 %v5332, %v5492
          %v5494 = vpop.f32.mrf.mxu0
          %5495 = vmatprep.mubr.bf16.mxu0 %v4881
          %5496 = vmatmul.mubr.bf16.gmra.mxu0 %v4880
          %v5497 = vpop.f32.mrf.mxu0
          %v5498 = vadd.f32 %v5337, %v5497
          %v5499 = vpop.f32.mrf.mxu0
          %v5500 = vpop.f32.mrf.mxu0
          %v5501 = vadd.f32 %v5340, %v5500
          %v5502 = vpop.f32.mrf.mxu0
          %5503 = vmatprep.mubr.bf16.mxu0 %v4886
          %5504 = vmatmul.mubr.bf16.gmra.mxu0 %v4885
          %v5505 = vpop.f32.mrf.mxu0
          %v5506 = vadd.f32 %v5345, %v5505
          %v5507 = vpop.f32.mrf.mxu0
          %v5508 = vpop.f32.mrf.mxu0
          %v5509 = vadd.f32 %v5348, %v5508
          %v5510 = vpop.f32.mrf.mxu0
          %5511 = vmatprep.mubr.bf16.mxu0 %v4891
          %5512 = vmatmul.mubr.bf16.gmra.mxu0 %v4890
          %v5513 = vpop.f32.mrf.mxu0
          %v5514 = vadd.f32 %v5353, %v5513
          %v5515 = vpop.f32.mrf.mxu0
          %v5516 = vpop.f32.mrf.mxu0
          %v5517 = vadd.f32 %v5356, %v5516
          %v5518 = vpop.f32.mrf.mxu0
          %5519 = vmatprep.mubr.bf16.mxu0 %v4896
          %5520 = vmatmul.mubr.bf16.gmra.mxu0 %v4895
          %v5521 = vpop.f32.mrf.mxu0
          %v5522 = vadd.f32 %v5361, %v5521
          %v5523 = vpop.f32.mrf.mxu0
          %v5524 = vpop.f32.mrf.mxu0
          %v5525 = vadd.f32 %v5364, %v5524
          %v5526 = vpop.f32.mrf.mxu0
          %5527 = vmatprep.mubr.bf16.mxu0 %v4901
          %5528 = vmatmul.mubr.bf16.gmra.mxu0 %v4900
          %v5529 = vpop.f32.mrf.mxu0
          %v5530 = vadd.f32 %v5369, %v5529
          %v5531 = vpop.f32.mrf.mxu0
          %v5532 = vpop.f32.mrf.mxu0
          %v5533 = vadd.f32 %v5372, %v5532
          %v5534 = vpop.f32.mrf.mxu0
          %5535 = vmatprep.mubr.bf16.mxu0 %v4906
          %5536 = vmatmul.mubr.bf16.gmra.mxu0 %v4905
          %v5537 = vpop.f32.mrf.mxu0
          %v5538 = vadd.f32 %v5377, %v5537
          %v5539 = vpop.f32.mrf.mxu0
          %v5540 = vpop.f32.mrf.mxu0
          %v5541 = vadd.f32 %v5380, %v5540
          %v5542 = vpop.f32.mrf.mxu0
          %5543 = vmatprep.mubr.bf16.mxu0 %v4911
          %5544 = vmatmul.mubr.bf16.gmra.mxu0 %v4910
          %v5545 = vpop.f32.mrf.mxu0
          %v5546 = vadd.f32 %v5385, %v5545
          %v5547 = vpop.f32.mrf.mxu0
          %v5548 = vpop.f32.mrf.mxu0
          %v5549 = vadd.f32 %v5388, %v5548
          %v5550 = vpop.f32.mrf.mxu0
          %5551 = vmatprep.mubr.bf16.mxu0 %v4916
          %5552 = vmatmul.mubr.bf16.gmra.mxu0 %v4915
          %v5553 = vpop.f32.mrf.mxu0
          %v5554 = vadd.f32 %v5393, %v5553
          %v5555 = vpop.f32.mrf.mxu0
          %v5556 = vpop.f32.mrf.mxu0
          %v5557 = vadd.f32 %v5396, %v5556
          %v5558 = vpop.f32.mrf.mxu0
          %5559 = vdwg.mxu0
          %5560 = vmatprep.subr.bf16.mxu0 0
          %5561 = vmatpush1.bf16.msra.mxu0 %v5197
          %5562 = vmatprep.subr.bf16.mxu0 0
          %5563 = vmatpush1.bf16.msra.mxu0 %v5196
          %5564 = vmatprep.subr.bf16.mxu0 0
          %5565 = vmatpush1.bf16.msra.mxu0 %v5195
          %5566 = vmatprep.subr.bf16.mxu0 0
          %5567 = vmatpush1.bf16.msra.mxu0 %v5194
          %5568 = vmatprep.subr.bf16.mxu0 0
          %5569 = vmatpush1.bf16.msra.mxu0 %v5193
          %5570 = vmatprep.subr.bf16.mxu0 0
          %5571 = vmatpush1.bf16.msra.mxu0 %v5192
          %5572 = vmatprep.subr.bf16.mxu0 0
          %5573 = vmatpush1.bf16.msra.mxu0 %v5191
          %5574 = vmatprep.subr.bf16.mxu0 0
          %5575 = vmatpush1.bf16.msra.mxu0 %v5190
          %5576 = vmatprep.subr.bf16.mxu0 0
          %5577 = vmatpush2.bf16.msra.mxu0 0
          %5578 = vmatprep.subr.bf16.mxu0 0
          %5579 = vmatpush2.bf16.msra.mxu0 0
          %5580 = vmatprep.subr.bf16.mxu0 0
          %5581 = vmatpush2.bf16.msra.mxu0 0
          %5582 = vmatprep.subr.bf16.mxu0 0
          %5583 = vmatpush2.bf16.msra.mxu0 0
          %5584 = vmatprep.subr.bf16.mxu0 0
          %5585 = vmatpush2.bf16.msra.mxu0 0
          %5586 = vmatprep.subr.bf16.mxu0 0
          %5587 = vmatpush2.bf16.msra.mxu0 0
          %5588 = vmatprep.subr.bf16.mxu0 0
          %5589 = vmatpush2.bf16.msra.mxu0 0
          %5590 = vmatprep.subr.bf16.mxu0 0
          %5591 = vmatpush2.bf16.msra.mxu0 0
          %5592 = vmatprep.mubr.bf16.mxu0 0
          %5593 = vmatmul.mubr.bf16.gmra.mxu0 %v4842
          %v5594 = vpop.f32.mrf.mxu0
          %v5595 = vadd.f32 %v5434, %v5594
          %v5596 = vpop.f32.mrf.mxu0
          %v5597 = vpop.f32.mrf.mxu0
          %v5598 = vadd.f32 %v5437, %v5597
          %v5599 = vpop.f32.mrf.mxu0
          %5600 = vmatprep.mubr.bf16.mxu0 0
          %5601 = vmatmul.mubr.bf16.gmra.mxu0 %v4847
          %v5602 = vpop.f32.mrf.mxu0
          %v5603 = vadd.f32 %v5442, %v5602
          %v5604 = vpop.f32.mrf.mxu0
          %v5605 = vpop.f32.mrf.mxu0
          %v5606 = vadd.f32 %v5445, %v5605
          %v5607 = vpop.f32.mrf.mxu0
          %5608 = vmatprep.mubr.bf16.mxu0 0
          %5609 = vmatmul.mubr.bf16.gmra.mxu0 %v4852
          %v5610 = vpop.f32.mrf.mxu0
          %v5611 = vadd.f32 %v5450, %v5610
          %v5612 = vpop.f32.mrf.mxu0
          %v5613 = vpop.f32.mrf.mxu0
          %v5614 = vadd.f32 %v5453, %v5613
          %v5615 = vpop.f32.mrf.mxu0
          %5616 = vmatprep.mubr.bf16.mxu0 0
          %5617 = vmatmul.mubr.bf16.gmra.mxu0 %v4857
          %v5618 = vpop.f32.mrf.mxu0
          %v5619 = vadd.f32 %v5458, %v5618
          %v5620 = vpop.f32.mrf.mxu0
          %v5621 = vpop.f32.mrf.mxu0
          %v5622 = vadd.f32 %v5461, %v5621
          %v5623 = vpop.f32.mrf.mxu0
          %5624 = vmatprep.mubr.bf16.mxu0 0
          %5625 = vmatmul.mubr.bf16.gmra.mxu0 %v4862
          %v5626 = vpop.f32.mrf.mxu0
          %v5627 = vadd.f32 %v5466, %v5626
          %v5628 = vpop.f32.mrf.mxu0
          %v5629 = vpop.f32.mrf.mxu0
          %v5630 = vadd.f32 %v5469, %v5629
          %v5631 = vpop.f32.mrf.mxu0
          %5632 = vmatprep.mubr.bf16.mxu0 0
          %5633 = vmatmul.mubr.bf16.gmra.mxu0 %v4867
          %v5634 = vpop.f32.mrf.mxu0
          %v5635 = vadd.f32 %v5474, %v5634
          %v5636 = vpop.f32.mrf.mxu0
          %v5637 = vpop.f32.mrf.mxu0
          %v5638 = vadd.f32 %v5477, %v5637
          %v5639 = vpop.f32.mrf.mxu0
          %5640 = vmatprep.mubr.bf16.mxu0 0
          %5641 = vmatmul.mubr.bf16.gmra.mxu0 %v4872
          %v5642 = vpop.f32.mrf.mxu0
          %v5643 = vadd.f32 %v5482, %v5642
          %v5644 = vpop.f32.mrf.mxu0
          %v5645 = vpop.f32.mrf.mxu0
          %v5646 = vadd.f32 %v5485, %v5645
          %v5647 = vpop.f32.mrf.mxu0
          %5648 = vmatprep.mubr.bf16.mxu0 0
          %5649 = vmatmul.mubr.bf16.gmra.mxu0 %v4877
          %v5650 = vpop.f32.mrf.mxu0
          %v5651 = vadd.f32 %v5490, %v5650
          %v5652 = vpop.f32.mrf.mxu0
          %v5653 = vpop.f32.mrf.mxu0
          %v5654 = vadd.f32 %v5493, %v5653
          %v5655 = vpop.f32.mrf.mxu0
          %5656 = vmatprep.mubr.bf16.mxu0 0
          %5657 = vmatmul.mubr.bf16.gmra.mxu0 %v4882
          %v5658 = vpop.f32.mrf.mxu0
          %v5659 = vadd.f32 %v5498, %v5658
          %v5660 = vpop.f32.mrf.mxu0
          %v5661 = vpop.f32.mrf.mxu0
          %v5662 = vadd.f32 %v5501, %v5661
          %v5663 = vpop.f32.mrf.mxu0
          %5664 = vmatprep.mubr.bf16.mxu0 0
          %5665 = vmatmul.mubr.bf16.gmra.mxu0 %v4887
          %v5666 = vpop.f32.mrf.mxu0
          %v5667 = vadd.f32 %v5506, %v5666
          %v5668 = vpop.f32.mrf.mxu0
          %v5669 = vpop.f32.mrf.mxu0
          %v5670 = vadd.f32 %v5509, %v5669
          %v5671 = vpop.f32.mrf.mxu0
          %5672 = vmatprep.mubr.bf16.mxu0 0
          %5673 = vmatmul.mubr.bf16.gmra.mxu0 %v4892
          %v5674 = vpop.f32.mrf.mxu0
          %v5675 = vadd.f32 %v5514, %v5674
          %v5676 = vpop.f32.mrf.mxu0
          %v5677 = vpop.f32.mrf.mxu0
          %v5678 = vadd.f32 %v5517, %v5677
          %v5679 = vpop.f32.mrf.mxu0
          %5680 = vmatprep.mubr.bf16.mxu0 0
          %5681 = vmatmul.mubr.bf16.gmra.mxu0 %v4897
          %v5682 = vpop.f32.mrf.mxu0
          %v5683 = vadd.f32 %v5522, %v5682
          %v5684 = vpop.f32.mrf.mxu0
          %v5685 = vpop.f32.mrf.mxu0
          %v5686 = vadd.f32 %v5525, %v5685
          %v5687 = vpop.f32.mrf.mxu0
          %5688 = vmatprep.mubr.bf16.mxu0 0
          %5689 = vmatmul.mubr.bf16.gmra.mxu0 %v4902
          %v5690 = vpop.f32.mrf.mxu0
          %v5691 = vadd.f32 %v5530, %v5690
          %v5692 = vpop.f32.mrf.mxu0
          %v5693 = vpop.f32.mrf.mxu0
          %v5694 = vadd.f32 %v5533, %v5693
          %v5695 = vpop.f32.mrf.mxu0
          %5696 = vmatprep.mubr.bf16.mxu0 0
          %5697 = vmatmul.mubr.bf16.gmra.mxu0 %v4907
          %v5698 = vpop.f32.mrf.mxu0
          %v5699 = vadd.f32 %v5538, %v5698
          %v5700 = vpop.f32.mrf.mxu0
          %v5701 = vpop.f32.mrf.mxu0
          %v5702 = vadd.f32 %v5541, %v5701
          %v5703 = vpop.f32.mrf.mxu0
          %5704 = vmatprep.mubr.bf16.mxu0 0
          %5705 = vmatmul.mubr.bf16.gmra.mxu0 %v4912
          %v5706 = vpop.f32.mrf.mxu0
          %v5707 = vadd.f32 %v5546, %v5706
          %v5708 = vpop.f32.mrf.mxu0
          %v5709 = vpop.f32.mrf.mxu0
          %v5710 = vadd.f32 %v5549, %v5709
          %v5711 = vpop.f32.mrf.mxu0
          %5712 = vmatprep.mubr.bf16.mxu0 0
          %5713 = vmatmul.mubr.bf16.gmra.mxu0 %v4917
          %v5714 = vpop.f32.mrf.mxu0
          %v5715 = vadd.f32 %v5554, %v5714
          %v5716 = vpop.f32.mrf.mxu0
          %v5717 = vpop.f32.mrf.mxu0
          %v5718 = vadd.f32 %v5557, %v5717
          %v5719 = vpop.f32.mrf.mxu0
          %5720 = vdwg.mxu0
          %v5817 = vunpack.c.l.b16 %v4228
          %v5818 = vunpack.c.h.b16 %v4228
          %v5819 = vunpack.c.l.b16 %v4229
          %v5820 = vunpack.c.h.b16 %v4229
          %v5821 = vunpack.c.l.b16 %v4230
          %v5822 = vunpack.c.l.b16 %v4231
          %v5823 = vunpack.c.h.b16 %v4231
          %v5824 = vunpack.c.l.b16 %v4232
          %v5825 = vunpack.c.h.b16 %v4232
          %v5826 = vunpack.c.l.b16 %v4233
          %v5827 = vunpack.c.l.b16 %v4234
          %v5828 = vunpack.c.h.b16 %v4234
          %v5829 = vunpack.c.l.b16 %v4235
          %v5830 = vunpack.c.h.b16 %v4235
          %v5831 = vunpack.c.l.b16 %v4236
          %v5832 = vunpack.c.l.b16 %v4237
          %v5833 = vunpack.c.h.b16 %v4237
          %v5834 = vunpack.c.l.b16 %v4238
          %v5835 = vunpack.c.h.b16 %v4238
          %v5836 = vunpack.c.l.b16 %v4239
          %v5837 = vunpack.c.l.b16 %v4240
          %v5838 = vunpack.c.h.b16 %v4240
          %v5839 = vunpack.c.l.b16 %v4241
          %v5840 = vunpack.c.h.b16 %v4241
          %v5841 = vunpack.c.l.b16 %v4242
          %v5842 = vunpack.c.l.b16 %v4243
          %v5843 = vunpack.c.h.b16 %v4243
          %v5844 = vunpack.c.l.b16 %v4244
          %v5845 = vunpack.c.h.b16 %v4244
          %v5846 = vunpack.c.l.b16 %v4245
          %v5847 = vunpack.c.l.b16 %v4246
          %v5848 = vunpack.c.h.b16 %v4246
          %v5849 = vunpack.c.l.b16 %v4247
          %v5850 = vunpack.c.h.b16 %v4247
          %v5851 = vunpack.c.l.b16 %v4248
          %v5852 = vunpack.c.l.b16 %v4249
          %v5853 = vunpack.c.h.b16 %v4249
          %v5854 = vunpack.c.l.b16 %v4250
          %v5855 = vunpack.c.h.b16 %v4250
          %v5856 = vunpack.c.l.b16 %v4251
          %v5857 = vunpack.c.l.b16 %v4252
          %v5858 = vunpack.c.h.b16 %v4252
          %v5859 = vunpack.c.l.b16 %v4253
          %v5860 = vunpack.c.h.b16 %v4253
          %v5861 = vunpack.c.l.b16 %v4254
          %v5862 = vunpack.c.l.b16 %v4255
          %v5863 = vunpack.c.h.b16 %v4255
          %v5864 = vunpack.c.l.b16 %v4256
          %v5865 = vunpack.c.h.b16 %v4256
          %v5866 = vunpack.c.l.b16 %v4257
          %v5867 = vunpack.c.l.b16 %v4258
          %v5868 = vunpack.c.h.b16 %v4258
          %v5869 = vunpack.c.l.b16 %v4259
          %v5870 = vunpack.c.h.b16 %v4259
          %v5871 = vunpack.c.l.b16 %v4260
          %v5872 = vunpack.c.l.b16 %v4261
          %v5873 = vunpack.c.h.b16 %v4261
          %v5874 = vunpack.c.l.b16 %v4262
          %v5875 = vunpack.c.h.b16 %v4262
          %v5876 = vunpack.c.l.b16 %v4263
          %v5877 = vunpack.c.l.b16 %v4264
          %v5878 = vunpack.c.h.b16 %v4264
          %v5879 = vunpack.c.l.b16 %v4265
          %v5880 = vunpack.c.h.b16 %v4265
          %v5881 = vunpack.c.l.b16 %v4266
          %v5882 = vunpack.c.l.b16 %v4267
          %v5883 = vunpack.c.h.b16 %v4267
          %v5884 = vunpack.c.l.b16 %v4268
          %v5885 = vunpack.c.h.b16 %v4268
          %v5886 = vunpack.c.l.b16 %v4269
          %v5887 = vunpack.c.l.b16 %v4270
          %v5888 = vunpack.c.h.b16 %v4270
          %v5889 = vunpack.c.l.b16 %v4271
          %v5890 = vunpack.c.h.b16 %v4271
          %v5891 = vunpack.c.l.b16 %v4272
          %v5892 = vunpack.c.l.b16 %v4273
          %v5893 = vunpack.c.h.b16 %v4273
          %v5894 = vunpack.c.l.b16 %v4274
          %v5895 = vunpack.c.h.b16 %v4274
          %v5896 = vunpack.c.l.b16 %v4275
          %v5897 = vunpack.c.l.b16 %v4276
          %v5898 = vunpack.c.h.b16 %v4276
          %v5899 = vunpack.c.l.b16 %v4277
          %v5900 = vunpack.c.h.b16 %v4277
          %v5901 = vunpack.c.l.b16 %v4278
          %v5902 = vunpack.c.l.b16 %v4279
          %v5903 = vunpack.c.h.b16 %v4279
          %v5904 = vunpack.c.l.b16 %v4280
          %v5905 = vunpack.c.h.b16 %v4280
          %v5906 = vunpack.c.l.b16 %v4281
          %v5907 = vunpack.c.l.b16 %v4282
          %v5908 = vunpack.c.h.b16 %v4282
          %v5909 = vunpack.c.l.b16 %v4283
          %v5910 = vunpack.c.h.b16 %v4283
          %v5911 = vunpack.c.l.b16 %v4284
          %v5912 = vunpack.c.l.b16 %v4285
          %v5913 = vunpack.c.h.b16 %v4285
          %v5914 = vunpack.c.l.b16 %v4286
          %v5915 = vunpack.c.h.b16 %v4286
          %v5916 = vunpack.c.l.b16 %v4287
          %v5917 = vunpack.c.l.b16 %v4288
          %v5918 = vunpack.c.h.b16 %v4288
          %v5919 = vunpack.c.l.b16 %v4289
          %v5920 = vunpack.c.h.b16 %v4289
          %v5921 = vunpack.c.l.b16 %v4290
          %v5922 = vunpack.c.l.b16 %v4291
          %v5923 = vunpack.c.h.b16 %v4291
          %v5924 = vunpack.c.l.b16 %v4292
          %v5925 = vunpack.c.h.b16 %v4292
          %v5926 = vunpack.c.l.b16 %v4293
          %v5927 = vunpack.c.l.b16 %v4294
          %v5928 = vunpack.c.h.b16 %v4294
          %v5929 = vunpack.c.l.b16 %v4295
          %v5930 = vunpack.c.h.b16 %v4295
          %v5931 = vunpack.c.l.b16 %v4296
          %v5932 = vunpack.c.l.b16 %v4297
          %v5933 = vunpack.c.h.b16 %v4297
          %v5934 = vunpack.c.l.b16 %v4298
          %v5935 = vunpack.c.h.b16 %v4298
          %v5936 = vunpack.c.l.b16 %v4299
          %v5937 = vunpack.c.l.b16 %v4300
          %v5938 = vunpack.c.h.b16 %v4300
          %v5939 = vunpack.c.l.b16 %v4301
          %v5940 = vunpack.c.h.b16 %v4301
          %v5941 = vunpack.c.l.b16 %v4302
          %v5942 = vunpack.c.l.b16 %v4303
          %v5943 = vunpack.c.h.b16 %v4303
          %v5944 = vunpack.c.l.b16 %v4304
          %v5945 = vunpack.c.h.b16 %v4304
          %v5946 = vunpack.c.l.b16 %v4305
          %v5947 = vunpack.c.l.b16 %v4306
          %v5948 = vunpack.c.h.b16 %v4306
          %v5949 = vunpack.c.l.b16 %v4307
          %v5950 = vunpack.c.h.b16 %v4307
          %v5951 = vunpack.c.l.b16 %v4308
          %v5952 = vunpack.c.l.b16 %v4309
          %v5953 = vunpack.c.h.b16 %v4309
          %v5954 = vunpack.c.l.b16 %v4310
          %v5955 = vunpack.c.h.b16 %v4310
          %v5956 = vunpack.c.l.b16 %v4311
          %v5957 = vunpack.c.l.b16 %v4312
          %v5958 = vunpack.c.h.b16 %v4312
          %v5959 = vunpack.c.l.b16 %v4313
          %v5960 = vunpack.c.h.b16 %v4313
          %v5961 = vunpack.c.l.b16 %v4314
          %v5962 = vunpack.c.l.b16 %v4315
          %v5963 = vunpack.c.h.b16 %v4315
          %v5964 = vunpack.c.l.b16 %v4316
          %v5965 = vunpack.c.h.b16 %v4316
          %v5966 = vunpack.c.l.b16 %v4317
          %v5967 = vunpack.c.l.b16 %v4318
          %v5968 = vunpack.c.h.b16 %v4318
          %v5969 = vunpack.c.l.b16 %v4319
          %v5970 = vunpack.c.h.b16 %v4319
          %v5971 = vunpack.c.l.b16 %v4320
          %v5972 = vunpack.c.l.b16 %v4321
          %v5973 = vunpack.c.h.b16 %v4321
          %v5974 = vunpack.c.l.b16 %v4322
          %v5975 = vunpack.c.h.b16 %v4322
          %v5976 = vunpack.c.l.b16 %v4323
          %v5977 = vpack.c.b16 %v5822, %v5817
          %v5978 = vpack.c.b16 %v5823, %v5818
          %v5979 = vpack.c.b16 %v5824, %v5819
          %v5980 = vpack.c.b16 %v5825, %v5820
          %v5981 = vpack.c.b16 %v5826, %v5821
          %v5982 = vpack.c.b16 %v5832, %v5827
          %v5983 = vpack.c.b16 %v5833, %v5828
          %v5984 = vpack.c.b16 %v5834, %v5829
          %v5985 = vpack.c.b16 %v5835, %v5830
          %v5986 = vpack.c.b16 %v5836, %v5831
          %v5987 = vpack.c.b16 %v5842, %v5837
          %v5988 = vpack.c.b16 %v5843, %v5838
          %v5989 = vpack.c.b16 %v5844, %v5839
          %v5990 = vpack.c.b16 %v5845, %v5840
          %v5991 = vpack.c.b16 %v5846, %v5841
          %v5992 = vpack.c.b16 %v5852, %v5847
          %v5993 = vpack.c.b16 %v5853, %v5848
          %v5994 = vpack.c.b16 %v5854, %v5849
          %v5995 = vpack.c.b16 %v5855, %v5850
          %v5996 = vpack.c.b16 %v5856, %v5851
          %v5997 = vpack.c.b16 %v5862, %v5857
          %v5998 = vpack.c.b16 %v5863, %v5858
          %v5999 = vpack.c.b16 %v5864, %v5859
          %v6000 = vpack.c.b16 %v5865, %v5860
          %v6001 = vpack.c.b16 %v5866, %v5861
          %v6002 = vpack.c.b16 %v5872, %v5867
          %v6003 = vpack.c.b16 %v5873, %v5868
          %v6004 = vpack.c.b16 %v5874, %v5869
          %v6005 = vpack.c.b16 %v5875, %v5870
          %v6006 = vpack.c.b16 %v5876, %v5871
          %v6007 = vpack.c.b16 %v5882, %v5877
          %v6008 = vpack.c.b16 %v5883, %v5878
          %v6009 = vpack.c.b16 %v5884, %v5879
          %v6010 = vpack.c.b16 %v5885, %v5880
          %v6011 = vpack.c.b16 %v5886, %v5881
          %v6012 = vpack.c.b16 %v5892, %v5887
          %v6013 = vpack.c.b16 %v5893, %v5888
          %v6014 = vpack.c.b16 %v5894, %v5889
          %v6015 = vpack.c.b16 %v5895, %v5890
          %v6016 = vpack.c.b16 %v5896, %v5891
          %v6017 = vpack.c.b16 %v5902, %v5897
          %v6018 = vpack.c.b16 %v5903, %v5898
          %v6019 = vpack.c.b16 %v5904, %v5899
          %v6020 = vpack.c.b16 %v5905, %v5900
          %v6021 = vpack.c.b16 %v5906, %v5901
          %v6022 = vpack.c.b16 %v5912, %v5907
          %v6023 = vpack.c.b16 %v5913, %v5908
          %v6024 = vpack.c.b16 %v5914, %v5909
          %v6025 = vpack.c.b16 %v5915, %v5910
          %v6026 = vpack.c.b16 %v5916, %v5911
          %v6027 = vpack.c.b16 %v5922, %v5917
          %v6028 = vpack.c.b16 %v5923, %v5918
          %v6029 = vpack.c.b16 %v5924, %v5919
          %v6030 = vpack.c.b16 %v5925, %v5920
          %v6031 = vpack.c.b16 %v5926, %v5921
          %v6032 = vpack.c.b16 %v5932, %v5927
          %v6033 = vpack.c.b16 %v5933, %v5928
          %v6034 = vpack.c.b16 %v5934, %v5929
          %v6035 = vpack.c.b16 %v5935, %v5930
          %v6036 = vpack.c.b16 %v5936, %v5931
          %v6037 = vpack.c.b16 %v5942, %v5937
          %v6038 = vpack.c.b16 %v5943, %v5938
          %v6039 = vpack.c.b16 %v5944, %v5939
          %v6040 = vpack.c.b16 %v5945, %v5940
          %v6041 = vpack.c.b16 %v5946, %v5941
          %v6042 = vpack.c.b16 %v5952, %v5947
          %v6043 = vpack.c.b16 %v5953, %v5948
          %v6044 = vpack.c.b16 %v5954, %v5949
          %v6045 = vpack.c.b16 %v5955, %v5950
          %v6046 = vpack.c.b16 %v5956, %v5951
          %v6047 = vpack.c.b16 %v5962, %v5957
          %v6048 = vpack.c.b16 %v5963, %v5958
          %v6049 = vpack.c.b16 %v5964, %v5959
          %v6050 = vpack.c.b16 %v5965, %v5960
          %v6051 = vpack.c.b16 %v5966, %v5961
          %v6052 = vpack.c.b16 %v5972, %v5967
          %v6053 = vpack.c.b16 %v5973, %v5968
          %v6054 = vpack.c.b16 %v5974, %v5969
          %v6055 = vpack.c.b16 %v5975, %v5970
          %v6056 = vpack.c.b16 %v5976, %v5971
          %v6217 = vunpack.c.l.b16 %v4324
          %v6218 = vunpack.c.l.b16 %v4325
          %v6219 = vunpack.c.l.b16 %v4326
          %v6220 = vunpack.c.l.b16 %v4327
          %v6221 = vunpack.c.l.b16 %v4328
          %v6222 = vunpack.c.l.b16 %v4329
          %v6223 = vunpack.c.l.b16 %v4330
          %v6224 = vunpack.c.l.b16 %v4331
          %v6225 = vunpack.c.l.b16 %v4332
          %v6226 = vunpack.c.l.b16 %v4333
          %v6227 = vunpack.c.l.b16 %v4334
          %v6228 = vunpack.c.l.b16 %v4335
          %v6229 = vunpack.c.l.b16 %v4336
          %v6230 = vunpack.c.l.b16 %v4337
          %v6231 = vunpack.c.l.b16 %v4338
          %v6232 = vunpack.c.l.b16 %v4339
          %v6233 = vunpack.c.l.b16 %v4340
          %v6234 = vunpack.c.l.b16 %v4341
          %v6235 = vunpack.c.l.b16 %v4342
          %v6236 = vunpack.c.l.b16 %v4343
          %v6237 = vunpack.c.l.b16 %v4344
          %v6238 = vunpack.c.l.b16 %v4345
          %v6239 = vunpack.c.l.b16 %v4346
          %v6240 = vunpack.c.l.b16 %v4347
          %v6241 = vunpack.c.l.b16 %v4348
          %v6242 = vunpack.c.l.b16 %v4349
          %v6243 = vunpack.c.l.b16 %v4350
          %v6244 = vunpack.c.l.b16 %v4351
          %v6245 = vunpack.c.l.b16 %v4352
          %v6246 = vunpack.c.l.b16 %v4353
          %v6247 = vunpack.c.l.b16 %v4354
          %v6248 = vunpack.c.l.b16 %v4355
          %v6249 = vunpack.c.l.b16 %v4356
          %v6250 = vunpack.c.l.b16 %v4357
          %v6251 = vunpack.c.l.b16 %v4358
          %v6252 = vunpack.c.l.b16 %v4359
          %v6253 = vunpack.c.l.b16 %v4360
          %v6254 = vunpack.c.l.b16 %v4361
          %v6255 = vunpack.c.l.b16 %v4362
          %v6256 = vunpack.c.l.b16 %v4363
          %v6257 = vunpack.c.l.b16 %v4364
          %v6258 = vunpack.c.l.b16 %v4365
          %v6259 = vunpack.c.l.b16 %v4366
          %v6260 = vunpack.c.l.b16 %v4367
          %v6261 = vunpack.c.l.b16 %v4368
          %v6262 = vunpack.c.l.b16 %v4369
          %v6263 = vunpack.c.l.b16 %v4370
          %v6264 = vunpack.c.l.b16 %v4371
          %v6265 = vunpack.c.l.b16 %v4372
          %v6266 = vunpack.c.l.b16 %v4373
          %v6267 = vunpack.c.l.b16 %v4374
          %v6268 = vunpack.c.l.b16 %v4375
          %v6269 = vunpack.c.l.b16 %v4376
          %v6270 = vunpack.c.l.b16 %v4377
          %v6271 = vunpack.c.l.b16 %v4378
          %v6272 = vunpack.c.l.b16 %v4379
          %v6273 = vunpack.c.l.b16 %v4380
          %v6274 = vunpack.c.l.b16 %v4381
          %v6275 = vunpack.c.l.b16 %v4382
          %v6276 = vunpack.c.l.b16 %v4383
          %v6277 = vunpack.c.l.b16 %v4384
          %v6278 = vunpack.c.l.b16 %v4385
          %v6279 = vunpack.c.l.b16 %v4386
          %v6280 = vunpack.c.l.b16 %v4387
          %v6281 = vunpack.c.l.b16 %v4388
          %v6282 = vunpack.c.l.b16 %v4389
          %v6283 = vunpack.c.l.b16 %v4390
          %v6284 = vunpack.c.l.b16 %v4391
          %v6285 = vunpack.c.l.b16 %v4392
          %v6286 = vunpack.c.l.b16 %v4393
          %v6287 = vunpack.c.l.b16 %v4394
          %v6288 = vunpack.c.l.b16 %v4395
          %v6289 = vunpack.c.l.b16 %v4396
          %v6290 = vunpack.c.l.b16 %v4397
          %v6291 = vunpack.c.l.b16 %v4398
          %v6292 = vunpack.c.l.b16 %v4399
          %v6293 = vunpack.c.l.b16 %v4400
          %v6294 = vunpack.c.l.b16 %v4401
          %v6295 = vunpack.c.l.b16 %v4402
          %v6296 = vunpack.c.l.b16 %v4403
          %v6297 = vpack.c.b16 %v6218, %v6217
          %v6298 = vpack.c.b16 %v6220, %v6219
          %v6299 = vpack.c.b16 %v6222, %v6221
          %v6300 = vpack.c.b16 %v6224, %v6223
          %v6301 = vpack.c.b16 %v6226, %v6225
          %v6302 = vpack.c.b16 %v6228, %v6227
          %v6303 = vpack.c.b16 %v6230, %v6229
          %v6304 = vpack.c.b16 %v6232, %v6231
          %v6305 = vpack.c.b16 %v6234, %v6233
          %v6306 = vpack.c.b16 %v6236, %v6235
          %v6307 = vpack.c.b16 %v6238, %v6237
          %v6308 = vpack.c.b16 %v6240, %v6239
          %v6309 = vpack.c.b16 %v6242, %v6241
          %v6310 = vpack.c.b16 %v6244, %v6243
          %v6311 = vpack.c.b16 %v6246, %v6245
          %v6312 = vpack.c.b16 %v6248, %v6247
          %v6313 = vpack.c.b16 %v6250, %v6249
          %v6314 = vpack.c.b16 %v6252, %v6251
          %v6315 = vpack.c.b16 %v6254, %v6253
          %v6316 = vpack.c.b16 %v6256, %v6255
          %v6317 = vpack.c.b16 %v6258, %v6257
          %v6318 = vpack.c.b16 %v6260, %v6259
          %v6319 = vpack.c.b16 %v6262, %v6261
          %v6320 = vpack.c.b16 %v6264, %v6263
          %v6321 = vpack.c.b16 %v6266, %v6265
          %v6322 = vpack.c.b16 %v6268, %v6267
          %v6323 = vpack.c.b16 %v6270, %v6269
          %v6324 = vpack.c.b16 %v6272, %v6271
          %v6325 = vpack.c.b16 %v6274, %v6273
          %v6326 = vpack.c.b16 %v6276, %v6275
          %v6327 = vpack.c.b16 %v6278, %v6277
          %v6328 = vpack.c.b16 %v6280, %v6279
          %v6329 = vpack.c.b16 %v6282, %v6281
          %v6330 = vpack.c.b16 %v6284, %v6283
          %v6331 = vpack.c.b16 %v6286, %v6285
          %v6332 = vpack.c.b16 %v6288, %v6287
          %v6333 = vpack.c.b16 %v6290, %v6289
          %v6334 = vpack.c.b16 %v6292, %v6291
          %v6335 = vpack.c.b16 %v6294, %v6293
          %v6336 = vpack.c.b16 %v6296, %v6295
          %6377 = vmatprep.subr.bf16.mxu0 0
          %6378 = vmatpush1.bf16.msra.mxu0 %v6304
          %6379 = vmatprep.subr.bf16.mxu0 0
          %6380 = vmatpush1.bf16.msra.mxu0 %v6303
          %6381 = vmatprep.subr.bf16.mxu0 0
          %6382 = vmatpush1.bf16.msra.mxu0 %v6302
          %6383 = vmatprep.subr.bf16.mxu0 0
          %6384 = vmatpush1.bf16.msra.mxu0 %v6301
          %6385 = vmatprep.subr.bf16.mxu0 0
          %6386 = vmatpush1.bf16.msra.mxu0 %v6300
          %6387 = vmatprep.subr.bf16.mxu0 0
          %6388 = vmatpush1.bf16.msra.mxu0 %v6299
          %6389 = vmatprep.subr.bf16.mxu0 0
          %6390 = vmatpush1.bf16.msra.mxu0 %v6298
          %6391 = vmatprep.subr.bf16.mxu0 0
          %6392 = vmatpush1.bf16.msra.mxu0 %v6297
          %6393 = vmatprep.subr.bf16.mxu0 0
          %6394 = vmatpush2.bf16.msra.mxu0 %v6312
          %6395 = vmatprep.subr.bf16.mxu0 0
          %6396 = vmatpush2.bf16.msra.mxu0 %v6311
          %6397 = vmatprep.subr.bf16.mxu0 0
          %6398 = vmatpush2.bf16.msra.mxu0 %v6310
          %6399 = vmatprep.subr.bf16.mxu0 0
          %6400 = vmatpush2.bf16.msra.mxu0 %v6309
          %6401 = vmatprep.subr.bf16.mxu0 0
          %6402 = vmatpush2.bf16.msra.mxu0 %v6308
          %6403 = vmatprep.subr.bf16.mxu0 0
          %6404 = vmatpush2.bf16.msra.mxu0 %v6307
          %6405 = vmatprep.subr.bf16.mxu0 0
          %6406 = vmatpush2.bf16.msra.mxu0 %v6306
          %6407 = vmatprep.subr.bf16.mxu0 0
          %6408 = vmatpush2.bf16.msra.mxu0 %v6305
          %6409 = vmatprep.mubr.bf16.mxu0 %v5978
          %6410 = vmatmul.mubr.bf16.gmra.mxu0 %v5977
          %v6411 = vpop.f32.mrf.mxu0
          %v6412 = vadd.f32 %v5595, %v6411
          %v6413 = vpop.f32.mrf.mxu0
          %v6414 = vpop.f32.mrf.mxu0
          %v6415 = vadd.f32 %v5598, %v6414
          %v6416 = vpop.f32.mrf.mxu0
          %6417 = vmatprep.mubr.bf16.mxu0 %v5983
          %6418 = vmatmul.mubr.bf16.gmra.mxu0 %v5982
          %v6419 = vpop.f32.mrf.mxu0
          %v6420 = vadd.f32 %v5603, %v6419
          %v6421 = vpop.f32.mrf.mxu0
          %v6422 = vpop.f32.mrf.mxu0
          %v6423 = vadd.f32 %v5606, %v6422
          %v6424 = vpop.f32.mrf.mxu0
          %6425 = vmatprep.mubr.bf16.mxu0 %v5988
          %6426 = vmatmul.mubr.bf16.gmra.mxu0 %v5987
          %v6427 = vpop.f32.mrf.mxu0
          %v6428 = vadd.f32 %v5611, %v6427
          %v6429 = vpop.f32.mrf.mxu0
          %v6430 = vpop.f32.mrf.mxu0
          %v6431 = vadd.f32 %v5614, %v6430
          %v6432 = vpop.f32.mrf.mxu0
          %6433 = vmatprep.mubr.bf16.mxu0 %v5993
          %6434 = vmatmul.mubr.bf16.gmra.mxu0 %v5992
          %v6435 = vpop.f32.mrf.mxu0
          %v6436 = vadd.f32 %v5619, %v6435
          %v6437 = vpop.f32.mrf.mxu0
          %v6438 = vpop.f32.mrf.mxu0
          %v6439 = vadd.f32 %v5622, %v6438
          %v6440 = vpop.f32.mrf.mxu0
          %6441 = vmatprep.mubr.bf16.mxu0 %v5998
          %6442 = vmatmul.mubr.bf16.gmra.mxu0 %v5997
          %v6443 = vpop.f32.mrf.mxu0
          %v6444 = vadd.f32 %v5627, %v6443
          %v6445 = vpop.f32.mrf.mxu0
          %v6446 = vpop.f32.mrf.mxu0
          %v6447 = vadd.f32 %v5630, %v6446
          %v6448 = vpop.f32.mrf.mxu0
          %6449 = vmatprep.mubr.bf16.mxu0 %v6003
          %6450 = vmatmul.mubr.bf16.gmra.mxu0 %v6002
          %v6451 = vpop.f32.mrf.mxu0
          %v6452 = vadd.f32 %v5635, %v6451
          %v6453 = vpop.f32.mrf.mxu0
          %v6454 = vpop.f32.mrf.mxu0
          %v6455 = vadd.f32 %v5638, %v6454
          %v6456 = vpop.f32.mrf.mxu0
          %6457 = vmatprep.mubr.bf16.mxu0 %v6008
          %6458 = vmatmul.mubr.bf16.gmra.mxu0 %v6007
          %v6459 = vpop.f32.mrf.mxu0
          %v6460 = vadd.f32 %v5643, %v6459
          %v6461 = vpop.f32.mrf.mxu0
          %v6462 = vpop.f32.mrf.mxu0
          %v6463 = vadd.f32 %v5646, %v6462
          %v6464 = vpop.f32.mrf.mxu0
          %6465 = vmatprep.mubr.bf16.mxu0 %v6013
          %6466 = vmatmul.mubr.bf16.gmra.mxu0 %v6012
          %v6467 = vpop.f32.mrf.mxu0
          %v6468 = vadd.f32 %v5651, %v6467
          %v6469 = vpop.f32.mrf.mxu0
          %v6470 = vpop.f32.mrf.mxu0
          %v6471 = vadd.f32 %v5654, %v6470
          %v6472 = vpop.f32.mrf.mxu0
          %6473 = vmatprep.mubr.bf16.mxu0 %v6018
          %6474 = vmatmul.mubr.bf16.gmra.mxu0 %v6017
          %v6475 = vpop.f32.mrf.mxu0
          %v6476 = vadd.f32 %v5659, %v6475
          %v6477 = vpop.f32.mrf.mxu0
          %v6478 = vpop.f32.mrf.mxu0
          %v6479 = vadd.f32 %v5662, %v6478
          %v6480 = vpop.f32.mrf.mxu0
          %6481 = vmatprep.mubr.bf16.mxu0 %v6023
          %6482 = vmatmul.mubr.bf16.gmra.mxu0 %v6022
          %v6483 = vpop.f32.mrf.mxu0
          %v6484 = vadd.f32 %v5667, %v6483
          %v6485 = vpop.f32.mrf.mxu0
          %v6486 = vpop.f32.mrf.mxu0
          %v6487 = vadd.f32 %v5670, %v6486
          %v6488 = vpop.f32.mrf.mxu0
          %6489 = vmatprep.mubr.bf16.mxu0 %v6028
          %6490 = vmatmul.mubr.bf16.gmra.mxu0 %v6027
          %v6491 = vpop.f32.mrf.mxu0
          %v6492 = vadd.f32 %v5675, %v6491
          %v6493 = vpop.f32.mrf.mxu0
          %v6494 = vpop.f32.mrf.mxu0
          %v6495 = vadd.f32 %v5678, %v6494
          %v6496 = vpop.f32.mrf.mxu0
          %6497 = vmatprep.mubr.bf16.mxu0 %v6033
          %6498 = vmatmul.mubr.bf16.gmra.mxu0 %v6032
          %v6499 = vpop.f32.mrf.mxu0
          %v6500 = vadd.f32 %v5683, %v6499
          %v6501 = vpop.f32.mrf.mxu0
          %v6502 = vpop.f32.mrf.mxu0
          %v6503 = vadd.f32 %v5686, %v6502
          %v6504 = vpop.f32.mrf.mxu0
          %6505 = vmatprep.mubr.bf16.mxu0 %v6038
          %6506 = vmatmul.mubr.bf16.gmra.mxu0 %v6037
          %v6507 = vpop.f32.mrf.mxu0
          %v6508 = vadd.f32 %v5691, %v6507
          %v6509 = vpop.f32.mrf.mxu0
          %v6510 = vpop.f32.mrf.mxu0
          %v6511 = vadd.f32 %v5694, %v6510
          %v6512 = vpop.f32.mrf.mxu0
          %6513 = vmatprep.mubr.bf16.mxu0 %v6043
          %6514 = vmatmul.mubr.bf16.gmra.mxu0 %v6042
          %v6515 = vpop.f32.mrf.mxu0
          %v6516 = vadd.f32 %v5699, %v6515
          %v6517 = vpop.f32.mrf.mxu0
          %v6518 = vpop.f32.mrf.mxu0
          %v6519 = vadd.f32 %v5702, %v6518
          %v6520 = vpop.f32.mrf.mxu0
          %6521 = vmatprep.mubr.bf16.mxu0 %v6048
          %6522 = vmatmul.mubr.bf16.gmra.mxu0 %v6047
          %v6523 = vpop.f32.mrf.mxu0
          %v6524 = vadd.f32 %v5707, %v6523
          %v6525 = vpop.f32.mrf.mxu0
          %v6526 = vpop.f32.mrf.mxu0
          %v6527 = vadd.f32 %v5710, %v6526
          %v6528 = vpop.f32.mrf.mxu0
          %6529 = vmatprep.mubr.bf16.mxu0 %v6053
          %6530 = vmatmul.mubr.bf16.gmra.mxu0 %v6052
          %v6531 = vpop.f32.mrf.mxu0
          %v6532 = vadd.f32 %v5715, %v6531
          %v6533 = vpop.f32.mrf.mxu0
          %v6534 = vpop.f32.mrf.mxu0
          %v6535 = vadd.f32 %v5718, %v6534
          %v6536 = vpop.f32.mrf.mxu0
          %6537 = vdwg.mxu0
          %6538 = vmatprep.subr.bf16.mxu0 0
          %6539 = vmatpush1.bf16.msra.mxu0 %v6320
          %6540 = vmatprep.subr.bf16.mxu0 0
          %6541 = vmatpush1.bf16.msra.mxu0 %v6319
          %6542 = vmatprep.subr.bf16.mxu0 0
          %6543 = vmatpush1.bf16.msra.mxu0 %v6318
          %6544 = vmatprep.subr.bf16.mxu0 0
          %6545 = vmatpush1.bf16.msra.mxu0 %v6317
          %6546 = vmatprep.subr.bf16.mxu0 0
          %6547 = vmatpush1.bf16.msra.mxu0 %v6316
          %6548 = vmatprep.subr.bf16.mxu0 0
          %6549 = vmatpush1.bf16.msra.mxu0 %v6315
          %6550 = vmatprep.subr.bf16.mxu0 0
          %6551 = vmatpush1.bf16.msra.mxu0 %v6314
          %6552 = vmatprep.subr.bf16.mxu0 0
          %6553 = vmatpush1.bf16.msra.mxu0 %v6313
          %6554 = vmatprep.subr.bf16.mxu0 0
          %6555 = vmatpush2.bf16.msra.mxu0 %v6328
          %6556 = vmatprep.subr.bf16.mxu0 0
          %6557 = vmatpush2.bf16.msra.mxu0 %v6327
          %6558 = vmatprep.subr.bf16.mxu0 0
          %6559 = vmatpush2.bf16.msra.mxu0 %v6326
          %6560 = vmatprep.subr.bf16.mxu0 0
          %6561 = vmatpush2.bf16.msra.mxu0 %v6325
          %6562 = vmatprep.subr.bf16.mxu0 0
          %6563 = vmatpush2.bf16.msra.mxu0 %v6324
          %6564 = vmatprep.subr.bf16.mxu0 0
          %6565 = vmatpush2.bf16.msra.mxu0 %v6323
          %6566 = vmatprep.subr.bf16.mxu0 0
          %6567 = vmatpush2.bf16.msra.mxu0 %v6322
          %6568 = vmatprep.subr.bf16.mxu0 0
          %6569 = vmatpush2.bf16.msra.mxu0 %v6321
          %6570 = vmatprep.mubr.bf16.mxu0 %v5980
          %6571 = vmatmul.mubr.bf16.gmra.mxu0 %v5979
          %v6572 = vpop.f32.mrf.mxu0
          %v6573 = vadd.f32 %v6412, %v6572
          %v6574 = vpop.f32.mrf.mxu0
          %v6575 = vpop.f32.mrf.mxu0
          %v6576 = vadd.f32 %v6415, %v6575
          %v6577 = vpop.f32.mrf.mxu0
          %6578 = vmatprep.mubr.bf16.mxu0 %v5985
          %6579 = vmatmul.mubr.bf16.gmra.mxu0 %v5984
          %v6580 = vpop.f32.mrf.mxu0
          %v6581 = vadd.f32 %v6420, %v6580
          %v6582 = vpop.f32.mrf.mxu0
          %v6583 = vpop.f32.mrf.mxu0
          %v6584 = vadd.f32 %v6423, %v6583
          %v6585 = vpop.f32.mrf.mxu0
          %6586 = vmatprep.mubr.bf16.mxu0 %v5990
          %6587 = vmatmul.mubr.bf16.gmra.mxu0 %v5989
          %v6588 = vpop.f32.mrf.mxu0
          %v6589 = vadd.f32 %v6428, %v6588
          %v6590 = vpop.f32.mrf.mxu0
          %v6591 = vpop.f32.mrf.mxu0
          %v6592 = vadd.f32 %v6431, %v6591
          %v6593 = vpop.f32.mrf.mxu0
          %6594 = vmatprep.mubr.bf16.mxu0 %v5995
          %6595 = vmatmul.mubr.bf16.gmra.mxu0 %v5994
          %v6596 = vpop.f32.mrf.mxu0
          %v6597 = vadd.f32 %v6436, %v6596
          %v6598 = vpop.f32.mrf.mxu0
          %v6599 = vpop.f32.mrf.mxu0
          %v6600 = vadd.f32 %v6439, %v6599
          %v6601 = vpop.f32.mrf.mxu0
          %6602 = vmatprep.mubr.bf16.mxu0 %v6000
          %6603 = vmatmul.mubr.bf16.gmra.mxu0 %v5999
          %v6604 = vpop.f32.mrf.mxu0
          %v6605 = vadd.f32 %v6444, %v6604
          %v6606 = vpop.f32.mrf.mxu0
          %v6607 = vpop.f32.mrf.mxu0
          %v6608 = vadd.f32 %v6447, %v6607
          %v6609 = vpop.f32.mrf.mxu0
          %6610 = vmatprep.mubr.bf16.mxu0 %v6005
          %6611 = vmatmul.mubr.bf16.gmra.mxu0 %v6004
          %v6612 = vpop.f32.mrf.mxu0
          %v6613 = vadd.f32 %v6452, %v6612
          %v6614 = vpop.f32.mrf.mxu0
          %v6615 = vpop.f32.mrf.mxu0
          %v6616 = vadd.f32 %v6455, %v6615
          %v6617 = vpop.f32.mrf.mxu0
          %6618 = vmatprep.mubr.bf16.mxu0 %v6010
          %6619 = vmatmul.mubr.bf16.gmra.mxu0 %v6009
          %v6620 = vpop.f32.mrf.mxu0
          %v6621 = vadd.f32 %v6460, %v6620
          %v6622 = vpop.f32.mrf.mxu0
          %v6623 = vpop.f32.mrf.mxu0
          %v6624 = vadd.f32 %v6463, %v6623
          %v6625 = vpop.f32.mrf.mxu0
          %6626 = vmatprep.mubr.bf16.mxu0 %v6015
          %6627 = vmatmul.mubr.bf16.gmra.mxu0 %v6014
          %v6628 = vpop.f32.mrf.mxu0
          %v6629 = vadd.f32 %v6468, %v6628
          %v6630 = vpop.f32.mrf.mxu0
          %v6631 = vpop.f32.mrf.mxu0
          %v6632 = vadd.f32 %v6471, %v6631
          %v6633 = vpop.f32.mrf.mxu0
          %6634 = vmatprep.mubr.bf16.mxu0 %v6020
          %6635 = vmatmul.mubr.bf16.gmra.mxu0 %v6019
          %v6636 = vpop.f32.mrf.mxu0
          %v6637 = vadd.f32 %v6476, %v6636
          %v6638 = vpop.f32.mrf.mxu0
          %v6639 = vpop.f32.mrf.mxu0
          %v6640 = vadd.f32 %v6479, %v6639
          %v6641 = vpop.f32.mrf.mxu0
          %6642 = vmatprep.mubr.bf16.mxu0 %v6025
          %6643 = vmatmul.mubr.bf16.gmra.mxu0 %v6024
          %v6644 = vpop.f32.mrf.mxu0
          %v6645 = vadd.f32 %v6484, %v6644
          %v6646 = vpop.f32.mrf.mxu0
          %v6647 = vpop.f32.mrf.mxu0
          %v6648 = vadd.f32 %v6487, %v6647
          %v6649 = vpop.f32.mrf.mxu0
          %6650 = vmatprep.mubr.bf16.mxu0 %v6030
          %6651 = vmatmul.mubr.bf16.gmra.mxu0 %v6029
          %v6652 = vpop.f32.mrf.mxu0
          %v6653 = vadd.f32 %v6492, %v6652
          %v6654 = vpop.f32.mrf.mxu0
          %v6655 = vpop.f32.mrf.mxu0
          %v6656 = vadd.f32 %v6495, %v6655
          %v6657 = vpop.f32.mrf.mxu0
          %6658 = vmatprep.mubr.bf16.mxu0 %v6035
          %6659 = vmatmul.mubr.bf16.gmra.mxu0 %v6034
          %v6660 = vpop.f32.mrf.mxu0
          %v6661 = vadd.f32 %v6500, %v6660
          %v6662 = vpop.f32.mrf.mxu0
          %v6663 = vpop.f32.mrf.mxu0
          %v6664 = vadd.f32 %v6503, %v6663
          %v6665 = vpop.f32.mrf.mxu0
          %6666 = vmatprep.mubr.bf16.mxu0 %v6040
          %6667 = vmatmul.mubr.bf16.gmra.mxu0 %v6039
          %v6668 = vpop.f32.mrf.mxu0
          %v6669 = vadd.f32 %v6508, %v6668
          %v6670 = vpop.f32.mrf.mxu0
          %v6671 = vpop.f32.mrf.mxu0
          %v6672 = vadd.f32 %v6511, %v6671
          %v6673 = vpop.f32.mrf.mxu0
          %6674 = vmatprep.mubr.bf16.mxu0 %v6045
          %6675 = vmatmul.mubr.bf16.gmra.mxu0 %v6044
          %v6676 = vpop.f32.mrf.mxu0
          %v6677 = vadd.f32 %v6516, %v6676
          %v6678 = vpop.f32.mrf.mxu0
          %v6679 = vpop.f32.mrf.mxu0
          %v6680 = vadd.f32 %v6519, %v6679
          %v6681 = vpop.f32.mrf.mxu0
          %6682 = vmatprep.mubr.bf16.mxu0 %v6050
          %6683 = vmatmul.mubr.bf16.gmra.mxu0 %v6049
          %v6684 = vpop.f32.mrf.mxu0
          %v6685 = vadd.f32 %v6524, %v6684
          %v6686 = vpop.f32.mrf.mxu0
          %v6687 = vpop.f32.mrf.mxu0
          %v6688 = vadd.f32 %v6527, %v6687
          %v6689 = vpop.f32.mrf.mxu0
          %6690 = vmatprep.mubr.bf16.mxu0 %v6055
          %6691 = vmatmul.mubr.bf16.gmra.mxu0 %v6054
          %v6692 = vpop.f32.mrf.mxu0
          %v6693 = vadd.f32 %v6532, %v6692
          %v6694 = vpop.f32.mrf.mxu0
          %v6695 = vpop.f32.mrf.mxu0
          %v6696 = vadd.f32 %v6535, %v6695
          %v6697 = vpop.f32.mrf.mxu0
          %6698 = vdwg.mxu0
          %6699 = vmatprep.subr.bf16.mxu0 0
          %6700 = vmatpush1.bf16.msra.mxu0 %v6336
          %6701 = vmatprep.subr.bf16.mxu0 0
          %6702 = vmatpush1.bf16.msra.mxu0 %v6335
          %6703 = vmatprep.subr.bf16.mxu0 0
          %6704 = vmatpush1.bf16.msra.mxu0 %v6334
          %6705 = vmatprep.subr.bf16.mxu0 0
          %6706 = vmatpush1.bf16.msra.mxu0 %v6333
          %6707 = vmatprep.subr.bf16.mxu0 0
          %6708 = vmatpush1.bf16.msra.mxu0 %v6332
          %6709 = vmatprep.subr.bf16.mxu0 0
          %6710 = vmatpush1.bf16.msra.mxu0 %v6331
          %6711 = vmatprep.subr.bf16.mxu0 0
          %6712 = vmatpush1.bf16.msra.mxu0 %v6330
          %6713 = vmatprep.subr.bf16.mxu0 0
          %6714 = vmatpush1.bf16.msra.mxu0 %v6329
          %6715 = vmatprep.subr.bf16.mxu0 0
          %6716 = vmatpush2.bf16.msra.mxu0 0
          %6717 = vmatprep.subr.bf16.mxu0 0
          %6718 = vmatpush2.bf16.msra.mxu0 0
          %6719 = vmatprep.subr.bf16.mxu0 0
          %6720 = vmatpush2.bf16.msra.mxu0 0
          %6721 = vmatprep.subr.bf16.mxu0 0
          %6722 = vmatpush2.bf16.msra.mxu0 0
          %6723 = vmatprep.subr.bf16.mxu0 0
          %6724 = vmatpush2.bf16.msra.mxu0 0
          %6725 = vmatprep.subr.bf16.mxu0 0
          %6726 = vmatpush2.bf16.msra.mxu0 0
          %6727 = vmatprep.subr.bf16.mxu0 0
          %6728 = vmatpush2.bf16.msra.mxu0 0
          %6729 = vmatprep.subr.bf16.mxu0 0
          %6730 = vmatpush2.bf16.msra.mxu0 0
          %6731 = vmatprep.mubr.bf16.mxu0 0
          %6732 = vmatmul.mubr.bf16.gmra.mxu0 %v5981
          %v6733 = vpop.f32.mrf.mxu0
          %v6734 = vadd.f32 %v6573, %v6733
          %v6735 = vpop.f32.mrf.mxu0
          %v6736 = vpop.f32.mrf.mxu0
          %v6737 = vadd.f32 %v6576, %v6736
          %v6738 = vpop.f32.mrf.mxu0
          %6739 = vmatprep.mubr.bf16.mxu0 0
          %6740 = vmatmul.mubr.bf16.gmra.mxu0 %v5986
          %v6741 = vpop.f32.mrf.mxu0
          %v6742 = vadd.f32 %v6581, %v6741
          %v6743 = vpop.f32.mrf.mxu0
          %v6744 = vpop.f32.mrf.mxu0
          %v6745 = vadd.f32 %v6584, %v6744
          %v6746 = vpop.f32.mrf.mxu0
          %6747 = vmatprep.mubr.bf16.mxu0 0
          %6748 = vmatmul.mubr.bf16.gmra.mxu0 %v5991
          %v6749 = vpop.f32.mrf.mxu0
          %v6750 = vadd.f32 %v6589, %v6749
          %v6751 = vpop.f32.mrf.mxu0
          %v6752 = vpop.f32.mrf.mxu0
          %v6753 = vadd.f32 %v6592, %v6752
          %v6754 = vpop.f32.mrf.mxu0
          %6755 = vmatprep.mubr.bf16.mxu0 0
          %6756 = vmatmul.mubr.bf16.gmra.mxu0 %v5996
          %v6757 = vpop.f32.mrf.mxu0
          %v6758 = vadd.f32 %v6597, %v6757
          %v6759 = vpop.f32.mrf.mxu0
          %v6760 = vpop.f32.mrf.mxu0
          %v6761 = vadd.f32 %v6600, %v6760
          %v6762 = vpop.f32.mrf.mxu0
          %6763 = vmatprep.mubr.bf16.mxu0 0
          %6764 = vmatmul.mubr.bf16.gmra.mxu0 %v6001
          %v6765 = vpop.f32.mrf.mxu0
          %v6766 = vadd.f32 %v6605, %v6765
          %v6767 = vpop.f32.mrf.mxu0
          %v6768 = vpop.f32.mrf.mxu0
          %v6769 = vadd.f32 %v6608, %v6768
          %v6770 = vpop.f32.mrf.mxu0
          %6771 = vmatprep.mubr.bf16.mxu0 0
          %6772 = vmatmul.mubr.bf16.gmra.mxu0 %v6006
          %v6773 = vpop.f32.mrf.mxu0
          %v6774 = vadd.f32 %v6613, %v6773
          %v6775 = vpop.f32.mrf.mxu0
          %v6776 = vpop.f32.mrf.mxu0
          %v6777 = vadd.f32 %v6616, %v6776
          %v6778 = vpop.f32.mrf.mxu0
          %6779 = vmatprep.mubr.bf16.mxu0 0
          %6780 = vmatmul.mubr.bf16.gmra.mxu0 %v6011
          %v6781 = vpop.f32.mrf.mxu0
          %v6782 = vadd.f32 %v6621, %v6781
          %v6783 = vpop.f32.mrf.mxu0
          %v6784 = vpop.f32.mrf.mxu0
          %v6785 = vadd.f32 %v6624, %v6784
          %v6786 = vpop.f32.mrf.mxu0
          %6787 = vmatprep.mubr.bf16.mxu0 0
          %6788 = vmatmul.mubr.bf16.gmra.mxu0 %v6016
          %v6789 = vpop.f32.mrf.mxu0
          %v6790 = vadd.f32 %v6629, %v6789
          %v6791 = vpop.f32.mrf.mxu0
          %v6792 = vpop.f32.mrf.mxu0
          %v6793 = vadd.f32 %v6632, %v6792
          %v6794 = vpop.f32.mrf.mxu0
          %6795 = vmatprep.mubr.bf16.mxu0 0
          %6796 = vmatmul.mubr.bf16.gmra.mxu0 %v6021
          %v6797 = vpop.f32.mrf.mxu0
          %v6798 = vadd.f32 %v6637, %v6797
          %v6799 = vpop.f32.mrf.mxu0
          %v6800 = vpop.f32.mrf.mxu0
          %v6801 = vadd.f32 %v6640, %v6800
          %v6802 = vpop.f32.mrf.mxu0
          %6803 = vmatprep.mubr.bf16.mxu0 0
          %6804 = vmatmul.mubr.bf16.gmra.mxu0 %v6026
          %v6805 = vpop.f32.mrf.mxu0
          %v6806 = vadd.f32 %v6645, %v6805
          %v6807 = vpop.f32.mrf.mxu0
          %v6808 = vpop.f32.mrf.mxu0
          %v6809 = vadd.f32 %v6648, %v6808
          %v6810 = vpop.f32.mrf.mxu0
          %6811 = vmatprep.mubr.bf16.mxu0 0
          %6812 = vmatmul.mubr.bf16.gmra.mxu0 %v6031
          %v6813 = vpop.f32.mrf.mxu0
          %v6814 = vadd.f32 %v6653, %v6813
          %v6815 = vpop.f32.mrf.mxu0
          %v6816 = vpop.f32.mrf.mxu0
          %v6817 = vadd.f32 %v6656, %v6816
          %v6818 = vpop.f32.mrf.mxu0
          %6819 = vmatprep.mubr.bf16.mxu0 0
          %6820 = vmatmul.mubr.bf16.gmra.mxu0 %v6036
          %v6821 = vpop.f32.mrf.mxu0
          %v6822 = vadd.f32 %v6661, %v6821
          %v6823 = vpop.f32.mrf.mxu0
          %v6824 = vpop.f32.mrf.mxu0
          %v6825 = vadd.f32 %v6664, %v6824
          %v6826 = vpop.f32.mrf.mxu0
          %6827 = vmatprep.mubr.bf16.mxu0 0
          %6828 = vmatmul.mubr.bf16.gmra.mxu0 %v6041
          %v6829 = vpop.f32.mrf.mxu0
          %v6830 = vadd.f32 %v6669, %v6829
          %v6831 = vpop.f32.mrf.mxu0
          %v6832 = vpop.f32.mrf.mxu0
          %v6833 = vadd.f32 %v6672, %v6832
          %v6834 = vpop.f32.mrf.mxu0
          %6835 = vmatprep.mubr.bf16.mxu0 0
          %6836 = vmatmul.mubr.bf16.gmra.mxu0 %v6046
          %v6837 = vpop.f32.mrf.mxu0
          %v6838 = vadd.f32 %v6677, %v6837
          %v6839 = vpop.f32.mrf.mxu0
          %v6840 = vpop.f32.mrf.mxu0
          %v6841 = vadd.f32 %v6680, %v6840
          %v6842 = vpop.f32.mrf.mxu0
          %6843 = vmatprep.mubr.bf16.mxu0 0
          %6844 = vmatmul.mubr.bf16.gmra.mxu0 %v6051
          %v6845 = vpop.f32.mrf.mxu0
          %v6846 = vadd.f32 %v6685, %v6845
          %v6847 = vpop.f32.mrf.mxu0
          %v6848 = vpop.f32.mrf.mxu0
          %v6849 = vadd.f32 %v6688, %v6848
          %v6850 = vpop.f32.mrf.mxu0
          %6851 = vmatprep.mubr.bf16.mxu0 0
          %6852 = vmatmul.mubr.bf16.gmra.mxu0 %v6056
          %v6853 = vpop.f32.mrf.mxu0
          %v6854 = vadd.f32 %v6693, %v6853
          %v6855 = vpop.f32.mrf.mxu0
          %v6856 = vpop.f32.mrf.mxu0
          %v6857 = vadd.f32 %v6696, %v6856
          %v6858 = vpop.f32.mrf.mxu0
          %6859 = vdwg.mxu0
          %v6860 = vld [vmem:[%s3383] sm:$0xff]
          %v6861 = vld [vmem:[%s3383 + $0x8] sm:$0xff]
          %v6862 = vld [vmem:[%s3383 + $0x10] sm:$0xf]
          %v6863 = vld [vmem:[%s3383 + $0x14] sm:$0xff]
          %v6864 = vld [vmem:[%s3383 + $0x1c] sm:$0xff]
          %v6865 = vld [vmem:[%s3383 + $0x24] sm:$0xf]
          %v6866 = vld [vmem:[%s3383 + $0x28] sm:$0xff]
          %v6867 = vld [vmem:[%s3383 + $0x30] sm:$0xff]
          %v6868 = vld [vmem:[%s3383 + $0x38] sm:$0xf]
          %v6869 = vld [vmem:[%s3383 + $0x3c] sm:$0xff]
          %v6870 = vld [vmem:[%s3383 + $0x44] sm:$0xff]
          %v6871 = vld [vmem:[%s3383 + $0x4c] sm:$0xf]
          %v6872 = vld [vmem:[%s3383 + $0x50] sm:$0xff]
          %v6873 = vld [vmem:[%s3383 + $0x58] sm:$0xff]
          %v6874 = vld [vmem:[%s3383 + $0x60] sm:$0xf]
          %v6875 = vld [vmem:[%s3383 + $0x64] sm:$0xff]
          %v6876 = vld [vmem:[%s3383 + $0x6c] sm:$0xff]
          %v6877 = vld [vmem:[%s3383 + $0x74] sm:$0xf]
          %v6878 = vld [vmem:[%s3383 + $0x78] sm:$0xff]
          %v6879 = vld [vmem:[%s3383 + $0x80] sm:$0xff]
          %v6880 = vld [vmem:[%s3383 + $0x88] sm:$0xf]
          %v6881 = vld [vmem:[%s3383 + $0x8c] sm:$0xff]
          %v6882 = vld [vmem:[%s3383 + $0x94] sm:$0xff]
          %v6883 = vld [vmem:[%s3383 + $0x9c] sm:$0xf]
          %v6884 = vld [vmem:[%s3383 + $0xa0] sm:$0xff]
          %v6885 = vld [vmem:[%s3383 + $0xa8] sm:$0xff]
          %v6886 = vld [vmem:[%s3383 + $0xb0] sm:$0xf]
          %v6887 = vld [vmem:[%s3383 + $0xb4] sm:$0xff]
          %v6888 = vld [vmem:[%s3383 + $0xbc] sm:$0xff]
          %v6889 = vld [vmem:[%s3383 + $0xc4] sm:$0xf]
          %v6890 = vld [vmem:[%s3383 + $0xc8] sm:$0xff]
          %v6891 = vld [vmem:[%s3383 + $0xd0] sm:$0xff]
          %v6892 = vld [vmem:[%s3383 + $0xd8] sm:$0xf]
          %v6893 = vld [vmem:[%s3383 + $0xdc] sm:$0xff]
          %v6894 = vld [vmem:[%s3383 + $0xe4] sm:$0xff]
          %v6895 = vld [vmem:[%s3383 + $0xec] sm:$0xf]
          %v6896 = vld [vmem:[%s3383 + $0xf0] sm:$0xff]
          %v6897 = vld [vmem:[%s3383 + $0xf8] sm:$0xff]
          %v6898 = vld [vmem:[%s3383 + $0x100] sm:$0xf]
          %v6899 = vld [vmem:[%s3383 + $0x104] sm:$0xff]
          %v6900 = vld [vmem:[%s3383 + $0x10c] sm:$0xff]
          %v6901 = vld [vmem:[%s3383 + $0x114] sm:$0xf]
          %v6902 = vld [vmem:[%s3383 + $0x118] sm:$0xff]
          %v6903 = vld [vmem:[%s3383 + $0x120] sm:$0xff]
          %v6904 = vld [vmem:[%s3383 + $0x128] sm:$0xf]
          %v6905 = vld [vmem:[%s3383 + $0x12c] sm:$0xff]
          %v6906 = vld [vmem:[%s3383 + $0x134] sm:$0xff]
          %v6907 = vld [vmem:[%s3383 + $0x13c] sm:$0xf]
          %v6908 = vld [vmem:[%s3383 + $0x140] sm:$0xff]
          %v6909 = vld [vmem:[%s3383 + $0x148] sm:$0xff]
          %v6910 = vld [vmem:[%s3383 + $0x150] sm:$0xf]
          %v6911 = vld [vmem:[%s3383 + $0x154] sm:$0xff]
          %v6912 = vld [vmem:[%s3383 + $0x15c] sm:$0xff]
          %v6913 = vld [vmem:[%s3383 + $0x164] sm:$0xf]
          %v6914 = vld [vmem:[%s3383 + $0x168] sm:$0xff]
          %v6915 = vld [vmem:[%s3383 + $0x170] sm:$0xff]
          %v6916 = vld [vmem:[%s3383 + $0x178] sm:$0xf]
          %v6917 = vld [vmem:[%s3383 + $0x17c] sm:$0xff]
          %v6918 = vld [vmem:[%s3383 + $0x184] sm:$0xff]
          %v6919 = vld [vmem:[%s3383 + $0x18c] sm:$0xf]
          %v6920 = vld [vmem:[%s3383 + $0x190] sm:$0xff]
          %v6921 = vld [vmem:[%s3383 + $0x198] sm:$0xff]
          %v6922 = vld [vmem:[%s3383 + $0x1a0] sm:$0xf]
          %v6923 = vld [vmem:[%s3383 + $0x1a4] sm:$0xff]
          %v6924 = vld [vmem:[%s3383 + $0x1ac] sm:$0xff]
          %v6925 = vld [vmem:[%s3383 + $0x1b4] sm:$0xf]
          %v6926 = vld [vmem:[%s3383 + $0x1b8] sm:$0xff]
          %v6927 = vld [vmem:[%s3383 + $0x1c0] sm:$0xff]
          %v6928 = vld [vmem:[%s3383 + $0x1c8] sm:$0xf]
          %v6929 = vld [vmem:[%s3383 + $0x1cc] sm:$0xff]
          %v6930 = vld [vmem:[%s3383 + $0x1d4] sm:$0xff]
          %v6931 = vld [vmem:[%s3383 + $0x1dc] sm:$0xf]
          %v6932 = vld [vmem:[%s3383 + $0x1e0] sm:$0xff]
          %v6933 = vld [vmem:[%s3383 + $0x1e8] sm:$0xff]
          %v6934 = vld [vmem:[%s3383 + $0x1f0] sm:$0xf]
          %v6935 = vld [vmem:[%s3383 + $0x1f4] sm:$0xff]
          %v6936 = vld [vmem:[%s3383 + $0x1fc] sm:$0xff]
          %v6937 = vld [vmem:[%s3383 + $0x204] sm:$0xf]
          %v6938 = vld [vmem:[%s3383 + $0x208] sm:$0xff]
          %v6939 = vld [vmem:[%s3383 + $0x210] sm:$0xff]
          %v6940 = vld [vmem:[%s3383 + $0x218] sm:$0xf]
          %v6941 = vld [vmem:[%s3383 + $0x21c] sm:$0xff]
          %v6942 = vld [vmem:[%s3383 + $0x224] sm:$0xff]
          %v6943 = vld [vmem:[%s3383 + $0x22c] sm:$0xf]
          %v6944 = vld [vmem:[%s3383 + $0x230] sm:$0xff]
          %v6945 = vld [vmem:[%s3383 + $0x238] sm:$0xff]
          %v6946 = vld [vmem:[%s3383 + $0x240] sm:$0xf]
          %v6947 = vld [vmem:[%s3383 + $0x244] sm:$0xff]
          %v6948 = vld [vmem:[%s3383 + $0x24c] sm:$0xff]
          %v6949 = vld [vmem:[%s3383 + $0x254] sm:$0xf]
          %v6950 = vld [vmem:[%s3383 + $0x258] sm:$0xff]
          %v6951 = vld [vmem:[%s3383 + $0x260] sm:$0xff]
          %v6952 = vld [vmem:[%s3383 + $0x268] sm:$0xf]
          %v6953 = vld [vmem:[%s3383 + $0x26c] sm:$0xff]
          %v6954 = vld [vmem:[%s3383 + $0x274] sm:$0xff]
          %v6955 = vld [vmem:[%s3383 + $0x27c] sm:$0xf]
          %s6956 = scalar_lea.vmem %s3, 640
          %v6957 = vld [vmem:[%s6956] sm:$0xf]
          %v6958 = vld [vmem:[%s6956 + $0x4] sm:$0xf]
          %v6959 = vld [vmem:[%s6956 + $0x8] sm:$0xf]
          %v6960 = vld [vmem:[%s6956 + $0xc] sm:$0xf]
          %v6961 = vld [vmem:[%s6956 + $0x10] sm:$0xf]
          %v6962 = vld [vmem:[%s6956 + $0x14] sm:$0xf]
          %v6963 = vld [vmem:[%s6956 + $0x18] sm:$0xf]
          %v6964 = vld [vmem:[%s6956 + $0x1c] sm:$0xf]
          %v6965 = vld [vmem:[%s6956 + $0x20] sm:$0xf]
          %v6966 = vld [vmem:[%s6956 + $0x24] sm:$0xf]
          %v6967 = vld [vmem:[%s6956 + $0x28] sm:$0xf]
          %v6968 = vld [vmem:[%s6956 + $0x2c] sm:$0xf]
          %v6969 = vld [vmem:[%s6956 + $0x30] sm:$0xf]
          %v6970 = vld [vmem:[%s6956 + $0x34] sm:$0xf]
          %v6971 = vld [vmem:[%s6956 + $0x38] sm:$0xf]
          %v6972 = vld [vmem:[%s6956 + $0x3c] sm:$0xf]
          %v6973 = vld [vmem:[%s6956 + $0x40] sm:$0xf]
          %v6974 = vld [vmem:[%s6956 + $0x44] sm:$0xf]
          %v6975 = vld [vmem:[%s6956 + $0x48] sm:$0xf]
          %v6976 = vld [vmem:[%s6956 + $0x4c] sm:$0xf]
          %v6977 = vld [vmem:[%s6956 + $0x50] sm:$0xf]
          %v6978 = vld [vmem:[%s6956 + $0x54] sm:$0xf]
          %v6979 = vld [vmem:[%s6956 + $0x58] sm:$0xf]
          %v6980 = vld [vmem:[%s6956 + $0x5c] sm:$0xf]
          %v6981 = vld [vmem:[%s6956 + $0x60] sm:$0xf]
          %v6982 = vld [vmem:[%s6956 + $0x64] sm:$0xf]
          %v6983 = vld [vmem:[%s6956 + $0x68] sm:$0xf]
          %v6984 = vld [vmem:[%s6956 + $0x6c] sm:$0xf]
          %v6985 = vld [vmem:[%s6956 + $0x70] sm:$0xf]
          %v6986 = vld [vmem:[%s6956 + $0x74] sm:$0xf]
          %v6987 = vld [vmem:[%s6956 + $0x78] sm:$0xf]
          %v6988 = vld [vmem:[%s6956 + $0x7c] sm:$0xf]
          %v6989 = vld [vmem:[%s6956 + $0x80] sm:$0xf]
          %v6990 = vld [vmem:[%s6956 + $0x84] sm:$0xf]
          %v6991 = vld [vmem:[%s6956 + $0x88] sm:$0xf]
          %v6992 = vld [vmem:[%s6956 + $0x8c] sm:$0xf]
          %v6993 = vld [vmem:[%s6956 + $0x90] sm:$0xf]
          %v6994 = vld [vmem:[%s6956 + $0x94] sm:$0xf]
          %v6995 = vld [vmem:[%s6956 + $0x98] sm:$0xf]
          %v6996 = vld [vmem:[%s6956 + $0x9c] sm:$0xf]
          %v6997 = vld [vmem:[%s6956 + $0xa0] sm:$0xf]
          %v6998 = vld [vmem:[%s6956 + $0xa4] sm:$0xf]
          %v6999 = vld [vmem:[%s6956 + $0xa8] sm:$0xf]
          %v7000 = vld [vmem:[%s6956 + $0xac] sm:$0xf]
          %v7001 = vld [vmem:[%s6956 + $0xb0] sm:$0xf]
          %v7002 = vld [vmem:[%s6956 + $0xb4] sm:$0xf]
          %v7003 = vld [vmem:[%s6956 + $0xb8] sm:$0xf]
          %v7004 = vld [vmem:[%s6956 + $0xbc] sm:$0xf]
          %v7005 = vld [vmem:[%s6956 + $0xc0] sm:$0xf]
          %v7006 = vld [vmem:[%s6956 + $0xc4] sm:$0xf]
          %v7007 = vld [vmem:[%s6956 + $0xc8] sm:$0xf]
          %v7008 = vld [vmem:[%s6956 + $0xcc] sm:$0xf]
          %v7009 = vld [vmem:[%s6956 + $0xd0] sm:$0xf]
          %v7010 = vld [vmem:[%s6956 + $0xd4] sm:$0xf]
          %v7011 = vld [vmem:[%s6956 + $0xd8] sm:$0xf]
          %v7012 = vld [vmem:[%s6956 + $0xdc] sm:$0xf]
          %v7013 = vld [vmem:[%s6956 + $0xe0] sm:$0xf]
          %v7014 = vld [vmem:[%s6956 + $0xe4] sm:$0xf]
          %v7015 = vld [vmem:[%s6956 + $0xe8] sm:$0xf]
          %v7016 = vld [vmem:[%s6956 + $0xec] sm:$0xf]
          %v7017 = vld [vmem:[%s6956 + $0xf0] sm:$0xf]
          %v7018 = vld [vmem:[%s6956 + $0xf4] sm:$0xf]
          %v7019 = vld [vmem:[%s6956 + $0xf8] sm:$0xf]
          %v7020 = vld [vmem:[%s6956 + $0xfc] sm:$0xf]
          %v7021 = vld [vmem:[%s6956 + $0x100] sm:$0xf]
          %v7022 = vld [vmem:[%s6956 + $0x104] sm:$0xf]
          %v7023 = vld [vmem:[%s6956 + $0x108] sm:$0xf]
          %v7024 = vld [vmem:[%s6956 + $0x10c] sm:$0xf]
          %v7025 = vld [vmem:[%s6956 + $0x110] sm:$0xf]
          %v7026 = vld [vmem:[%s6956 + $0x114] sm:$0xf]
          %v7027 = vld [vmem:[%s6956 + $0x118] sm:$0xf]
          %v7028 = vld [vmem:[%s6956 + $0x11c] sm:$0xf]
          %v7029 = vld [vmem:[%s6956 + $0x120] sm:$0xf]
          %v7030 = vld [vmem:[%s6956 + $0x124] sm:$0xf]
          %v7031 = vld [vmem:[%s6956 + $0x128] sm:$0xf]
          %v7032 = vld [vmem:[%s6956 + $0x12c] sm:$0xf]
          %v7033 = vld [vmem:[%s6956 + $0x130] sm:$0xf]
          %v7034 = vld [vmem:[%s6956 + $0x134] sm:$0xf]
          %v7035 = vld [vmem:[%s6956 + $0x138] sm:$0xf]
          %v7036 = vld [vmem:[%s6956 + $0x13c] sm:$0xf]
          %v7133 = vunpack.c.l.b16 %v6860
          %v7134 = vunpack.c.h.b16 %v6860
          %v7135 = vunpack.c.l.b16 %v6861
          %v7136 = vunpack.c.h.b16 %v6861
          %v7137 = vunpack.c.l.b16 %v6862
          %v7138 = vunpack.c.l.b16 %v6863
          %v7139 = vunpack.c.h.b16 %v6863
          %v7140 = vunpack.c.l.b16 %v6864
          %v7141 = vunpack.c.h.b16 %v6864
          %v7142 = vunpack.c.l.b16 %v6865
          %v7143 = vunpack.c.l.b16 %v6866
          %v7144 = vunpack.c.h.b16 %v6866
          %v7145 = vunpack.c.l.b16 %v6867
          %v7146 = vunpack.c.h.b16 %v6867
          %v7147 = vunpack.c.l.b16 %v6868
          %v7148 = vunpack.c.l.b16 %v6869
          %v7149 = vunpack.c.h.b16 %v6869
          %v7150 = vunpack.c.l.b16 %v6870
          %v7151 = vunpack.c.h.b16 %v6870
          %v7152 = vunpack.c.l.b16 %v6871
          %v7153 = vunpack.c.l.b16 %v6872
          %v7154 = vunpack.c.h.b16 %v6872
          %v7155 = vunpack.c.l.b16 %v6873
          %v7156 = vunpack.c.h.b16 %v6873
          %v7157 = vunpack.c.l.b16 %v6874
          %v7158 = vunpack.c.l.b16 %v6875
          %v7159 = vunpack.c.h.b16 %v6875
          %v7160 = vunpack.c.l.b16 %v6876
          %v7161 = vunpack.c.h.b16 %v6876
          %v7162 = vunpack.c.l.b16 %v6877
          %v7163 = vunpack.c.l.b16 %v6878
          %v7164 = vunpack.c.h.b16 %v6878
          %v7165 = vunpack.c.l.b16 %v6879
          %v7166 = vunpack.c.h.b16 %v6879
          %v7167 = vunpack.c.l.b16 %v6880
          %v7168 = vunpack.c.l.b16 %v6881
          %v7169 = vunpack.c.h.b16 %v6881
          %v7170 = vunpack.c.l.b16 %v6882
          %v7171 = vunpack.c.h.b16 %v6882
          %v7172 = vunpack.c.l.b16 %v6883
          %v7173 = vunpack.c.l.b16 %v6884
          %v7174 = vunpack.c.h.b16 %v6884
          %v7175 = vunpack.c.l.b16 %v6885
          %v7176 = vunpack.c.h.b16 %v6885
          %v7177 = vunpack.c.l.b16 %v6886
          %v7178 = vunpack.c.l.b16 %v6887
          %v7179 = vunpack.c.h.b16 %v6887
          %v7180 = vunpack.c.l.b16 %v6888
          %v7181 = vunpack.c.h.b16 %v6888
          %v7182 = vunpack.c.l.b16 %v6889
          %v7183 = vunpack.c.l.b16 %v6890
          %v7184 = vunpack.c.h.b16 %v6890
          %v7185 = vunpack.c.l.b16 %v6891
          %v7186 = vunpack.c.h.b16 %v6891
          %v7187 = vunpack.c.l.b16 %v6892
          %v7188 = vunpack.c.l.b16 %v6893
          %v7189 = vunpack.c.h.b16 %v6893
          %v7190 = vunpack.c.l.b16 %v6894
          %v7191 = vunpack.c.h.b16 %v6894
          %v7192 = vunpack.c.l.b16 %v6895
          %v7193 = vunpack.c.l.b16 %v6896
          %v7194 = vunpack.c.h.b16 %v6896
          %v7195 = vunpack.c.l.b16 %v6897
          %v7196 = vunpack.c.h.b16 %v6897
          %v7197 = vunpack.c.l.b16 %v6898
          %v7198 = vunpack.c.l.b16 %v6899
          %v7199 = vunpack.c.h.b16 %v6899
          %v7200 = vunpack.c.l.b16 %v6900
          %v7201 = vunpack.c.h.b16 %v6900
          %v7202 = vunpack.c.l.b16 %v6901
          %v7203 = vunpack.c.l.b16 %v6902
          %v7204 = vunpack.c.h.b16 %v6902
          %v7205 = vunpack.c.l.b16 %v6903
          %v7206 = vunpack.c.h.b16 %v6903
          %v7207 = vunpack.c.l.b16 %v6904
          %v7208 = vunpack.c.l.b16 %v6905
          %v7209 = vunpack.c.h.b16 %v6905
          %v7210 = vunpack.c.l.b16 %v6906
          %v7211 = vunpack.c.h.b16 %v6906
          %v7212 = vunpack.c.l.b16 %v6907
          %v7213 = vunpack.c.l.b16 %v6908
          %v7214 = vunpack.c.h.b16 %v6908
          %v7215 = vunpack.c.l.b16 %v6909
          %v7216 = vunpack.c.h.b16 %v6909
          %v7217 = vunpack.c.l.b16 %v6910
          %v7218 = vunpack.c.l.b16 %v6911
          %v7219 = vunpack.c.h.b16 %v6911
          %v7220 = vunpack.c.l.b16 %v6912
          %v7221 = vunpack.c.h.b16 %v6912
          %v7222 = vunpack.c.l.b16 %v6913
          %v7223 = vunpack.c.l.b16 %v6914
          %v7224 = vunpack.c.h.b16 %v6914
          %v7225 = vunpack.c.l.b16 %v6915
          %v7226 = vunpack.c.h.b16 %v6915
          %v7227 = vunpack.c.l.b16 %v6916
          %v7228 = vunpack.c.l.b16 %v6917
          %v7229 = vunpack.c.h.b16 %v6917
          %v7230 = vunpack.c.l.b16 %v6918
          %v7231 = vunpack.c.h.b16 %v6918
          %v7232 = vunpack.c.l.b16 %v6919
          %v7233 = vunpack.c.l.b16 %v6920
          %v7234 = vunpack.c.h.b16 %v6920
          %v7235 = vunpack.c.l.b16 %v6921
          %v7236 = vunpack.c.h.b16 %v6921
          %v7237 = vunpack.c.l.b16 %v6922
          %v7238 = vunpack.c.l.b16 %v6923
          %v7239 = vunpack.c.h.b16 %v6923
          %v7240 = vunpack.c.l.b16 %v6924
          %v7241 = vunpack.c.h.b16 %v6924
          %v7242 = vunpack.c.l.b16 %v6925
          %v7243 = vunpack.c.l.b16 %v6926
          %v7244 = vunpack.c.h.b16 %v6926
          %v7245 = vunpack.c.l.b16 %v6927
          %v7246 = vunpack.c.h.b16 %v6927
          %v7247 = vunpack.c.l.b16 %v6928
          %v7248 = vunpack.c.l.b16 %v6929
          %v7249 = vunpack.c.h.b16 %v6929
          %v7250 = vunpack.c.l.b16 %v6930
          %v7251 = vunpack.c.h.b16 %v6930
          %v7252 = vunpack.c.l.b16 %v6931
          %v7253 = vunpack.c.l.b16 %v6932
          %v7254 = vunpack.c.h.b16 %v6932
          %v7255 = vunpack.c.l.b16 %v6933
          %v7256 = vunpack.c.h.b16 %v6933
          %v7257 = vunpack.c.l.b16 %v6934
          %v7258 = vunpack.c.l.b16 %v6935
          %v7259 = vunpack.c.h.b16 %v6935
          %v7260 = vunpack.c.l.b16 %v6936
          %v7261 = vunpack.c.h.b16 %v6936
          %v7262 = vunpack.c.l.b16 %v6937
          %v7263 = vunpack.c.l.b16 %v6938
          %v7264 = vunpack.c.h.b16 %v6938
          %v7265 = vunpack.c.l.b16 %v6939
          %v7266 = vunpack.c.h.b16 %v6939
          %v7267 = vunpack.c.l.b16 %v6940
          %v7268 = vunpack.c.l.b16 %v6941
          %v7269 = vunpack.c.h.b16 %v6941
          %v7270 = vunpack.c.l.b16 %v6942
          %v7271 = vunpack.c.h.b16 %v6942
          %v7272 = vunpack.c.l.b16 %v6943
          %v7273 = vunpack.c.l.b16 %v6944
          %v7274 = vunpack.c.h.b16 %v6944
          %v7275 = vunpack.c.l.b16 %v6945
          %v7276 = vunpack.c.h.b16 %v6945
          %v7277 = vunpack.c.l.b16 %v6946
          %v7278 = vunpack.c.l.b16 %v6947
          %v7279 = vunpack.c.h.b16 %v6947
          %v7280 = vunpack.c.l.b16 %v6948
          %v7281 = vunpack.c.h.b16 %v6948
          %v7282 = vunpack.c.l.b16 %v6949
          %v7283 = vunpack.c.l.b16 %v6950
          %v7284 = vunpack.c.h.b16 %v6950
          %v7285 = vunpack.c.l.b16 %v6951
          %v7286 = vunpack.c.h.b16 %v6951
          %v7287 = vunpack.c.l.b16 %v6952
          %v7288 = vunpack.c.l.b16 %v6953
          %v7289 = vunpack.c.h.b16 %v6953
          %v7290 = vunpack.c.l.b16 %v6954
          %v7291 = vunpack.c.h.b16 %v6954
          %v7292 = vunpack.c.l.b16 %v6955
          %v7293 = vpack.c.b16 %v7138, %v7133
          %v7294 = vpack.c.b16 %v7139, %v7134
          %v7295 = vpack.c.b16 %v7140, %v7135
          %v7296 = vpack.c.b16 %v7141, %v7136
          %v7297 = vpack.c.b16 %v7142, %v7137
          %v7298 = vpack.c.b16 %v7148, %v7143
          %v7299 = vpack.c.b16 %v7149, %v7144
          %v7300 = vpack.c.b16 %v7150, %v7145
          %v7301 = vpack.c.b16 %v7151, %v7146
          %v7302 = vpack.c.b16 %v7152, %v7147
          %v7303 = vpack.c.b16 %v7158, %v7153
          %v7304 = vpack.c.b16 %v7159, %v7154
          %v7305 = vpack.c.b16 %v7160, %v7155
          %v7306 = vpack.c.b16 %v7161, %v7156
          %v7307 = vpack.c.b16 %v7162, %v7157
          %v7308 = vpack.c.b16 %v7168, %v7163
          %v7309 = vpack.c.b16 %v7169, %v7164
          %v7310 = vpack.c.b16 %v7170, %v7165
          %v7311 = vpack.c.b16 %v7171, %v7166
          %v7312 = vpack.c.b16 %v7172, %v7167
          %v7313 = vpack.c.b16 %v7178, %v7173
          %v7314 = vpack.c.b16 %v7179, %v7174
          %v7315 = vpack.c.b16 %v7180, %v7175
          %v7316 = vpack.c.b16 %v7181, %v7176
          %v7317 = vpack.c.b16 %v7182, %v7177
          %v7318 = vpack.c.b16 %v7188, %v7183
          %v7319 = vpack.c.b16 %v7189, %v7184
          %v7320 = vpack.c.b16 %v7190, %v7185
          %v7321 = vpack.c.b16 %v7191, %v7186
          %v7322 = vpack.c.b16 %v7192, %v7187
          %v7323 = vpack.c.b16 %v7198, %v7193
          %v7324 = vpack.c.b16 %v7199, %v7194
          %v7325 = vpack.c.b16 %v7200, %v7195
          %v7326 = vpack.c.b16 %v7201, %v7196
          %v7327 = vpack.c.b16 %v7202, %v7197
          %v7328 = vpack.c.b16 %v7208, %v7203
          %v7329 = vpack.c.b16 %v7209, %v7204
          %v7330 = vpack.c.b16 %v7210, %v7205
          %v7331 = vpack.c.b16 %v7211, %v7206
          %v7332 = vpack.c.b16 %v7212, %v7207
          %v7333 = vpack.c.b16 %v7218, %v7213
          %v7334 = vpack.c.b16 %v7219, %v7214
          %v7335 = vpack.c.b16 %v7220, %v7215
          %v7336 = vpack.c.b16 %v7221, %v7216
          %v7337 = vpack.c.b16 %v7222, %v7217
          %v7338 = vpack.c.b16 %v7228, %v7223
          %v7339 = vpack.c.b16 %v7229, %v7224
          %v7340 = vpack.c.b16 %v7230, %v7225
          %v7341 = vpack.c.b16 %v7231, %v7226
          %v7342 = vpack.c.b16 %v7232, %v7227
          %v7343 = vpack.c.b16 %v7238, %v7233
          %v7344 = vpack.c.b16 %v7239, %v7234
          %v7345 = vpack.c.b16 %v7240, %v7235
          %v7346 = vpack.c.b16 %v7241, %v7236
          %v7347 = vpack.c.b16 %v7242, %v7237
          %v7348 = vpack.c.b16 %v7248, %v7243
          %v7349 = vpack.c.b16 %v7249, %v7244
          %v7350 = vpack.c.b16 %v7250, %v7245
          %v7351 = vpack.c.b16 %v7251, %v7246
          %v7352 = vpack.c.b16 %v7252, %v7247
          %v7353 = vpack.c.b16 %v7258, %v7253
          %v7354 = vpack.c.b16 %v7259, %v7254
          %v7355 = vpack.c.b16 %v7260, %v7255
          %v7356 = vpack.c.b16 %v7261, %v7256
          %v7357 = vpack.c.b16 %v7262, %v7257
          %v7358 = vpack.c.b16 %v7268, %v7263
          %v7359 = vpack.c.b16 %v7269, %v7264
          %v7360 = vpack.c.b16 %v7270, %v7265
          %v7361 = vpack.c.b16 %v7271, %v7266
          %v7362 = vpack.c.b16 %v7272, %v7267
          %v7363 = vpack.c.b16 %v7278, %v7273
          %v7364 = vpack.c.b16 %v7279, %v7274
          %v7365 = vpack.c.b16 %v7280, %v7275
          %v7366 = vpack.c.b16 %v7281, %v7276
          %v7367 = vpack.c.b16 %v7282, %v7277
          %v7368 = vpack.c.b16 %v7288, %v7283
          %v7369 = vpack.c.b16 %v7289, %v7284
          %v7370 = vpack.c.b16 %v7290, %v7285
          %v7371 = vpack.c.b16 %v7291, %v7286
          %v7372 = vpack.c.b16 %v7292, %v7287
          %v7533 = vunpack.c.l.b16 %v6957
          %v7534 = vunpack.c.l.b16 %v6958
          %v7535 = vunpack.c.l.b16 %v6959
          %v7536 = vunpack.c.l.b16 %v6960
          %v7537 = vunpack.c.l.b16 %v6961
          %v7538 = vunpack.c.l.b16 %v6962
          %v7539 = vunpack.c.l.b16 %v6963
          %v7540 = vunpack.c.l.b16 %v6964
          %v7541 = vunpack.c.l.b16 %v6965
          %v7542 = vunpack.c.l.b16 %v6966
          %v7543 = vunpack.c.l.b16 %v6967
          %v7544 = vunpack.c.l.b16 %v6968
          %v7545 = vunpack.c.l.b16 %v6969
          %v7546 = vunpack.c.l.b16 %v6970
          %v7547 = vunpack.c.l.b16 %v6971
          %v7548 = vunpack.c.l.b16 %v6972
          %v7549 = vunpack.c.l.b16 %v6973
          %v7550 = vunpack.c.l.b16 %v6974
          %v7551 = vunpack.c.l.b16 %v6975
          %v7552 = vunpack.c.l.b16 %v6976
          %v7553 = vunpack.c.l.b16 %v6977
          %v7554 = vunpack.c.l.b16 %v6978
          %v7555 = vunpack.c.l.b16 %v6979
          %v7556 = vunpack.c.l.b16 %v6980
          %v7557 = vunpack.c.l.b16 %v6981
          %v7558 = vunpack.c.l.b16 %v6982
          %v7559 = vunpack.c.l.b16 %v6983
          %v7560 = vunpack.c.l.b16 %v6984
          %v7561 = vunpack.c.l.b16 %v6985
          %v7562 = vunpack.c.l.b16 %v6986
          %v7563 = vunpack.c.l.b16 %v6987
          %v7564 = vunpack.c.l.b16 %v6988
          %v7565 = vunpack.c.l.b16 %v6989
          %v7566 = vunpack.c.l.b16 %v6990
          %v7567 = vunpack.c.l.b16 %v6991
          %v7568 = vunpack.c.l.b16 %v6992
          %v7569 = vunpack.c.l.b16 %v6993
          %v7570 = vunpack.c.l.b16 %v6994
          %v7571 = vunpack.c.l.b16 %v6995
          %v7572 = vunpack.c.l.b16 %v6996
          %v7573 = vunpack.c.l.b16 %v6997
          %v7574 = vunpack.c.l.b16 %v6998
          %v7575 = vunpack.c.l.b16 %v6999
          %v7576 = vunpack.c.l.b16 %v7000
          %v7577 = vunpack.c.l.b16 %v7001
          %v7578 = vunpack.c.l.b16 %v7002
          %v7579 = vunpack.c.l.b16 %v7003
          %v7580 = vunpack.c.l.b16 %v7004
          %v7581 = vunpack.c.l.b16 %v7005
          %v7582 = vunpack.c.l.b16 %v7006
          %v7583 = vunpack.c.l.b16 %v7007
          %v7584 = vunpack.c.l.b16 %v7008
          %v7585 = vunpack.c.l.b16 %v7009
          %v7586 = vunpack.c.l.b16 %v7010
          %v7587 = vunpack.c.l.b16 %v7011
          %v7588 = vunpack.c.l.b16 %v7012
          %v7589 = vunpack.c.l.b16 %v7013
          %v7590 = vunpack.c.l.b16 %v7014
          %v7591 = vunpack.c.l.b16 %v7015
          %v7592 = vunpack.c.l.b16 %v7016
          %v7593 = vunpack.c.l.b16 %v7017
          %v7594 = vunpack.c.l.b16 %v7018
          %v7595 = vunpack.c.l.b16 %v7019
          %v7596 = vunpack.c.l.b16 %v7020
          %v7597 = vunpack.c.l.b16 %v7021
          %v7598 = vunpack.c.l.b16 %v7022
          %v7599 = vunpack.c.l.b16 %v7023
          %v7600 = vunpack.c.l.b16 %v7024
          %v7601 = vunpack.c.l.b16 %v7025
          %v7602 = vunpack.c.l.b16 %v7026
          %v7603 = vunpack.c.l.b16 %v7027
          %v7604 = vunpack.c.l.b16 %v7028
          %v7605 = vunpack.c.l.b16 %v7029
          %v7606 = vunpack.c.l.b16 %v7030
          %v7607 = vunpack.c.l.b16 %v7031
          %v7608 = vunpack.c.l.b16 %v7032
          %v7609 = vunpack.c.l.b16 %v7033
          %v7610 = vunpack.c.l.b16 %v7034
          %v7611 = vunpack.c.l.b16 %v7035
          %v7612 = vunpack.c.l.b16 %v7036
          %v7613 = vpack.c.b16 %v7534, %v7533
          %v7614 = vpack.c.b16 %v7536, %v7535
          %v7615 = vpack.c.b16 %v7538, %v7537
          %v7616 = vpack.c.b16 %v7540, %v7539
          %v7617 = vpack.c.b16 %v7542, %v7541
          %v7618 = vpack.c.b16 %v7544, %v7543
          %v7619 = vpack.c.b16 %v7546, %v7545
          %v7620 = vpack.c.b16 %v7548, %v7547
          %v7621 = vpack.c.b16 %v7550, %v7549
          %v7622 = vpack.c.b16 %v7552, %v7551
          %v7623 = vpack.c.b16 %v7554, %v7553
          %v7624 = vpack.c.b16 %v7556, %v7555
          %v7625 = vpack.c.b16 %v7558, %v7557
          %v7626 = vpack.c.b16 %v7560, %v7559
          %v7627 = vpack.c.b16 %v7562, %v7561
          %v7628 = vpack.c.b16 %v7564, %v7563
          %v7629 = vpack.c.b16 %v7566, %v7565
          %v7630 = vpack.c.b16 %v7568, %v7567
          %v7631 = vpack.c.b16 %v7570, %v7569
          %v7632 = vpack.c.b16 %v7572, %v7571
          %v7633 = vpack.c.b16 %v7574, %v7573
          %v7634 = vpack.c.b16 %v7576, %v7575
          %v7635 = vpack.c.b16 %v7578, %v7577
          %v7636 = vpack.c.b16 %v7580, %v7579
          %v7637 = vpack.c.b16 %v7582, %v7581
          %v7638 = vpack.c.b16 %v7584, %v7583
          %v7639 = vpack.c.b16 %v7586, %v7585
          %v7640 = vpack.c.b16 %v7588, %v7587
          %v7641 = vpack.c.b16 %v7590, %v7589
          %v7642 = vpack.c.b16 %v7592, %v7591
          %v7643 = vpack.c.b16 %v7594, %v7593
          %v7644 = vpack.c.b16 %v7596, %v7595
          %v7645 = vpack.c.b16 %v7598, %v7597
          %v7646 = vpack.c.b16 %v7600, %v7599
          %v7647 = vpack.c.b16 %v7602, %v7601
          %v7648 = vpack.c.b16 %v7604, %v7603
          %v7649 = vpack.c.b16 %v7606, %v7605
          %v7650 = vpack.c.b16 %v7608, %v7607
          %v7651 = vpack.c.b16 %v7610, %v7609
          %v7652 = vpack.c.b16 %v7612, %v7611
          %7693 = vmatprep.subr.bf16.mxu0 0
          %7694 = vmatpush1.bf16.msra.mxu0 %v7620
          %7695 = vmatprep.subr.bf16.mxu0 0
          %7696 = vmatpush1.bf16.msra.mxu0 %v7619
          %7697 = vmatprep.subr.bf16.mxu0 0
          %7698 = vmatpush1.bf16.msra.mxu0 %v7618
          %7699 = vmatprep.subr.bf16.mxu0 0
          %7700 = vmatpush1.bf16.msra.mxu0 %v7617
          %7701 = vmatprep.subr.bf16.mxu0 0
          %7702 = vmatpush1.bf16.msra.mxu0 %v7616
          %7703 = vmatprep.subr.bf16.mxu0 0
          %7704 = vmatpush1.bf16.msra.mxu0 %v7615
          %7705 = vmatprep.subr.bf16.mxu0 0
          %7706 = vmatpush1.bf16.msra.mxu0 %v7614
          %7707 = vmatprep.subr.bf16.mxu0 0
          %7708 = vmatpush1.bf16.msra.mxu0 %v7613
          %7709 = vmatprep.subr.bf16.mxu0 0
          %7710 = vmatpush2.bf16.msra.mxu0 %v7628
          %7711 = vmatprep.subr.bf16.mxu0 0
          %7712 = vmatpush2.bf16.msra.mxu0 %v7627
          %7713 = vmatprep.subr.bf16.mxu0 0
          %7714 = vmatpush2.bf16.msra.mxu0 %v7626
          %7715 = vmatprep.subr.bf16.mxu0 0
          %7716 = vmatpush2.bf16.msra.mxu0 %v7625
          %7717 = vmatprep.subr.bf16.mxu0 0
          %7718 = vmatpush2.bf16.msra.mxu0 %v7624
          %7719 = vmatprep.subr.bf16.mxu0 0
          %7720 = vmatpush2.bf16.msra.mxu0 %v7623
          %7721 = vmatprep.subr.bf16.mxu0 0
          %7722 = vmatpush2.bf16.msra.mxu0 %v7622
          %7723 = vmatprep.subr.bf16.mxu0 0
          %7724 = vmatpush2.bf16.msra.mxu0 %v7621
          %7725 = vmatprep.mubr.bf16.mxu0 %v7294
          %7726 = vmatmul.mubr.bf16.gmra.mxu0 %v7293
          %v7727 = vpop.f32.mrf.mxu0
          %v7728 = vadd.f32 0.0, %v7727
          %v7729 = vpop.f32.mrf.mxu0
          %v7730 = vpop.f32.mrf.mxu0
          %v7731 = vadd.f32 0.0, %v7730
          %v7732 = vpop.f32.mrf.mxu0
          %7733 = vmatprep.mubr.bf16.mxu0 %v7299
          %7734 = vmatmul.mubr.bf16.gmra.mxu0 %v7298
          %v7735 = vpop.f32.mrf.mxu0
          %v7736 = vadd.f32 0.0, %v7735
          %v7737 = vpop.f32.mrf.mxu0
          %v7738 = vpop.f32.mrf.mxu0
          %v7739 = vadd.f32 0.0, %v7738
          %v7740 = vpop.f32.mrf.mxu0
          %7741 = vmatprep.mubr.bf16.mxu0 %v7304
          %7742 = vmatmul.mubr.bf16.gmra.mxu0 %v7303
          %v7743 = vpop.f32.mrf.mxu0
          %v7744 = vadd.f32 0.0, %v7743
          %v7745 = vpop.f32.mrf.mxu0
          %v7746 = vpop.f32.mrf.mxu0
          %v7747 = vadd.f32 0.0, %v7746
          %v7748 = vpop.f32.mrf.mxu0
          %7749 = vmatprep.mubr.bf16.mxu0 %v7309
          %7750 = vmatmul.mubr.bf16.gmra.mxu0 %v7308
          %v7751 = vpop.f32.mrf.mxu0
          %v7752 = vadd.f32 0.0, %v7751
          %v7753 = vpop.f32.mrf.mxu0
          %v7754 = vpop.f32.mrf.mxu0
          %v7755 = vadd.f32 0.0, %v7754
          %v7756 = vpop.f32.mrf.mxu0
          %7757 = vmatprep.mubr.bf16.mxu0 %v7314
          %7758 = vmatmul.mubr.bf16.gmra.mxu0 %v7313
          %v7759 = vpop.f32.mrf.mxu0
          %v7760 = vadd.f32 0.0, %v7759
          %v7761 = vpop.f32.mrf.mxu0
          %v7762 = vpop.f32.mrf.mxu0
          %v7763 = vadd.f32 0.0, %v7762
          %v7764 = vpop.f32.mrf.mxu0
          %7765 = vmatprep.mubr.bf16.mxu0 %v7319
          %7766 = vmatmul.mubr.bf16.gmra.mxu0 %v7318
          %v7767 = vpop.f32.mrf.mxu0
          %v7768 = vadd.f32 0.0, %v7767
          %v7769 = vpop.f32.mrf.mxu0
          %v7770 = vpop.f32.mrf.mxu0
          %v7771 = vadd.f32 0.0, %v7770
          %v7772 = vpop.f32.mrf.mxu0
          %7773 = vmatprep.mubr.bf16.mxu0 %v7324
          %7774 = vmatmul.mubr.bf16.gmra.mxu0 %v7323
          %v7775 = vpop.f32.mrf.mxu0
          %v7776 = vadd.f32 0.0, %v7775
          %v7777 = vpop.f32.mrf.mxu0
          %v7778 = vpop.f32.mrf.mxu0
          %v7779 = vadd.f32 0.0, %v7778
          %v7780 = vpop.f32.mrf.mxu0
          %7781 = vmatprep.mubr.bf16.mxu0 %v7329
          %7782 = vmatmul.mubr.bf16.gmra.mxu0 %v7328
          %v7783 = vpop.f32.mrf.mxu0
          %v7784 = vadd.f32 0.0, %v7783
          %v7785 = vpop.f32.mrf.mxu0
          %v7786 = vpop.f32.mrf.mxu0
          %v7787 = vadd.f32 0.0, %v7786
          %v7788 = vpop.f32.mrf.mxu0
          %7789 = vmatprep.mubr.bf16.mxu0 %v7334
          %7790 = vmatmul.mubr.bf16.gmra.mxu0 %v7333
          %v7791 = vpop.f32.mrf.mxu0
          %v7792 = vadd.f32 0.0, %v7791
          %v7793 = vpop.f32.mrf.mxu0
          %v7794 = vpop.f32.mrf.mxu0
          %v7795 = vadd.f32 0.0, %v7794
          %v7796 = vpop.f32.mrf.mxu0
          %7797 = vmatprep.mubr.bf16.mxu0 %v7339
          %7798 = vmatmul.mubr.bf16.gmra.mxu0 %v7338
          %v7799 = vpop.f32.mrf.mxu0
          %v7800 = vadd.f32 0.0, %v7799
          %v7801 = vpop.f32.mrf.mxu0
          %v7802 = vpop.f32.mrf.mxu0
          %v7803 = vadd.f32 0.0, %v7802
          %v7804 = vpop.f32.mrf.mxu0
          %7805 = vmatprep.mubr.bf16.mxu0 %v7344
          %7806 = vmatmul.mubr.bf16.gmra.mxu0 %v7343
          %v7807 = vpop.f32.mrf.mxu0
          %v7808 = vadd.f32 0.0, %v7807
          %v7809 = vpop.f32.mrf.mxu0
          %v7810 = vpop.f32.mrf.mxu0
          %v7811 = vadd.f32 0.0, %v7810
          %v7812 = vpop.f32.mrf.mxu0
          %7813 = vmatprep.mubr.bf16.mxu0 %v7349
          %7814 = vmatmul.mubr.bf16.gmra.mxu0 %v7348
          %v7815 = vpop.f32.mrf.mxu0
          %v7816 = vadd.f32 0.0, %v7815
          %v7817 = vpop.f32.mrf.mxu0
          %v7818 = vpop.f32.mrf.mxu0
          %v7819 = vadd.f32 0.0, %v7818
          %v7820 = vpop.f32.mrf.mxu0
          %7821 = vmatprep.mubr.bf16.mxu0 %v7354
          %7822 = vmatmul.mubr.bf16.gmra.mxu0 %v7353
          %v7823 = vpop.f32.mrf.mxu0
          %v7824 = vadd.f32 0.0, %v7823
          %v7825 = vpop.f32.mrf.mxu0
          %v7826 = vpop.f32.mrf.mxu0
          %v7827 = vadd.f32 0.0, %v7826
          %v7828 = vpop.f32.mrf.mxu0
          %7829 = vmatprep.mubr.bf16.mxu0 %v7359
          %7830 = vmatmul.mubr.bf16.gmra.mxu0 %v7358
          %v7831 = vpop.f32.mrf.mxu0
          %v7832 = vadd.f32 0.0, %v7831
          %v7833 = vpop.f32.mrf.mxu0
          %v7834 = vpop.f32.mrf.mxu0
          %v7835 = vadd.f32 0.0, %v7834
          %v7836 = vpop.f32.mrf.mxu0
          %7837 = vmatprep.mubr.bf16.mxu0 %v7364
          %7838 = vmatmul.mubr.bf16.gmra.mxu0 %v7363
          %v7839 = vpop.f32.mrf.mxu0
          %v7840 = vadd.f32 0.0, %v7839
          %v7841 = vpop.f32.mrf.mxu0
          %v7842 = vpop.f32.mrf.mxu0
          %v7843 = vadd.f32 0.0, %v7842
          %v7844 = vpop.f32.mrf.mxu0
          %7845 = vmatprep.mubr.bf16.mxu0 %v7369
          %7846 = vmatmul.mubr.bf16.gmra.mxu0 %v7368
          %v7847 = vpop.f32.mrf.mxu0
          %v7848 = vadd.f32 0.0, %v7847
          %v7849 = vpop.f32.mrf.mxu0
          %v7850 = vpop.f32.mrf.mxu0
          %v7851 = vadd.f32 0.0, %v7850
          %v7852 = vpop.f32.mrf.mxu0
          %7853 = vdwg.mxu0
          %7854 = vmatprep.subr.bf16.mxu0 0
          %7855 = vmatpush1.bf16.msra.mxu0 %v7636
          %7856 = vmatprep.subr.bf16.mxu0 0
          %7857 = vmatpush1.bf16.msra.mxu0 %v7635
          %7858 = vmatprep.subr.bf16.mxu0 0
          %7859 = vmatpush1.bf16.msra.mxu0 %v7634
          %7860 = vmatprep.subr.bf16.mxu0 0
          %7861 = vmatpush1.bf16.msra.mxu0 %v7633
          %7862 = vmatprep.subr.bf16.mxu0 0
          %7863 = vmatpush1.bf16.msra.mxu0 %v7632
          %7864 = vmatprep.subr.bf16.mxu0 0
          %7865 = vmatpush1.bf16.msra.mxu0 %v7631
          %7866 = vmatprep.subr.bf16.mxu0 0
          %7867 = vmatpush1.bf16.msra.mxu0 %v7630
          %7868 = vmatprep.subr.bf16.mxu0 0
          %7869 = vmatpush1.bf16.msra.mxu0 %v7629
          %7870 = vmatprep.subr.bf16.mxu0 0
          %7871 = vmatpush2.bf16.msra.mxu0 %v7644
          %7872 = vmatprep.subr.bf16.mxu0 0
          %7873 = vmatpush2.bf16.msra.mxu0 %v7643
          %7874 = vmatprep.subr.bf16.mxu0 0
          %7875 = vmatpush2.bf16.msra.mxu0 %v7642
          %7876 = vmatprep.subr.bf16.mxu0 0
          %7877 = vmatpush2.bf16.msra.mxu0 %v7641
          %7878 = vmatprep.subr.bf16.mxu0 0
          %7879 = vmatpush2.bf16.msra.mxu0 %v7640
          %7880 = vmatprep.subr.bf16.mxu0 0
          %7881 = vmatpush2.bf16.msra.mxu0 %v7639
          %7882 = vmatprep.subr.bf16.mxu0 0
          %7883 = vmatpush2.bf16.msra.mxu0 %v7638
          %7884 = vmatprep.subr.bf16.mxu0 0
          %7885 = vmatpush2.bf16.msra.mxu0 %v7637
          %7886 = vmatprep.mubr.bf16.mxu0 %v7296
          %7887 = vmatmul.mubr.bf16.gmra.mxu0 %v7295
          %v7888 = vpop.f32.mrf.mxu0
          %v7889 = vadd.f32 %v7728, %v7888
          %v7890 = vpop.f32.mrf.mxu0
          %v7891 = vpop.f32.mrf.mxu0
          %v7892 = vadd.f32 %v7731, %v7891
          %v7893 = vpop.f32.mrf.mxu0
          %7894 = vmatprep.mubr.bf16.mxu0 %v7301
          %7895 = vmatmul.mubr.bf16.gmra.mxu0 %v7300
          %v7896 = vpop.f32.mrf.mxu0
          %v7897 = vadd.f32 %v7736, %v7896
          %v7898 = vpop.f32.mrf.mxu0
          %v7899 = vpop.f32.mrf.mxu0
          %v7900 = vadd.f32 %v7739, %v7899
          %v7901 = vpop.f32.mrf.mxu0
          %7902 = vmatprep.mubr.bf16.mxu0 %v7306
          %7903 = vmatmul.mubr.bf16.gmra.mxu0 %v7305
          %v7904 = vpop.f32.mrf.mxu0
          %v7905 = vadd.f32 %v7744, %v7904
          %v7906 = vpop.f32.mrf.mxu0
          %v7907 = vpop.f32.mrf.mxu0
          %v7908 = vadd.f32 %v7747, %v7907
          %v7909 = vpop.f32.mrf.mxu0
          %7910 = vmatprep.mubr.bf16.mxu0 %v7311
          %7911 = vmatmul.mubr.bf16.gmra.mxu0 %v7310
          %v7912 = vpop.f32.mrf.mxu0
          %v7913 = vadd.f32 %v7752, %v7912
          %v7914 = vpop.f32.mrf.mxu0
          %v7915 = vpop.f32.mrf.mxu0
          %v7916 = vadd.f32 %v7755, %v7915
          %v7917 = vpop.f32.mrf.mxu0
          %7918 = vmatprep.mubr.bf16.mxu0 %v7316
          %7919 = vmatmul.mubr.bf16.gmra.mxu0 %v7315
          %v7920 = vpop.f32.mrf.mxu0
          %v7921 = vadd.f32 %v7760, %v7920
          %v7922 = vpop.f32.mrf.mxu0
          %v7923 = vpop.f32.mrf.mxu0
          %v7924 = vadd.f32 %v7763, %v7923
          %v7925 = vpop.f32.mrf.mxu0
          %7926 = vmatprep.mubr.bf16.mxu0 %v7321
          %7927 = vmatmul.mubr.bf16.gmra.mxu0 %v7320
          %v7928 = vpop.f32.mrf.mxu0
          %v7929 = vadd.f32 %v7768, %v7928
          %v7930 = vpop.f32.mrf.mxu0
          %v7931 = vpop.f32.mrf.mxu0
          %v7932 = vadd.f32 %v7771, %v7931
          %v7933 = vpop.f32.mrf.mxu0
          %7934 = vmatprep.mubr.bf16.mxu0 %v7326
          %7935 = vmatmul.mubr.bf16.gmra.mxu0 %v7325
          %v7936 = vpop.f32.mrf.mxu0
          %v7937 = vadd.f32 %v7776, %v7936
          %v7938 = vpop.f32.mrf.mxu0
          %v7939 = vpop.f32.mrf.mxu0
          %v7940 = vadd.f32 %v7779, %v7939
          %v7941 = vpop.f32.mrf.mxu0
          %7942 = vmatprep.mubr.bf16.mxu0 %v7331
          %7943 = vmatmul.mubr.bf16.gmra.mxu0 %v7330
          %v7944 = vpop.f32.mrf.mxu0
          %v7945 = vadd.f32 %v7784, %v7944
          %v7946 = vpop.f32.mrf.mxu0
          %v7947 = vpop.f32.mrf.mxu0
          %v7948 = vadd.f32 %v7787, %v7947
          %v7949 = vpop.f32.mrf.mxu0
          %7950 = vmatprep.mubr.bf16.mxu0 %v7336
          %7951 = vmatmul.mubr.bf16.gmra.mxu0 %v7335
          %v7952 = vpop.f32.mrf.mxu0
          %v7953 = vadd.f32 %v7792, %v7952
          %v7954 = vpop.f32.mrf.mxu0
          %v7955 = vpop.f32.mrf.mxu0
          %v7956 = vadd.f32 %v7795, %v7955
          %v7957 = vpop.f32.mrf.mxu0
          %7958 = vmatprep.mubr.bf16.mxu0 %v7341
          %7959 = vmatmul.mubr.bf16.gmra.mxu0 %v7340
          %v7960 = vpop.f32.mrf.mxu0
          %v7961 = vadd.f32 %v7800, %v7960
          %v7962 = vpop.f32.mrf.mxu0
          %v7963 = vpop.f32.mrf.mxu0
          %v7964 = vadd.f32 %v7803, %v7963
          %v7965 = vpop.f32.mrf.mxu0
          %7966 = vmatprep.mubr.bf16.mxu0 %v7346
          %7967 = vmatmul.mubr.bf16.gmra.mxu0 %v7345
          %v7968 = vpop.f32.mrf.mxu0
          %v7969 = vadd.f32 %v7808, %v7968
          %v7970 = vpop.f32.mrf.mxu0
          %v7971 = vpop.f32.mrf.mxu0
          %v7972 = vadd.f32 %v7811, %v7971
          %v7973 = vpop.f32.mrf.mxu0
          %7974 = vmatprep.mubr.bf16.mxu0 %v7351
          %7975 = vmatmul.mubr.bf16.gmra.mxu0 %v7350
          %v7976 = vpop.f32.mrf.mxu0
          %v7977 = vadd.f32 %v7816, %v7976
          %v7978 = vpop.f32.mrf.mxu0
          %v7979 = vpop.f32.mrf.mxu0
          %v7980 = vadd.f32 %v7819, %v7979
          %v7981 = vpop.f32.mrf.mxu0
          %7982 = vmatprep.mubr.bf16.mxu0 %v7356
          %7983 = vmatmul.mubr.bf16.gmra.mxu0 %v7355
          %v7984 = vpop.f32.mrf.mxu0
          %v7985 = vadd.f32 %v7824, %v7984
          %v7986 = vpop.f32.mrf.mxu0
          %v7987 = vpop.f32.mrf.mxu0
          %v7988 = vadd.f32 %v7827, %v7987
          %v7989 = vpop.f32.mrf.mxu0
          %7990 = vmatprep.mubr.bf16.mxu0 %v7361
          %7991 = vmatmul.mubr.bf16.gmra.mxu0 %v7360
          %v7992 = vpop.f32.mrf.mxu0
          %v7993 = vadd.f32 %v7832, %v7992
          %v7994 = vpop.f32.mrf.mxu0
          %v7995 = vpop.f32.mrf.mxu0
          %v7996 = vadd.f32 %v7835, %v7995
          %v7997 = vpop.f32.mrf.mxu0
          %7998 = vmatprep.mubr.bf16.mxu0 %v7366
          %7999 = vmatmul.mubr.bf16.gmra.mxu0 %v7365
          %v8000 = vpop.f32.mrf.mxu0
          %v8001 = vadd.f32 %v7840, %v8000
          %v8002 = vpop.f32.mrf.mxu0
          %v8003 = vpop.f32.mrf.mxu0
          %v8004 = vadd.f32 %v7843, %v8003
          %v8005 = vpop.f32.mrf.mxu0
          %8006 = vmatprep.mubr.bf16.mxu0 %v7371
          %8007 = vmatmul.mubr.bf16.gmra.mxu0 %v7370
          %v8008 = vpop.f32.mrf.mxu0
          %v8009 = vadd.f32 %v7848, %v8008
          %v8010 = vpop.f32.mrf.mxu0
          %v8011 = vpop.f32.mrf.mxu0
          %v8012 = vadd.f32 %v7851, %v8011
          %v8013 = vpop.f32.mrf.mxu0
          %8014 = vdwg.mxu0
          %8015 = vmatprep.subr.bf16.mxu0 0
          %8016 = vmatpush1.bf16.msra.mxu0 %v7652
          %8017 = vmatprep.subr.bf16.mxu0 0
          %8018 = vmatpush1.bf16.msra.mxu0 %v7651
          %8019 = vmatprep.subr.bf16.mxu0 0
          %8020 = vmatpush1.bf16.msra.mxu0 %v7650
          %8021 = vmatprep.subr.bf16.mxu0 0
          %8022 = vmatpush1.bf16.msra.mxu0 %v7649
          %8023 = vmatprep.subr.bf16.mxu0 0
          %8024 = vmatpush1.bf16.msra.mxu0 %v7648
          %8025 = vmatprep.subr.bf16.mxu0 0
          %8026 = vmatpush1.bf16.msra.mxu0 %v7647
          %8027 = vmatprep.subr.bf16.mxu0 0
          %8028 = vmatpush1.bf16.msra.mxu0 %v7646
          %8029 = vmatprep.subr.bf16.mxu0 0
          %8030 = vmatpush1.bf16.msra.mxu0 %v7645
          %8031 = vmatprep.subr.bf16.mxu0 0
          %8032 = vmatpush2.bf16.msra.mxu0 0
          %8033 = vmatprep.subr.bf16.mxu0 0
          %8034 = vmatpush2.bf16.msra.mxu0 0
          %8035 = vmatprep.subr.bf16.mxu0 0
          %8036 = vmatpush2.bf16.msra.mxu0 0
          %8037 = vmatprep.subr.bf16.mxu0 0
          %8038 = vmatpush2.bf16.msra.mxu0 0
          %8039 = vmatprep.subr.bf16.mxu0 0
          %8040 = vmatpush2.bf16.msra.mxu0 0
          %8041 = vmatprep.subr.bf16.mxu0 0
          %8042 = vmatpush2.bf16.msra.mxu0 0
          %8043 = vmatprep.subr.bf16.mxu0 0
          %8044 = vmatpush2.bf16.msra.mxu0 0
          %8045 = vmatprep.subr.bf16.mxu0 0
          %8046 = vmatpush2.bf16.msra.mxu0 0
          %8047 = vmatprep.mubr.bf16.mxu0 0
          %8048 = vmatmul.mubr.bf16.gmra.mxu0 %v7297
          %v8049 = vpop.f32.mrf.mxu0
          %v8050 = vadd.f32 %v7889, %v8049
          %v8051 = vpop.f32.mrf.mxu0
          %v8052 = vpop.f32.mrf.mxu0
          %v8053 = vadd.f32 %v7892, %v8052
          %v8054 = vpop.f32.mrf.mxu0
          %8055 = vmatprep.mubr.bf16.mxu0 0
          %8056 = vmatmul.mubr.bf16.gmra.mxu0 %v7302
          %v8057 = vpop.f32.mrf.mxu0
          %v8058 = vadd.f32 %v7897, %v8057
          %v8059 = vpop.f32.mrf.mxu0
          %v8060 = vpop.f32.mrf.mxu0
          %v8061 = vadd.f32 %v7900, %v8060
          %v8062 = vpop.f32.mrf.mxu0
          %8063 = vmatprep.mubr.bf16.mxu0 0
          %8064 = vmatmul.mubr.bf16.gmra.mxu0 %v7307
          %v8065 = vpop.f32.mrf.mxu0
          %v8066 = vadd.f32 %v7905, %v8065
          %v8067 = vpop.f32.mrf.mxu0
          %v8068 = vpop.f32.mrf.mxu0
          %v8069 = vadd.f32 %v7908, %v8068
          %v8070 = vpop.f32.mrf.mxu0
          %8071 = vmatprep.mubr.bf16.mxu0 0
          %8072 = vmatmul.mubr.bf16.gmra.mxu0 %v7312
          %v8073 = vpop.f32.mrf.mxu0
          %v8074 = vadd.f32 %v7913, %v8073
          %v8075 = vpop.f32.mrf.mxu0
          %v8076 = vpop.f32.mrf.mxu0
          %v8077 = vadd.f32 %v7916, %v8076
          %v8078 = vpop.f32.mrf.mxu0
          %8079 = vmatprep.mubr.bf16.mxu0 0
          %8080 = vmatmul.mubr.bf16.gmra.mxu0 %v7317
          %v8081 = vpop.f32.mrf.mxu0
          %v8082 = vadd.f32 %v7921, %v8081
          %v8083 = vpop.f32.mrf.mxu0
          %v8084 = vpop.f32.mrf.mxu0
          %v8085 = vadd.f32 %v7924, %v8084
          %v8086 = vpop.f32.mrf.mxu0
          %8087 = vmatprep.mubr.bf16.mxu0 0
          %8088 = vmatmul.mubr.bf16.gmra.mxu0 %v7322
          %v8089 = vpop.f32.mrf.mxu0
          %v8090 = vadd.f32 %v7929, %v8089
          %v8091 = vpop.f32.mrf.mxu0
          %v8092 = vpop.f32.mrf.mxu0
          %v8093 = vadd.f32 %v7932, %v8092
          %v8094 = vpop.f32.mrf.mxu0
          %8095 = vmatprep.mubr.bf16.mxu0 0
          %8096 = vmatmul.mubr.bf16.gmra.mxu0 %v7327
          %v8097 = vpop.f32.mrf.mxu0
          %v8098 = vadd.f32 %v7937, %v8097
          %v8099 = vpop.f32.mrf.mxu0
          %v8100 = vpop.f32.mrf.mxu0
          %v8101 = vadd.f32 %v7940, %v8100
          %v8102 = vpop.f32.mrf.mxu0
          %8103 = vmatprep.mubr.bf16.mxu0 0
          %8104 = vmatmul.mubr.bf16.gmra.mxu0 %v7332
          %v8105 = vpop.f32.mrf.mxu0
          %v8106 = vadd.f32 %v7945, %v8105
          %v8107 = vpop.f32.mrf.mxu0
          %v8108 = vpop.f32.mrf.mxu0
          %v8109 = vadd.f32 %v7948, %v8108
          %v8110 = vpop.f32.mrf.mxu0
          %8111 = vmatprep.mubr.bf16.mxu0 0
          %8112 = vmatmul.mubr.bf16.gmra.mxu0 %v7337
          %v8113 = vpop.f32.mrf.mxu0
          %v8114 = vadd.f32 %v7953, %v8113
          %v8115 = vpop.f32.mrf.mxu0
          %v8116 = vpop.f32.mrf.mxu0
          %v8117 = vadd.f32 %v7956, %v8116
          %v8118 = vpop.f32.mrf.mxu0
          %8119 = vmatprep.mubr.bf16.mxu0 0
          %8120 = vmatmul.mubr.bf16.gmra.mxu0 %v7342
          %v8121 = vpop.f32.mrf.mxu0
          %v8122 = vadd.f32 %v7961, %v8121
          %v8123 = vpop.f32.mrf.mxu0
          %v8124 = vpop.f32.mrf.mxu0
          %v8125 = vadd.f32 %v7964, %v8124
          %v8126 = vpop.f32.mrf.mxu0
          %8127 = vmatprep.mubr.bf16.mxu0 0
          %8128 = vmatmul.mubr.bf16.gmra.mxu0 %v7347
          %v8129 = vpop.f32.mrf.mxu0
          %v8130 = vadd.f32 %v7969, %v8129
          %v8131 = vpop.f32.mrf.mxu0
          %v8132 = vpop.f32.mrf.mxu0
          %v8133 = vadd.f32 %v7972, %v8132
          %v8134 = vpop.f32.mrf.mxu0
          %8135 = vmatprep.mubr.bf16.mxu0 0
          %8136 = vmatmul.mubr.bf16.gmra.mxu0 %v7352
          %v8137 = vpop.f32.mrf.mxu0
          %v8138 = vadd.f32 %v7977, %v8137
          %v8139 = vpop.f32.mrf.mxu0
          %v8140 = vpop.f32.mrf.mxu0
          %v8141 = vadd.f32 %v7980, %v8140
          %v8142 = vpop.f32.mrf.mxu0
          %8143 = vmatprep.mubr.bf16.mxu0 0
          %8144 = vmatmul.mubr.bf16.gmra.mxu0 %v7357
          %v8145 = vpop.f32.mrf.mxu0
          %v8146 = vadd.f32 %v7985, %v8145
          %v8147 = vpop.f32.mrf.mxu0
          %v8148 = vpop.f32.mrf.mxu0
          %v8149 = vadd.f32 %v7988, %v8148
          %v8150 = vpop.f32.mrf.mxu0
          %8151 = vmatprep.mubr.bf16.mxu0 0
          %8152 = vmatmul.mubr.bf16.gmra.mxu0 %v7362
          %v8153 = vpop.f32.mrf.mxu0
          %v8154 = vadd.f32 %v7993, %v8153
          %v8155 = vpop.f32.mrf.mxu0
          %v8156 = vpop.f32.mrf.mxu0
          %v8157 = vadd.f32 %v7996, %v8156
          %v8158 = vpop.f32.mrf.mxu0
          %8159 = vmatprep.mubr.bf16.mxu0 0
          %8160 = vmatmul.mubr.bf16.gmra.mxu0 %v7367
          %v8161 = vpop.f32.mrf.mxu0
          %v8162 = vadd.f32 %v8001, %v8161
          %v8163 = vpop.f32.mrf.mxu0
          %v8164 = vpop.f32.mrf.mxu0
          %v8165 = vadd.f32 %v8004, %v8164
          %v8166 = vpop.f32.mrf.mxu0
          %8167 = vmatprep.mubr.bf16.mxu0 0
          %8168 = vmatmul.mubr.bf16.gmra.mxu0 %v7372
          %v8169 = vpop.f32.mrf.mxu0
          %v8170 = vadd.f32 %v8009, %v8169
          %v8171 = vpop.f32.mrf.mxu0
          %v8172 = vpop.f32.mrf.mxu0
          %v8173 = vadd.f32 %v8012, %v8172
          %v8174 = vpop.f32.mrf.mxu0
          %8175 = vdwg.mxu0
          %v8176 = vadd.f32 %v6734, %v8050
          %v8177 = vadd.f32 %v6737, %v8053
          %v8178 = vadd.f32 %v6742, %v8058
          %v8179 = vadd.f32 %v6745, %v8061
          %v8180 = vadd.f32 %v6750, %v8066
          %v8181 = vadd.f32 %v6753, %v8069
          %v8182 = vadd.f32 %v6758, %v8074
          %v8183 = vadd.f32 %v6761, %v8077
          %v8184 = vadd.f32 %v6766, %v8082
          %v8185 = vadd.f32 %v6769, %v8085
          %v8186 = vadd.f32 %v6774, %v8090
          %v8187 = vadd.f32 %v6777, %v8093
          %v8188 = vadd.f32 %v6782, %v8098
          %v8189 = vadd.f32 %v6785, %v8101
          %v8190 = vadd.f32 %v6790, %v8106
          %v8191 = vadd.f32 %v6793, %v8109
          %v8192 = vadd.f32 %v6798, %v8114
          %v8193 = vadd.f32 %v6801, %v8117
          %v8194 = vadd.f32 %v6806, %v8122
          %v8195 = vadd.f32 %v6809, %v8125
          %v8196 = vadd.f32 %v6814, %v8130
          %v8197 = vadd.f32 %v6817, %v8133
          %v8198 = vadd.f32 %v6822, %v8138
          %v8199 = vadd.f32 %v6825, %v8141
          %v8200 = vadd.f32 %v6830, %v8146
          %v8201 = vadd.f32 %v6833, %v8149
          %v8202 = vadd.f32 %v6838, %v8154
          %v8203 = vadd.f32 %v6841, %v8157
          %v8204 = vadd.f32 %v6846, %v8162
          %v8205 = vadd.f32 %v6849, %v8165
          %v8206 = vadd.f32 %v6854, %v8170
          %v8207 = vadd.f32 %v6857, %v8173
          %s8208 = scalar_lea.vmem [#allocation2], 120
          %v8209 = vld [vmem:[%s8208] sm:$0xff]
          %v8210 = vld [vmem:[%s8208 + $0x8] sm:$0xff]
          %v8211 = vld [vmem:[%s8208 + $0x10] sm:$0xf]
          %v8212 = vld [vmem:[%s8208 + $0x14] sm:$0xff]
          %v8213 = vld [vmem:[%s8208 + $0x1c] sm:$0xff]
          %v8214 = vld [vmem:[%s8208 + $0x24] sm:$0xf]
          %v8215 = vld [vmem:[%s8208 + $0x28] sm:$0xff]
          %v8216 = vld [vmem:[%s8208 + $0x30] sm:$0xff]
          %v8217 = vld [vmem:[%s8208 + $0x38] sm:$0xf]
          %v8218 = vld [vmem:[%s8208 + $0x3c] sm:$0xff]
          %v8219 = vld [vmem:[%s8208 + $0x44] sm:$0xff]
          %v8220 = vld [vmem:[%s8208 + $0x4c] sm:$0xf]
          %v8221 = vld [vmem:[%s8208 + $0x50] sm:$0xff]
          %v8222 = vld [vmem:[%s8208 + $0x58] sm:$0xff]
          %v8223 = vld [vmem:[%s8208 + $0x60] sm:$0xf]
          %v8224 = vld [vmem:[%s8208 + $0x64] sm:$0xff]
          %v8225 = vld [vmem:[%s8208 + $0x6c] sm:$0xff]
          %v8226 = vld [vmem:[%s8208 + $0x74] sm:$0xf]
          %v8227 = vld [vmem:[%s8208 + $0x78] sm:$0xff]
          %v8228 = vld [vmem:[%s8208 + $0x80] sm:$0xff]
          %v8229 = vld [vmem:[%s8208 + $0x88] sm:$0xf]
          %v8230 = vld [vmem:[%s8208 + $0x8c] sm:$0xff]
          %v8231 = vld [vmem:[%s8208 + $0x94] sm:$0xff]
          %v8232 = vld [vmem:[%s8208 + $0x9c] sm:$0xf]
          %v8233 = vld [vmem:[%s8208 + $0xa0] sm:$0xff]
          %v8234 = vld [vmem:[%s8208 + $0xa8] sm:$0xff]
          %v8235 = vld [vmem:[%s8208 + $0xb0] sm:$0xf]
          %v8236 = vld [vmem:[%s8208 + $0xb4] sm:$0xff]
          %v8237 = vld [vmem:[%s8208 + $0xbc] sm:$0xff]
          %v8238 = vld [vmem:[%s8208 + $0xc4] sm:$0xf]
          %v8239 = vld [vmem:[%s8208 + $0xc8] sm:$0xff]
          %v8240 = vld [vmem:[%s8208 + $0xd0] sm:$0xff]
          %v8241 = vld [vmem:[%s8208 + $0xd8] sm:$0xf]
          %v8242 = vld [vmem:[%s8208 + $0xdc] sm:$0xff]
          %v8243 = vld [vmem:[%s8208 + $0xe4] sm:$0xff]
          %v8244 = vld [vmem:[%s8208 + $0xec] sm:$0xf]
          %v8245 = vld [vmem:[%s8208 + $0xf0] sm:$0xff]
          %v8246 = vld [vmem:[%s8208 + $0xf8] sm:$0xff]
          %v8247 = vld [vmem:[%s8208 + $0x100] sm:$0xf]
          %v8248 = vld [vmem:[%s8208 + $0x104] sm:$0xff]
          %v8249 = vld [vmem:[%s8208 + $0x10c] sm:$0xff]
          %v8250 = vld [vmem:[%s8208 + $0x114] sm:$0xf]
          %v8251 = vld [vmem:[%s8208 + $0x118] sm:$0xff]
          %v8252 = vld [vmem:[%s8208 + $0x120] sm:$0xff]
          %v8253 = vld [vmem:[%s8208 + $0x128] sm:$0xf]
          %v8254 = vld [vmem:[%s8208 + $0x12c] sm:$0xff]
          %v8255 = vld [vmem:[%s8208 + $0x134] sm:$0xff]
          %v8256 = vld [vmem:[%s8208 + $0x13c] sm:$0xf]
          %v8257 = vld [vmem:[%s8208 + $0x140] sm:$0xff]
          %v8258 = vld [vmem:[%s8208 + $0x148] sm:$0xff]
          %v8259 = vld [vmem:[%s8208 + $0x150] sm:$0xf]
          %v8260 = vld [vmem:[%s8208 + $0x154] sm:$0xff]
          %v8261 = vld [vmem:[%s8208 + $0x15c] sm:$0xff]
          %v8262 = vld [vmem:[%s8208 + $0x164] sm:$0xf]
          %v8263 = vld [vmem:[%s8208 + $0x168] sm:$0xff]
          %v8264 = vld [vmem:[%s8208 + $0x170] sm:$0xff]
          %v8265 = vld [vmem:[%s8208 + $0x178] sm:$0xf]
          %v8266 = vld [vmem:[%s8208 + $0x17c] sm:$0xff]
          %v8267 = vld [vmem:[%s8208 + $0x184] sm:$0xff]
          %v8268 = vld [vmem:[%s8208 + $0x18c] sm:$0xf]
          %v8269 = vld [vmem:[%s8208 + $0x190] sm:$0xff]
          %v8270 = vld [vmem:[%s8208 + $0x198] sm:$0xff]
          %v8271 = vld [vmem:[%s8208 + $0x1a0] sm:$0xf]
          %v8272 = vld [vmem:[%s8208 + $0x1a4] sm:$0xff]
          %v8273 = vld [vmem:[%s8208 + $0x1ac] sm:$0xff]
          %v8274 = vld [vmem:[%s8208 + $0x1b4] sm:$0xf]
          %v8275 = vld [vmem:[%s8208 + $0x1b8] sm:$0xff]
          %v8276 = vld [vmem:[%s8208 + $0x1c0] sm:$0xff]
          %v8277 = vld [vmem:[%s8208 + $0x1c8] sm:$0xf]
          %v8278 = vld [vmem:[%s8208 + $0x1cc] sm:$0xff]
          %v8279 = vld [vmem:[%s8208 + $0x1d4] sm:$0xff]
          %v8280 = vld [vmem:[%s8208 + $0x1dc] sm:$0xf]
          %v8281 = vld [vmem:[%s8208 + $0x1e0] sm:$0xff]
          %v8282 = vld [vmem:[%s8208 + $0x1e8] sm:$0xff]
          %v8283 = vld [vmem:[%s8208 + $0x1f0] sm:$0xf]
          %v8284 = vld [vmem:[%s8208 + $0x1f4] sm:$0xff]
          %v8285 = vld [vmem:[%s8208 + $0x1fc] sm:$0xff]
          %v8286 = vld [vmem:[%s8208 + $0x204] sm:$0xf]
          %v8287 = vld [vmem:[%s8208 + $0x208] sm:$0xff]
          %v8288 = vld [vmem:[%s8208 + $0x210] sm:$0xff]
          %v8289 = vld [vmem:[%s8208 + $0x218] sm:$0xf]
          %v8290 = vld [vmem:[%s8208 + $0x21c] sm:$0xff]
          %v8291 = vld [vmem:[%s8208 + $0x224] sm:$0xff]
          %v8292 = vld [vmem:[%s8208 + $0x22c] sm:$0xf]
          %v8293 = vld [vmem:[%s8208 + $0x230] sm:$0xff]
          %v8294 = vld [vmem:[%s8208 + $0x238] sm:$0xff]
          %v8295 = vld [vmem:[%s8208 + $0x240] sm:$0xf]
          %v8296 = vld [vmem:[%s8208 + $0x244] sm:$0xff]
          %v8297 = vld [vmem:[%s8208 + $0x24c] sm:$0xff]
          %v8298 = vld [vmem:[%s8208 + $0x254] sm:$0xf]
          %v8299 = vld [vmem:[%s8208 + $0x258] sm:$0xff]
          %v8300 = vld [vmem:[%s8208 + $0x260] sm:$0xff]
          %v8301 = vld [vmem:[%s8208 + $0x268] sm:$0xf]
          %v8302 = vld [vmem:[%s8208 + $0x26c] sm:$0xff]
          %v8303 = vld [vmem:[%s8208 + $0x274] sm:$0xff]
          %v8304 = vld [vmem:[%s8208 + $0x27c] sm:$0xf]
          %s8305 = scalar_lea.vmem %s3, 960
          %v8306 = vld [vmem:[%s8305] sm:$0xf]
          %v8307 = vld [vmem:[%s8305 + $0x4] sm:$0xf]
          %v8308 = vld [vmem:[%s8305 + $0x8] sm:$0xf]
          %v8309 = vld [vmem:[%s8305 + $0xc] sm:$0xf]
          %v8310 = vld [vmem:[%s8305 + $0x10] sm:$0xf]
          %v8311 = vld [vmem:[%s8305 + $0x14] sm:$0xf]
          %v8312 = vld [vmem:[%s8305 + $0x18] sm:$0xf]
          %v8313 = vld [vmem:[%s8305 + $0x1c] sm:$0xf]
          %v8314 = vld [vmem:[%s8305 + $0x20] sm:$0xf]
          %v8315 = vld [vmem:[%s8305 + $0x24] sm:$0xf]
          %v8316 = vld [vmem:[%s8305 + $0x28] sm:$0xf]
          %v8317 = vld [vmem:[%s8305 + $0x2c] sm:$0xf]
          %v8318 = vld [vmem:[%s8305 + $0x30] sm:$0xf]
          %v8319 = vld [vmem:[%s8305 + $0x34] sm:$0xf]
          %v8320 = vld [vmem:[%s8305 + $0x38] sm:$0xf]
          %v8321 = vld [vmem:[%s8305 + $0x3c] sm:$0xf]
          %v8322 = vld [vmem:[%s8305 + $0x40] sm:$0xf]
          %v8323 = vld [vmem:[%s8305 + $0x44] sm:$0xf]
          %v8324 = vld [vmem:[%s8305 + $0x48] sm:$0xf]
          %v8325 = vld [vmem:[%s8305 + $0x4c] sm:$0xf]
          %v8326 = vld [vmem:[%s8305 + $0x50] sm:$0xf]
          %v8327 = vld [vmem:[%s8305 + $0x54] sm:$0xf]
          %v8328 = vld [vmem:[%s8305 + $0x58] sm:$0xf]
          %v8329 = vld [vmem:[%s8305 + $0x5c] sm:$0xf]
          %v8330 = vld [vmem:[%s8305 + $0x60] sm:$0xf]
          %v8331 = vld [vmem:[%s8305 + $0x64] sm:$0xf]
          %v8332 = vld [vmem:[%s8305 + $0x68] sm:$0xf]
          %v8333 = vld [vmem:[%s8305 + $0x6c] sm:$0xf]
          %v8334 = vld [vmem:[%s8305 + $0x70] sm:$0xf]
          %v8335 = vld [vmem:[%s8305 + $0x74] sm:$0xf]
          %v8336 = vld [vmem:[%s8305 + $0x78] sm:$0xf]
          %v8337 = vld [vmem:[%s8305 + $0x7c] sm:$0xf]
          %v8338 = vld [vmem:[%s8305 + $0x80] sm:$0xf]
          %v8339 = vld [vmem:[%s8305 + $0x84] sm:$0xf]
          %v8340 = vld [vmem:[%s8305 + $0x88] sm:$0xf]
          %v8341 = vld [vmem:[%s8305 + $0x8c] sm:$0xf]
          %v8342 = vld [vmem:[%s8305 + $0x90] sm:$0xf]
          %v8343 = vld [vmem:[%s8305 + $0x94] sm:$0xf]
          %v8344 = vld [vmem:[%s8305 + $0x98] sm:$0xf]
          %v8345 = vld [vmem:[%s8305 + $0x9c] sm:$0xf]
          %v8346 = vld [vmem:[%s8305 + $0xa0] sm:$0xf]
          %v8347 = vld [vmem:[%s8305 + $0xa4] sm:$0xf]
          %v8348 = vld [vmem:[%s8305 + $0xa8] sm:$0xf]
          %v8349 = vld [vmem:[%s8305 + $0xac] sm:$0xf]
          %v8350 = vld [vmem:[%s8305 + $0xb0] sm:$0xf]
          %v8351 = vld [vmem:[%s8305 + $0xb4] sm:$0xf]
          %v8352 = vld [vmem:[%s8305 + $0xb8] sm:$0xf]
          %v8353 = vld [vmem:[%s8305 + $0xbc] sm:$0xf]
          %v8354 = vld [vmem:[%s8305 + $0xc0] sm:$0xf]
          %v8355 = vld [vmem:[%s8305 + $0xc4] sm:$0xf]
          %v8356 = vld [vmem:[%s8305 + $0xc8] sm:$0xf]
          %v8357 = vld [vmem:[%s8305 + $0xcc] sm:$0xf]
          %v8358 = vld [vmem:[%s8305 + $0xd0] sm:$0xf]
          %v8359 = vld [vmem:[%s8305 + $0xd4] sm:$0xf]
          %v8360 = vld [vmem:[%s8305 + $0xd8] sm:$0xf]
          %v8361 = vld [vmem:[%s8305 + $0xdc] sm:$0xf]
          %v8362 = vld [vmem:[%s8305 + $0xe0] sm:$0xf]
          %v8363 = vld [vmem:[%s8305 + $0xe4] sm:$0xf]
          %v8364 = vld [vmem:[%s8305 + $0xe8] sm:$0xf]
          %v8365 = vld [vmem:[%s8305 + $0xec] sm:$0xf]
          %v8366 = vld [vmem:[%s8305 + $0xf0] sm:$0xf]
          %v8367 = vld [vmem:[%s8305 + $0xf4] sm:$0xf]
          %v8368 = vld [vmem:[%s8305 + $0xf8] sm:$0xf]
          %v8369 = vld [vmem:[%s8305 + $0xfc] sm:$0xf]
          %v8370 = vld [vmem:[%s8305 + $0x100] sm:$0xf]
          %v8371 = vld [vmem:[%s8305 + $0x104] sm:$0xf]
          %v8372 = vld [vmem:[%s8305 + $0x108] sm:$0xf]
          %v8373 = vld [vmem:[%s8305 + $0x10c] sm:$0xf]
          %v8374 = vld [vmem:[%s8305 + $0x110] sm:$0xf]
          %v8375 = vld [vmem:[%s8305 + $0x114] sm:$0xf]
          %v8376 = vld [vmem:[%s8305 + $0x118] sm:$0xf]
          %v8377 = vld [vmem:[%s8305 + $0x11c] sm:$0xf]
          %v8378 = vld [vmem:[%s8305 + $0x120] sm:$0xf]
          %v8379 = vld [vmem:[%s8305 + $0x124] sm:$0xf]
          %v8380 = vld [vmem:[%s8305 + $0x128] sm:$0xf]
          %v8381 = vld [vmem:[%s8305 + $0x12c] sm:$0xf]
          %v8382 = vld [vmem:[%s8305 + $0x130] sm:$0xf]
          %v8383 = vld [vmem:[%s8305 + $0x134] sm:$0xf]
          %v8384 = vld [vmem:[%s8305 + $0x138] sm:$0xf]
          %v8385 = vld [vmem:[%s8305 + $0x13c] sm:$0xf]
          %v8482 = vunpack.c.l.b16 %v8209
          %v8483 = vunpack.c.h.b16 %v8209
          %v8484 = vunpack.c.l.b16 %v8210
          %v8485 = vunpack.c.h.b16 %v8210
          %v8486 = vunpack.c.l.b16 %v8211
          %v8487 = vunpack.c.l.b16 %v8212
          %v8488 = vunpack.c.h.b16 %v8212
          %v8489 = vunpack.c.l.b16 %v8213
          %v8490 = vunpack.c.h.b16 %v8213
          %v8491 = vunpack.c.l.b16 %v8214
          %v8492 = vunpack.c.l.b16 %v8215
          %v8493 = vunpack.c.h.b16 %v8215
          %v8494 = vunpack.c.l.b16 %v8216
          %v8495 = vunpack.c.h.b16 %v8216
          %v8496 = vunpack.c.l.b16 %v8217
          %v8497 = vunpack.c.l.b16 %v8218
          %v8498 = vunpack.c.h.b16 %v8218
          %v8499 = vunpack.c.l.b16 %v8219
          %v8500 = vunpack.c.h.b16 %v8219
          %v8501 = vunpack.c.l.b16 %v8220
          %v8502 = vunpack.c.l.b16 %v8221
          %v8503 = vunpack.c.h.b16 %v8221
          %v8504 = vunpack.c.l.b16 %v8222
          %v8505 = vunpack.c.h.b16 %v8222
          %v8506 = vunpack.c.l.b16 %v8223
          %v8507 = vunpack.c.l.b16 %v8224
          %v8508 = vunpack.c.h.b16 %v8224
          %v8509 = vunpack.c.l.b16 %v8225
          %v8510 = vunpack.c.h.b16 %v8225
          %v8511 = vunpack.c.l.b16 %v8226
          %v8512 = vunpack.c.l.b16 %v8227
          %v8513 = vunpack.c.h.b16 %v8227
          %v8514 = vunpack.c.l.b16 %v8228
          %v8515 = vunpack.c.h.b16 %v8228
          %v8516 = vunpack.c.l.b16 %v8229
          %v8517 = vunpack.c.l.b16 %v8230
          %v8518 = vunpack.c.h.b16 %v8230
          %v8519 = vunpack.c.l.b16 %v8231
          %v8520 = vunpack.c.h.b16 %v8231
          %v8521 = vunpack.c.l.b16 %v8232
          %v8522 = vunpack.c.l.b16 %v8233
          %v8523 = vunpack.c.h.b16 %v8233
          %v8524 = vunpack.c.l.b16 %v8234
          %v8525 = vunpack.c.h.b16 %v8234
          %v8526 = vunpack.c.l.b16 %v8235
          %v8527 = vunpack.c.l.b16 %v8236
          %v8528 = vunpack.c.h.b16 %v8236
          %v8529 = vunpack.c.l.b16 %v8237
          %v8530 = vunpack.c.h.b16 %v8237
          %v8531 = vunpack.c.l.b16 %v8238
          %v8532 = vunpack.c.l.b16 %v8239
          %v8533 = vunpack.c.h.b16 %v8239
          %v8534 = vunpack.c.l.b16 %v8240
          %v8535 = vunpack.c.h.b16 %v8240
          %v8536 = vunpack.c.l.b16 %v8241
          %v8537 = vunpack.c.l.b16 %v8242
          %v8538 = vunpack.c.h.b16 %v8242
          %v8539 = vunpack.c.l.b16 %v8243
          %v8540 = vunpack.c.h.b16 %v8243
          %v8541 = vunpack.c.l.b16 %v8244
          %v8542 = vunpack.c.l.b16 %v8245
          %v8543 = vunpack.c.h.b16 %v8245
          %v8544 = vunpack.c.l.b16 %v8246
          %v8545 = vunpack.c.h.b16 %v8246
          %v8546 = vunpack.c.l.b16 %v8247
          %v8547 = vunpack.c.l.b16 %v8248
          %v8548 = vunpack.c.h.b16 %v8248
          %v8549 = vunpack.c.l.b16 %v8249
          %v8550 = vunpack.c.h.b16 %v8249
          %v8551 = vunpack.c.l.b16 %v8250
          %v8552 = vunpack.c.l.b16 %v8251
          %v8553 = vunpack.c.h.b16 %v8251
          %v8554 = vunpack.c.l.b16 %v8252
          %v8555 = vunpack.c.h.b16 %v8252
          %v8556 = vunpack.c.l.b16 %v8253
          %v8557 = vunpack.c.l.b16 %v8254
          %v8558 = vunpack.c.h.b16 %v8254
          %v8559 = vunpack.c.l.b16 %v8255
          %v8560 = vunpack.c.h.b16 %v8255
          %v8561 = vunpack.c.l.b16 %v8256
          %v8562 = vunpack.c.l.b16 %v8257
          %v8563 = vunpack.c.h.b16 %v8257
          %v8564 = vunpack.c.l.b16 %v8258
          %v8565 = vunpack.c.h.b16 %v8258
          %v8566 = vunpack.c.l.b16 %v8259
          %v8567 = vunpack.c.l.b16 %v8260
          %v8568 = vunpack.c.h.b16 %v8260
          %v8569 = vunpack.c.l.b16 %v8261
          %v8570 = vunpack.c.h.b16 %v8261
          %v8571 = vunpack.c.l.b16 %v8262
          %v8572 = vunpack.c.l.b16 %v8263
          %v8573 = vunpack.c.h.b16 %v8263
          %v8574 = vunpack.c.l.b16 %v8264
          %v8575 = vunpack.c.h.b16 %v8264
          %v8576 = vunpack.c.l.b16 %v8265
          %v8577 = vunpack.c.l.b16 %v8266
          %v8578 = vunpack.c.h.b16 %v8266
          %v8579 = vunpack.c.l.b16 %v8267
          %v8580 = vunpack.c.h.b16 %v8267
          %v8581 = vunpack.c.l.b16 %v8268
          %v8582 = vunpack.c.l.b16 %v8269
          %v8583 = vunpack.c.h.b16 %v8269
          %v8584 = vunpack.c.l.b16 %v8270
          %v8585 = vunpack.c.h.b16 %v8270
          %v8586 = vunpack.c.l.b16 %v8271
          %v8587 = vunpack.c.l.b16 %v8272
          %v8588 = vunpack.c.h.b16 %v8272
          %v8589 = vunpack.c.l.b16 %v8273
          %v8590 = vunpack.c.h.b16 %v8273
          %v8591 = vunpack.c.l.b16 %v8274
          %v8592 = vunpack.c.l.b16 %v8275
          %v8593 = vunpack.c.h.b16 %v8275
          %v8594 = vunpack.c.l.b16 %v8276
          %v8595 = vunpack.c.h.b16 %v8276
          %v8596 = vunpack.c.l.b16 %v8277
          %v8597 = vunpack.c.l.b16 %v8278
          %v8598 = vunpack.c.h.b16 %v8278
          %v8599 = vunpack.c.l.b16 %v8279
          %v8600 = vunpack.c.h.b16 %v8279
          %v8601 = vunpack.c.l.b16 %v8280
          %v8602 = vunpack.c.l.b16 %v8281
          %v8603 = vunpack.c.h.b16 %v8281
          %v8604 = vunpack.c.l.b16 %v8282
          %v8605 = vunpack.c.h.b16 %v8282
          %v8606 = vunpack.c.l.b16 %v8283
          %v8607 = vunpack.c.l.b16 %v8284
          %v8608 = vunpack.c.h.b16 %v8284
          %v8609 = vunpack.c.l.b16 %v8285
          %v8610 = vunpack.c.h.b16 %v8285
          %v8611 = vunpack.c.l.b16 %v8286
          %v8612 = vunpack.c.l.b16 %v8287
          %v8613 = vunpack.c.h.b16 %v8287
          %v8614 = vunpack.c.l.b16 %v8288
          %v8615 = vunpack.c.h.b16 %v8288
          %v8616 = vunpack.c.l.b16 %v8289
          %v8617 = vunpack.c.l.b16 %v8290
          %v8618 = vunpack.c.h.b16 %v8290
          %v8619 = vunpack.c.l.b16 %v8291
          %v8620 = vunpack.c.h.b16 %v8291
          %v8621 = vunpack.c.l.b16 %v8292
          %v8622 = vunpack.c.l.b16 %v8293
          %v8623 = vunpack.c.h.b16 %v8293
          %v8624 = vunpack.c.l.b16 %v8294
          %v8625 = vunpack.c.h.b16 %v8294
          %v8626 = vunpack.c.l.b16 %v8295
          %v8627 = vunpack.c.l.b16 %v8296
          %v8628 = vunpack.c.h.b16 %v8296
          %v8629 = vunpack.c.l.b16 %v8297
          %v8630 = vunpack.c.h.b16 %v8297
          %v8631 = vunpack.c.l.b16 %v8298
          %v8632 = vunpack.c.l.b16 %v8299
          %v8633 = vunpack.c.h.b16 %v8299
          %v8634 = vunpack.c.l.b16 %v8300
          %v8635 = vunpack.c.h.b16 %v8300
          %v8636 = vunpack.c.l.b16 %v8301
          %v8637 = vunpack.c.l.b16 %v8302
          %v8638 = vunpack.c.h.b16 %v8302
          %v8639 = vunpack.c.l.b16 %v8303
          %v8640 = vunpack.c.h.b16 %v8303
          %v8641 = vunpack.c.l.b16 %v8304
          %v8642 = vpack.c.b16 %v8487, %v8482
          %v8643 = vpack.c.b16 %v8488, %v8483
          %v8644 = vpack.c.b16 %v8489, %v8484
          %v8645 = vpack.c.b16 %v8490, %v8485
          %v8646 = vpack.c.b16 %v8491, %v8486
          %v8647 = vpack.c.b16 %v8497, %v8492
          %v8648 = vpack.c.b16 %v8498, %v8493
          %v8649 = vpack.c.b16 %v8499, %v8494
          %v8650 = vpack.c.b16 %v8500, %v8495
          %v8651 = vpack.c.b16 %v8501, %v8496
          %v8652 = vpack.c.b16 %v8507, %v8502
          %v8653 = vpack.c.b16 %v8508, %v8503
          %v8654 = vpack.c.b16 %v8509, %v8504
          %v8655 = vpack.c.b16 %v8510, %v8505
          %v8656 = vpack.c.b16 %v8511, %v8506
          %v8657 = vpack.c.b16 %v8517, %v8512
          %v8658 = vpack.c.b16 %v8518, %v8513
          %v8659 = vpack.c.b16 %v8519, %v8514
          %v8660 = vpack.c.b16 %v8520, %v8515
          %v8661 = vpack.c.b16 %v8521, %v8516
          %v8662 = vpack.c.b16 %v8527, %v8522
          %v8663 = vpack.c.b16 %v8528, %v8523
          %v8664 = vpack.c.b16 %v8529, %v8524
          %v8665 = vpack.c.b16 %v8530, %v8525
          %v8666 = vpack.c.b16 %v8531, %v8526
          %v8667 = vpack.c.b16 %v8537, %v8532
          %v8668 = vpack.c.b16 %v8538, %v8533
          %v8669 = vpack.c.b16 %v8539, %v8534
          %v8670 = vpack.c.b16 %v8540, %v8535
          %v8671 = vpack.c.b16 %v8541, %v8536
          %v8672 = vpack.c.b16 %v8547, %v8542
          %v8673 = vpack.c.b16 %v8548, %v8543
          %v8674 = vpack.c.b16 %v8549, %v8544
          %v8675 = vpack.c.b16 %v8550, %v8545
          %v8676 = vpack.c.b16 %v8551, %v8546
          %v8677 = vpack.c.b16 %v8557, %v8552
          %v8678 = vpack.c.b16 %v8558, %v8553
          %v8679 = vpack.c.b16 %v8559, %v8554
          %v8680 = vpack.c.b16 %v8560, %v8555
          %v8681 = vpack.c.b16 %v8561, %v8556
          %v8682 = vpack.c.b16 %v8567, %v8562
          %v8683 = vpack.c.b16 %v8568, %v8563
          %v8684 = vpack.c.b16 %v8569, %v8564
          %v8685 = vpack.c.b16 %v8570, %v8565
          %v8686 = vpack.c.b16 %v8571, %v8566
          %v8687 = vpack.c.b16 %v8577, %v8572
          %v8688 = vpack.c.b16 %v8578, %v8573
          %v8689 = vpack.c.b16 %v8579, %v8574
          %v8690 = vpack.c.b16 %v8580, %v8575
          %v8691 = vpack.c.b16 %v8581, %v8576
          %v8692 = vpack.c.b16 %v8587, %v8582
          %v8693 = vpack.c.b16 %v8588, %v8583
          %v8694 = vpack.c.b16 %v8589, %v8584
          %v8695 = vpack.c.b16 %v8590, %v8585
          %v8696 = vpack.c.b16 %v8591, %v8586
          %v8697 = vpack.c.b16 %v8597, %v8592
          %v8698 = vpack.c.b16 %v8598, %v8593
          %v8699 = vpack.c.b16 %v8599, %v8594
          %v8700 = vpack.c.b16 %v8600, %v8595
          %v8701 = vpack.c.b16 %v8601, %v8596
          %v8702 = vpack.c.b16 %v8607, %v8602
          %v8703 = vpack.c.b16 %v8608, %v8603
          %v8704 = vpack.c.b16 %v8609, %v8604
          %v8705 = vpack.c.b16 %v8610, %v8605
          %v8706 = vpack.c.b16 %v8611, %v8606
          %v8707 = vpack.c.b16 %v8617, %v8612
          %v8708 = vpack.c.b16 %v8618, %v8613
          %v8709 = vpack.c.b16 %v8619, %v8614
          %v8710 = vpack.c.b16 %v8620, %v8615
          %v8711 = vpack.c.b16 %v8621, %v8616
          %v8712 = vpack.c.b16 %v8627, %v8622
          %v8713 = vpack.c.b16 %v8628, %v8623
          %v8714 = vpack.c.b16 %v8629, %v8624
          %v8715 = vpack.c.b16 %v8630, %v8625
          %v8716 = vpack.c.b16 %v8631, %v8626
          %v8717 = vpack.c.b16 %v8637, %v8632
          %v8718 = vpack.c.b16 %v8638, %v8633
          %v8719 = vpack.c.b16 %v8639, %v8634
          %v8720 = vpack.c.b16 %v8640, %v8635
          %v8721 = vpack.c.b16 %v8641, %v8636
          %v8882 = vunpack.c.l.b16 %v8306
          %v8883 = vunpack.c.l.b16 %v8307
          %v8884 = vunpack.c.l.b16 %v8308
          %v8885 = vunpack.c.l.b16 %v8309
          %v8886 = vunpack.c.l.b16 %v8310
          %v8887 = vunpack.c.l.b16 %v8311
          %v8888 = vunpack.c.l.b16 %v8312
          %v8889 = vunpack.c.l.b16 %v8313
          %v8890 = vunpack.c.l.b16 %v8314
          %v8891 = vunpack.c.l.b16 %v8315
          %v8892 = vunpack.c.l.b16 %v8316
          %v8893 = vunpack.c.l.b16 %v8317
          %v8894 = vunpack.c.l.b16 %v8318
          %v8895 = vunpack.c.l.b16 %v8319
          %v8896 = vunpack.c.l.b16 %v8320
          %v8897 = vunpack.c.l.b16 %v8321
          %v8898 = vunpack.c.l.b16 %v8322
          %v8899 = vunpack.c.l.b16 %v8323
          %v8900 = vunpack.c.l.b16 %v8324
          %v8901 = vunpack.c.l.b16 %v8325
          %v8902 = vunpack.c.l.b16 %v8326
          %v8903 = vunpack.c.l.b16 %v8327
          %v8904 = vunpack.c.l.b16 %v8328
          %v8905 = vunpack.c.l.b16 %v8329
          %v8906 = vunpack.c.l.b16 %v8330
          %v8907 = vunpack.c.l.b16 %v8331
          %v8908 = vunpack.c.l.b16 %v8332
          %v8909 = vunpack.c.l.b16 %v8333
          %v8910 = vunpack.c.l.b16 %v8334
          %v8911 = vunpack.c.l.b16 %v8335
          %v8912 = vunpack.c.l.b16 %v8336
          %v8913 = vunpack.c.l.b16 %v8337
          %v8914 = vunpack.c.l.b16 %v8338
          %v8915 = vunpack.c.l.b16 %v8339
          %v8916 = vunpack.c.l.b16 %v8340
          %v8917 = vunpack.c.l.b16 %v8341
          %v8918 = vunpack.c.l.b16 %v8342
          %v8919 = vunpack.c.l.b16 %v8343
          %v8920 = vunpack.c.l.b16 %v8344
          %v8921 = vunpack.c.l.b16 %v8345
          %v8922 = vunpack.c.l.b16 %v8346
          %v8923 = vunpack.c.l.b16 %v8347
          %v8924 = vunpack.c.l.b16 %v8348
          %v8925 = vunpack.c.l.b16 %v8349
          %v8926 = vunpack.c.l.b16 %v8350
          %v8927 = vunpack.c.l.b16 %v8351
          %v8928 = vunpack.c.l.b16 %v8352
          %v8929 = vunpack.c.l.b16 %v8353
          %v8930 = vunpack.c.l.b16 %v8354
          %v8931 = vunpack.c.l.b16 %v8355
          %v8932 = vunpack.c.l.b16 %v8356
          %v8933 = vunpack.c.l.b16 %v8357
          %v8934 = vunpack.c.l.b16 %v8358
          %v8935 = vunpack.c.l.b16 %v8359
          %v8936 = vunpack.c.l.b16 %v8360
          %v8937 = vunpack.c.l.b16 %v8361
          %v8938 = vunpack.c.l.b16 %v8362
          %v8939 = vunpack.c.l.b16 %v8363
          %v8940 = vunpack.c.l.b16 %v8364
          %v8941 = vunpack.c.l.b16 %v8365
          %v8942 = vunpack.c.l.b16 %v8366
          %v8943 = vunpack.c.l.b16 %v8367
          %v8944 = vunpack.c.l.b16 %v8368
          %v8945 = vunpack.c.l.b16 %v8369
          %v8946 = vunpack.c.l.b16 %v8370
          %v8947 = vunpack.c.l.b16 %v8371
          %v8948 = vunpack.c.l.b16 %v8372
          %v8949 = vunpack.c.l.b16 %v8373
          %v8950 = vunpack.c.l.b16 %v8374
          %v8951 = vunpack.c.l.b16 %v8375
          %v8952 = vunpack.c.l.b16 %v8376
          %v8953 = vunpack.c.l.b16 %v8377
          %v8954 = vunpack.c.l.b16 %v8378
          %v8955 = vunpack.c.l.b16 %v8379
          %v8956 = vunpack.c.l.b16 %v8380
          %v8957 = vunpack.c.l.b16 %v8381
          %v8958 = vunpack.c.l.b16 %v8382
          %v8959 = vunpack.c.l.b16 %v8383
          %v8960 = vunpack.c.l.b16 %v8384
          %v8961 = vunpack.c.l.b16 %v8385
          %v8962 = vpack.c.b16 %v8883, %v8882
          %v8963 = vpack.c.b16 %v8885, %v8884
          %v8964 = vpack.c.b16 %v8887, %v8886
          %v8965 = vpack.c.b16 %v8889, %v8888
          %v8966 = vpack.c.b16 %v8891, %v8890
          %v8967 = vpack.c.b16 %v8893, %v8892
          %v8968 = vpack.c.b16 %v8895, %v8894
          %v8969 = vpack.c.b16 %v8897, %v8896
          %v8970 = vpack.c.b16 %v8899, %v8898
          %v8971 = vpack.c.b16 %v8901, %v8900
          %v8972 = vpack.c.b16 %v8903, %v8902
          %v8973 = vpack.c.b16 %v8905, %v8904
          %v8974 = vpack.c.b16 %v8907, %v8906
          %v8975 = vpack.c.b16 %v8909, %v8908
          %v8976 = vpack.c.b16 %v8911, %v8910
          %v8977 = vpack.c.b16 %v8913, %v8912
          %v8978 = vpack.c.b16 %v8915, %v8914
          %v8979 = vpack.c.b16 %v8917, %v8916
          %v8980 = vpack.c.b16 %v8919, %v8918
          %v8981 = vpack.c.b16 %v8921, %v8920
          %v8982 = vpack.c.b16 %v8923, %v8922
          %v8983 = vpack.c.b16 %v8925, %v8924
          %v8984 = vpack.c.b16 %v8927, %v8926
          %v8985 = vpack.c.b16 %v8929, %v8928
          %v8986 = vpack.c.b16 %v8931, %v8930
          %v8987 = vpack.c.b16 %v8933, %v8932
          %v8988 = vpack.c.b16 %v8935, %v8934
          %v8989 = vpack.c.b16 %v8937, %v8936
          %v8990 = vpack.c.b16 %v8939, %v8938
          %v8991 = vpack.c.b16 %v8941, %v8940
          %v8992 = vpack.c.b16 %v8943, %v8942
          %v8993 = vpack.c.b16 %v8945, %v8944
          %v8994 = vpack.c.b16 %v8947, %v8946
          %v8995 = vpack.c.b16 %v8949, %v8948
          %v8996 = vpack.c.b16 %v8951, %v8950
          %v8997 = vpack.c.b16 %v8953, %v8952
          %v8998 = vpack.c.b16 %v8955, %v8954
          %v8999 = vpack.c.b16 %v8957, %v8956
          %v9000 = vpack.c.b16 %v8959, %v8958
          %v9001 = vpack.c.b16 %v8961, %v8960
          %9042 = vmatprep.subr.bf16.mxu0 0
          %9043 = vmatpush1.bf16.msra.mxu0 %v8969
          %9044 = vmatprep.subr.bf16.mxu0 0
          %9045 = vmatpush1.bf16.msra.mxu0 %v8968
          %9046 = vmatprep.subr.bf16.mxu0 0
          %9047 = vmatpush1.bf16.msra.mxu0 %v8967
          %9048 = vmatprep.subr.bf16.mxu0 0
          %9049 = vmatpush1.bf16.msra.mxu0 %v8966
          %9050 = vmatprep.subr.bf16.mxu0 0
          %9051 = vmatpush1.bf16.msra.mxu0 %v8965
          %9052 = vmatprep.subr.bf16.mxu0 0
          %9053 = vmatpush1.bf16.msra.mxu0 %v8964
          %9054 = vmatprep.subr.bf16.mxu0 0
          %9055 = vmatpush1.bf16.msra.mxu0 %v8963
          %9056 = vmatprep.subr.bf16.mxu0 0
          %9057 = vmatpush1.bf16.msra.mxu0 %v8962
          %9058 = vmatprep.subr.bf16.mxu0 0
          %9059 = vmatpush2.bf16.msra.mxu0 %v8977
          %9060 = vmatprep.subr.bf16.mxu0 0
          %9061 = vmatpush2.bf16.msra.mxu0 %v8976
          %9062 = vmatprep.subr.bf16.mxu0 0
          %9063 = vmatpush2.bf16.msra.mxu0 %v8975
          %9064 = vmatprep.subr.bf16.mxu0 0
          %9065 = vmatpush2.bf16.msra.mxu0 %v8974
          %9066 = vmatprep.subr.bf16.mxu0 0
          %9067 = vmatpush2.bf16.msra.mxu0 %v8973
          %9068 = vmatprep.subr.bf16.mxu0 0
          %9069 = vmatpush2.bf16.msra.mxu0 %v8972
          %9070 = vmatprep.subr.bf16.mxu0 0
          %9071 = vmatpush2.bf16.msra.mxu0 %v8971
          %9072 = vmatprep.subr.bf16.mxu0 0
          %9073 = vmatpush2.bf16.msra.mxu0 %v8970
          %9074 = vmatprep.mubr.bf16.mxu0 %v8643
          %9075 = vmatmul.mubr.bf16.gmra.mxu0 %v8642
          %v9076 = vpop.f32.mrf.mxu0
          %v9077 = vadd.f32 0.0, %v9076
          %v9078 = vpop.f32.mrf.mxu0
          %v9079 = vpop.f32.mrf.mxu0
          %v9080 = vadd.f32 0.0, %v9079
          %v9081 = vpop.f32.mrf.mxu0
          %9082 = vmatprep.mubr.bf16.mxu0 %v8648
          %9083 = vmatmul.mubr.bf16.gmra.mxu0 %v8647
          %v9084 = vpop.f32.mrf.mxu0
          %v9085 = vadd.f32 0.0, %v9084
          %v9086 = vpop.f32.mrf.mxu0
          %v9087 = vpop.f32.mrf.mxu0
          %v9088 = vadd.f32 0.0, %v9087
          %v9089 = vpop.f32.mrf.mxu0
          %9090 = vmatprep.mubr.bf16.mxu0 %v8653
          %9091 = vmatmul.mubr.bf16.gmra.mxu0 %v8652
          %v9092 = vpop.f32.mrf.mxu0
          %v9093 = vadd.f32 0.0, %v9092
          %v9094 = vpop.f32.mrf.mxu0
          %v9095 = vpop.f32.mrf.mxu0
          %v9096 = vadd.f32 0.0, %v9095
          %v9097 = vpop.f32.mrf.mxu0
          %9098 = vmatprep.mubr.bf16.mxu0 %v8658
          %9099 = vmatmul.mubr.bf16.gmra.mxu0 %v8657
          %v9100 = vpop.f32.mrf.mxu0
          %v9101 = vadd.f32 0.0, %v9100
          %v9102 = vpop.f32.mrf.mxu0
          %v9103 = vpop.f32.mrf.mxu0
          %v9104 = vadd.f32 0.0, %v9103
          %v9105 = vpop.f32.mrf.mxu0
          %9106 = vmatprep.mubr.bf16.mxu0 %v8663
          %9107 = vmatmul.mubr.bf16.gmra.mxu0 %v8662
          %v9108 = vpop.f32.mrf.mxu0
          %v9109 = vadd.f32 0.0, %v9108
          %v9110 = vpop.f32.mrf.mxu0
          %v9111 = vpop.f32.mrf.mxu0
          %v9112 = vadd.f32 0.0, %v9111
          %v9113 = vpop.f32.mrf.mxu0
          %9114 = vmatprep.mubr.bf16.mxu0 %v8668
          %9115 = vmatmul.mubr.bf16.gmra.mxu0 %v8667
          %v9116 = vpop.f32.mrf.mxu0
          %v9117 = vadd.f32 0.0, %v9116
          %v9118 = vpop.f32.mrf.mxu0
          %v9119 = vpop.f32.mrf.mxu0
          %v9120 = vadd.f32 0.0, %v9119
          %v9121 = vpop.f32.mrf.mxu0
          %9122 = vmatprep.mubr.bf16.mxu0 %v8673
          %9123 = vmatmul.mubr.bf16.gmra.mxu0 %v8672
          %v9124 = vpop.f32.mrf.mxu0
          %v9125 = vadd.f32 0.0, %v9124
          %v9126 = vpop.f32.mrf.mxu0
          %v9127 = vpop.f32.mrf.mxu0
          %v9128 = vadd.f32 0.0, %v9127
          %v9129 = vpop.f32.mrf.mxu0
          %9130 = vmatprep.mubr.bf16.mxu0 %v8678
          %9131 = vmatmul.mubr.bf16.gmra.mxu0 %v8677
          %v9132 = vpop.f32.mrf.mxu0
          %v9133 = vadd.f32 0.0, %v9132
          %v9134 = vpop.f32.mrf.mxu0
          %v9135 = vpop.f32.mrf.mxu0
          %v9136 = vadd.f32 0.0, %v9135
          %v9137 = vpop.f32.mrf.mxu0
          %9138 = vmatprep.mubr.bf16.mxu0 %v8683
          %9139 = vmatmul.mubr.bf16.gmra.mxu0 %v8682
          %v9140 = vpop.f32.mrf.mxu0
          %v9141 = vadd.f32 0.0, %v9140
          %v9142 = vpop.f32.mrf.mxu0
          %v9143 = vpop.f32.mrf.mxu0
          %v9144 = vadd.f32 0.0, %v9143
          %v9145 = vpop.f32.mrf.mxu0
          %9146 = vmatprep.mubr.bf16.mxu0 %v8688
          %9147 = vmatmul.mubr.bf16.gmra.mxu0 %v8687
          %v9148 = vpop.f32.mrf.mxu0
          %v9149 = vadd.f32 0.0, %v9148
          %v9150 = vpop.f32.mrf.mxu0
          %v9151 = vpop.f32.mrf.mxu0
          %v9152 = vadd.f32 0.0, %v9151
          %v9153 = vpop.f32.mrf.mxu0
          %9154 = vmatprep.mubr.bf16.mxu0 %v8693
          %9155 = vmatmul.mubr.bf16.gmra.mxu0 %v8692
          %v9156 = vpop.f32.mrf.mxu0
          %v9157 = vadd.f32 0.0, %v9156
          %v9158 = vpop.f32.mrf.mxu0
          %v9159 = vpop.f32.mrf.mxu0
          %v9160 = vadd.f32 0.0, %v9159
          %v9161 = vpop.f32.mrf.mxu0
          %9162 = vmatprep.mubr.bf16.mxu0 %v8698
          %9163 = vmatmul.mubr.bf16.gmra.mxu0 %v8697
          %v9164 = vpop.f32.mrf.mxu0
          %v9165 = vadd.f32 0.0, %v9164
          %v9166 = vpop.f32.mrf.mxu0
          %v9167 = vpop.f32.mrf.mxu0
          %v9168 = vadd.f32 0.0, %v9167
          %v9169 = vpop.f32.mrf.mxu0
          %9170 = vmatprep.mubr.bf16.mxu0 %v8703
          %9171 = vmatmul.mubr.bf16.gmra.mxu0 %v8702
          %v9172 = vpop.f32.mrf.mxu0
          %v9173 = vadd.f32 0.0, %v9172
          %v9174 = vpop.f32.mrf.mxu0
          %v9175 = vpop.f32.mrf.mxu0
          %v9176 = vadd.f32 0.0, %v9175
          %v9177 = vpop.f32.mrf.mxu0
          %9178 = vmatprep.mubr.bf16.mxu0 %v8708
          %9179 = vmatmul.mubr.bf16.gmra.mxu0 %v8707
          %v9180 = vpop.f32.mrf.mxu0
          %v9181 = vadd.f32 0.0, %v9180
          %v9182 = vpop.f32.mrf.mxu0
          %v9183 = vpop.f32.mrf.mxu0
          %v9184 = vadd.f32 0.0, %v9183
          %v9185 = vpop.f32.mrf.mxu0
          %9186 = vmatprep.mubr.bf16.mxu0 %v8713
          %9187 = vmatmul.mubr.bf16.gmra.mxu0 %v8712
          %v9188 = vpop.f32.mrf.mxu0
          %v9189 = vadd.f32 0.0, %v9188
          %v9190 = vpop.f32.mrf.mxu0
          %v9191 = vpop.f32.mrf.mxu0
          %v9192 = vadd.f32 0.0, %v9191
          %v9193 = vpop.f32.mrf.mxu0
          %9194 = vmatprep.mubr.bf16.mxu0 %v8718
          %9195 = vmatmul.mubr.bf16.gmra.mxu0 %v8717
          %v9196 = vpop.f32.mrf.mxu0
          %v9197 = vadd.f32 0.0, %v9196
          %v9198 = vpop.f32.mrf.mxu0
          %v9199 = vpop.f32.mrf.mxu0
          %v9200 = vadd.f32 0.0, %v9199
          %v9201 = vpop.f32.mrf.mxu0
          %9202 = vdwg.mxu0
          %9203 = vmatprep.subr.bf16.mxu0 0
          %9204 = vmatpush1.bf16.msra.mxu0 %v8985
          %9205 = vmatprep.subr.bf16.mxu0 0
          %9206 = vmatpush1.bf16.msra.mxu0 %v8984
          %9207 = vmatprep.subr.bf16.mxu0 0
          %9208 = vmatpush1.bf16.msra.mxu0 %v8983
          %9209 = vmatprep.subr.bf16.mxu0 0
          %9210 = vmatpush1.bf16.msra.mxu0 %v8982
          %9211 = vmatprep.subr.bf16.mxu0 0
          %9212 = vmatpush1.bf16.msra.mxu0 %v8981
          %9213 = vmatprep.subr.bf16.mxu0 0
          %9214 = vmatpush1.bf16.msra.mxu0 %v8980
          %9215 = vmatprep.subr.bf16.mxu0 0
          %9216 = vmatpush1.bf16.msra.mxu0 %v8979
          %9217 = vmatprep.subr.bf16.mxu0 0
          %9218 = vmatpush1.bf16.msra.mxu0 %v8978
          %9219 = vmatprep.subr.bf16.mxu0 0
          %9220 = vmatpush2.bf16.msra.mxu0 %v8993
          %9221 = vmatprep.subr.bf16.mxu0 0
          %9222 = vmatpush2.bf16.msra.mxu0 %v8992
          %9223 = vmatprep.subr.bf16.mxu0 0
          %9224 = vmatpush2.bf16.msra.mxu0 %v8991
          %9225 = vmatprep.subr.bf16.mxu0 0
          %9226 = vmatpush2.bf16.msra.mxu0 %v8990
          %9227 = vmatprep.subr.bf16.mxu0 0
          %9228 = vmatpush2.bf16.msra.mxu0 %v8989
          %9229 = vmatprep.subr.bf16.mxu0 0
          %9230 = vmatpush2.bf16.msra.mxu0 %v8988
          %9231 = vmatprep.subr.bf16.mxu0 0
          %9232 = vmatpush2.bf16.msra.mxu0 %v8987
          %9233 = vmatprep.subr.bf16.mxu0 0
          %9234 = vmatpush2.bf16.msra.mxu0 %v8986
          %9235 = vmatprep.mubr.bf16.mxu0 %v8645
          %9236 = vmatmul.mubr.bf16.gmra.mxu0 %v8644
          %v9237 = vpop.f32.mrf.mxu0
          %v9238 = vadd.f32 %v9077, %v9237
          %v9239 = vpop.f32.mrf.mxu0
          %v9240 = vpop.f32.mrf.mxu0
          %v9241 = vadd.f32 %v9080, %v9240
          %v9242 = vpop.f32.mrf.mxu0
          %9243 = vmatprep.mubr.bf16.mxu0 %v8650
          %9244 = vmatmul.mubr.bf16.gmra.mxu0 %v8649
          %v9245 = vpop.f32.mrf.mxu0
          %v9246 = vadd.f32 %v9085, %v9245
          %v9247 = vpop.f32.mrf.mxu0
          %v9248 = vpop.f32.mrf.mxu0
          %v9249 = vadd.f32 %v9088, %v9248
          %v9250 = vpop.f32.mrf.mxu0
          %9251 = vmatprep.mubr.bf16.mxu0 %v8655
          %9252 = vmatmul.mubr.bf16.gmra.mxu0 %v8654
          %v9253 = vpop.f32.mrf.mxu0
          %v9254 = vadd.f32 %v9093, %v9253
          %v9255 = vpop.f32.mrf.mxu0
          %v9256 = vpop.f32.mrf.mxu0
          %v9257 = vadd.f32 %v9096, %v9256
          %v9258 = vpop.f32.mrf.mxu0
          %9259 = vmatprep.mubr.bf16.mxu0 %v8660
          %9260 = vmatmul.mubr.bf16.gmra.mxu0 %v8659
          %v9261 = vpop.f32.mrf.mxu0
          %v9262 = vadd.f32 %v9101, %v9261
          %v9263 = vpop.f32.mrf.mxu0
          %v9264 = vpop.f32.mrf.mxu0
          %v9265 = vadd.f32 %v9104, %v9264
          %v9266 = vpop.f32.mrf.mxu0
          %9267 = vmatprep.mubr.bf16.mxu0 %v8665
          %9268 = vmatmul.mubr.bf16.gmra.mxu0 %v8664
          %v9269 = vpop.f32.mrf.mxu0
          %v9270 = vadd.f32 %v9109, %v9269
          %v9271 = vpop.f32.mrf.mxu0
          %v9272 = vpop.f32.mrf.mxu0
          %v9273 = vadd.f32 %v9112, %v9272
          %v9274 = vpop.f32.mrf.mxu0
          %9275 = vmatprep.mubr.bf16.mxu0 %v8670
          %9276 = vmatmul.mubr.bf16.gmra.mxu0 %v8669
          %v9277 = vpop.f32.mrf.mxu0
          %v9278 = vadd.f32 %v9117, %v9277
          %v9279 = vpop.f32.mrf.mxu0
          %v9280 = vpop.f32.mrf.mxu0
          %v9281 = vadd.f32 %v9120, %v9280
          %v9282 = vpop.f32.mrf.mxu0
          %9283 = vmatprep.mubr.bf16.mxu0 %v8675
          %9284 = vmatmul.mubr.bf16.gmra.mxu0 %v8674
          %v9285 = vpop.f32.mrf.mxu0
          %v9286 = vadd.f32 %v9125, %v9285
          %v9287 = vpop.f32.mrf.mxu0
          %v9288 = vpop.f32.mrf.mxu0
          %v9289 = vadd.f32 %v9128, %v9288
          %v9290 = vpop.f32.mrf.mxu0
          %9291 = vmatprep.mubr.bf16.mxu0 %v8680
          %9292 = vmatmul.mubr.bf16.gmra.mxu0 %v8679
          %v9293 = vpop.f32.mrf.mxu0
          %v9294 = vadd.f32 %v9133, %v9293
          %v9295 = vpop.f32.mrf.mxu0
          %v9296 = vpop.f32.mrf.mxu0
          %v9297 = vadd.f32 %v9136, %v9296
          %v9298 = vpop.f32.mrf.mxu0
          %9299 = vmatprep.mubr.bf16.mxu0 %v8685
          %9300 = vmatmul.mubr.bf16.gmra.mxu0 %v8684
          %v9301 = vpop.f32.mrf.mxu0
          %v9302 = vadd.f32 %v9141, %v9301
          %v9303 = vpop.f32.mrf.mxu0
          %v9304 = vpop.f32.mrf.mxu0
          %v9305 = vadd.f32 %v9144, %v9304
          %v9306 = vpop.f32.mrf.mxu0
          %9307 = vmatprep.mubr.bf16.mxu0 %v8690
          %9308 = vmatmul.mubr.bf16.gmra.mxu0 %v8689
          %v9309 = vpop.f32.mrf.mxu0
          %v9310 = vadd.f32 %v9149, %v9309
          %v9311 = vpop.f32.mrf.mxu0
          %v9312 = vpop.f32.mrf.mxu0
          %v9313 = vadd.f32 %v9152, %v9312
          %v9314 = vpop.f32.mrf.mxu0
          %9315 = vmatprep.mubr.bf16.mxu0 %v8695
          %9316 = vmatmul.mubr.bf16.gmra.mxu0 %v8694
          %v9317 = vpop.f32.mrf.mxu0
          %v9318 = vadd.f32 %v9157, %v9317
          %v9319 = vpop.f32.mrf.mxu0
          %v9320 = vpop.f32.mrf.mxu0
          %v9321 = vadd.f32 %v9160, %v9320
          %v9322 = vpop.f32.mrf.mxu0
          %9323 = vmatprep.mubr.bf16.mxu0 %v8700
          %9324 = vmatmul.mubr.bf16.gmra.mxu0 %v8699
          %v9325 = vpop.f32.mrf.mxu0
          %v9326 = vadd.f32 %v9165, %v9325
          %v9327 = vpop.f32.mrf.mxu0
          %v9328 = vpop.f32.mrf.mxu0
          %v9329 = vadd.f32 %v9168, %v9328
          %v9330 = vpop.f32.mrf.mxu0
          %9331 = vmatprep.mubr.bf16.mxu0 %v8705
          %9332 = vmatmul.mubr.bf16.gmra.mxu0 %v8704
          %v9333 = vpop.f32.mrf.mxu0
          %v9334 = vadd.f32 %v9173, %v9333
          %v9335 = vpop.f32.mrf.mxu0
          %v9336 = vpop.f32.mrf.mxu0
          %v9337 = vadd.f32 %v9176, %v9336
          %v9338 = vpop.f32.mrf.mxu0
          %9339 = vmatprep.mubr.bf16.mxu0 %v8710
          %9340 = vmatmul.mubr.bf16.gmra.mxu0 %v8709
          %v9341 = vpop.f32.mrf.mxu0
          %v9342 = vadd.f32 %v9181, %v9341
          %v9343 = vpop.f32.mrf.mxu0
          %v9344 = vpop.f32.mrf.mxu0
          %v9345 = vadd.f32 %v9184, %v9344
          %v9346 = vpop.f32.mrf.mxu0
          %9347 = vmatprep.mubr.bf16.mxu0 %v8715
          %9348 = vmatmul.mubr.bf16.gmra.mxu0 %v8714
          %v9349 = vpop.f32.mrf.mxu0
          %v9350 = vadd.f32 %v9189, %v9349
          %v9351 = vpop.f32.mrf.mxu0
          %v9352 = vpop.f32.mrf.mxu0
          %v9353 = vadd.f32 %v9192, %v9352
          %v9354 = vpop.f32.mrf.mxu0
          %9355 = vmatprep.mubr.bf16.mxu0 %v8720
          %9356 = vmatmul.mubr.bf16.gmra.mxu0 %v8719
          %v9357 = vpop.f32.mrf.mxu0
          %v9358 = vadd.f32 %v9197, %v9357
          %v9359 = vpop.f32.mrf.mxu0
          %v9360 = vpop.f32.mrf.mxu0
          %v9361 = vadd.f32 %v9200, %v9360
          %v9362 = vpop.f32.mrf.mxu0
          %9363 = vdwg.mxu0
          %9364 = vmatprep.subr.bf16.mxu0 0
          %9365 = vmatpush1.bf16.msra.mxu0 %v9001
          %9366 = vmatprep.subr.bf16.mxu0 0
          %9367 = vmatpush1.bf16.msra.mxu0 %v9000
          %9368 = vmatprep.subr.bf16.mxu0 0
          %9369 = vmatpush1.bf16.msra.mxu0 %v8999
          %9370 = vmatprep.subr.bf16.mxu0 0
          %9371 = vmatpush1.bf16.msra.mxu0 %v8998
          %9372 = vmatprep.subr.bf16.mxu0 0
          %9373 = vmatpush1.bf16.msra.mxu0 %v8997
          %9374 = vmatprep.subr.bf16.mxu0 0
          %9375 = vmatpush1.bf16.msra.mxu0 %v8996
          %9376 = vmatprep.subr.bf16.mxu0 0
          %9377 = vmatpush1.bf16.msra.mxu0 %v8995
          %9378 = vmatprep.subr.bf16.mxu0 0
          %9379 = vmatpush1.bf16.msra.mxu0 %v8994
          %9380 = vmatprep.subr.bf16.mxu0 0
          %9381 = vmatpush2.bf16.msra.mxu0 0
          %9382 = vmatprep.subr.bf16.mxu0 0
          %9383 = vmatpush2.bf16.msra.mxu0 0
          %9384 = vmatprep.subr.bf16.mxu0 0
          %9385 = vmatpush2.bf16.msra.mxu0 0
          %9386 = vmatprep.subr.bf16.mxu0 0
          %9387 = vmatpush2.bf16.msra.mxu0 0
          %9388 = vmatprep.subr.bf16.mxu0 0
          %9389 = vmatpush2.bf16.msra.mxu0 0
          %9390 = vmatprep.subr.bf16.mxu0 0
          %9391 = vmatpush2.bf16.msra.mxu0 0
          %9392 = vmatprep.subr.bf16.mxu0 0
          %9393 = vmatpush2.bf16.msra.mxu0 0
          %9394 = vmatprep.subr.bf16.mxu0 0
          %9395 = vmatpush2.bf16.msra.mxu0 0
          %9396 = vmatprep.mubr.bf16.mxu0 0
          %9397 = vmatmul.mubr.bf16.gmra.mxu0 %v8646
          %v9398 = vpop.f32.mrf.mxu0
          %v9399 = vadd.f32 %v9238, %v9398
          %v9400 = vpop.f32.mrf.mxu0
          %v9401 = vpop.f32.mrf.mxu0
          %v9402 = vadd.f32 %v9241, %v9401
          %v9403 = vpop.f32.mrf.mxu0
          %9404 = vmatprep.mubr.bf16.mxu0 0
          %9405 = vmatmul.mubr.bf16.gmra.mxu0 %v8651
          %v9406 = vpop.f32.mrf.mxu0
          %v9407 = vadd.f32 %v9246, %v9406
          %v9408 = vpop.f32.mrf.mxu0
          %v9409 = vpop.f32.mrf.mxu0
          %v9410 = vadd.f32 %v9249, %v9409
          %v9411 = vpop.f32.mrf.mxu0
          %9412 = vmatprep.mubr.bf16.mxu0 0
          %9413 = vmatmul.mubr.bf16.gmra.mxu0 %v8656
          %v9414 = vpop.f32.mrf.mxu0
          %v9415 = vadd.f32 %v9254, %v9414
          %v9416 = vpop.f32.mrf.mxu0
          %v9417 = vpop.f32.mrf.mxu0
          %v9418 = vadd.f32 %v9257, %v9417
          %v9419 = vpop.f32.mrf.mxu0
          %9420 = vmatprep.mubr.bf16.mxu0 0
          %9421 = vmatmul.mubr.bf16.gmra.mxu0 %v8661
          %v9422 = vpop.f32.mrf.mxu0
          %v9423 = vadd.f32 %v9262, %v9422
          %v9424 = vpop.f32.mrf.mxu0
          %v9425 = vpop.f32.mrf.mxu0
          %v9426 = vadd.f32 %v9265, %v9425
          %v9427 = vpop.f32.mrf.mxu0
          %9428 = vmatprep.mubr.bf16.mxu0 0
          %9429 = vmatmul.mubr.bf16.gmra.mxu0 %v8666
          %v9430 = vpop.f32.mrf.mxu0
          %v9431 = vadd.f32 %v9270, %v9430
          %v9432 = vpop.f32.mrf.mxu0
          %v9433 = vpop.f32.mrf.mxu0
          %v9434 = vadd.f32 %v9273, %v9433
          %v9435 = vpop.f32.mrf.mxu0
          %9436 = vmatprep.mubr.bf16.mxu0 0
          %9437 = vmatmul.mubr.bf16.gmra.mxu0 %v8671
          %v9438 = vpop.f32.mrf.mxu0
          %v9439 = vadd.f32 %v9278, %v9438
          %v9440 = vpop.f32.mrf.mxu0
          %v9441 = vpop.f32.mrf.mxu0
          %v9442 = vadd.f32 %v9281, %v9441
          %v9443 = vpop.f32.mrf.mxu0
          %9444 = vmatprep.mubr.bf16.mxu0 0
          %9445 = vmatmul.mubr.bf16.gmra.mxu0 %v8676
          %v9446 = vpop.f32.mrf.mxu0
          %v9447 = vadd.f32 %v9286, %v9446
          %v9448 = vpop.f32.mrf.mxu0
          %v9449 = vpop.f32.mrf.mxu0
          %v9450 = vadd.f32 %v9289, %v9449
          %v9451 = vpop.f32.mrf.mxu0
          %9452 = vmatprep.mubr.bf16.mxu0 0
          %9453 = vmatmul.mubr.bf16.gmra.mxu0 %v8681
          %v9454 = vpop.f32.mrf.mxu0
          %v9455 = vadd.f32 %v9294, %v9454
          %v9456 = vpop.f32.mrf.mxu0
          %v9457 = vpop.f32.mrf.mxu0
          %v9458 = vadd.f32 %v9297, %v9457
          %v9459 = vpop.f32.mrf.mxu0
          %9460 = vmatprep.mubr.bf16.mxu0 0
          %9461 = vmatmul.mubr.bf16.gmra.mxu0 %v8686
          %v9462 = vpop.f32.mrf.mxu0
          %v9463 = vadd.f32 %v9302, %v9462
          %v9464 = vpop.f32.mrf.mxu0
          %v9465 = vpop.f32.mrf.mxu0
          %v9466 = vadd.f32 %v9305, %v9465
          %v9467 = vpop.f32.mrf.mxu0
          %9468 = vmatprep.mubr.bf16.mxu0 0
          %9469 = vmatmul.mubr.bf16.gmra.mxu0 %v8691
          %v9470 = vpop.f32.mrf.mxu0
          %v9471 = vadd.f32 %v9310, %v9470
          %v9472 = vpop.f32.mrf.mxu0
          %v9473 = vpop.f32.mrf.mxu0
          %v9474 = vadd.f32 %v9313, %v9473
          %v9475 = vpop.f32.mrf.mxu0
          %9476 = vmatprep.mubr.bf16.mxu0 0
          %9477 = vmatmul.mubr.bf16.gmra.mxu0 %v8696
          %v9478 = vpop.f32.mrf.mxu0
          %v9479 = vadd.f32 %v9318, %v9478
          %v9480 = vpop.f32.mrf.mxu0
          %v9481 = vpop.f32.mrf.mxu0
          %v9482 = vadd.f32 %v9321, %v9481
          %v9483 = vpop.f32.mrf.mxu0
          %9484 = vmatprep.mubr.bf16.mxu0 0
          %9485 = vmatmul.mubr.bf16.gmra.mxu0 %v8701
          %v9486 = vpop.f32.mrf.mxu0
          %v9487 = vadd.f32 %v9326, %v9486
          %v9488 = vpop.f32.mrf.mxu0
          %v9489 = vpop.f32.mrf.mxu0
          %v9490 = vadd.f32 %v9329, %v9489
          %v9491 = vpop.f32.mrf.mxu0
          %9492 = vmatprep.mubr.bf16.mxu0 0
          %9493 = vmatmul.mubr.bf16.gmra.mxu0 %v8706
          %v9494 = vpop.f32.mrf.mxu0
          %v9495 = vadd.f32 %v9334, %v9494
          %v9496 = vpop.f32.mrf.mxu0
          %v9497 = vpop.f32.mrf.mxu0
          %v9498 = vadd.f32 %v9337, %v9497
          %v9499 = vpop.f32.mrf.mxu0
          %9500 = vmatprep.mubr.bf16.mxu0 0
          %9501 = vmatmul.mubr.bf16.gmra.mxu0 %v8711
          %v9502 = vpop.f32.mrf.mxu0
          %v9503 = vadd.f32 %v9342, %v9502
          %v9504 = vpop.f32.mrf.mxu0
          %v9505 = vpop.f32.mrf.mxu0
          %v9506 = vadd.f32 %v9345, %v9505
          %v9507 = vpop.f32.mrf.mxu0
          %9508 = vmatprep.mubr.bf16.mxu0 0
          %9509 = vmatmul.mubr.bf16.gmra.mxu0 %v8716
          %v9510 = vpop.f32.mrf.mxu0
          %v9511 = vadd.f32 %v9350, %v9510
          %v9512 = vpop.f32.mrf.mxu0
          %v9513 = vpop.f32.mrf.mxu0
          %v9514 = vadd.f32 %v9353, %v9513
          %v9515 = vpop.f32.mrf.mxu0
          %9516 = vmatprep.mubr.bf16.mxu0 0
          %9517 = vmatmul.mubr.bf16.gmra.mxu0 %v8721
          %v9518 = vpop.f32.mrf.mxu0
          %v9519 = vadd.f32 %v9358, %v9518
          %v9520 = vpop.f32.mrf.mxu0
          %v9521 = vpop.f32.mrf.mxu0
          %v9522 = vadd.f32 %v9361, %v9521
          %v9523 = vpop.f32.mrf.mxu0
          %9524 = vdwg.mxu0
          %v9525 = vadd.f32 %v8176, %v9399
          %v9526 = vadd.f32 %v8177, %v9402
          %v9527 = vadd.f32 %v8178, %v9407
          %v9528 = vadd.f32 %v8179, %v9410
          %v9529 = vadd.f32 %v8180, %v9415
          %v9530 = vadd.f32 %v8181, %v9418
          %v9531 = vadd.f32 %v8182, %v9423
          %v9532 = vadd.f32 %v8183, %v9426
          %v9533 = vadd.f32 %v8184, %v9431
          %v9534 = vadd.f32 %v8185, %v9434
          %v9535 = vadd.f32 %v8186, %v9439
          %v9536 = vadd.f32 %v8187, %v9442
          %v9537 = vadd.f32 %v8188, %v9447
          %v9538 = vadd.f32 %v8189, %v9450
          %v9539 = vadd.f32 %v8190, %v9455
          %v9540 = vadd.f32 %v8191, %v9458
          %v9541 = vadd.f32 %v8192, %v9463
          %v9542 = vadd.f32 %v8193, %v9466
          %v9543 = vadd.f32 %v8194, %v9471
          %v9544 = vadd.f32 %v8195, %v9474
          %v9545 = vadd.f32 %v8196, %v9479
          %v9546 = vadd.f32 %v8197, %v9482
          %v9547 = vadd.f32 %v8198, %v9487
          %v9548 = vadd.f32 %v8199, %v9490
          %v9549 = vadd.f32 %v8200, %v9495
          %v9550 = vadd.f32 %v8201, %v9498
          %v9551 = vadd.f32 %v8202, %v9503
          %v9552 = vadd.f32 %v8203, %v9506
          %v9553 = vadd.f32 %v8204, %v9511
          %v9554 = vadd.f32 %v8205, %v9514
          %v9555 = vadd.f32 %v8206, %v9519
          %v9556 = vadd.f32 %v8207, %v9522
          %s9557 = scalar_lea.vmem [#allocation2], 160
          %v9558 = vld [vmem:[%s9557] sm:$0xff]
          %v9559 = vld [vmem:[%s9557 + $0x8] sm:$0xff]
          %v9560 = vld [vmem:[%s9557 + $0x10] sm:$0xf]
          %v9561 = vld [vmem:[%s9557 + $0x14] sm:$0xff]
          %v9562 = vld [vmem:[%s9557 + $0x1c] sm:$0xff]
          %v9563 = vld [vmem:[%s9557 + $0x24] sm:$0xf]
          %v9564 = vld [vmem:[%s9557 + $0x28] sm:$0xff]
          %v9565 = vld [vmem:[%s9557 + $0x30] sm:$0xff]
          %v9566 = vld [vmem:[%s9557 + $0x38] sm:$0xf]
          %v9567 = vld [vmem:[%s9557 + $0x3c] sm:$0xff]
          %v9568 = vld [vmem:[%s9557 + $0x44] sm:$0xff]
          %v9569 = vld [vmem:[%s9557 + $0x4c] sm:$0xf]
          %v9570 = vld [vmem:[%s9557 + $0x50] sm:$0xff]
          %v9571 = vld [vmem:[%s9557 + $0x58] sm:$0xff]
          %v9572 = vld [vmem:[%s9557 + $0x60] sm:$0xf]
          %v9573 = vld [vmem:[%s9557 + $0x64] sm:$0xff]
          %v9574 = vld [vmem:[%s9557 + $0x6c] sm:$0xff]
          %v9575 = vld [vmem:[%s9557 + $0x74] sm:$0xf]
          %v9576 = vld [vmem:[%s9557 + $0x78] sm:$0xff]
          %v9577 = vld [vmem:[%s9557 + $0x80] sm:$0xff]
          %v9578 = vld [vmem:[%s9557 + $0x88] sm:$0xf]
          %v9579 = vld [vmem:[%s9557 + $0x8c] sm:$0xff]
          %v9580 = vld [vmem:[%s9557 + $0x94] sm:$0xff]
          %v9581 = vld [vmem:[%s9557 + $0x9c] sm:$0xf]
          %v9582 = vld [vmem:[%s9557 + $0xa0] sm:$0xff]
          %v9583 = vld [vmem:[%s9557 + $0xa8] sm:$0xff]
          %v9584 = vld [vmem:[%s9557 + $0xb0] sm:$0xf]
          %v9585 = vld [vmem:[%s9557 + $0xb4] sm:$0xff]
          %v9586 = vld [vmem:[%s9557 + $0xbc] sm:$0xff]
          %v9587 = vld [vmem:[%s9557 + $0xc4] sm:$0xf]
          %v9588 = vld [vmem:[%s9557 + $0xc8] sm:$0xff]
          %v9589 = vld [vmem:[%s9557 + $0xd0] sm:$0xff]
          %v9590 = vld [vmem:[%s9557 + $0xd8] sm:$0xf]
          %v9591 = vld [vmem:[%s9557 + $0xdc] sm:$0xff]
          %v9592 = vld [vmem:[%s9557 + $0xe4] sm:$0xff]
          %v9593 = vld [vmem:[%s9557 + $0xec] sm:$0xf]
          %v9594 = vld [vmem:[%s9557 + $0xf0] sm:$0xff]
          %v9595 = vld [vmem:[%s9557 + $0xf8] sm:$0xff]
          %v9596 = vld [vmem:[%s9557 + $0x100] sm:$0xf]
          %v9597 = vld [vmem:[%s9557 + $0x104] sm:$0xff]
          %v9598 = vld [vmem:[%s9557 + $0x10c] sm:$0xff]
          %v9599 = vld [vmem:[%s9557 + $0x114] sm:$0xf]
          %v9600 = vld [vmem:[%s9557 + $0x118] sm:$0xff]
          %v9601 = vld [vmem:[%s9557 + $0x120] sm:$0xff]
          %v9602 = vld [vmem:[%s9557 + $0x128] sm:$0xf]
          %v9603 = vld [vmem:[%s9557 + $0x12c] sm:$0xff]
          %v9604 = vld [vmem:[%s9557 + $0x134] sm:$0xff]
          %v9605 = vld [vmem:[%s9557 + $0x13c] sm:$0xf]
          %v9606 = vld [vmem:[%s9557 + $0x140] sm:$0xff]
          %v9607 = vld [vmem:[%s9557 + $0x148] sm:$0xff]
          %v9608 = vld [vmem:[%s9557 + $0x150] sm:$0xf]
          %v9609 = vld [vmem:[%s9557 + $0x154] sm:$0xff]
          %v9610 = vld [vmem:[%s9557 + $0x15c] sm:$0xff]
          %v9611 = vld [vmem:[%s9557 + $0x164] sm:$0xf]
          %v9612 = vld [vmem:[%s9557 + $0x168] sm:$0xff]
          %v9613 = vld [vmem:[%s9557 + $0x170] sm:$0xff]
          %v9614 = vld [vmem:[%s9557 + $0x178] sm:$0xf]
          %v9615 = vld [vmem:[%s9557 + $0x17c] sm:$0xff]
          %v9616 = vld [vmem:[%s9557 + $0x184] sm:$0xff]
          %v9617 = vld [vmem:[%s9557 + $0x18c] sm:$0xf]
          %v9618 = vld [vmem:[%s9557 + $0x190] sm:$0xff]
          %v9619 = vld [vmem:[%s9557 + $0x198] sm:$0xff]
          %v9620 = vld [vmem:[%s9557 + $0x1a0] sm:$0xf]
          %v9621 = vld [vmem:[%s9557 + $0x1a4] sm:$0xff]
          %v9622 = vld [vmem:[%s9557 + $0x1ac] sm:$0xff]
          %v9623 = vld [vmem:[%s9557 + $0x1b4] sm:$0xf]
          %v9624 = vld [vmem:[%s9557 + $0x1b8] sm:$0xff]
          %v9625 = vld [vmem:[%s9557 + $0x1c0] sm:$0xff]
          %v9626 = vld [vmem:[%s9557 + $0x1c8] sm:$0xf]
          %v9627 = vld [vmem:[%s9557 + $0x1cc] sm:$0xff]
          %v9628 = vld [vmem:[%s9557 + $0x1d4] sm:$0xff]
          %v9629 = vld [vmem:[%s9557 + $0x1dc] sm:$0xf]
          %v9630 = vld [vmem:[%s9557 + $0x1e0] sm:$0xff]
          %v9631 = vld [vmem:[%s9557 + $0x1e8] sm:$0xff]
          %v9632 = vld [vmem:[%s9557 + $0x1f0] sm:$0xf]
          %v9633 = vld [vmem:[%s9557 + $0x1f4] sm:$0xff]
          %v9634 = vld [vmem:[%s9557 + $0x1fc] sm:$0xff]
          %v9635 = vld [vmem:[%s9557 + $0x204] sm:$0xf]
          %v9636 = vld [vmem:[%s9557 + $0x208] sm:$0xff]
          %v9637 = vld [vmem:[%s9557 + $0x210] sm:$0xff]
          %v9638 = vld [vmem:[%s9557 + $0x218] sm:$0xf]
          %v9639 = vld [vmem:[%s9557 + $0x21c] sm:$0xff]
          %v9640 = vld [vmem:[%s9557 + $0x224] sm:$0xff]
          %v9641 = vld [vmem:[%s9557 + $0x22c] sm:$0xf]
          %v9642 = vld [vmem:[%s9557 + $0x230] sm:$0xff]
          %v9643 = vld [vmem:[%s9557 + $0x238] sm:$0xff]
          %v9644 = vld [vmem:[%s9557 + $0x240] sm:$0xf]
          %v9645 = vld [vmem:[%s9557 + $0x244] sm:$0xff]
          %v9646 = vld [vmem:[%s9557 + $0x24c] sm:$0xff]
          %v9647 = vld [vmem:[%s9557 + $0x254] sm:$0xf]
          %v9648 = vld [vmem:[%s9557 + $0x258] sm:$0xff]
          %v9649 = vld [vmem:[%s9557 + $0x260] sm:$0xff]
          %v9650 = vld [vmem:[%s9557 + $0x268] sm:$0xf]
          %v9651 = vld [vmem:[%s9557 + $0x26c] sm:$0xff]
          %v9652 = vld [vmem:[%s9557 + $0x274] sm:$0xff]
          %v9653 = vld [vmem:[%s9557 + $0x27c] sm:$0xf]
          %s9654 = scalar_lea.vmem %s3, 1280
          %v9655 = vld [vmem:[%s9654] sm:$0xf]
          %v9656 = vld [vmem:[%s9654 + $0x4] sm:$0xf]
          %v9657 = vld [vmem:[%s9654 + $0x8] sm:$0xf]
          %v9658 = vld [vmem:[%s9654 + $0xc] sm:$0xf]
          %v9659 = vld [vmem:[%s9654 + $0x10] sm:$0xf]
          %v9660 = vld [vmem:[%s9654 + $0x14] sm:$0xf]
          %v9661 = vld [vmem:[%s9654 + $0x18] sm:$0xf]
          %v9662 = vld [vmem:[%s9654 + $0x1c] sm:$0xf]
          %v9663 = vld [vmem:[%s9654 + $0x20] sm:$0xf]
          %v9664 = vld [vmem:[%s9654 + $0x24] sm:$0xf]
          %v9665 = vld [vmem:[%s9654 + $0x28] sm:$0xf]
          %v9666 = vld [vmem:[%s9654 + $0x2c] sm:$0xf]
          %v9667 = vld [vmem:[%s9654 + $0x30] sm:$0xf]
          %v9668 = vld [vmem:[%s9654 + $0x34] sm:$0xf]
          %v9669 = vld [vmem:[%s9654 + $0x38] sm:$0xf]
          %v9670 = vld [vmem:[%s9654 + $0x3c] sm:$0xf]
          %v9671 = vld [vmem:[%s9654 + $0x40] sm:$0xf]
          %v9672 = vld [vmem:[%s9654 + $0x44] sm:$0xf]
          %v9673 = vld [vmem:[%s9654 + $0x48] sm:$0xf]
          %v9674 = vld [vmem:[%s9654 + $0x4c] sm:$0xf]
          %v9675 = vld [vmem:[%s9654 + $0x50] sm:$0xf]
          %v9676 = vld [vmem:[%s9654 + $0x54] sm:$0xf]
          %v9677 = vld [vmem:[%s9654 + $0x58] sm:$0xf]
          %v9678 = vld [vmem:[%s9654 + $0x5c] sm:$0xf]
          %v9679 = vld [vmem:[%s9654 + $0x60] sm:$0xf]
          %v9680 = vld [vmem:[%s9654 + $0x64] sm:$0xf]
          %v9681 = vld [vmem:[%s9654 + $0x68] sm:$0xf]
          %v9682 = vld [vmem:[%s9654 + $0x6c] sm:$0xf]
          %v9683 = vld [vmem:[%s9654 + $0x70] sm:$0xf]
          %v9684 = vld [vmem:[%s9654 + $0x74] sm:$0xf]
          %v9685 = vld [vmem:[%s9654 + $0x78] sm:$0xf]
          %v9686 = vld [vmem:[%s9654 + $0x7c] sm:$0xf]
          %v9687 = vld [vmem:[%s9654 + $0x80] sm:$0xf]
          %v9688 = vld [vmem:[%s9654 + $0x84] sm:$0xf]
          %v9689 = vld [vmem:[%s9654 + $0x88] sm:$0xf]
          %v9690 = vld [vmem:[%s9654 + $0x8c] sm:$0xf]
          %v9691 = vld [vmem:[%s9654 + $0x90] sm:$0xf]
          %v9692 = vld [vmem:[%s9654 + $0x94] sm:$0xf]
          %v9693 = vld [vmem:[%s9654 + $0x98] sm:$0xf]
          %v9694 = vld [vmem:[%s9654 + $0x9c] sm:$0xf]
          %v9695 = vld [vmem:[%s9654 + $0xa0] sm:$0xf]
          %v9696 = vld [vmem:[%s9654 + $0xa4] sm:$0xf]
          %v9697 = vld [vmem:[%s9654 + $0xa8] sm:$0xf]
          %v9698 = vld [vmem:[%s9654 + $0xac] sm:$0xf]
          %v9699 = vld [vmem:[%s9654 + $0xb0] sm:$0xf]
          %v9700 = vld [vmem:[%s9654 + $0xb4] sm:$0xf]
          %v9701 = vld [vmem:[%s9654 + $0xb8] sm:$0xf]
          %v9702 = vld [vmem:[%s9654 + $0xbc] sm:$0xf]
          %v9703 = vld [vmem:[%s9654 + $0xc0] sm:$0xf]
          %v9704 = vld [vmem:[%s9654 + $0xc4] sm:$0xf]
          %v9705 = vld [vmem:[%s9654 + $0xc8] sm:$0xf]
          %v9706 = vld [vmem:[%s9654 + $0xcc] sm:$0xf]
          %v9707 = vld [vmem:[%s9654 + $0xd0] sm:$0xf]
          %v9708 = vld [vmem:[%s9654 + $0xd4] sm:$0xf]
          %v9709 = vld [vmem:[%s9654 + $0xd8] sm:$0xf]
          %v9710 = vld [vmem:[%s9654 + $0xdc] sm:$0xf]
          %v9711 = vld [vmem:[%s9654 + $0xe0] sm:$0xf]
          %v9712 = vld [vmem:[%s9654 + $0xe4] sm:$0xf]
          %v9713 = vld [vmem:[%s9654 + $0xe8] sm:$0xf]
          %v9714 = vld [vmem:[%s9654 + $0xec] sm:$0xf]
          %v9715 = vld [vmem:[%s9654 + $0xf0] sm:$0xf]
          %v9716 = vld [vmem:[%s9654 + $0xf4] sm:$0xf]
          %v9717 = vld [vmem:[%s9654 + $0xf8] sm:$0xf]
          %v9718 = vld [vmem:[%s9654 + $0xfc] sm:$0xf]
          %v9719 = vld [vmem:[%s9654 + $0x100] sm:$0xf]
          %v9720 = vld [vmem:[%s9654 + $0x104] sm:$0xf]
          %v9721 = vld [vmem:[%s9654 + $0x108] sm:$0xf]
          %v9722 = vld [vmem:[%s9654 + $0x10c] sm:$0xf]
          %v9723 = vld [vmem:[%s9654 + $0x110] sm:$0xf]
          %v9724 = vld [vmem:[%s9654 + $0x114] sm:$0xf]
          %v9725 = vld [vmem:[%s9654 + $0x118] sm:$0xf]
          %v9726 = vld [vmem:[%s9654 + $0x11c] sm:$0xf]
          %v9727 = vld [vmem:[%s9654 + $0x120] sm:$0xf]
          %v9728 = vld [vmem:[%s9654 + $0x124] sm:$0xf]
          %v9729 = vld [vmem:[%s9654 + $0x128] sm:$0xf]
          %v9730 = vld [vmem:[%s9654 + $0x12c] sm:$0xf]
          %v9731 = vld [vmem:[%s9654 + $0x130] sm:$0xf]
          %v9732 = vld [vmem:[%s9654 + $0x134] sm:$0xf]
          %v9733 = vld [vmem:[%s9654 + $0x138] sm:$0xf]
          %v9734 = vld [vmem:[%s9654 + $0x13c] sm:$0xf]
          %v9831 = vunpack.c.l.b16 %v9558
          %v9832 = vunpack.c.h.b16 %v9558
          %v9833 = vunpack.c.l.b16 %v9559
          %v9834 = vunpack.c.h.b16 %v9559
          %v9835 = vunpack.c.l.b16 %v9560
          %v9836 = vunpack.c.l.b16 %v9561
          %v9837 = vunpack.c.h.b16 %v9561
          %v9838 = vunpack.c.l.b16 %v9562
          %v9839 = vunpack.c.h.b16 %v9562
          %v9840 = vunpack.c.l.b16 %v9563
          %v9841 = vunpack.c.l.b16 %v9564
          %v9842 = vunpack.c.h.b16 %v9564
          %v9843 = vunpack.c.l.b16 %v9565
          %v9844 = vunpack.c.h.b16 %v9565
          %v9845 = vunpack.c.l.b16 %v9566
          %v9846 = vunpack.c.l.b16 %v9567
          %v9847 = vunpack.c.h.b16 %v9567
          %v9848 = vunpack.c.l.b16 %v9568
          %v9849 = vunpack.c.h.b16 %v9568
          %v9850 = vunpack.c.l.b16 %v9569
          %v9851 = vunpack.c.l.b16 %v9570
          %v9852 = vunpack.c.h.b16 %v9570
          %v9853 = vunpack.c.l.b16 %v9571
          %v9854 = vunpack.c.h.b16 %v9571
          %v9855 = vunpack.c.l.b16 %v9572
          %v9856 = vunpack.c.l.b16 %v9573
          %v9857 = vunpack.c.h.b16 %v9573
          %v9858 = vunpack.c.l.b16 %v9574
          %v9859 = vunpack.c.h.b16 %v9574
          %v9860 = vunpack.c.l.b16 %v9575
          %v9861 = vunpack.c.l.b16 %v9576
          %v9862 = vunpack.c.h.b16 %v9576
          %v9863 = vunpack.c.l.b16 %v9577
          %v9864 = vunpack.c.h.b16 %v9577
          %v9865 = vunpack.c.l.b16 %v9578
          %v9866 = vunpack.c.l.b16 %v9579
          %v9867 = vunpack.c.h.b16 %v9579
          %v9868 = vunpack.c.l.b16 %v9580
          %v9869 = vunpack.c.h.b16 %v9580
          %v9870 = vunpack.c.l.b16 %v9581
          %v9871 = vunpack.c.l.b16 %v9582
          %v9872 = vunpack.c.h.b16 %v9582
          %v9873 = vunpack.c.l.b16 %v9583
          %v9874 = vunpack.c.h.b16 %v9583
          %v9875 = vunpack.c.l.b16 %v9584
          %v9876 = vunpack.c.l.b16 %v9585
          %v9877 = vunpack.c.h.b16 %v9585
          %v9878 = vunpack.c.l.b16 %v9586
          %v9879 = vunpack.c.h.b16 %v9586
          %v9880 = vunpack.c.l.b16 %v9587
          %v9881 = vunpack.c.l.b16 %v9588
          %v9882 = vunpack.c.h.b16 %v9588
          %v9883 = vunpack.c.l.b16 %v9589
          %v9884 = vunpack.c.h.b16 %v9589
          %v9885 = vunpack.c.l.b16 %v9590
          %v9886 = vunpack.c.l.b16 %v9591
          %v9887 = vunpack.c.h.b16 %v9591
          %v9888 = vunpack.c.l.b16 %v9592
          %v9889 = vunpack.c.h.b16 %v9592
          %v9890 = vunpack.c.l.b16 %v9593
          %v9891 = vunpack.c.l.b16 %v9594
          %v9892 = vunpack.c.h.b16 %v9594
          %v9893 = vunpack.c.l.b16 %v9595
          %v9894 = vunpack.c.h.b16 %v9595
          %v9895 = vunpack.c.l.b16 %v9596
          %v9896 = vunpack.c.l.b16 %v9597
          %v9897 = vunpack.c.h.b16 %v9597
          %v9898 = vunpack.c.l.b16 %v9598
          %v9899 = vunpack.c.h.b16 %v9598
          %v9900 = vunpack.c.l.b16 %v9599
          %v9901 = vunpack.c.l.b16 %v9600
          %v9902 = vunpack.c.h.b16 %v9600
          %v9903 = vunpack.c.l.b16 %v9601
          %v9904 = vunpack.c.h.b16 %v9601
          %v9905 = vunpack.c.l.b16 %v9602
          %v9906 = vunpack.c.l.b16 %v9603
          %v9907 = vunpack.c.h.b16 %v9603
          %v9908 = vunpack.c.l.b16 %v9604
          %v9909 = vunpack.c.h.b16 %v9604
          %v9910 = vunpack.c.l.b16 %v9605
          %v9911 = vunpack.c.l.b16 %v9606
          %v9912 = vunpack.c.h.b16 %v9606
          %v9913 = vunpack.c.l.b16 %v9607
          %v9914 = vunpack.c.h.b16 %v9607
          %v9915 = vunpack.c.l.b16 %v9608
          %v9916 = vunpack.c.l.b16 %v9609
          %v9917 = vunpack.c.h.b16 %v9609
          %v9918 = vunpack.c.l.b16 %v9610
          %v9919 = vunpack.c.h.b16 %v9610
          %v9920 = vunpack.c.l.b16 %v9611
          %v9921 = vunpack.c.l.b16 %v9612
          %v9922 = vunpack.c.h.b16 %v9612
          %v9923 = vunpack.c.l.b16 %v9613
          %v9924 = vunpack.c.h.b16 %v9613
          %v9925 = vunpack.c.l.b16 %v9614
          %v9926 = vunpack.c.l.b16 %v9615
          %v9927 = vunpack.c.h.b16 %v9615
          %v9928 = vunpack.c.l.b16 %v9616
          %v9929 = vunpack.c.h.b16 %v9616
          %v9930 = vunpack.c.l.b16 %v9617
          %v9931 = vunpack.c.l.b16 %v9618
          %v9932 = vunpack.c.h.b16 %v9618
          %v9933 = vunpack.c.l.b16 %v9619
          %v9934 = vunpack.c.h.b16 %v9619
          %v9935 = vunpack.c.l.b16 %v9620
          %v9936 = vunpack.c.l.b16 %v9621
          %v9937 = vunpack.c.h.b16 %v9621
          %v9938 = vunpack.c.l.b16 %v9622
          %v9939 = vunpack.c.h.b16 %v9622
          %v9940 = vunpack.c.l.b16 %v9623
          %v9941 = vunpack.c.l.b16 %v9624
          %v9942 = vunpack.c.h.b16 %v9624
          %v9943 = vunpack.c.l.b16 %v9625
          %v9944 = vunpack.c.h.b16 %v9625
          %v9945 = vunpack.c.l.b16 %v9626
          %v9946 = vunpack.c.l.b16 %v9627
          %v9947 = vunpack.c.h.b16 %v9627
          %v9948 = vunpack.c.l.b16 %v9628
          %v9949 = vunpack.c.h.b16 %v9628
          %v9950 = vunpack.c.l.b16 %v9629
          %v9951 = vunpack.c.l.b16 %v9630
          %v9952 = vunpack.c.h.b16 %v9630
          %v9953 = vunpack.c.l.b16 %v9631
          %v9954 = vunpack.c.h.b16 %v9631
          %v9955 = vunpack.c.l.b16 %v9632
          %v9956 = vunpack.c.l.b16 %v9633
          %v9957 = vunpack.c.h.b16 %v9633
          %v9958 = vunpack.c.l.b16 %v9634
          %v9959 = vunpack.c.h.b16 %v9634
          %v9960 = vunpack.c.l.b16 %v9635
          %v9961 = vunpack.c.l.b16 %v9636
          %v9962 = vunpack.c.h.b16 %v9636
          %v9963 = vunpack.c.l.b16 %v9637
          %v9964 = vunpack.c.h.b16 %v9637
          %v9965 = vunpack.c.l.b16 %v9638
          %v9966 = vunpack.c.l.b16 %v9639
          %v9967 = vunpack.c.h.b16 %v9639
          %v9968 = vunpack.c.l.b16 %v9640
          %v9969 = vunpack.c.h.b16 %v9640
          %v9970 = vunpack.c.l.b16 %v9641
          %v9971 = vunpack.c.l.b16 %v9642
          %v9972 = vunpack.c.h.b16 %v9642
          %v9973 = vunpack.c.l.b16 %v9643
          %v9974 = vunpack.c.h.b16 %v9643
          %v9975 = vunpack.c.l.b16 %v9644
          %v9976 = vunpack.c.l.b16 %v9645
          %v9977 = vunpack.c.h.b16 %v9645
          %v9978 = vunpack.c.l.b16 %v9646
          %v9979 = vunpack.c.h.b16 %v9646
          %v9980 = vunpack.c.l.b16 %v9647
          %v9981 = vunpack.c.l.b16 %v9648
          %v9982 = vunpack.c.h.b16 %v9648
          %v9983 = vunpack.c.l.b16 %v9649
          %v9984 = vunpack.c.h.b16 %v9649
          %v9985 = vunpack.c.l.b16 %v9650
          %v9986 = vunpack.c.l.b16 %v9651
          %v9987 = vunpack.c.h.b16 %v9651
          %v9988 = vunpack.c.l.b16 %v9652
          %v9989 = vunpack.c.h.b16 %v9652
          %v9990 = vunpack.c.l.b16 %v9653
          %v9991 = vpack.c.b16 %v9836, %v9831
          %v9992 = vpack.c.b16 %v9837, %v9832
          %v9993 = vpack.c.b16 %v9838, %v9833
          %v9994 = vpack.c.b16 %v9839, %v9834
          %v9995 = vpack.c.b16 %v9840, %v9835
          %v9996 = vpack.c.b16 %v9846, %v9841
          %v9997 = vpack.c.b16 %v9847, %v9842
          %v9998 = vpack.c.b16 %v9848, %v9843
          %v9999 = vpack.c.b16 %v9849, %v9844
          %v10000 = vpack.c.b16 %v9850, %v9845
          %v10001 = vpack.c.b16 %v9856, %v9851
          %v10002 = vpack.c.b16 %v9857, %v9852
          %v10003 = vpack.c.b16 %v9858, %v9853
          %v10004 = vpack.c.b16 %v9859, %v9854
          %v10005 = vpack.c.b16 %v9860, %v9855
          %v10006 = vpack.c.b16 %v9866, %v9861
          %v10007 = vpack.c.b16 %v9867, %v9862
          %v10008 = vpack.c.b16 %v9868, %v9863
          %v10009 = vpack.c.b16 %v9869, %v9864
          %v10010 = vpack.c.b16 %v9870, %v9865
          %v10011 = vpack.c.b16 %v9876, %v9871
          %v10012 = vpack.c.b16 %v9877, %v9872
          %v10013 = vpack.c.b16 %v9878, %v9873
          %v10014 = vpack.c.b16 %v9879, %v9874
          %v10015 = vpack.c.b16 %v9880, %v9875
          %v10016 = vpack.c.b16 %v9886, %v9881
          %v10017 = vpack.c.b16 %v9887, %v9882
          %v10018 = vpack.c.b16 %v9888, %v9883
          %v10019 = vpack.c.b16 %v9889, %v9884
          %v10020 = vpack.c.b16 %v9890, %v9885
          %v10021 = vpack.c.b16 %v9896, %v9891
          %v10022 = vpack.c.b16 %v9897, %v9892
          %v10023 = vpack.c.b16 %v9898, %v9893
          %v10024 = vpack.c.b16 %v9899, %v9894
          %v10025 = vpack.c.b16 %v9900, %v9895
          %v10026 = vpack.c.b16 %v9906, %v9901
          %v10027 = vpack.c.b16 %v9907, %v9902
          %v10028 = vpack.c.b16 %v9908, %v9903
          %v10029 = vpack.c.b16 %v9909, %v9904
          %v10030 = vpack.c.b16 %v9910, %v9905
          %v10031 = vpack.c.b16 %v9916, %v9911
          %v10032 = vpack.c.b16 %v9917, %v9912
          %v10033 = vpack.c.b16 %v9918, %v9913
          %v10034 = vpack.c.b16 %v9919, %v9914
          %v10035 = vpack.c.b16 %v9920, %v9915
          %v10036 = vpack.c.b16 %v9926, %v9921
          %v10037 = vpack.c.b16 %v9927, %v9922
          %v10038 = vpack.c.b16 %v9928, %v9923
          %v10039 = vpack.c.b16 %v9929, %v9924
          %v10040 = vpack.c.b16 %v9930, %v9925
          %v10041 = vpack.c.b16 %v9936, %v9931
          %v10042 = vpack.c.b16 %v9937, %v9932
          %v10043 = vpack.c.b16 %v9938, %v9933
          %v10044 = vpack.c.b16 %v9939, %v9934
          %v10045 = vpack.c.b16 %v9940, %v9935
          %v10046 = vpack.c.b16 %v9946, %v9941
          %v10047 = vpack.c.b16 %v9947, %v9942
          %v10048 = vpack.c.b16 %v9948, %v9943
          %v10049 = vpack.c.b16 %v9949, %v9944
          %v10050 = vpack.c.b16 %v9950, %v9945
          %v10051 = vpack.c.b16 %v9956, %v9951
          %v10052 = vpack.c.b16 %v9957, %v9952
          %v10053 = vpack.c.b16 %v9958, %v9953
          %v10054 = vpack.c.b16 %v9959, %v9954
          %v10055 = vpack.c.b16 %v9960, %v9955
          %v10056 = vpack.c.b16 %v9966, %v9961
          %v10057 = vpack.c.b16 %v9967, %v9962
          %v10058 = vpack.c.b16 %v9968, %v9963
          %v10059 = vpack.c.b16 %v9969, %v9964
          %v10060 = vpack.c.b16 %v9970, %v9965
          %v10061 = vpack.c.b16 %v9976, %v9971
          %v10062 = vpack.c.b16 %v9977, %v9972
          %v10063 = vpack.c.b16 %v9978, %v9973
          %v10064 = vpack.c.b16 %v9979, %v9974
          %v10065 = vpack.c.b16 %v9980, %v9975
          %v10066 = vpack.c.b16 %v9986, %v9981
          %v10067 = vpack.c.b16 %v9987, %v9982
          %v10068 = vpack.c.b16 %v9988, %v9983
          %v10069 = vpack.c.b16 %v9989, %v9984
          %v10070 = vpack.c.b16 %v9990, %v9985
          %v10231 = vunpack.c.l.b16 %v9655
          %v10232 = vunpack.c.l.b16 %v9656
          %v10233 = vunpack.c.l.b16 %v9657
          %v10234 = vunpack.c.l.b16 %v9658
          %v10235 = vunpack.c.l.b16 %v9659
          %v10236 = vunpack.c.l.b16 %v9660
          %v10237 = vunpack.c.l.b16 %v9661
          %v10238 = vunpack.c.l.b16 %v9662
          %v10239 = vunpack.c.l.b16 %v9663
          %v10240 = vunpack.c.l.b16 %v9664
          %v10241 = vunpack.c.l.b16 %v9665
          %v10242 = vunpack.c.l.b16 %v9666
          %v10243 = vunpack.c.l.b16 %v9667
          %v10244 = vunpack.c.l.b16 %v9668
          %v10245 = vunpack.c.l.b16 %v9669
          %v10246 = vunpack.c.l.b16 %v9670
          %v10247 = vunpack.c.l.b16 %v9671
          %v10248 = vunpack.c.l.b16 %v9672
          %v10249 = vunpack.c.l.b16 %v9673
          %v10250 = vunpack.c.l.b16 %v9674
          %v10251 = vunpack.c.l.b16 %v9675
          %v10252 = vunpack.c.l.b16 %v9676
          %v10253 = vunpack.c.l.b16 %v9677
          %v10254 = vunpack.c.l.b16 %v9678
          %v10255 = vunpack.c.l.b16 %v9679
          %v10256 = vunpack.c.l.b16 %v9680
          %v10257 = vunpack.c.l.b16 %v9681
          %v10258 = vunpack.c.l.b16 %v9682
          %v10259 = vunpack.c.l.b16 %v9683
          %v10260 = vunpack.c.l.b16 %v9684
          %v10261 = vunpack.c.l.b16 %v9685
          %v10262 = vunpack.c.l.b16 %v9686
          %v10263 = vunpack.c.l.b16 %v9687
          %v10264 = vunpack.c.l.b16 %v9688
          %v10265 = vunpack.c.l.b16 %v9689
          %v10266 = vunpack.c.l.b16 %v9690
          %v10267 = vunpack.c.l.b16 %v9691
          %v10268 = vunpack.c.l.b16 %v9692
          %v10269 = vunpack.c.l.b16 %v9693
          %v10270 = vunpack.c.l.b16 %v9694
          %v10271 = vunpack.c.l.b16 %v9695
          %v10272 = vunpack.c.l.b16 %v9696
          %v10273 = vunpack.c.l.b16 %v9697
          %v10274 = vunpack.c.l.b16 %v9698
          %v10275 = vunpack.c.l.b16 %v9699
          %v10276 = vunpack.c.l.b16 %v9700
          %v10277 = vunpack.c.l.b16 %v9701
          %v10278 = vunpack.c.l.b16 %v9702
          %v10279 = vunpack.c.l.b16 %v9703
          %v10280 = vunpack.c.l.b16 %v9704
          %v10281 = vunpack.c.l.b16 %v9705
          %v10282 = vunpack.c.l.b16 %v9706
          %v10283 = vunpack.c.l.b16 %v9707
          %v10284 = vunpack.c.l.b16 %v9708
          %v10285 = vunpack.c.l.b16 %v9709
          %v10286 = vunpack.c.l.b16 %v9710
          %v10287 = vunpack.c.l.b16 %v9711
          %v10288 = vunpack.c.l.b16 %v9712
          %v10289 = vunpack.c.l.b16 %v9713
          %v10290 = vunpack.c.l.b16 %v9714
          %v10291 = vunpack.c.l.b16 %v9715
          %v10292 = vunpack.c.l.b16 %v9716
          %v10293 = vunpack.c.l.b16 %v9717
          %v10294 = vunpack.c.l.b16 %v9718
          %v10295 = vunpack.c.l.b16 %v9719
          %v10296 = vunpack.c.l.b16 %v9720
          %v10297 = vunpack.c.l.b16 %v9721
          %v10298 = vunpack.c.l.b16 %v9722
          %v10299 = vunpack.c.l.b16 %v9723
          %v10300 = vunpack.c.l.b16 %v9724
          %v10301 = vunpack.c.l.b16 %v9725
          %v10302 = vunpack.c.l.b16 %v9726
          %v10303 = vunpack.c.l.b16 %v9727
          %v10304 = vunpack.c.l.b16 %v9728
          %v10305 = vunpack.c.l.b16 %v9729
          %v10306 = vunpack.c.l.b16 %v9730
          %v10307 = vunpack.c.l.b16 %v9731
          %v10308 = vunpack.c.l.b16 %v9732
          %v10309 = vunpack.c.l.b16 %v9733
          %v10310 = vunpack.c.l.b16 %v9734
          %v10311 = vpack.c.b16 %v10232, %v10231
          %v10312 = vpack.c.b16 %v10234, %v10233
          %v10313 = vpack.c.b16 %v10236, %v10235
          %v10314 = vpack.c.b16 %v10238, %v10237
          %v10315 = vpack.c.b16 %v10240, %v10239
          %v10316 = vpack.c.b16 %v10242, %v10241
          %v10317 = vpack.c.b16 %v10244, %v10243
          %v10318 = vpack.c.b16 %v10246, %v10245
          %v10319 = vpack.c.b16 %v10248, %v10247
          %v10320 = vpack.c.b16 %v10250, %v10249
          %v10321 = vpack.c.b16 %v10252, %v10251
          %v10322 = vpack.c.b16 %v10254, %v10253
          %v10323 = vpack.c.b16 %v10256, %v10255
          %v10324 = vpack.c.b16 %v10258, %v10257
          %v10325 = vpack.c.b16 %v10260, %v10259
          %v10326 = vpack.c.b16 %v10262, %v10261
          %v10327 = vpack.c.b16 %v10264, %v10263
          %v10328 = vpack.c.b16 %v10266, %v10265
          %v10329 = vpack.c.b16 %v10268, %v10267
          %v10330 = vpack.c.b16 %v10270, %v10269
          %v10331 = vpack.c.b16 %v10272, %v10271
          %v10332 = vpack.c.b16 %v10274, %v10273
          %v10333 = vpack.c.b16 %v10276, %v10275
          %v10334 = vpack.c.b16 %v10278, %v10277
          %v10335 = vpack.c.b16 %v10280, %v10279
          %v10336 = vpack.c.b16 %v10282, %v10281
          %v10337 = vpack.c.b16 %v10284, %v10283
          %v10338 = vpack.c.b16 %v10286, %v10285
          %v10339 = vpack.c.b16 %v10288, %v10287
          %v10340 = vpack.c.b16 %v10290, %v10289
          %v10341 = vpack.c.b16 %v10292, %v10291
          %v10342 = vpack.c.b16 %v10294, %v10293
          %v10343 = vpack.c.b16 %v10296, %v10295
          %v10344 = vpack.c.b16 %v10298, %v10297
          %v10345 = vpack.c.b16 %v10300, %v10299
          %v10346 = vpack.c.b16 %v10302, %v10301
          %v10347 = vpack.c.b16 %v10304, %v10303
          %v10348 = vpack.c.b16 %v10306, %v10305
          %v10349 = vpack.c.b16 %v10308, %v10307
          %v10350 = vpack.c.b16 %v10310, %v10309
          %10391 = vmatprep.subr.bf16.mxu0 0
          %10392 = vmatpush1.bf16.msra.mxu0 %v10318
          %10393 = vmatprep.subr.bf16.mxu0 0
          %10394 = vmatpush1.bf16.msra.mxu0 %v10317
          %10395 = vmatprep.subr.bf16.mxu0 0
          %10396 = vmatpush1.bf16.msra.mxu0 %v10316
          %10397 = vmatprep.subr.bf16.mxu0 0
          %10398 = vmatpush1.bf16.msra.mxu0 %v10315
          %10399 = vmatprep.subr.bf16.mxu0 0
          %10400 = vmatpush1.bf16.msra.mxu0 %v10314
          %10401 = vmatprep.subr.bf16.mxu0 0
          %10402 = vmatpush1.bf16.msra.mxu0 %v10313
          %10403 = vmatprep.subr.bf16.mxu0 0
          %10404 = vmatpush1.bf16.msra.mxu0 %v10312
          %10405 = vmatprep.subr.bf16.mxu0 0
          %10406 = vmatpush1.bf16.msra.mxu0 %v10311
          %10407 = vmatprep.subr.bf16.mxu0 0
          %10408 = vmatpush2.bf16.msra.mxu0 %v10326
          %10409 = vmatprep.subr.bf16.mxu0 0
          %10410 = vmatpush2.bf16.msra.mxu0 %v10325
          %10411 = vmatprep.subr.bf16.mxu0 0
          %10412 = vmatpush2.bf16.msra.mxu0 %v10324
          %10413 = vmatprep.subr.bf16.mxu0 0
          %10414 = vmatpush2.bf16.msra.mxu0 %v10323
          %10415 = vmatprep.subr.bf16.mxu0 0
          %10416 = vmatpush2.bf16.msra.mxu0 %v10322
          %10417 = vmatprep.subr.bf16.mxu0 0
          %10418 = vmatpush2.bf16.msra.mxu0 %v10321
          %10419 = vmatprep.subr.bf16.mxu0 0
          %10420 = vmatpush2.bf16.msra.mxu0 %v10320
          %10421 = vmatprep.subr.bf16.mxu0 0
          %10422 = vmatpush2.bf16.msra.mxu0 %v10319
          %10423 = vmatprep.mubr.bf16.mxu0 %v9992
          %10424 = vmatmul.mubr.bf16.gmra.mxu0 %v9991
          %v10425 = vpop.f32.mrf.mxu0
          %v10426 = vadd.f32 0.0, %v10425
          %v10427 = vpop.f32.mrf.mxu0
          %v10428 = vpop.f32.mrf.mxu0
          %v10429 = vadd.f32 0.0, %v10428
          %v10430 = vpop.f32.mrf.mxu0
          %10431 = vmatprep.mubr.bf16.mxu0 %v9997
          %10432 = vmatmul.mubr.bf16.gmra.mxu0 %v9996
          %v10433 = vpop.f32.mrf.mxu0
          %v10434 = vadd.f32 0.0, %v10433
          %v10435 = vpop.f32.mrf.mxu0
          %v10436 = vpop.f32.mrf.mxu0
          %v10437 = vadd.f32 0.0, %v10436
          %v10438 = vpop.f32.mrf.mxu0
          %10439 = vmatprep.mubr.bf16.mxu0 %v10002
          %10440 = vmatmul.mubr.bf16.gmra.mxu0 %v10001
          %v10441 = vpop.f32.mrf.mxu0
          %v10442 = vadd.f32 0.0, %v10441
          %v10443 = vpop.f32.mrf.mxu0
          %v10444 = vpop.f32.mrf.mxu0
          %v10445 = vadd.f32 0.0, %v10444
          %v10446 = vpop.f32.mrf.mxu0
          %10447 = vmatprep.mubr.bf16.mxu0 %v10007
          %10448 = vmatmul.mubr.bf16.gmra.mxu0 %v10006
          %v10449 = vpop.f32.mrf.mxu0
          %v10450 = vadd.f32 0.0, %v10449
          %v10451 = vpop.f32.mrf.mxu0
          %v10452 = vpop.f32.mrf.mxu0
          %v10453 = vadd.f32 0.0, %v10452
          %v10454 = vpop.f32.mrf.mxu0
          %10455 = vmatprep.mubr.bf16.mxu0 %v10012
          %10456 = vmatmul.mubr.bf16.gmra.mxu0 %v10011
          %v10457 = vpop.f32.mrf.mxu0
          %v10458 = vadd.f32 0.0, %v10457
          %v10459 = vpop.f32.mrf.mxu0
          %v10460 = vpop.f32.mrf.mxu0
          %v10461 = vadd.f32 0.0, %v10460
          %v10462 = vpop.f32.mrf.mxu0
          %10463 = vmatprep.mubr.bf16.mxu0 %v10017
          %10464 = vmatmul.mubr.bf16.gmra.mxu0 %v10016
          %v10465 = vpop.f32.mrf.mxu0
          %v10466 = vadd.f32 0.0, %v10465
          %v10467 = vpop.f32.mrf.mxu0
          %v10468 = vpop.f32.mrf.mxu0
          %v10469 = vadd.f32 0.0, %v10468
          %v10470 = vpop.f32.mrf.mxu0
          %10471 = vmatprep.mubr.bf16.mxu0 %v10022
          %10472 = vmatmul.mubr.bf16.gmra.mxu0 %v10021
          %v10473 = vpop.f32.mrf.mxu0
          %v10474 = vadd.f32 0.0, %v10473
          %v10475 = vpop.f32.mrf.mxu0
          %v10476 = vpop.f32.mrf.mxu0
          %v10477 = vadd.f32 0.0, %v10476
          %v10478 = vpop.f32.mrf.mxu0
          %10479 = vmatprep.mubr.bf16.mxu0 %v10027
          %10480 = vmatmul.mubr.bf16.gmra.mxu0 %v10026
          %v10481 = vpop.f32.mrf.mxu0
          %v10482 = vadd.f32 0.0, %v10481
          %v10483 = vpop.f32.mrf.mxu0
          %v10484 = vpop.f32.mrf.mxu0
          %v10485 = vadd.f32 0.0, %v10484
          %v10486 = vpop.f32.mrf.mxu0
          %10487 = vmatprep.mubr.bf16.mxu0 %v10032
          %10488 = vmatmul.mubr.bf16.gmra.mxu0 %v10031
          %v10489 = vpop.f32.mrf.mxu0
          %v10490 = vadd.f32 0.0, %v10489
          %v10491 = vpop.f32.mrf.mxu0
          %v10492 = vpop.f32.mrf.mxu0
          %v10493 = vadd.f32 0.0, %v10492
          %v10494 = vpop.f32.mrf.mxu0
          %10495 = vmatprep.mubr.bf16.mxu0 %v10037
          %10496 = vmatmul.mubr.bf16.gmra.mxu0 %v10036
          %v10497 = vpop.f32.mrf.mxu0
          %v10498 = vadd.f32 0.0, %v10497
          %v10499 = vpop.f32.mrf.mxu0
          %v10500 = vpop.f32.mrf.mxu0
          %v10501 = vadd.f32 0.0, %v10500
          %v10502 = vpop.f32.mrf.mxu0
          %10503 = vmatprep.mubr.bf16.mxu0 %v10042
          %10504 = vmatmul.mubr.bf16.gmra.mxu0 %v10041
          %v10505 = vpop.f32.mrf.mxu0
          %v10506 = vadd.f32 0.0, %v10505
          %v10507 = vpop.f32.mrf.mxu0
          %v10508 = vpop.f32.mrf.mxu0
          %v10509 = vadd.f32 0.0, %v10508
          %v10510 = vpop.f32.mrf.mxu0
          %10511 = vmatprep.mubr.bf16.mxu0 %v10047
          %10512 = vmatmul.mubr.bf16.gmra.mxu0 %v10046
          %v10513 = vpop.f32.mrf.mxu0
          %v10514 = vadd.f32 0.0, %v10513
          %v10515 = vpop.f32.mrf.mxu0
          %v10516 = vpop.f32.mrf.mxu0
          %v10517 = vadd.f32 0.0, %v10516
          %v10518 = vpop.f32.mrf.mxu0
          %10519 = vmatprep.mubr.bf16.mxu0 %v10052
          %10520 = vmatmul.mubr.bf16.gmra.mxu0 %v10051
          %v10521 = vpop.f32.mrf.mxu0
          %v10522 = vadd.f32 0.0, %v10521
          %v10523 = vpop.f32.mrf.mxu0
          %v10524 = vpop.f32.mrf.mxu0
          %v10525 = vadd.f32 0.0, %v10524
          %v10526 = vpop.f32.mrf.mxu0
          %10527 = vmatprep.mubr.bf16.mxu0 %v10057
          %10528 = vmatmul.mubr.bf16.gmra.mxu0 %v10056
          %v10529 = vpop.f32.mrf.mxu0
          %v10530 = vadd.f32 0.0, %v10529
          %v10531 = vpop.f32.mrf.mxu0
          %v10532 = vpop.f32.mrf.mxu0
          %v10533 = vadd.f32 0.0, %v10532
          %v10534 = vpop.f32.mrf.mxu0
          %10535 = vmatprep.mubr.bf16.mxu0 %v10062
          %10536 = vmatmul.mubr.bf16.gmra.mxu0 %v10061
          %v10537 = vpop.f32.mrf.mxu0
          %v10538 = vadd.f32 0.0, %v10537
          %v10539 = vpop.f32.mrf.mxu0
          %v10540 = vpop.f32.mrf.mxu0
          %v10541 = vadd.f32 0.0, %v10540
          %v10542 = vpop.f32.mrf.mxu0
          %10543 = vmatprep.mubr.bf16.mxu0 %v10067
          %10544 = vmatmul.mubr.bf16.gmra.mxu0 %v10066
          %v10545 = vpop.f32.mrf.mxu0
          %v10546 = vadd.f32 0.0, %v10545
          %v10547 = vpop.f32.mrf.mxu0
          %v10548 = vpop.f32.mrf.mxu0
          %v10549 = vadd.f32 0.0, %v10548
          %v10550 = vpop.f32.mrf.mxu0
          %10551 = vdwg.mxu0
          %10552 = vmatprep.subr.bf16.mxu0 0
          %10553 = vmatpush1.bf16.msra.mxu0 %v10334
          %10554 = vmatprep.subr.bf16.mxu0 0
          %10555 = vmatpush1.bf16.msra.mxu0 %v10333
          %10556 = vmatprep.subr.bf16.mxu0 0
          %10557 = vmatpush1.bf16.msra.mxu0 %v10332
          %10558 = vmatprep.subr.bf16.mxu0 0
          %10559 = vmatpush1.bf16.msra.mxu0 %v10331
          %10560 = vmatprep.subr.bf16.mxu0 0
          %10561 = vmatpush1.bf16.msra.mxu0 %v10330
          %10562 = vmatprep.subr.bf16.mxu0 0
          %10563 = vmatpush1.bf16.msra.mxu0 %v10329
          %10564 = vmatprep.subr.bf16.mxu0 0
          %10565 = vmatpush1.bf16.msra.mxu0 %v10328
          %10566 = vmatprep.subr.bf16.mxu0 0
          %10567 = vmatpush1.bf16.msra.mxu0 %v10327
          %10568 = vmatprep.subr.bf16.mxu0 0
          %10569 = vmatpush2.bf16.msra.mxu0 %v10342
          %10570 = vmatprep.subr.bf16.mxu0 0
          %10571 = vmatpush2.bf16.msra.mxu0 %v10341
          %10572 = vmatprep.subr.bf16.mxu0 0
          %10573 = vmatpush2.bf16.msra.mxu0 %v10340
          %10574 = vmatprep.subr.bf16.mxu0 0
          %10575 = vmatpush2.bf16.msra.mxu0 %v10339
          %10576 = vmatprep.subr.bf16.mxu0 0
          %10577 = vmatpush2.bf16.msra.mxu0 %v10338
          %10578 = vmatprep.subr.bf16.mxu0 0
          %10579 = vmatpush2.bf16.msra.mxu0 %v10337
          %10580 = vmatprep.subr.bf16.mxu0 0
          %10581 = vmatpush2.bf16.msra.mxu0 %v10336
          %10582 = vmatprep.subr.bf16.mxu0 0
          %10583 = vmatpush2.bf16.msra.mxu0 %v10335
          %10584 = vmatprep.mubr.bf16.mxu0 %v9994
          %10585 = vmatmul.mubr.bf16.gmra.mxu0 %v9993
          %v10586 = vpop.f32.mrf.mxu0
          %v10587 = vadd.f32 %v10426, %v10586
          %v10588 = vpop.f32.mrf.mxu0
          %v10589 = vpop.f32.mrf.mxu0
          %v10590 = vadd.f32 %v10429, %v10589
          %v10591 = vpop.f32.mrf.mxu0
          %10592 = vmatprep.mubr.bf16.mxu0 %v9999
          %10593 = vmatmul.mubr.bf16.gmra.mxu0 %v9998
          %v10594 = vpop.f32.mrf.mxu0
          %v10595 = vadd.f32 %v10434, %v10594
          %v10596 = vpop.f32.mrf.mxu0
          %v10597 = vpop.f32.mrf.mxu0
          %v10598 = vadd.f32 %v10437, %v10597
          %v10599 = vpop.f32.mrf.mxu0
          %10600 = vmatprep.mubr.bf16.mxu0 %v10004
          %10601 = vmatmul.mubr.bf16.gmra.mxu0 %v10003
          %v10602 = vpop.f32.mrf.mxu0
          %v10603 = vadd.f32 %v10442, %v10602
          %v10604 = vpop.f32.mrf.mxu0
          %v10605 = vpop.f32.mrf.mxu0
          %v10606 = vadd.f32 %v10445, %v10605
          %v10607 = vpop.f32.mrf.mxu0
          %10608 = vmatprep.mubr.bf16.mxu0 %v10009
          %10609 = vmatmul.mubr.bf16.gmra.mxu0 %v10008
          %v10610 = vpop.f32.mrf.mxu0
          %v10611 = vadd.f32 %v10450, %v10610
          %v10612 = vpop.f32.mrf.mxu0
          %v10613 = vpop.f32.mrf.mxu0
          %v10614 = vadd.f32 %v10453, %v10613
          %v10615 = vpop.f32.mrf.mxu0
          %10616 = vmatprep.mubr.bf16.mxu0 %v10014
          %10617 = vmatmul.mubr.bf16.gmra.mxu0 %v10013
          %v10618 = vpop.f32.mrf.mxu0
          %v10619 = vadd.f32 %v10458, %v10618
          %v10620 = vpop.f32.mrf.mxu0
          %v10621 = vpop.f32.mrf.mxu0
          %v10622 = vadd.f32 %v10461, %v10621
          %v10623 = vpop.f32.mrf.mxu0
          %10624 = vmatprep.mubr.bf16.mxu0 %v10019
          %10625 = vmatmul.mubr.bf16.gmra.mxu0 %v10018
          %v10626 = vpop.f32.mrf.mxu0
          %v10627 = vadd.f32 %v10466, %v10626
          %v10628 = vpop.f32.mrf.mxu0
          %v10629 = vpop.f32.mrf.mxu0
          %v10630 = vadd.f32 %v10469, %v10629
          %v10631 = vpop.f32.mrf.mxu0
          %10632 = vmatprep.mubr.bf16.mxu0 %v10024
          %10633 = vmatmul.mubr.bf16.gmra.mxu0 %v10023
          %v10634 = vpop.f32.mrf.mxu0
          %v10635 = vadd.f32 %v10474, %v10634
          %v10636 = vpop.f32.mrf.mxu0
          %v10637 = vpop.f32.mrf.mxu0
          %v10638 = vadd.f32 %v10477, %v10637
          %v10639 = vpop.f32.mrf.mxu0
          %10640 = vmatprep.mubr.bf16.mxu0 %v10029
          %10641 = vmatmul.mubr.bf16.gmra.mxu0 %v10028
          %v10642 = vpop.f32.mrf.mxu0
          %v10643 = vadd.f32 %v10482, %v10642
          %v10644 = vpop.f32.mrf.mxu0
          %v10645 = vpop.f32.mrf.mxu0
          %v10646 = vadd.f32 %v10485, %v10645
          %v10647 = vpop.f32.mrf.mxu0
          %10648 = vmatprep.mubr.bf16.mxu0 %v10034
          %10649 = vmatmul.mubr.bf16.gmra.mxu0 %v10033
          %v10650 = vpop.f32.mrf.mxu0
          %v10651 = vadd.f32 %v10490, %v10650
          %v10652 = vpop.f32.mrf.mxu0
          %v10653 = vpop.f32.mrf.mxu0
          %v10654 = vadd.f32 %v10493, %v10653
          %v10655 = vpop.f32.mrf.mxu0
          %10656 = vmatprep.mubr.bf16.mxu0 %v10039
          %10657 = vmatmul.mubr.bf16.gmra.mxu0 %v10038
          %v10658 = vpop.f32.mrf.mxu0
          %v10659 = vadd.f32 %v10498, %v10658
          %v10660 = vpop.f32.mrf.mxu0
          %v10661 = vpop.f32.mrf.mxu0
          %v10662 = vadd.f32 %v10501, %v10661
          %v10663 = vpop.f32.mrf.mxu0
          %10664 = vmatprep.mubr.bf16.mxu0 %v10044
          %10665 = vmatmul.mubr.bf16.gmra.mxu0 %v10043
          %v10666 = vpop.f32.mrf.mxu0
          %v10667 = vadd.f32 %v10506, %v10666
          %v10668 = vpop.f32.mrf.mxu0
          %v10669 = vpop.f32.mrf.mxu0
          %v10670 = vadd.f32 %v10509, %v10669
          %v10671 = vpop.f32.mrf.mxu0
          %10672 = vmatprep.mubr.bf16.mxu0 %v10049
          %10673 = vmatmul.mubr.bf16.gmra.mxu0 %v10048
          %v10674 = vpop.f32.mrf.mxu0
          %v10675 = vadd.f32 %v10514, %v10674
          %v10676 = vpop.f32.mrf.mxu0
          %v10677 = vpop.f32.mrf.mxu0
          %v10678 = vadd.f32 %v10517, %v10677
          %v10679 = vpop.f32.mrf.mxu0
          %10680 = vmatprep.mubr.bf16.mxu0 %v10054
          %10681 = vmatmul.mubr.bf16.gmra.mxu0 %v10053
          %v10682 = vpop.f32.mrf.mxu0
          %v10683 = vadd.f32 %v10522, %v10682
          %v10684 = vpop.f32.mrf.mxu0
          %v10685 = vpop.f32.mrf.mxu0
          %v10686 = vadd.f32 %v10525, %v10685
          %v10687 = vpop.f32.mrf.mxu0
          %10688 = vmatprep.mubr.bf16.mxu0 %v10059
          %10689 = vmatmul.mubr.bf16.gmra.mxu0 %v10058
          %v10690 = vpop.f32.mrf.mxu0
          %v10691 = vadd.f32 %v10530, %v10690
          %v10692 = vpop.f32.mrf.mxu0
          %v10693 = vpop.f32.mrf.mxu0
          %v10694 = vadd.f32 %v10533, %v10693
          %v10695 = vpop.f32.mrf.mxu0
          %10696 = vmatprep.mubr.bf16.mxu0 %v10064
          %10697 = vmatmul.mubr.bf16.gmra.mxu0 %v10063
          %v10698 = vpop.f32.mrf.mxu0
          %v10699 = vadd.f32 %v10538, %v10698
          %v10700 = vpop.f32.mrf.mxu0
          %v10701 = vpop.f32.mrf.mxu0
          %v10702 = vadd.f32 %v10541, %v10701
          %v10703 = vpop.f32.mrf.mxu0
          %10704 = vmatprep.mubr.bf16.mxu0 %v10069
          %10705 = vmatmul.mubr.bf16.gmra.mxu0 %v10068
          %v10706 = vpop.f32.mrf.mxu0
          %v10707 = vadd.f32 %v10546, %v10706
          %v10708 = vpop.f32.mrf.mxu0
          %v10709 = vpop.f32.mrf.mxu0
          %v10710 = vadd.f32 %v10549, %v10709
          %v10711 = vpop.f32.mrf.mxu0
          %10712 = vdwg.mxu0
          %10713 = vmatprep.subr.bf16.mxu0 0
          %10714 = vmatpush1.bf16.msra.mxu0 %v10350
          %10715 = vmatprep.subr.bf16.mxu0 0
          %10716 = vmatpush1.bf16.msra.mxu0 %v10349
          %10717 = vmatprep.subr.bf16.mxu0 0
          %10718 = vmatpush1.bf16.msra.mxu0 %v10348
          %10719 = vmatprep.subr.bf16.mxu0 0
          %10720 = vmatpush1.bf16.msra.mxu0 %v10347
          %10721 = vmatprep.subr.bf16.mxu0 0
          %10722 = vmatpush1.bf16.msra.mxu0 %v10346
          %10723 = vmatprep.subr.bf16.mxu0 0
          %10724 = vmatpush1.bf16.msra.mxu0 %v10345
          %10725 = vmatprep.subr.bf16.mxu0 0
          %10726 = vmatpush1.bf16.msra.mxu0 %v10344
          %10727 = vmatprep.subr.bf16.mxu0 0
          %10728 = vmatpush1.bf16.msra.mxu0 %v10343
          %10729 = vmatprep.subr.bf16.mxu0 0
          %10730 = vmatpush2.bf16.msra.mxu0 0
          %10731 = vmatprep.subr.bf16.mxu0 0
          %10732 = vmatpush2.bf16.msra.mxu0 0
          %10733 = vmatprep.subr.bf16.mxu0 0
          %10734 = vmatpush2.bf16.msra.mxu0 0
          %10735 = vmatprep.subr.bf16.mxu0 0
          %10736 = vmatpush2.bf16.msra.mxu0 0
          %10737 = vmatprep.subr.bf16.mxu0 0
          %10738 = vmatpush2.bf16.msra.mxu0 0
          %10739 = vmatprep.subr.bf16.mxu0 0
          %10740 = vmatpush2.bf16.msra.mxu0 0
          %10741 = vmatprep.subr.bf16.mxu0 0
          %10742 = vmatpush2.bf16.msra.mxu0 0
          %10743 = vmatprep.subr.bf16.mxu0 0
          %10744 = vmatpush2.bf16.msra.mxu0 0
          %10745 = vmatprep.mubr.bf16.mxu0 0
          %10746 = vmatmul.mubr.bf16.gmra.mxu0 %v9995
          %v10747 = vpop.f32.mrf.mxu0
          %v10748 = vadd.f32 %v10587, %v10747
          %v10749 = vpop.f32.mrf.mxu0
          %v10750 = vpop.f32.mrf.mxu0
          %v10751 = vadd.f32 %v10590, %v10750
          %v10752 = vpop.f32.mrf.mxu0
          %10753 = vmatprep.mubr.bf16.mxu0 0
          %10754 = vmatmul.mubr.bf16.gmra.mxu0 %v10000
          %v10755 = vpop.f32.mrf.mxu0
          %v10756 = vadd.f32 %v10595, %v10755
          %v10757 = vpop.f32.mrf.mxu0
          %v10758 = vpop.f32.mrf.mxu0
          %v10759 = vadd.f32 %v10598, %v10758
          %v10760 = vpop.f32.mrf.mxu0
          %10761 = vmatprep.mubr.bf16.mxu0 0
          %10762 = vmatmul.mubr.bf16.gmra.mxu0 %v10005
          %v10763 = vpop.f32.mrf.mxu0
          %v10764 = vadd.f32 %v10603, %v10763
          %v10765 = vpop.f32.mrf.mxu0
          %v10766 = vpop.f32.mrf.mxu0
          %v10767 = vadd.f32 %v10606, %v10766
          %v10768 = vpop.f32.mrf.mxu0
          %10769 = vmatprep.mubr.bf16.mxu0 0
          %10770 = vmatmul.mubr.bf16.gmra.mxu0 %v10010
          %v10771 = vpop.f32.mrf.mxu0
          %v10772 = vadd.f32 %v10611, %v10771
          %v10773 = vpop.f32.mrf.mxu0
          %v10774 = vpop.f32.mrf.mxu0
          %v10775 = vadd.f32 %v10614, %v10774
          %v10776 = vpop.f32.mrf.mxu0
          %10777 = vmatprep.mubr.bf16.mxu0 0
          %10778 = vmatmul.mubr.bf16.gmra.mxu0 %v10015
          %v10779 = vpop.f32.mrf.mxu0
          %v10780 = vadd.f32 %v10619, %v10779
          %v10781 = vpop.f32.mrf.mxu0
          %v10782 = vpop.f32.mrf.mxu0
          %v10783 = vadd.f32 %v10622, %v10782
          %v10784 = vpop.f32.mrf.mxu0
          %10785 = vmatprep.mubr.bf16.mxu0 0
          %10786 = vmatmul.mubr.bf16.gmra.mxu0 %v10020
          %v10787 = vpop.f32.mrf.mxu0
          %v10788 = vadd.f32 %v10627, %v10787
          %v10789 = vpop.f32.mrf.mxu0
          %v10790 = vpop.f32.mrf.mxu0
          %v10791 = vadd.f32 %v10630, %v10790
          %v10792 = vpop.f32.mrf.mxu0
          %10793 = vmatprep.mubr.bf16.mxu0 0
          %10794 = vmatmul.mubr.bf16.gmra.mxu0 %v10025
          %v10795 = vpop.f32.mrf.mxu0
          %v10796 = vadd.f32 %v10635, %v10795
          %v10797 = vpop.f32.mrf.mxu0
          %v10798 = vpop.f32.mrf.mxu0
          %v10799 = vadd.f32 %v10638, %v10798
          %v10800 = vpop.f32.mrf.mxu0
          %10801 = vmatprep.mubr.bf16.mxu0 0
          %10802 = vmatmul.mubr.bf16.gmra.mxu0 %v10030
          %v10803 = vpop.f32.mrf.mxu0
          %v10804 = vadd.f32 %v10643, %v10803
          %v10805 = vpop.f32.mrf.mxu0
          %v10806 = vpop.f32.mrf.mxu0
          %v10807 = vadd.f32 %v10646, %v10806
          %v10808 = vpop.f32.mrf.mxu0
          %10809 = vmatprep.mubr.bf16.mxu0 0
          %10810 = vmatmul.mubr.bf16.gmra.mxu0 %v10035
          %v10811 = vpop.f32.mrf.mxu0
          %v10812 = vadd.f32 %v10651, %v10811
          %v10813 = vpop.f32.mrf.mxu0
          %v10814 = vpop.f32.mrf.mxu0
          %v10815 = vadd.f32 %v10654, %v10814
          %v10816 = vpop.f32.mrf.mxu0
          %10817 = vmatprep.mubr.bf16.mxu0 0
          %10818 = vmatmul.mubr.bf16.gmra.mxu0 %v10040
          %v10819 = vpop.f32.mrf.mxu0
          %v10820 = vadd.f32 %v10659, %v10819
          %v10821 = vpop.f32.mrf.mxu0
          %v10822 = vpop.f32.mrf.mxu0
          %v10823 = vadd.f32 %v10662, %v10822
          %v10824 = vpop.f32.mrf.mxu0
          %10825 = vmatprep.mubr.bf16.mxu0 0
          %10826 = vmatmul.mubr.bf16.gmra.mxu0 %v10045
          %v10827 = vpop.f32.mrf.mxu0
          %v10828 = vadd.f32 %v10667, %v10827
          %v10829 = vpop.f32.mrf.mxu0
          %v10830 = vpop.f32.mrf.mxu0
          %v10831 = vadd.f32 %v10670, %v10830
          %v10832 = vpop.f32.mrf.mxu0
          %10833 = vmatprep.mubr.bf16.mxu0 0
          %10834 = vmatmul.mubr.bf16.gmra.mxu0 %v10050
          %v10835 = vpop.f32.mrf.mxu0
          %v10836 = vadd.f32 %v10675, %v10835
          %v10837 = vpop.f32.mrf.mxu0
          %v10838 = vpop.f32.mrf.mxu0
          %v10839 = vadd.f32 %v10678, %v10838
          %v10840 = vpop.f32.mrf.mxu0
          %10841 = vmatprep.mubr.bf16.mxu0 0
          %10842 = vmatmul.mubr.bf16.gmra.mxu0 %v10055
          %v10843 = vpop.f32.mrf.mxu0
          %v10844 = vadd.f32 %v10683, %v10843
          %v10845 = vpop.f32.mrf.mxu0
          %v10846 = vpop.f32.mrf.mxu0
          %v10847 = vadd.f32 %v10686, %v10846
          %v10848 = vpop.f32.mrf.mxu0
          %10849 = vmatprep.mubr.bf16.mxu0 0
          %10850 = vmatmul.mubr.bf16.gmra.mxu0 %v10060
          %v10851 = vpop.f32.mrf.mxu0
          %v10852 = vadd.f32 %v10691, %v10851
          %v10853 = vpop.f32.mrf.mxu0
          %v10854 = vpop.f32.mrf.mxu0
          %v10855 = vadd.f32 %v10694, %v10854
          %v10856 = vpop.f32.mrf.mxu0
          %10857 = vmatprep.mubr.bf16.mxu0 0
          %10858 = vmatmul.mubr.bf16.gmra.mxu0 %v10065
          %v10859 = vpop.f32.mrf.mxu0
          %v10860 = vadd.f32 %v10699, %v10859
          %v10861 = vpop.f32.mrf.mxu0
          %v10862 = vpop.f32.mrf.mxu0
          %v10863 = vadd.f32 %v10702, %v10862
          %v10864 = vpop.f32.mrf.mxu0
          %10865 = vmatprep.mubr.bf16.mxu0 0
          %10866 = vmatmul.mubr.bf16.gmra.mxu0 %v10070
          %v10867 = vpop.f32.mrf.mxu0
          %v10868 = vadd.f32 %v10707, %v10867
          %v10869 = vpop.f32.mrf.mxu0
          %v10870 = vpop.f32.mrf.mxu0
          %v10871 = vadd.f32 %v10710, %v10870
          %v10872 = vpop.f32.mrf.mxu0
          %10873 = vdwg.mxu0
          %v10874 = vadd.f32 %v9525, %v10748
          %v10875 = vadd.f32 %v9526, %v10751
          %v10876 = vadd.f32 %v9527, %v10756
          %v10877 = vadd.f32 %v9528, %v10759
          %v10878 = vadd.f32 %v9529, %v10764
          %v10879 = vadd.f32 %v9530, %v10767
          %v10880 = vadd.f32 %v9531, %v10772
          %v10881 = vadd.f32 %v9532, %v10775
          %v10882 = vadd.f32 %v9533, %v10780
          %v10883 = vadd.f32 %v9534, %v10783
          %v10884 = vadd.f32 %v9535, %v10788
          %v10885 = vadd.f32 %v9536, %v10791
          %v10886 = vadd.f32 %v9537, %v10796
          %v10887 = vadd.f32 %v9538, %v10799
          %v10888 = vadd.f32 %v9539, %v10804
          %v10889 = vadd.f32 %v9540, %v10807
          %v10890 = vadd.f32 %v9541, %v10812
          %v10891 = vadd.f32 %v9542, %v10815
          %v10892 = vadd.f32 %v9543, %v10820
          %v10893 = vadd.f32 %v9544, %v10823
          %v10894 = vadd.f32 %v9545, %v10828
          %v10895 = vadd.f32 %v9546, %v10831
          %v10896 = vadd.f32 %v9547, %v10836
          %v10897 = vadd.f32 %v9548, %v10839
          %v10898 = vadd.f32 %v9549, %v10844
          %v10899 = vadd.f32 %v9550, %v10847
          %v10900 = vadd.f32 %v9551, %v10852
          %v10901 = vadd.f32 %v9552, %v10855
          %v10902 = vadd.f32 %v9553, %v10860
          %v10903 = vadd.f32 %v9554, %v10863
          %v10904 = vadd.f32 %v9555, %v10868
          %v10905 = vadd.f32 %v9556, %v10871
          %v10907 = vlaneseq
          %v10908 = vshrl.u32 %v10907, 7
          %v10909 = vsub.s32 0, %v10908
          %v10910 = vrot.slane %v422, %v10909
          %v10912 = vadd.f32 %v10874, %v10910
          %v10913 = vadd.f32 %v10875, %v10910
          %v10914 = vadd.f32 %v10876, %v10910
          %v10915 = vadd.f32 %v10877, %v10910
          %v10916 = vadd.f32 %v10878, %v10910
          %v10917 = vadd.f32 %v10879, %v10910
          %v10918 = vadd.f32 %v10880, %v10910
          %v10919 = vadd.f32 %v10881, %v10910
          %v10920 = vadd.f32 %v10882, %v10910
          %v10921 = vadd.f32 %v10883, %v10910
          %v10922 = vadd.f32 %v10884, %v10910
          %v10923 = vadd.f32 %v10885, %v10910
          %v10924 = vadd.f32 %v10886, %v10910
          %v10925 = vadd.f32 %v10887, %v10910
          %v10926 = vadd.f32 %v10888, %v10910
          %v10927 = vadd.f32 %v10889, %v10910
          %v10928 = vadd.f32 %v10890, %v10910
          %v10929 = vadd.f32 %v10891, %v10910
          %v10930 = vadd.f32 %v10892, %v10910
          %v10931 = vadd.f32 %v10893, %v10910
          %v10932 = vadd.f32 %v10894, %v10910
          %v10933 = vadd.f32 %v10895, %v10910
          %v10934 = vadd.f32 %v10896, %v10910
          %v10935 = vadd.f32 %v10897, %v10910
          %v10936 = vadd.f32 %v10898, %v10910
          %v10937 = vadd.f32 %v10899, %v10910
          %v10938 = vadd.f32 %v10900, %v10910
          %v10939 = vadd.f32 %v10901, %v10910
          %v10940 = vadd.f32 %v10902, %v10910
          %v10941 = vadd.f32 %v10903, %v10910
          %v10942 = vadd.f32 %v10904, %v10910
          %v10943 = vadd.f32 %v10905, %v10910
          %v10944 = vmul.f32 %v10912, 0.2
          %v10945 = vmul.f32 %v10913, 0.2
          %v10946 = vmul.f32 %v10914, 0.2
          %v10947 = vmul.f32 %v10915, 0.2
          %v10948 = vmul.f32 %v10916, 0.2
          %v10949 = vmul.f32 %v10917, 0.2
          %v10950 = vmul.f32 %v10918, 0.2
          %v10951 = vmul.f32 %v10919, 0.2
          %v10952 = vmul.f32 %v10920, 0.2
          %v10953 = vmul.f32 %v10921, 0.2
          %v10954 = vmul.f32 %v10922, 0.2
          %v10955 = vmul.f32 %v10923, 0.2
          %v10956 = vmul.f32 %v10924, 0.2
          %v10957 = vmul.f32 %v10925, 0.2
          %v10958 = vmul.f32 %v10926, 0.2
          %v10959 = vmul.f32 %v10927, 0.2
          %v10960 = vmul.f32 %v10928, 0.2
          %v10961 = vmul.f32 %v10929, 0.2
          %v10962 = vmul.f32 %v10930, 0.2
          %v10963 = vmul.f32 %v10931, 0.2
          %v10964 = vmul.f32 %v10932, 0.2
          %v10965 = vmul.f32 %v10933, 0.2
          %v10966 = vmul.f32 %v10934, 0.2
          %v10967 = vmul.f32 %v10935, 0.2
          %v10968 = vmul.f32 %v10936, 0.2
          %v10969 = vmul.f32 %v10937, 0.2
          %v10970 = vmul.f32 %v10938, 0.2
          %v10971 = vmul.f32 %v10939, 0.2
          %v10972 = vmul.f32 %v10940, 0.2
          %v10973 = vmul.f32 %v10941, 0.2
          %v10974 = vmul.f32 %v10942, 0.2
          %v10975 = vmul.f32 %v10943, 0.2
          %v10976 = vmax.f32 %v10912, %v10944
          %v10977 = vmax.f32 %v10913, %v10945
          %v10978 = vmax.f32 %v10914, %v10946
          %v10979 = vmax.f32 %v10915, %v10947
          %v10980 = vmax.f32 %v10916, %v10948
          %v10981 = vmax.f32 %v10917, %v10949
          %v10982 = vmax.f32 %v10918, %v10950
          %v10983 = vmax.f32 %v10919, %v10951
          %v10984 = vmax.f32 %v10920, %v10952
          %v10985 = vmax.f32 %v10921, %v10953
          %v10986 = vmax.f32 %v10922, %v10954
          %v10987 = vmax.f32 %v10923, %v10955
          %v10988 = vmax.f32 %v10924, %v10956
          %v10989 = vmax.f32 %v10925, %v10957
          %v10990 = vmax.f32 %v10926, %v10958
          %v10991 = vmax.f32 %v10927, %v10959
          %v10992 = vmax.f32 %v10928, %v10960
          %v10993 = vmax.f32 %v10929, %v10961
          %v10994 = vmax.f32 %v10930, %v10962
          %v10995 = vmax.f32 %v10931, %v10963
          %v10996 = vmax.f32 %v10932, %v10964
          %v10997 = vmax.f32 %v10933, %v10965
          %v10998 = vmax.f32 %v10934, %v10966
          %v10999 = vmax.f32 %v10935, %v10967
          %v11000 = vmax.f32 %v10936, %v10968
          %v11001 = vmax.f32 %v10937, %v10969
          %v11002 = vmax.f32 %v10938, %v10970
          %v11003 = vmax.f32 %v10939, %v10971
          %v11004 = vmax.f32 %v10940, %v10972
          %v11005 = vmax.f32 %v10941, %v10973
          %v11006 = vmax.f32 %v10942, %v10974
          %v11007 = vmax.f32 %v10943, %v10975
          %v11008 = vld [vmem:[%s3383 + $0x8] sm:$0xf]
          %v11009 = vld [vmem:[%s3383 + $0x1c] sm:$0xf]
          %v11010 = vld [vmem:[%s3383 + $0x30] sm:$0xf]
          %v11011 = vld [vmem:[%s3383 + $0x44] sm:$0xf]
          %v11012 = vld [vmem:[%s3383 + $0x58] sm:$0xf]
          %v11013 = vld [vmem:[%s3383 + $0x6c] sm:$0xf]
          %v11014 = vld [vmem:[%s3383 + $0x80] sm:$0xf]
          %v11015 = vld [vmem:[%s3383 + $0x94] sm:$0xf]
          %v11016 = vld [vmem:[%s3383 + $0xa8] sm:$0xf]
          %v11017 = vld [vmem:[%s3383 + $0xbc] sm:$0xf]
          %v11018 = vld [vmem:[%s3383 + $0xd0] sm:$0xf]
          %v11019 = vld [vmem:[%s3383 + $0xe4] sm:$0xf]
          %v11020 = vld [vmem:[%s3383 + $0xf8] sm:$0xf]
          %v11021 = vld [vmem:[%s3383 + $0x10c] sm:$0xf]
          %v11022 = vld [vmem:[%s3383 + $0x120] sm:$0xf]
          %v11023 = vld [vmem:[%s3383 + $0x134] sm:$0xf]
          %v11024 = vld [vmem:[%s3383 + $0x148] sm:$0xf]
          %v11025 = vld [vmem:[%s3383 + $0x15c] sm:$0xf]
          %v11026 = vld [vmem:[%s3383 + $0x170] sm:$0xf]
          %v11027 = vld [vmem:[%s3383 + $0x184] sm:$0xf]
          %v11028 = vld [vmem:[%s3383 + $0x198] sm:$0xf]
          %v11029 = vld [vmem:[%s3383 + $0x1ac] sm:$0xf]
          %v11030 = vld [vmem:[%s3383 + $0x1c0] sm:$0xf]
          %v11031 = vld [vmem:[%s3383 + $0x1d4] sm:$0xf]
          %v11032 = vld [vmem:[%s3383 + $0x1e8] sm:$0xf]
          %v11033 = vld [vmem:[%s3383 + $0x1fc] sm:$0xf]
          %v11034 = vld [vmem:[%s3383 + $0x210] sm:$0xf]
          %v11035 = vld [vmem:[%s3383 + $0x224] sm:$0xf]
          %v11036 = vld [vmem:[%s3383 + $0x238] sm:$0xf]
          %v11037 = vld [vmem:[%s3383 + $0x24c] sm:$0xf]
          %v11038 = vld [vmem:[%s3383 + $0x260] sm:$0xf]
          %v11039 = vld [vmem:[%s3383 + $0x274] sm:$0xf]
          %v11040 = vunpack.c.l.bf16 %v11008
          %v11041 = vunpack.c.l.bf16 %v11009
          %v11042 = vunpack.c.l.bf16 %v11010
          %v11043 = vunpack.c.l.bf16 %v11011
          %v11044 = vunpack.c.l.bf16 %v11012
          %v11045 = vunpack.c.l.bf16 %v11013
          %v11046 = vunpack.c.l.bf16 %v11014
          %v11047 = vunpack.c.l.bf16 %v11015
          %v11048 = vunpack.c.l.bf16 %v11016
          %v11049 = vunpack.c.l.bf16 %v11017
          %v11050 = vunpack.c.l.bf16 %v11018
          %v11051 = vunpack.c.l.bf16 %v11019
          %v11052 = vunpack.c.l.bf16 %v11020
          %v11053 = vunpack.c.l.bf16 %v11021
          %v11054 = vunpack.c.l.bf16 %v11022
          %v11055 = vunpack.c.l.bf16 %v11023
          %v11056 = vunpack.c.l.bf16 %v11024
          %v11057 = vunpack.c.l.bf16 %v11025
          %v11058 = vunpack.c.l.bf16 %v11026
          %v11059 = vunpack.c.l.bf16 %v11027
          %v11060 = vunpack.c.l.bf16 %v11028
          %v11061 = vunpack.c.l.bf16 %v11029
          %v11062 = vunpack.c.l.bf16 %v11030
          %v11063 = vunpack.c.l.bf16 %v11031
          %v11064 = vunpack.c.l.bf16 %v11032
          %v11065 = vunpack.c.l.bf16 %v11033
          %v11066 = vunpack.c.l.bf16 %v11034
          %v11067 = vunpack.c.l.bf16 %v11035
          %v11068 = vunpack.c.l.bf16 %v11036
          %v11069 = vunpack.c.l.bf16 %v11037
          %v11070 = vunpack.c.l.bf16 %v11038
          %v11071 = vunpack.c.l.bf16 %v11039
          %v11072 = vadd.f32 %v11040, %v10976
          %v11073 = vadd.f32 %v11041, %v10977
          %v11074 = vadd.f32 %v11042, %v10978
          %v11075 = vadd.f32 %v11043, %v10979
          %v11076 = vadd.f32 %v11044, %v10980
          %v11077 = vadd.f32 %v11045, %v10981
          %v11078 = vadd.f32 %v11046, %v10982
          %v11079 = vadd.f32 %v11047, %v10983
          %v11080 = vadd.f32 %v11048, %v10984
          %v11081 = vadd.f32 %v11049, %v10985
          %v11082 = vadd.f32 %v11050, %v10986
          %v11083 = vadd.f32 %v11051, %v10987
          %v11084 = vadd.f32 %v11052, %v10988
          %v11085 = vadd.f32 %v11053, %v10989
          %v11086 = vadd.f32 %v11054, %v10990
          %v11087 = vadd.f32 %v11055, %v10991
          %v11088 = vadd.f32 %v11056, %v10992
          %v11089 = vadd.f32 %v11057, %v10993
          %v11090 = vadd.f32 %v11058, %v10994
          %v11091 = vadd.f32 %v11059, %v10995
          %v11092 = vadd.f32 %v11060, %v10996
          %v11093 = vadd.f32 %v11061, %v10997
          %v11094 = vadd.f32 %v11062, %v10998
          %v11095 = vadd.f32 %v11063, %v10999
          %v11096 = vadd.f32 %v11064, %v11000
          %v11097 = vadd.f32 %v11065, %v11001
          %v11098 = vadd.f32 %v11066, %v11002
          %v11099 = vadd.f32 %v11067, %v11003
          %v11100 = vadd.f32 %v11068, %v11004
          %v11101 = vadd.f32 %v11069, %v11005
          %v11102 = vadd.f32 %v11070, %v11006
          %v11103 = vadd.f32 %v11071, %v11007
          %s11104 = smul.u32 %s424, 256
          %s11105 = scalar_lea.vmem %s220, %s11104 [#allocation3]
          %11106 = vst [vmem:[%s11105] sm:$0xff] %v11072
          %11107 = vst [vmem:[%s11105 + $0x8] sm:$0xff] %v11073
          %11108 = vst [vmem:[%s11105 + $0x10] sm:$0xff] %v11074
          %11109 = vst [vmem:[%s11105 + $0x18] sm:$0xff] %v11075
          %11110 = vst [vmem:[%s11105 + $0x20] sm:$0xff] %v11076
          %11111 = vst [vmem:[%s11105 + $0x28] sm:$0xff] %v11077
          %11112 = vst [vmem:[%s11105 + $0x30] sm:$0xff] %v11078
          %11113 = vst [vmem:[%s11105 + $0x38] sm:$0xff] %v11079
          %11114 = vst [vmem:[%s11105 + $0x40] sm:$0xff] %v11080
          %11115 = vst [vmem:[%s11105 + $0x48] sm:$0xff] %v11081
          %11116 = vst [vmem:[%s11105 + $0x50] sm:$0xff] %v11082
          %11117 = vst [vmem:[%s11105 + $0x58] sm:$0xff] %v11083
          %11118 = vst [vmem:[%s11105 + $0x60] sm:$0xff] %v11084
          %11119 = vst [vmem:[%s11105 + $0x68] sm:$0xff] %v11085
          %11120 = vst [vmem:[%s11105 + $0x70] sm:$0xff] %v11086
          %11121 = vst [vmem:[%s11105 + $0x78] sm:$0xff] %v11087
          %11122 = vst [vmem:[%s11105 + $0x80] sm:$0xff] %v11088
          %11123 = vst [vmem:[%s11105 + $0x88] sm:$0xff] %v11089
          %11124 = vst [vmem:[%s11105 + $0x90] sm:$0xff] %v11090
          %11125 = vst [vmem:[%s11105 + $0x98] sm:$0xff] %v11091
          %11126 = vst [vmem:[%s11105 + $0xa0] sm:$0xff] %v11092
          %11127 = vst [vmem:[%s11105 + $0xa8] sm:$0xff] %v11093
          %11128 = vst [vmem:[%s11105 + $0xb0] sm:$0xff] %v11094
          %11129 = vst [vmem:[%s11105 + $0xb8] sm:$0xff] %v11095
          %11130 = vst [vmem:[%s11105 + $0xc0] sm:$0xff] %v11096
          %11131 = vst [vmem:[%s11105 + $0xc8] sm:$0xff] %v11097
          %11132 = vst [vmem:[%s11105 + $0xd0] sm:$0xff] %v11098
          %11133 = vst [vmem:[%s11105 + $0xd8] sm:$0xff] %v11099
          %11134 = vst [vmem:[%s11105 + $0xe0] sm:$0xff] %v11100
          %11135 = vst [vmem:[%s11105 + $0xe8] sm:$0xff] %v11101
          %11136 = vst [vmem:[%s11105 + $0xf0] sm:$0xff] %v11102
          %11137 = vst [vmem:[%s11105 + $0xf8] sm:$0xff] %v11103
        $region45: #{decoder_embedding_forward.1} parent=39 // loop_footer
          %s428 = sadd.s32 1, %s424
        $region46: #{decoder_embedding_forward.1} parent=39 // loop_footer_branch
          %423 = sbr.rel target = $region42
        $region47: #{decoder_embedding_forward.1} parent=39 // loop_exit
          _
        %s11138 = sand.u32 %s137, 1
        %s11139 = scalar_lea.sflag [#allocation4], %s11138
        %s11140 = sand.u32 %s137, 1
        %s11141 = smul.addr %s11140, 768
        %s11142 = scalar_lea.vmem [#allocation3], %s11141
        // Predicated region
        $region48: #{decoder_embedding_forward.1} parent=39 // pred_check
          %p11143 = pneg %p147
        $region49: #{decoder_embedding_forward.1} parent=39 // pred_check_branch
          %11145 = sbr.rel (%p11143) target = $region51
        $region50: #{decoder_embedding_forward.1} parent=39 // pred_region
          %s11146 = smul.u32 3, %s19
          %s11148 = ssub.s32 12288, 12288
          %11149 = vsyncadd %s11139, %s11148
          %s11150 = smul.addr %s11146, 32
          %s11151 = smul.addr %s11150, 128
          %s11152 = scalar_lea.hbm %s5, %s11151
          %s11153 = sshll.u32 %s11142, 4
          %s11154 = int_to_ptr.vmem [resolvable:$true] %s11153
          %11159 = dma.vmem_to_hbm [thread:$0]  %s11154, 12288, %s11152, %s11139, 128, 128, 8
        $region51: #{decoder_embedding_forward.1} parent=39 // pred_fallthru
          _
      $region40: #{decoder_embedding_forward.1} parent=5 // pred_fallthru
        _
      %p11160 = scmp.le.s32.totalorder 2, %s14
      // Predicated region
      $region52: #{decoder_embedding_forward.1} parent=5 // pred_check
        %p11161 = pneg %p11160
      $region53: #{decoder_embedding_forward.1} parent=5 // pred_check_branch
        %11163 = sbr.rel (%p11161) target = $region55
      $region54: #{decoder_embedding_forward.1} parent=5 // pred_region
        %s11164 = ssub.s32 %s14, 2
        // Predicated region
        $region56: #{decoder_embedding_forward.1} parent=54 // pred_check
          %p11165 = pneg %p153
        $region57: #{decoder_embedding_forward.1} parent=54 // pred_check_branch
          %11167 = sbr.rel (%p11165) target = $region59
        $region58: #{decoder_embedding_forward.1} parent=54 // pred_region
          %s11168 = sand.u32 %s138, 1
          %s11169 = scalar_lea.sflag [#allocation4], %s11168
          %s11170 = sand.u32 %s138, 1
          %s11171 = smul.addr %s11170, 768
          %s11172 = scalar_lea.vmem [#allocation3], %s11171
          %11173 = dma.done %s11169, 12288
        $region59: #{decoder_embedding_forward.1} parent=54 // pred_fallthru
          _
      $region55: #{decoder_embedding_forward.1} parent=5 // pred_fallthru
        _
    $region6: #{decoder_embedding_forward.1} parent=1 // loop_footer
      %s18 = sadd.s32 1, %s14
    $region7: #{decoder_embedding_forward.1} parent=1 // loop_footer_branch
      %13 = sbr.rel target = $region3
    $region8: #{decoder_embedding_forward.1} parent=1 // loop_exit
      _
    %11174 = vsyncpa [#allocation4], 1
    %s11175 = scalar_lea.sflag [#allocation4], 1
    %11176 = vsyncpa %s11175, 1

</llo_original>
